<compile_context>
chip_gen: v7x
topology: tpu7x:2x2x1
jax: 0.10.0
libtpu: 0.0.40
codegen_flags: <defaults>
</compile_context>

<pallas_src>
import functools

import numpy as np
import jax
import jax.numpy as jnp
from jax.experimental import pallas as pl
from jax.experimental.pallas import tpu as pltpu

BN_EPS = 1e-5
EMB_DIM = 100
LAYER_SPECS = ((64, 2, 1), (128, 2, 2), (256, 2, 2))   # (out_channels, num_blocks, stride)


# ---------------------------------------------------------------------------
# Fused Pallas kernel (whole network, everything resident in VMEM)
# ---------------------------------------------------------------------------
def _fused_resnet_kernel(*refs, block_has_downsample):
    *in_refs, out_ref = refs
    it = iter(in_refs)

    def take():
        return next(it)[...]

    def conv_bn(x, relu, res=None):
        """Conv1d(no bias) + folded BN + optional residual + ReLU.

        Consumes 3 refs:  w (K*C_in, C_out) bf16 (BN scale folded in),
        b (1, C_out) f32 (BN shift), g (K, N*L_out, N*L_in) bf16 gather stack.
        """
        w = take()
        b = take()
        g = take()
        k_taps = g.shape[0]
        xb = x.astype(jnp.bfloat16)
        # Gather tap k rows (padding / stride / batch boundaries baked into g) — exact.
        cols = [jnp.dot(g[k], xb, preferred_element_type=jnp.float32)
                for k in range(k_taps)]                              # (N*L_out, C_in)
        im = cols[0] if k_taps == 1 else jnp.concatenate(cols, axis=1)
        # One deep matmul per conv: depth = K*C_in, M = N*L_out.
        y = jnp.dot(im.astype(jnp.bfloat16), w,
                    preferred_element_type=jnp.float32) + b
        if res is not None:
            y = y + res
        if relu:
            y = jnp.maximum(y, 0.0)
        return y

    def maxpool(x):
        """MaxPool1d(3, stride=2, padding=1); input is post-ReLU (>=0) so the
        zero rows produced by out-of-range taps behave like -inf padding."""
        g = take()
        xb = x.astype(jnp.bfloat16)
        m = jnp.dot(g[0], xb, preferred_element_type=jnp.float32)
        for k in range(1, g.shape[0]):
            m = jnp.maximum(m, jnp.dot(g[k], xb, preferred_element_type=jnp.float32))
        return m

    x = take()                                   # (N*100, size_token) f32, channels-last

    # ---- stem: Conv1d(size_token, 64, 7, s=2, p=3) + BN + ReLU, MaxPool1d(3, 2, 1)
    x = conv_bn(x, relu=True)                    # (N*50, 64)
    x = maxpool(x)                               # (N*25, 64)

    # ---- layer1..layer3 (BasicBlock x 2 each; forward does not use layer4)
    for has_ds in block_has_downsample:
        out = conv_bn(x, relu=True)                                  # conv1+bn1+relu
        identity = conv_bn(x, relu=False) if has_ds else x           # downsample branch
        x = conv_bn(out, relu=True, res=identity)                    # conv2+bn2, +=id, relu

    # ---- head: AvgPool1d(4) -> Dropout(eval: identity) -> Flatten -> Linear -> Sigmoid
    p_avg = take()                               # (N, N*L) f32, 0.25 over first 4 positions
    fc_w = take()                                # (256, num_classes) f32
    fc_b = take()                                # (1, num_classes) f32
    pooled = jnp.dot(p_avg, x, preferred_element_type=jnp.float32)   # (N, 256)
    logits = jnp.dot(pooled, fc_w, preferred_element_type=jnp.float32) + fc_b
    out_ref[...] = (1.0 / (1.0 + jnp.exp(-logits))).astype(out_ref.dtype)


# ---------------------------------------------------------------------------
# Host-side constant builders (0/1 gather operands, avgpool operand)
# ---------------------------------------------------------------------------
def _gather_stack(batch, l_in, k, stride, pad):
    """Block-diagonal 0/1 matrices selecting conv tap k rows; encodes zero padding,
    stride and per-sample boundaries.  Shape (k, batch*l_out, batch*l_in)."""
    l_out = (l_in + 2 * pad - k) // stride + 1
    g = np.zeros((k, batch * l_out, batch * l_in), np.float32)
    for kk in range(k):
        for n in range(batch):
            for l in range(l_out):
                t = stride * l + kk - pad
                if 0 <= t < l_in:
                    g[kk, n * l_out + l, n * l_in + t] = 1.0
    return jnp.asarray(g, jnp.bfloat16), l_out


def _avgpool_matrix(batch, l_in, pool_k):
    p = np.zeros((batch, batch * l_in), np.float32)
    for n in range(batch):
        p[n, n * l_in:n * l_in + pool_k] = 1.0 / pool_k
    return jnp.asarray(p)


# ---------------------------------------------------------------------------
# Parameter init (deterministic, synthetic) and forward pass
# ---------------------------------------------------------------------------
def _bn_fold(c):
    gamma = jnp.ones((c,), jnp.float32)
    beta = jnp.zeros((c,), jnp.float32)
    running_mean = jnp.zeros((c,), jnp.float32)
    running_var = jnp.ones((c,), jnp.float32)
    scale = gamma / jnp.sqrt(running_var + BN_EPS)
    shift = beta - running_mean * scale
    return scale, shift


def _conv_w(key, c_in, c_out, k):
    fan_in = c_in * k
    return jax.random.normal(key, (k, c_in, c_out), jnp.float32) / np.sqrt(fan_in)


def init_params(key, unique_words, size_token, num_classes):
    keys = iter(jax.random.split(key, 64))
    p = {'emb': jax.random.normal(next(keys), (unique_words, EMB_DIM), jnp.float32)}
    p['stem_w'] = _conv_w(next(keys), size_token, 64, 7)      # Conv1d(size_token, 64, 7, 2, 3)
    p['stem_bn'] = _bn_fold(64)

    def basic_block(c_in, c_out, stride):
        blk = {'w1': _conv_w(next(keys), c_in, c_out, 3), 'bn1': _bn_fold(c_out),
               'w2': _conv_w(next(keys), c_out, c_out, 3), 'bn2': _bn_fold(c_out)}
        if stride != 1 or c_in != c_out:
            blk['wd'] = _conv_w(next(keys), c_in, c_out, 1)
            blk['bnd'] = _bn_fold(c_out)
        return blk

    layers = []
    in_c = 64
    for out_c, n_blocks, stride in LAYER_SPECS:
        blocks = []
        for bi in range(n_blocks):
            s = stride if bi == 0 else 1
            blocks.append(basic_block(in_c, out_c, s))
            in_c = out_c
        layers.append(blocks)
    p['layers'] = layers
    p['fc_w'] = jax.random.normal(next(keys), (256, num_classes), jnp.float32) / np.sqrt(256)
    p['fc_b'] = jnp.zeros((num_classes,), jnp.float32)
    return p


def forward(params, tokens, *, size_token, num_classes):
    batch = tokens.shape[0]

    # Embedding with max_norm=size_token renorm (glue outside the kernel).
    vecs = params['emb'][tokens]                                     # (B, size_token, 100)
    norms = jnp.linalg.norm(vecs, axis=-1, keepdims=True)
    vecs = vecs * jnp.where(norms > size_token, size_token / (norms + 1e-7), 1.0)

    # PyTorch Conv1d sees (B, C=size_token, L=100); fold (B, L) into matmul rows.
    x = jnp.transpose(vecs, (0, 2, 1)).reshape(batch * EMB_DIM, size_token)
    flat = [x.astype(jnp.float32)]

    def add_conv(w, bn, l_in, k, stride, pad):
        scale, shift = bn
        kk, c_in, c_out = w.shape
        w_fold = (w.reshape(kk * c_in, c_out) * scale[None, :]).astype(jnp.bfloat16)
        g, l_out = _gather_stack(batch, l_in, k, stride, pad)
        flat.extend([w_fold, shift.reshape(1, c_out).astype(jnp.float32), g])
        return l_out

    # stem
    l = add_conv(params['stem_w'], params['stem_bn'], EMB_DIM, 7, 2, 3)   # L: 100 -> 50
    g_mp, l = _gather_stack(batch, l, 3, 2, 1)                            # L: 50 -> 25
    flat.append(g_mp)

    block_has_downsample = []
    for (_, _, stride), layer_blocks in zip(LAYER_SPECS, params['layers']):
        for bi, blk in enumerate(layer_blocks):
            s = stride if bi == 0 else 1
            has_ds = 'wd' in blk
            block_has_downsample.append(has_ds)
            l_out = add_conv(blk['w1'], blk['bn1'], l, 3, s, 1)
            if has_ds:
                add_conv(blk['wd'], blk['bnd'], l, 1, s, 0)
            l = l_out
            add_conv(blk['w2'], blk['bn2'], l, 3, 1, 1)

    # head
    flat.append(_avgpool_matrix(batch, l, 4))
    flat.append(params['fc_w'].astype(jnp.float32))
    flat.append(params['fc_b'].reshape(1, num_classes).astype(jnp.float32))

    kernel = functools.partial(_fused_resnet_kernel,
                               block_has_downsample=tuple(block_has_downsample))
    vmem = pl.BlockSpec(memory_space=pltpu.MemorySpace.VMEM)
    out = pl.pallas_call(
        kernel,
        out_shape=jax.ShapeDtypeStruct((batch, num_classes), jnp.float32),
        in_specs=[vmem] * len(flat),
        out_specs=vmem,
    )(*flat)
    # torch.squeeze(out, 1) is a no-op for num_classes=2.
    return out


if __name__ == "__main__":
    unique_words, size_token, num_classes = 50, 16, 2
    batch = 2
    key = jax.random.PRNGKey(0)
    pkey, dkey = jax.random.split(key)
    params = init_params(pkey, unique_words, size_token, num_classes)
    tokens = jax.random.randint(dkey, (batch, size_token), 0, unique_words)

    fwd = jax.jit(functools.partial(forward, size_token=size_token,
                                    num_classes=num_classes))
    out = jax.block_until_ready(fwd(params, tokens))
    assert out.shape == (batch, num_classes), out.shape
    assert bool(jnp.all(jnp.isfinite(out)))
    assert bool(jnp.all((out >= 0.0) & (out <= 1.0)))
    print("KERNEL_OK")
</pallas_src>

<mosaic_0001>
module attributes {stable_mosaic.version = 11 : i64} {
  func.func @_fused_resnet_kernel(%arg0: memref<200x16xf32, #tpu.memory_space<vmem>>, %arg1: memref<112x64xbf16, #tpu.memory_space<vmem>>, %arg2: memref<1x64xf32, #tpu.memory_space<vmem>>, %arg3: memref<7x100x200xbf16, #tpu.memory_space<vmem>>, %arg4: memref<3x50x100xbf16, #tpu.memory_space<vmem>>, %arg5: memref<192x64xbf16, #tpu.memory_space<vmem>>, %arg6: memref<1x64xf32, #tpu.memory_space<vmem>>, %arg7: memref<3x50x50xbf16, #tpu.memory_space<vmem>>, %arg8: memref<192x64xbf16, #tpu.memory_space<vmem>>, %arg9: memref<1x64xf32, #tpu.memory_space<vmem>>, %arg10: memref<3x50x50xbf16, #tpu.memory_space<vmem>>, %arg11: memref<192x64xbf16, #tpu.memory_space<vmem>>, %arg12: memref<1x64xf32, #tpu.memory_space<vmem>>, %arg13: memref<3x50x50xbf16, #tpu.memory_space<vmem>>, %arg14: memref<192x64xbf16, #tpu.memory_space<vmem>>, %arg15: memref<1x64xf32, #tpu.memory_space<vmem>>, %arg16: memref<3x50x50xbf16, #tpu.memory_space<vmem>>, %arg17: memref<192x128xbf16, #tpu.memory_space<vmem>>, %arg18: memref<1x128xf32, #tpu.memory_space<vmem>>, %arg19: memref<3x26x50xbf16, #tpu.memory_space<vmem>>, %arg20: memref<64x128xbf16, #tpu.memory_space<vmem>>, %arg21: memref<1x128xf32, #tpu.memory_space<vmem>>, %arg22: memref<1x26x50xbf16, #tpu.memory_space<vmem>>, %arg23: memref<384x128xbf16, #tpu.memory_space<vmem>>, %arg24: memref<1x128xf32, #tpu.memory_space<vmem>>, %arg25: memref<3x26x26xbf16, #tpu.memory_space<vmem>>, %arg26: memref<384x128xbf16, #tpu.memory_space<vmem>>, %arg27: memref<1x128xf32, #tpu.memory_space<vmem>>, %arg28: memref<3x26x26xbf16, #tpu.memory_space<vmem>>, %arg29: memref<384x128xbf16, #tpu.memory_space<vmem>>, %arg30: memref<1x128xf32, #tpu.memory_space<vmem>>, %arg31: memref<3x26x26xbf16, #tpu.memory_space<vmem>>, %arg32: memref<384x256xbf16, #tpu.memory_space<vmem>>, %arg33: memref<1x256xf32, #tpu.memory_space<vmem>>, %arg34: memref<3x14x26xbf16, #tpu.memory_space<vmem>>, %arg35: memref<128x256xbf16, #tpu.memory_space<vmem>>, %arg36: memref<1x256xf32, #tpu.memory_space<vmem>>, %arg37: memref<1x14x26xbf16, #tpu.memory_space<vmem>>, %arg38: memref<768x256xbf16, #tpu.memory_space<vmem>>, %arg39: memref<1x256xf32, #tpu.memory_space<vmem>>, %arg40: memref<3x14x14xbf16, #tpu.memory_space<vmem>>, %arg41: memref<768x256xbf16, #tpu.memory_space<vmem>>, %arg42: memref<1x256xf32, #tpu.memory_space<vmem>>, %arg43: memref<3x14x14xbf16, #tpu.memory_space<vmem>>, %arg44: memref<768x256xbf16, #tpu.memory_space<vmem>>, %arg45: memref<1x256xf32, #tpu.memory_space<vmem>>, %arg46: memref<3x14x14xbf16, #tpu.memory_space<vmem>>, %arg47: memref<2x14xf32, #tpu.memory_space<vmem>>, %arg48: memref<256x2xf32, #tpu.memory_space<vmem>>, %arg49: memref<1x2xf32, #tpu.memory_space<vmem>>, %arg50: memref<2x2xf32, #tpu.memory_space<vmem>>) attributes {dimension_semantics = [], scalar_prefetch = 0 : i64, scratch_operands = 0 : i64, tpu.core_type = #tpu.core_type<tc>} {
    %c0 = arith.constant 0 : index
    %c0_0 = arith.constant 0 : index
    %0 = vector.load %arg0[%c0, %c0_0] : memref<200x16xf32, #tpu.memory_space<vmem>>, vector<200x16xf32>
    %c0_1 = arith.constant 0 : index
    %c0_2 = arith.constant 0 : index
    %1 = vector.load %arg1[%c0_1, %c0_2] : memref<112x64xbf16, #tpu.memory_space<vmem>>, vector<112x64xbf16>
    %c0_3 = arith.constant 0 : index
    %c0_4 = arith.constant 0 : index
    %2 = vector.load %arg2[%c0_3, %c0_4] : memref<1x64xf32, #tpu.memory_space<vmem>>, vector<1x64xf32>
    %c0_5 = arith.constant 0 : index
    %c0_6 = arith.constant 0 : index
    %c0_7 = arith.constant 0 : index
    %3 = vector.load %arg3[%c0_5, %c0_6, %c0_7] : memref<7x100x200xbf16, #tpu.memory_space<vmem>>, vector<7x100x200xbf16>
    %4 = arith.truncf %0 : vector<200x16xf32> to vector<200x16xbf16>
    %5 = vector.extract_strided_slice %3 {offsets = [0, 0, 0], sizes = [1, 100, 200], strides = [1, 1, 1]} : vector<7x100x200xbf16> to vector<1x100x200xbf16>
    %6 = vector.shape_cast %5 : vector<1x100x200xbf16> to vector<100x200xbf16>
    %cst = arith.constant dense<0.000000e+00> : vector<100x16xf32>
    %7 = tpu.matmul %6, %4, %cst {dimension_numbers = #tpu.dot_dimension_numbers<[1], [0], [0], [1], [0, 0, 1, 1], [], []>} : vector<100x200xbf16>, vector<200x16xbf16>, vector<100x16xf32> -> vector<100x16xf32>
    %8 = vector.extract_strided_slice %3 {offsets = [1, 0, 0], sizes = [1, 100, 200], strides = [1, 1, 1]} : vector<7x100x200xbf16> to vector<1x100x200xbf16>
    %9 = vector.shape_cast %8 : vector<1x100x200xbf16> to vector<100x200xbf16>
    %cst_8 = arith.constant dense<0.000000e+00> : vector<100x16xf32>
    %10 = tpu.matmul %9, %4, %cst_8 {dimension_numbers = #tpu.dot_dimension_numbers<[1], [0], [0], [1], [0, 0, 1, 1], [], []>} : vector<100x200xbf16>, vector<200x16xbf16>, vector<100x16xf32> -> vector<100x16xf32>
    %11 = vector.extract_strided_slice %3 {offsets = [2, 0, 0], sizes = [1, 100, 200], strides = [1, 1, 1]} : vector<7x100x200xbf16> to vector<1x100x200xbf16>
    %12 = vector.shape_cast %11 : vector<1x100x200xbf16> to vector<100x200xbf16>
    %cst_9 = arith.constant dense<0.000000e+00> : vector<100x16xf32>
    %13 = tpu.matmul %12, %4, %cst_9 {dimension_numbers = #tpu.dot_dimension_numbers<[1], [0], [0], [1], [0, 0, 1, 1], [], []>} : vector<100x200xbf16>, vector<200x16xbf16>, vector<100x16xf32> -> vector<100x16xf32>
    %14 = vector.extract_strided_slice %3 {offsets = [3, 0, 0], sizes = [1, 100, 200], strides = [1, 1, 1]} : vector<7x100x200xbf16> to vector<1x100x200xbf16>
    %15 = vector.shape_cast %14 : vector<1x100x200xbf16> to vector<100x200xbf16>
    %cst_10 = arith.constant dense<0.000000e+00> : vector<100x16xf32>
    %16 = tpu.matmul %15, %4, %cst_10 {dimension_numbers = #tpu.dot_dimension_numbers<[1], [0], [0], [1], [0, 0, 1, 1], [], []>} : vector<100x200xbf16>, vector<200x16xbf16>, vector<100x16xf32> -> vector<100x16xf32>
    %17 = vector.extract_strided_slice %3 {offsets = [4, 0, 0], sizes = [1, 100, 200], strides = [1, 1, 1]} : vector<7x100x200xbf16> to vector<1x100x200xbf16>
    %18 = vector.shape_cast %17 : vector<1x100x200xbf16> to vector<100x200xbf16>
    %cst_11 = arith.constant dense<0.000000e+00> : vector<100x16xf32>
    %19 = tpu.matmul %18, %4, %cst_11 {dimension_numbers = #tpu.dot_dimension_numbers<[1], [0], [0], [1], [0, 0, 1, 1], [], []>} : vector<100x200xbf16>, vector<200x16xbf16>, vector<100x16xf32> -> vector<100x16xf32>
    %20 = vector.extract_strided_slice %3 {offsets = [5, 0, 0], sizes = [1, 100, 200], strides = [1, 1, 1]} : vector<7x100x200xbf16> to vector<1x100x200xbf16>
    %21 = vector.shape_cast %20 : vector<1x100x200xbf16> to vector<100x200xbf16>
    %cst_12 = arith.constant dense<0.000000e+00> : vector<100x16xf32>
    %22 = tpu.matmul %21, %4, %cst_12 {dimension_numbers = #tpu.dot_dimension_numbers<[1], [0], [0], [1], [0, 0, 1, 1], [], []>} : vector<100x200xbf16>, vector<200x16xbf16>, vector<100x16xf32> -> vector<100x16xf32>
    %23 = vector.extract_strided_slice %3 {offsets = [6, 0, 0], sizes = [1, 100, 200], strides = [1, 1, 1]} : vector<7x100x200xbf16> to vector<1x100x200xbf16>
    %24 = vector.shape_cast %23 : vector<1x100x200xbf16> to vector<100x200xbf16>
    %cst_13 = arith.constant dense<0.000000e+00> : vector<100x16xf32>
    %25 = tpu.matmul %24, %4, %cst_13 {dimension_numbers = #tpu.dot_dimension_numbers<[1], [0], [0], [1], [0, 0, 1, 1], [], []>} : vector<100x200xbf16>, vector<200x16xbf16>, vector<100x16xf32> -> vector<100x16xf32>
    %26 = tpu.concatenate %7, %10, %13, %16, %19, %22, %25 in 1 : vector<100x16xf32>, vector<100x16xf32>, vector<100x16xf32>, vector<100x16xf32>, vector<100x16xf32>, vector<100x16xf32>, vector<100x16xf32> -> vector<100x112xf32>
    %27 = arith.truncf %26 : vector<100x112xf32> to vector<100x112xbf16>
    %cst_14 = arith.constant dense<0.000000e+00> : vector<100x64xf32>
    %28 = tpu.matmul %27, %1, %cst_14 {dimension_numbers = #tpu.dot_dimension_numbers<[1], [0], [0], [1], [0, 0, 1, 1], [], []>} : vector<100x112xbf16>, vector<112x64xbf16>, vector<100x64xf32> -> vector<100x64xf32>
    %29 = vector.broadcast %2 : vector<1x64xf32> to vector<100x64xf32>
    %30 = arith.addf %28, %29 : vector<100x64xf32>
    %cst_15 = arith.constant 0.000000e+00 : f32
    %31 = vector.broadcast %cst_15 : f32 to vector<100x64xf32>
    %32 = arith.maximumf %30, %31 : vector<100x64xf32>
    %c0_16 = arith.constant 0 : index
    %c0_17 = arith.constant 0 : index
    %c0_18 = arith.constant 0 : index
    %33 = vector.load %arg4[%c0_16, %c0_17, %c0_18] : memref<3x50x100xbf16, #tpu.memory_space<vmem>>, vector<3x50x100xbf16>
    %34 = arith.truncf %32 : vector<100x64xf32> to vector<100x64xbf16>
    %35 = vector.extract_strided_slice %33 {offsets = [0, 0, 0], sizes = [1, 50, 100], strides = [1, 1, 1]} : vector<3x50x100xbf16> to vector<1x50x100xbf16>
    %36 = vector.shape_cast %35 : vector<1x50x100xbf16> to vector<50x100xbf16>
    %cst_19 = arith.constant dense<0.000000e+00> : vector<50x64xf32>
    %37 = tpu.matmul %36, %34, %cst_19 {dimension_numbers = #tpu.dot_dimension_numbers<[1], [0], [0], [1], [0, 0, 1, 1], [], []>} : vector<50x100xbf16>, vector<100x64xbf16>, vector<50x64xf32> -> vector<50x64xf32>
    %38 = vector.extract_strided_slice %33 {offsets = [1, 0, 0], sizes = [1, 50, 100], strides = [1, 1, 1]} : vector<3x50x100xbf16> to vector<1x50x100xbf16>
    %39 = vector.shape_cast %38 : vector<1x50x100xbf16> to vector<50x100xbf16>
    %cst_20 = arith.constant dense<0.000000e+00> : vector<50x64xf32>
    %40 = tpu.matmul %39, %34, %cst_20 {dimension_numbers = #tpu.dot_dimension_numbers<[1], [0], [0], [1], [0, 0, 1, 1], [], []>} : vector<50x100xbf16>, vector<100x64xbf16>, vector<50x64xf32> -> vector<50x64xf32>
    %41 = arith.maximumf %37, %40 : vector<50x64xf32>
    %42 = vector.extract_strided_slice %33 {offsets = [2, 0, 0], sizes = [1, 50, 100], strides = [1, 1, 1]} : vector<3x50x100xbf16> to vector<1x50x100xbf16>
    %43 = vector.shape_cast %42 : vector<1x50x100xbf16> to vector<50x100xbf16>
    %cst_21 = arith.constant dense<0.000000e+00> : vector<50x64xf32>
    %44 = tpu.matmul %43, %34, %cst_21 {dimension_numbers = #tpu.dot_dimension_numbers<[1], [0], [0], [1], [0, 0, 1, 1], [], []>} : vector<50x100xbf16>, vector<100x64xbf16>, vector<50x64xf32> -> vector<50x64xf32>
    %45 = arith.maximumf %41, %44 : vector<50x64xf32>
    %c0_22 = arith.constant 0 : index
    %c0_23 = arith.constant 0 : index
    %46 = vector.load %arg5[%c0_22, %c0_23] : memref<192x64xbf16, #tpu.memory_space<vmem>>, vector<192x64xbf16>
    %c0_24 = arith.constant 0 : index
    %c0_25 = arith.constant 0 : index
    %47 = vector.load %arg6[%c0_24, %c0_25] : memref<1x64xf32, #tpu.memory_space<vmem>>, vector<1x64xf32>
    %c0_26 = arith.constant 0 : index
    %c0_27 = arith.constant 0 : index
    %c0_28 = arith.constant 0 : index
    %48 = vector.load %arg7[%c0_26, %c0_27, %c0_28] : memref<3x50x50xbf16, #tpu.memory_space<vmem>>, vector<3x50x50xbf16>
    %49 = arith.truncf %45 : vector<50x64xf32> to vector<50x64xbf16>
    %50 = vector.extract_strided_slice %48 {offsets = [0, 0, 0], sizes = [1, 50, 50], strides = [1, 1, 1]} : vector<3x50x50xbf16> to vector<1x50x50xbf16>
    %51 = vector.shape_cast %50 : vector<1x50x50xbf16> to vector<50x50xbf16>
    %cst_29 = arith.constant dense<0.000000e+00> : vector<50x64xf32>
    %52 = tpu.matmul %51, %49, %cst_29 {dimension_numbers = #tpu.dot_dimension_numbers<[1], [0], [0], [1], [0, 0, 1, 1], [], []>} : vector<50x50xbf16>, vector<50x64xbf16>, vector<50x64xf32> -> vector<50x64xf32>
    %53 = vector.extract_strided_slice %48 {offsets = [1, 0, 0], sizes = [1, 50, 50], strides = [1, 1, 1]} : vector<3x50x50xbf16> to vector<1x50x50xbf16>
    %54 = vector.shape_cast %53 : vector<1x50x50xbf16> to vector<50x50xbf16>
    %cst_30 = arith.constant dense<0.000000e+00> : vector<50x64xf32>
    %55 = tpu.matmul %54, %49, %cst_30 {dimension_numbers = #tpu.dot_dimension_numbers<[1], [0], [0], [1], [0, 0, 1, 1], [], []>} : vector<50x50xbf16>, vector<50x64xbf16>, vector<50x64xf32> -> vector<50x64xf32>
    %56 = vector.extract_strided_slice %48 {offsets = [2, 0, 0], sizes = [1, 50, 50], strides = [1, 1, 1]} : vector<3x50x50xbf16> to vector<1x50x50xbf16>
    %57 = vector.shape_cast %56 : vector<1x50x50xbf16> to vector<50x50xbf16>
    %cst_31 = arith.constant dense<0.000000e+00> : vector<50x64xf32>
    %58 = tpu.matmul %57, %49, %cst_31 {dimension_numbers = #tpu.dot_dimension_numbers<[1], [0], [0], [1], [0, 0, 1, 1], [], []>} : vector<50x50xbf16>, vector<50x64xbf16>, vector<50x64xf32> -> vector<50x64xf32>
    %59 = tpu.concatenate %52, %55, %58 in 1 : vector<50x64xf32>, vector<50x64xf32>, vector<50x64xf32> -> vector<50x192xf32>
    %60 = arith.truncf %59 : vector<50x192xf32> to vector<50x192xbf16>
    %cst_32 = arith.constant dense<0.000000e+00> : vector<50x64xf32>
    %61 = tpu.matmul %60, %46, %cst_32 {dimension_numbers = #tpu.dot_dimension_numbers<[1], [0], [0], [1], [0, 0, 1, 1], [], []>} : vector<50x192xbf16>, vector<192x64xbf16>, vector<50x64xf32> -> vector<50x64xf32>
    %62 = vector.broadcast %47 : vector<1x64xf32> to vector<50x64xf32>
    %63 = arith.addf %61, %62 : vector<50x64xf32>
    %cst_33 = arith.constant 0.000000e+00 : f32
    %64 = vector.broadcast %cst_33 : f32 to vector<50x64xf32>
    %65 = arith.maximumf %63, %64 : vector<50x64xf32>
    %c0_34 = arith.constant 0 : index
    %c0_35 = arith.constant 0 : index
    %66 = vector.load %arg8[%c0_34, %c0_35] : memref<192x64xbf16, #tpu.memory_space<vmem>>, vector<192x64xbf16>
    %c0_36 = arith.constant 0 : index
    %c0_37 = arith.constant 0 : index
    %67 = vector.load %arg9[%c0_36, %c0_37] : memref<1x64xf32, #tpu.memory_space<vmem>>, vector<1x64xf32>
    %c0_38 = arith.constant 0 : index
    %c0_39 = arith.constant 0 : index
    %c0_40 = arith.constant 0 : index
    %68 = vector.load %arg10[%c0_38, %c0_39, %c0_40] : memref<3x50x50xbf16, #tpu.memory_space<vmem>>, vector<3x50x50xbf16>
    %69 = arith.truncf %65 : vector<50x64xf32> to vector<50x64xbf16>
    %70 = vector.extract_strided_slice %68 {offsets = [0, 0, 0], sizes = [1, 50, 50], strides = [1, 1, 1]} : vector<3x50x50xbf16> to vector<1x50x50xbf16>
    %71 = vector.shape_cast %70 : vector<1x50x50xbf16> to vector<50x50xbf16>
    %cst_41 = arith.constant dense<0.000000e+00> : vector<50x64xf32>
    %72 = tpu.matmul %71, %69, %cst_41 {dimension_numbers = #tpu.dot_dimension_numbers<[1], [0], [0], [1], [0, 0, 1, 1], [], []>} : vector<50x50xbf16>, vector<50x64xbf16>, vector<50x64xf32> -> vector<50x64xf32>
    %73 = vector.extract_strided_slice %68 {offsets = [1, 0, 0], sizes = [1, 50, 50], strides = [1, 1, 1]} : vector<3x50x50xbf16> to vector<1x50x50xbf16>
    %74 = vector.shape_cast %73 : vector<1x50x50xbf16> to vector<50x50xbf16>
    %cst_42 = arith.constant dense<0.000000e+00> : vector<50x64xf32>
    %75 = tpu.matmul %74, %69, %cst_42 {dimension_numbers = #tpu.dot_dimension_numbers<[1], [0], [0], [1], [0, 0, 1, 1], [], []>} : vector<50x50xbf16>, vector<50x64xbf16>, vector<50x64xf32> -> vector<50x64xf32>
    %76 = vector.extract_strided_slice %68 {offsets = [2, 0, 0], sizes = [1, 50, 50], strides = [1, 1, 1]} : vector<3x50x50xbf16> to vector<1x50x50xbf16>
    %77 = vector.shape_cast %76 : vector<1x50x50xbf16> to vector<50x50xbf16>
    %cst_43 = arith.constant dense<0.000000e+00> : vector<50x64xf32>
    %78 = tpu.matmul %77, %69, %cst_43 {dimension_numbers = #tpu.dot_dimension_numbers<[1], [0], [0], [1], [0, 0, 1, 1], [], []>} : vector<50x50xbf16>, vector<50x64xbf16>, vector<50x64xf32> -> vector<50x64xf32>
    %79 = tpu.concatenate %72, %75, %78 in 1 : vector<50x64xf32>, vector<50x64xf32>, vector<50x64xf32> -> vector<50x192xf32>
    %80 = arith.truncf %79 : vector<50x192xf32> to vector<50x192xbf16>
    %cst_44 = arith.constant dense<0.000000e+00> : vector<50x64xf32>
    %81 = tpu.matmul %80, %66, %cst_44 {dimension_numbers = #tpu.dot_dimension_numbers<[1], [0], [0], [1], [0, 0, 1, 1], [], []>} : vector<50x192xbf16>, vector<192x64xbf16>, vector<50x64xf32> -> vector<50x64xf32>
    %82 = vector.broadcast %67 : vector<1x64xf32> to vector<50x64xf32>
    %83 = arith.addf %81, %82 : vector<50x64xf32>
    %84 = arith.addf %83, %45 : vector<50x64xf32>
    %cst_45 = arith.constant 0.000000e+00 : f32
    %85 = vector.broadcast %cst_45 : f32 to vector<50x64xf32>
    %86 = arith.maximumf %84, %85 : vector<50x64xf32>
    %c0_46 = arith.constant 0 : index
    %c0_47 = arith.constant 0 : index
    %87 = vector.load %arg11[%c0_46, %c0_47] : memref<192x64xbf16, #tpu.memory_space<vmem>>, vector<192x64xbf16>
    %c0_48 = arith.constant 0 : index
    %c0_49 = arith.constant 0 : index
    %88 = vector.load %arg12[%c0_48, %c0_49] : memref<1x64xf32, #tpu.memory_space<vmem>>, vector<1x64xf32>
    %c0_50 = arith.constant 0 : index
    %c0_51 = arith.constant 0 : index
    %c0_52 = arith.constant 0 : index
    %89 = vector.load %arg13[%c0_50, %c0_51, %c0_52] : memref<3x50x50xbf16, #tpu.memory_space<vmem>>, vector<3x50x50xbf16>
    %90 = arith.truncf %86 : vector<50x64xf32> to vector<50x64xbf16>
    %91 = vector.extract_strided_slice %89 {offsets = [0, 0, 0], sizes = [1, 50, 50], strides = [1, 1, 1]} : vector<3x50x50xbf16> to vector<1x50x50xbf16>
    %92 = vector.shape_cast %91 : vector<1x50x50xbf16> to vector<50x50xbf16>
    %cst_53 = arith.constant dense<0.000000e+00> : vector<50x64xf32>
    %93 = tpu.matmul %92, %90, %cst_53 {dimension_numbers = #tpu.dot_dimension_numbers<[1], [0], [0], [1], [0, 0, 1, 1], [], []>} : vector<50x50xbf16>, vector<50x64xbf16>, vector<50x64xf32> -> vector<50x64xf32>
    %94 = vector.extract_strided_slice %89 {offsets = [1, 0, 0], sizes = [1, 50, 50], strides = [1, 1, 1]} : vector<3x50x50xbf16> to vector<1x50x50xbf16>
    %95 = vector.shape_cast %94 : vector<1x50x50xbf16> to vector<50x50xbf16>
    %cst_54 = arith.constant dense<0.000000e+00> : vector<50x64xf32>
    %96 = tpu.matmul %95, %90, %cst_54 {dimension_numbers = #tpu.dot_dimension_numbers<[1], [0], [0], [1], [0, 0, 1, 1], [], []>} : vector<50x50xbf16>, vector<50x64xbf16>, vector<50x64xf32> -> vector<50x64xf32>
    %97 = vector.extract_strided_slice %89 {offsets = [2, 0, 0], sizes = [1, 50, 50], strides = [1, 1, 1]} : vector<3x50x50xbf16> to vector<1x50x50xbf16>
    %98 = vector.shape_cast %97 : vector<1x50x50xbf16> to vector<50x50xbf16>
    %cst_55 = arith.constant dense<0.000000e+00> : vector<50x64xf32>
    %99 = tpu.matmul %98, %90, %cst_55 {dimension_numbers = #tpu.dot_dimension_numbers<[1], [0], [0], [1], [0, 0, 1, 1], [], []>} : vector<50x50xbf16>, vector<50x64xbf16>, vector<50x64xf32> -> vector<50x64xf32>
    %100 = tpu.concatenate %93, %96, %99 in 1 : vector<50x64xf32>, vector<50x64xf32>, vector<50x64xf32> -> vector<50x192xf32>
    %101 = arith.truncf %100 : vector<50x192xf32> to vector<50x192xbf16>
    %cst_56 = arith.constant dense<0.000000e+00> : vector<50x64xf32>
    %102 = tpu.matmul %101, %87, %cst_56 {dimension_numbers = #tpu.dot_dimension_numbers<[1], [0], [0], [1], [0, 0, 1, 1], [], []>} : vector<50x192xbf16>, vector<192x64xbf16>, vector<50x64xf32> -> vector<50x64xf32>
    %103 = vector.broadcast %88 : vector<1x64xf32> to vector<50x64xf32>
    %104 = arith.addf %102, %103 : vector<50x64xf32>
    %cst_57 = arith.constant 0.000000e+00 : f32
    %105 = vector.broadcast %cst_57 : f32 to vector<50x64xf32>
    %106 = arith.maximumf %104, %105 : vector<50x64xf32>
    %c0_58 = arith.constant 0 : index
    %c0_59 = arith.constant 0 : index
    %107 = vector.load %arg14[%c0_58, %c0_59] : memref<192x64xbf16, #tpu.memory_space<vmem>>, vector<192x64xbf16>
    %c0_60 = arith.constant 0 : index
    %c0_61 = arith.constant 0 : index
    %108 = vector.load %arg15[%c0_60, %c0_61] : memref<1x64xf32, #tpu.memory_space<vmem>>, vector<1x64xf32>
    %c0_62 = arith.constant 0 : index
    %c0_63 = arith.constant 0 : index
    %c0_64 = arith.constant 0 : index
    %109 = vector.load %arg16[%c0_62, %c0_63, %c0_64] : memref<3x50x50xbf16, #tpu.memory_space<vmem>>, vector<3x50x50xbf16>
    %110 = arith.truncf %106 : vector<50x64xf32> to vector<50x64xbf16>
    %111 = vector.extract_strided_slice %109 {offsets = [0, 0, 0], sizes = [1, 50, 50], strides = [1, 1, 1]} : vector<3x50x50xbf16> to vector<1x50x50xbf16>
    %112 = vector.shape_cast %111 : vector<1x50x50xbf16> to vector<50x50xbf16>
    %cst_65 = arith.constant dense<0.000000e+00> : vector<50x64xf32>
    %113 = tpu.matmul %112, %110, %cst_65 {dimension_numbers = #tpu.dot_dimension_numbers<[1], [0], [0], [1], [0, 0, 1, 1], [], []>} : vector<50x50xbf16>, vector<50x64xbf16>, vector<50x64xf32> -> vector<50x64xf32>
    %114 = vector.extract_strided_slice %109 {offsets = [1, 0, 0], sizes = [1, 50, 50], strides = [1, 1, 1]} : vector<3x50x50xbf16> to vector<1x50x50xbf16>
    %115 = vector.shape_cast %114 : vector<1x50x50xbf16> to vector<50x50xbf16>
    %cst_66 = arith.constant dense<0.000000e+00> : vector<50x64xf32>
    %116 = tpu.matmul %115, %110, %cst_66 {dimension_numbers = #tpu.dot_dimension_numbers<[1], [0], [0], [1], [0, 0, 1, 1], [], []>} : vector<50x50xbf16>, vector<50x64xbf16>, vector<50x64xf32> -> vector<50x64xf32>
    %117 = vector.extract_strided_slice %109 {offsets = [2, 0, 0], sizes = [1, 50, 50], strides = [1, 1, 1]} : vector<3x50x50xbf16> to vector<1x50x50xbf16>
    %118 = vector.shape_cast %117 : vector<1x50x50xbf16> to vector<50x50xbf16>
    %cst_67 = arith.constant dense<0.000000e+00> : vector<50x64xf32>
    %119 = tpu.matmul %118, %110, %cst_67 {dimension_numbers = #tpu.dot_dimension_numbers<[1], [0], [0], [1], [0, 0, 1, 1], [], []>} : vector<50x50xbf16>, vector<50x64xbf16>, vector<50x64xf32> -> vector<50x64xf32>
    %120 = tpu.concatenate %113, %116, %119 in 1 : vector<50x64xf32>, vector<50x64xf32>, vector<50x64xf32> -> vector<50x192xf32>
    %121 = arith.truncf %120 : vector<50x192xf32> to vector<50x192xbf16>
    %cst_68 = arith.constant dense<0.000000e+00> : vector<50x64xf32>
    %122 = tpu.matmul %121, %107, %cst_68 {dimension_numbers = #tpu.dot_dimension_numbers<[1], [0], [0], [1], [0, 0, 1, 1], [], []>} : vector<50x192xbf16>, vector<192x64xbf16>, vector<50x64xf32> -> vector<50x64xf32>
    %123 = vector.broadcast %108 : vector<1x64xf32> to vector<50x64xf32>
    %124 = arith.addf %122, %123 : vector<50x64xf32>
    %125 = arith.addf %124, %86 : vector<50x64xf32>
    %cst_69 = arith.constant 0.000000e+00 : f32
    %126 = vector.broadcast %cst_69 : f32 to vector<50x64xf32>
    %127 = arith.maximumf %125, %126 : vector<50x64xf32>
    %c0_70 = arith.constant 0 : index
    %c0_71 = arith.constant 0 : index
    %128 = vector.load %arg17[%c0_70, %c0_71] : memref<192x128xbf16, #tpu.memory_space<vmem>>, vector<192x128xbf16>
    %c0_72 = arith.constant 0 : index
    %c0_73 = arith.constant 0 : index
    %129 = vector.load %arg18[%c0_72, %c0_73] : memref<1x128xf32, #tpu.memory_space<vmem>>, vector<1x128xf32>
    %c0_74 = arith.constant 0 : index
    %c0_75 = arith.constant 0 : index
    %c0_76 = arith.constant 0 : index
    %130 = vector.load %arg19[%c0_74, %c0_75, %c0_76] : memref<3x26x50xbf16, #tpu.memory_space<vmem>>, vector<3x26x50xbf16>
    %131 = arith.truncf %127 : vector<50x64xf32> to vector<50x64xbf16>
    %132 = vector.extract_strided_slice %130 {offsets = [0, 0, 0], sizes = [1, 26, 50], strides = [1, 1, 1]} : vector<3x26x50xbf16> to vector<1x26x50xbf16>
    %133 = vector.shape_cast %132 : vector<1x26x50xbf16> to vector<26x50xbf16>
    %cst_77 = arith.constant dense<0.000000e+00> : vector<26x64xf32>
    %134 = tpu.matmul %133, %131, %cst_77 {dimension_numbers = #tpu.dot_dimension_numbers<[1], [0], [0], [1], [0, 0, 1, 1], [], []>} : vector<26x50xbf16>, vector<50x64xbf16>, vector<26x64xf32> -> vector<26x64xf32>
    %135 = vector.extract_strided_slice %130 {offsets = [1, 0, 0], sizes = [1, 26, 50], strides = [1, 1, 1]} : vector<3x26x50xbf16> to vector<1x26x50xbf16>
    %136 = vector.shape_cast %135 : vector<1x26x50xbf16> to vector<26x50xbf16>
    %cst_78 = arith.constant dense<0.000000e+00> : vector<26x64xf32>
    %137 = tpu.matmul %136, %131, %cst_78 {dimension_numbers = #tpu.dot_dimension_numbers<[1], [0], [0], [1], [0, 0, 1, 1], [], []>} : vector<26x50xbf16>, vector<50x64xbf16>, vector<26x64xf32> -> vector<26x64xf32>
    %138 = vector.extract_strided_slice %130 {offsets = [2, 0, 0], sizes = [1, 26, 50], strides = [1, 1, 1]} : vector<3x26x50xbf16> to vector<1x26x50xbf16>
    %139 = vector.shape_cast %138 : vector<1x26x50xbf16> to vector<26x50xbf16>
    %cst_79 = arith.constant dense<0.000000e+00> : vector<26x64xf32>
    %140 = tpu.matmul %139, %131, %cst_79 {dimension_numbers = #tpu.dot_dimension_numbers<[1], [0], [0], [1], [0, 0, 1, 1], [], []>} : vector<26x50xbf16>, vector<50x64xbf16>, vector<26x64xf32> -> vector<26x64xf32>
    %141 = tpu.concatenate %134, %137, %140 in 1 : vector<26x64xf32>, vector<26x64xf32>, vector<26x64xf32> -> vector<26x192xf32>
    %142 = arith.truncf %141 : vector<26x192xf32> to vector<26x192xbf16>
    %cst_80 = arith.constant dense<0.000000e+00> : vector<26x128xf32>
    %143 = tpu.matmul %142, %128, %cst_80 {dimension_numbers = #tpu.dot_dimension_numbers<[1], [0], [0], [1], [0, 0, 1, 1], [], []>} : vector<26x192xbf16>, vector<192x128xbf16>, vector<26x128xf32> -> vector<26x128xf32>
    %144 = vector.broadcast %129 : vector<1x128xf32> to vector<26x128xf32>
    %145 = arith.addf %143, %144 : vector<26x128xf32>
    %cst_81 = arith.constant 0.000000e+00 : f32
    %146 = vector.broadcast %cst_81 : f32 to vector<26x128xf32>
    %147 = arith.maximumf %145, %146 : vector<26x128xf32>
    %c0_82 = arith.constant 0 : index
    %c0_83 = arith.constant 0 : index
    %148 = vector.load %arg20[%c0_82, %c0_83] : memref<64x128xbf16, #tpu.memory_space<vmem>>, vector<64x128xbf16>
    %c0_84 = arith.constant 0 : index
    %c0_85 = arith.constant 0 : index
    %149 = vector.load %arg21[%c0_84, %c0_85] : memref<1x128xf32, #tpu.memory_space<vmem>>, vector<1x128xf32>
    %c0_86 = arith.constant 0 : index
    %c0_87 = arith.constant 0 : index
    %c0_88 = arith.constant 0 : index
    %150 = vector.load %arg22[%c0_86, %c0_87, %c0_88] : memref<1x26x50xbf16, #tpu.memory_space<vmem>>, vector<1x26x50xbf16>
    %151 = arith.truncf %127 : vector<50x64xf32> to vector<50x64xbf16>
    %152 = vector.shape_cast %150 : vector<1x26x50xbf16> to vector<26x50xbf16>
    %cst_89 = arith.constant dense<0.000000e+00> : vector<26x64xf32>
    %153 = tpu.matmul %152, %151, %cst_89 {dimension_numbers = #tpu.dot_dimension_numbers<[1], [0], [0], [1], [0, 0, 1, 1], [], []>} : vector<26x50xbf16>, vector<50x64xbf16>, vector<26x64xf32> -> vector<26x64xf32>
    %154 = arith.truncf %153 : vector<26x64xf32> to vector<26x64xbf16>
    %cst_90 = arith.constant dense<0.000000e+00> : vector<26x128xf32>
    %155 = tpu.matmul %154, %148, %cst_90 {dimension_numbers = #tpu.dot_dimension_numbers<[1], [0], [0], [1], [0, 0, 1, 1], [], []>} : vector<26x64xbf16>, vector<64x128xbf16>, vector<26x128xf32> -> vector<26x128xf32>
    %156 = vector.broadcast %149 : vector<1x128xf32> to vector<26x128xf32>
    %157 = arith.addf %155, %156 : vector<26x128xf32>
    %c0_91 = arith.constant 0 : index
    %c0_92 = arith.constant 0 : index
    %158 = vector.load %arg23[%c0_91, %c0_92] : memref<384x128xbf16, #tpu.memory_space<vmem>>, vector<384x128xbf16>
    %c0_93 = arith.constant 0 : index
    %c0_94 = arith.constant 0 : index
    %159 = vector.load %arg24[%c0_93, %c0_94] : memref<1x128xf32, #tpu.memory_space<vmem>>, vector<1x128xf32>
    %c0_95 = arith.constant 0 : index
    %c0_96 = arith.constant 0 : index
    %c0_97 = arith.constant 0 : index
    %160 = vector.load %arg25[%c0_95, %c0_96, %c0_97] : memref<3x26x26xbf16, #tpu.memory_space<vmem>>, vector<3x26x26xbf16>
    %161 = arith.truncf %147 : vector<26x128xf32> to vector<26x128xbf16>
    %162 = vector.extract_strided_slice %160 {offsets = [0, 0, 0], sizes = [1, 26, 26], strides = [1, 1, 1]} : vector<3x26x26xbf16> to vector<1x26x26xbf16>
    %163 = vector.shape_cast %162 : vector<1x26x26xbf16> to vector<26x26xbf16>
    %cst_98 = arith.constant dense<0.000000e+00> : vector<26x128xf32>
    %164 = tpu.matmul %163, %161, %cst_98 {dimension_numbers = #tpu.dot_dimension_numbers<[1], [0], [0], [1], [0, 0, 1, 1], [], []>} : vector<26x26xbf16>, vector<26x128xbf16>, vector<26x128xf32> -> vector<26x128xf32>
    %165 = vector.extract_strided_slice %160 {offsets = [1, 0, 0], sizes = [1, 26, 26], strides = [1, 1, 1]} : vector<3x26x26xbf16> to vector<1x26x26xbf16>
    %166 = vector.shape_cast %165 : vector<1x26x26xbf16> to vector<26x26xbf16>
    %cst_99 = arith.constant dense<0.000000e+00> : vector<26x128xf32>
    %167 = tpu.matmul %166, %161, %cst_99 {dimension_numbers = #tpu.dot_dimension_numbers<[1], [0], [0], [1], [0, 0, 1, 1], [], []>} : vector<26x26xbf16>, vector<26x128xbf16>, vector<26x128xf32> -> vector<26x128xf32>
    %168 = vector.extract_strided_slice %160 {offsets = [2, 0, 0], sizes = [1, 26, 26], strides = [1, 1, 1]} : vector<3x26x26xbf16> to vector<1x26x26xbf16>
    %169 = vector.shape_cast %168 : vector<1x26x26xbf16> to vector<26x26xbf16>
    %cst_100 = arith.constant dense<0.000000e+00> : vector<26x128xf32>
    %170 = tpu.matmul %169, %161, %cst_100 {dimension_numbers = #tpu.dot_dimension_numbers<[1], [0], [0], [1], [0, 0, 1, 1], [], []>} : vector<26x26xbf16>, vector<26x128xbf16>, vector<26x128xf32> -> vector<26x128xf32>
    %171 = tpu.concatenate %164, %167, %170 in 1 : vector<26x128xf32>, vector<26x128xf32>, vector<26x128xf32> -> vector<26x384xf32>
    %172 = arith.truncf %171 : vector<26x384xf32> to vector<26x384xbf16>
    %cst_101 = arith.constant dense<0.000000e+00> : vector<26x128xf32>
    %173 = tpu.matmul %172, %158, %cst_101 {dimension_numbers = #tpu.dot_dimension_numbers<[1], [0], [0], [1], [0, 0, 1, 1], [], []>} : vector<26x384xbf16>, vector<384x128xbf16>, vector<26x128xf32> -> vector<26x128xf32>
    %174 = vector.broadcast %159 : vector<1x128xf32> to vector<26x128xf32>
    %175 = arith.addf %173, %174 : vector<26x128xf32>
    %176 = arith.addf %175, %157 : vector<26x128xf32>
    %cst_102 = arith.constant 0.000000e+00 : f32
    %177 = vector.broadcast %cst_102 : f32 to vector<26x128xf32>
    %178 = arith.maximumf %176, %177 : vector<26x128xf32>
    %c0_103 = arith.constant 0 : index
    %c0_104 = arith.constant 0 : index
    %179 = vector.load %arg26[%c0_103, %c0_104] : memref<384x128xbf16, #tpu.memory_space<vmem>>, vector<384x128xbf16>
    %c0_105 = arith.constant 0 : index
    %c0_106 = arith.constant 0 : index
    %180 = vector.load %arg27[%c0_105, %c0_106] : memref<1x128xf32, #tpu.memory_space<vmem>>, vector<1x128xf32>
    %c0_107 = arith.constant 0 : index
    %c0_108 = arith.constant 0 : index
    %c0_109 = arith.constant 0 : index
    %181 = vector.load %arg28[%c0_107, %c0_108, %c0_109] : memref<3x26x26xbf16, #tpu.memory_space<vmem>>, vector<3x26x26xbf16>
    %182 = arith.truncf %178 : vector<26x128xf32> to vector<26x128xbf16>
    %183 = vector.extract_strided_slice %181 {offsets = [0, 0, 0], sizes = [1, 26, 26], strides = [1, 1, 1]} : vector<3x26x26xbf16> to vector<1x26x26xbf16>
    %184 = vector.shape_cast %183 : vector<1x26x26xbf16> to vector<26x26xbf16>
    %cst_110 = arith.constant dense<0.000000e+00> : vector<26x128xf32>
    %185 = tpu.matmul %184, %182, %cst_110 {dimension_numbers = #tpu.dot_dimension_numbers<[1], [0], [0], [1], [0, 0, 1, 1], [], []>} : vector<26x26xbf16>, vector<26x128xbf16>, vector<26x128xf32> -> vector<26x128xf32>
    %186 = vector.extract_strided_slice %181 {offsets = [1, 0, 0], sizes = [1, 26, 26], strides = [1, 1, 1]} : vector<3x26x26xbf16> to vector<1x26x26xbf16>
    %187 = vector.shape_cast %186 : vector<1x26x26xbf16> to vector<26x26xbf16>
    %cst_111 = arith.constant dense<0.000000e+00> : vector<26x128xf32>
    %188 = tpu.matmul %187, %182, %cst_111 {dimension_numbers = #tpu.dot_dimension_numbers<[1], [0], [0], [1], [0, 0, 1, 1], [], []>} : vector<26x26xbf16>, vector<26x128xbf16>, vector<26x128xf32> -> vector<26x128xf32>
    %189 = vector.extract_strided_slice %181 {offsets = [2, 0, 0], sizes = [1, 26, 26], strides = [1, 1, 1]} : vector<3x26x26xbf16> to vector<1x26x26xbf16>
    %190 = vector.shape_cast %189 : vector<1x26x26xbf16> to vector<26x26xbf16>
    %cst_112 = arith.constant dense<0.000000e+00> : vector<26x128xf32>
    %191 = tpu.matmul %190, %182, %cst_112 {dimension_numbers = #tpu.dot_dimension_numbers<[1], [0], [0], [1], [0, 0, 1, 1], [], []>} : vector<26x26xbf16>, vector<26x128xbf16>, vector<26x128xf32> -> vector<26x128xf32>
    %192 = tpu.concatenate %185, %188, %191 in 1 : vector<26x128xf32>, vector<26x128xf32>, vector<26x128xf32> -> vector<26x384xf32>
    %193 = arith.truncf %192 : vector<26x384xf32> to vector<26x384xbf16>
    %cst_113 = arith.constant dense<0.000000e+00> : vector<26x128xf32>
    %194 = tpu.matmul %193, %179, %cst_113 {dimension_numbers = #tpu.dot_dimension_numbers<[1], [0], [0], [1], [0, 0, 1, 1], [], []>} : vector<26x384xbf16>, vector<384x128xbf16>, vector<26x128xf32> -> vector<26x128xf32>
    %195 = vector.broadcast %180 : vector<1x128xf32> to vector<26x128xf32>
    %196 = arith.addf %194, %195 : vector<26x128xf32>
    %cst_114 = arith.constant 0.000000e+00 : f32
    %197 = vector.broadcast %cst_114 : f32 to vector<26x128xf32>
    %198 = arith.maximumf %196, %197 : vector<26x128xf32>
    %c0_115 = arith.constant 0 : index
    %c0_116 = arith.constant 0 : index
    %199 = vector.load %arg29[%c0_115, %c0_116] : memref<384x128xbf16, #tpu.memory_space<vmem>>, vector<384x128xbf16>
    %c0_117 = arith.constant 0 : index
    %c0_118 = arith.constant 0 : index
    %200 = vector.load %arg30[%c0_117, %c0_118] : memref<1x128xf32, #tpu.memory_space<vmem>>, vector<1x128xf32>
    %c0_119 = arith.constant 0 : index
    %c0_120 = arith.constant 0 : index
    %c0_121 = arith.constant 0 : index
    %201 = vector.load %arg31[%c0_119, %c0_120, %c0_121] : memref<3x26x26xbf16, #tpu.memory_space<vmem>>, vector<3x26x26xbf16>
    %202 = arith.truncf %198 : vector<26x128xf32> to vector<26x128xbf16>
    %203 = vector.extract_strided_slice %201 {offsets = [0, 0, 0], sizes = [1, 26, 26], strides = [1, 1, 1]} : vector<3x26x26xbf16> to vector<1x26x26xbf16>
    %204 = vector.shape_cast %203 : vector<1x26x26xbf16> to vector<26x26xbf16>
    %cst_122 = arith.constant dense<0.000000e+00> : vector<26x128xf32>
    %205 = tpu.matmul %204, %202, %cst_122 {dimension_numbers = #tpu.dot_dimension_numbers<[1], [0], [0], [1], [0, 0, 1, 1], [], []>} : vector<26x26xbf16>, vector<26x128xbf16>, vector<26x128xf32> -> vector<26x128xf32>
    %206 = vector.extract_strided_slice %201 {offsets = [1, 0, 0], sizes = [1, 26, 26], strides = [1, 1, 1]} : vector<3x26x26xbf16> to vector<1x26x26xbf16>
    %207 = vector.shape_cast %206 : vector<1x26x26xbf16> to vector<26x26xbf16>
    %cst_123 = arith.constant dense<0.000000e+00> : vector<26x128xf32>
    %208 = tpu.matmul %207, %202, %cst_123 {dimension_numbers = #tpu.dot_dimension_numbers<[1], [0], [0], [1], [0, 0, 1, 1], [], []>} : vector<26x26xbf16>, vector<26x128xbf16>, vector<26x128xf32> -> vector<26x128xf32>
    %209 = vector.extract_strided_slice %201 {offsets = [2, 0, 0], sizes = [1, 26, 26], strides = [1, 1, 1]} : vector<3x26x26xbf16> to vector<1x26x26xbf16>
    %210 = vector.shape_cast %209 : vector<1x26x26xbf16> to vector<26x26xbf16>
    %cst_124 = arith.constant dense<0.000000e+00> : vector<26x128xf32>
    %211 = tpu.matmul %210, %202, %cst_124 {dimension_numbers = #tpu.dot_dimension_numbers<[1], [0], [0], [1], [0, 0, 1, 1], [], []>} : vector<26x26xbf16>, vector<26x128xbf16>, vector<26x128xf32> -> vector<26x128xf32>
    %212 = tpu.concatenate %205, %208, %211 in 1 : vector<26x128xf32>, vector<26x128xf32>, vector<26x128xf32> -> vector<26x384xf32>
    %213 = arith.truncf %212 : vector<26x384xf32> to vector<26x384xbf16>
    %cst_125 = arith.constant dense<0.000000e+00> : vector<26x128xf32>
    %214 = tpu.matmul %213, %199, %cst_125 {dimension_numbers = #tpu.dot_dimension_numbers<[1], [0], [0], [1], [0, 0, 1, 1], [], []>} : vector<26x384xbf16>, vector<384x128xbf16>, vector<26x128xf32> -> vector<26x128xf32>
    %215 = vector.broadcast %200 : vector<1x128xf32> to vector<26x128xf32>
    %216 = arith.addf %214, %215 : vector<26x128xf32>
    %217 = arith.addf %216, %178 : vector<26x128xf32>
    %cst_126 = arith.constant 0.000000e+00 : f32
    %218 = vector.broadcast %cst_126 : f32 to vector<26x128xf32>
    %219 = arith.maximumf %217, %218 : vector<26x128xf32>
    %c0_127 = arith.constant 0 : index
    %c0_128 = arith.constant 0 : index
    %220 = vector.load %arg32[%c0_127, %c0_128] : memref<384x256xbf16, #tpu.memory_space<vmem>>, vector<384x256xbf16>
    %c0_129 = arith.constant 0 : index
    %c0_130 = arith.constant 0 : index
    %221 = vector.load %arg33[%c0_129, %c0_130] : memref<1x256xf32, #tpu.memory_space<vmem>>, vector<1x256xf32>
    %c0_131 = arith.constant 0 : index
    %c0_132 = arith.constant 0 : index
    %c0_133 = arith.constant 0 : index
    %222 = vector.load %arg34[%c0_131, %c0_132, %c0_133] : memref<3x14x26xbf16, #tpu.memory_space<vmem>>, vector<3x14x26xbf16>
    %223 = arith.truncf %219 : vector<26x128xf32> to vector<26x128xbf16>
    %224 = vector.extract_strided_slice %222 {offsets = [0, 0, 0], sizes = [1, 14, 26], strides = [1, 1, 1]} : vector<3x14x26xbf16> to vector<1x14x26xbf16>
    %225 = vector.shape_cast %224 : vector<1x14x26xbf16> to vector<14x26xbf16>
    %cst_134 = arith.constant dense<0.000000e+00> : vector<14x128xf32>
    %226 = tpu.matmul %225, %223, %cst_134 {dimension_numbers = #tpu.dot_dimension_numbers<[1], [0], [0], [1], [0, 0, 1, 1], [], []>} : vector<14x26xbf16>, vector<26x128xbf16>, vector<14x128xf32> -> vector<14x128xf32>
    %227 = vector.extract_strided_slice %222 {offsets = [1, 0, 0], sizes = [1, 14, 26], strides = [1, 1, 1]} : vector<3x14x26xbf16> to vector<1x14x26xbf16>
    %228 = vector.shape_cast %227 : vector<1x14x26xbf16> to vector<14x26xbf16>
    %cst_135 = arith.constant dense<0.000000e+00> : vector<14x128xf32>
    %229 = tpu.matmul %228, %223, %cst_135 {dimension_numbers = #tpu.dot_dimension_numbers<[1], [0], [0], [1], [0, 0, 1, 1], [], []>} : vector<14x26xbf16>, vector<26x128xbf16>, vector<14x128xf32> -> vector<14x128xf32>
    %230 = vector.extract_strided_slice %222 {offsets = [2, 0, 0], sizes = [1, 14, 26], strides = [1, 1, 1]} : vector<3x14x26xbf16> to vector<1x14x26xbf16>
    %231 = vector.shape_cast %230 : vector<1x14x26xbf16> to vector<14x26xbf16>
    %cst_136 = arith.constant dense<0.000000e+00> : vector<14x128xf32>
    %232 = tpu.matmul %231, %223, %cst_136 {dimension_numbers = #tpu.dot_dimension_numbers<[1], [0], [0], [1], [0, 0, 1, 1], [], []>} : vector<14x26xbf16>, vector<26x128xbf16>, vector<14x128xf32> -> vector<14x128xf32>
    %233 = tpu.concatenate %226, %229, %232 in 1 : vector<14x128xf32>, vector<14x128xf32>, vector<14x128xf32> -> vector<14x384xf32>
    %234 = arith.truncf %233 : vector<14x384xf32> to vector<14x384xbf16>
    %cst_137 = arith.constant dense<0.000000e+00> : vector<14x256xf32>
    %235 = tpu.matmul %234, %220, %cst_137 {dimension_numbers = #tpu.dot_dimension_numbers<[1], [0], [0], [1], [0, 0, 1, 1], [], []>} : vector<14x384xbf16>, vector<384x256xbf16>, vector<14x256xf32> -> vector<14x256xf32>
    %236 = vector.broadcast %221 : vector<1x256xf32> to vector<14x256xf32>
    %237 = arith.addf %235, %236 : vector<14x256xf32>
    %cst_138 = arith.constant 0.000000e+00 : f32
    %238 = vector.broadcast %cst_138 : f32 to vector<14x256xf32>
    %239 = arith.maximumf %237, %238 : vector<14x256xf32>
    %c0_139 = arith.constant 0 : index
    %c0_140 = arith.constant 0 : index
    %240 = vector.load %arg35[%c0_139, %c0_140] : memref<128x256xbf16, #tpu.memory_space<vmem>>, vector<128x256xbf16>
    %c0_141 = arith.constant 0 : index
    %c0_142 = arith.constant 0 : index
    %241 = vector.load %arg36[%c0_141, %c0_142] : memref<1x256xf32, #tpu.memory_space<vmem>>, vector<1x256xf32>
    %c0_143 = arith.constant 0 : index
    %c0_144 = arith.constant 0 : index
    %c0_145 = arith.constant 0 : index
    %242 = vector.load %arg37[%c0_143, %c0_144, %c0_145] : memref<1x14x26xbf16, #tpu.memory_space<vmem>>, vector<1x14x26xbf16>
    %243 = arith.truncf %219 : vector<26x128xf32> to vector<26x128xbf16>
    %244 = vector.shape_cast %242 : vector<1x14x26xbf16> to vector<14x26xbf16>
    %cst_146 = arith.constant dense<0.000000e+00> : vector<14x128xf32>
    %245 = tpu.matmul %244, %243, %cst_146 {dimension_numbers = #tpu.dot_dimension_numbers<[1], [0], [0], [1], [0, 0, 1, 1], [], []>} : vector<14x26xbf16>, vector<26x128xbf16>, vector<14x128xf32> -> vector<14x128xf32>
    %246 = arith.truncf %245 : vector<14x128xf32> to vector<14x128xbf16>
    %cst_147 = arith.constant dense<0.000000e+00> : vector<14x256xf32>
    %247 = tpu.matmul %246, %240, %cst_147 {dimension_numbers = #tpu.dot_dimension_numbers<[1], [0], [0], [1], [0, 0, 1, 1], [], []>} : vector<14x128xbf16>, vector<128x256xbf16>, vector<14x256xf32> -> vector<14x256xf32>
    %248 = vector.broadcast %241 : vector<1x256xf32> to vector<14x256xf32>
    %249 = arith.addf %247, %248 : vector<14x256xf32>
    %c0_148 = arith.constant 0 : index
    %c0_149 = arith.constant 0 : index
    %250 = vector.load %arg38[%c0_148, %c0_149] : memref<768x256xbf16, #tpu.memory_space<vmem>>, vector<768x256xbf16>
    %c0_150 = arith.constant 0 : index
    %c0_151 = arith.constant 0 : index
    %251 = vector.load %arg39[%c0_150, %c0_151] : memref<1x256xf32, #tpu.memory_space<vmem>>, vector<1x256xf32>
    %c0_152 = arith.constant 0 : index
    %c0_153 = arith.constant 0 : index
    %c0_154 = arith.constant 0 : index
    %252 = vector.load %arg40[%c0_152, %c0_153, %c0_154] : memref<3x14x14xbf16, #tpu.memory_space<vmem>>, vector<3x14x14xbf16>
    %253 = arith.truncf %239 : vector<14x256xf32> to vector<14x256xbf16>
    %254 = vector.extract_strided_slice %252 {offsets = [0, 0, 0], sizes = [1, 14, 14], strides = [1, 1, 1]} : vector<3x14x14xbf16> to vector<1x14x14xbf16>
    %255 = vector.shape_cast %254 : vector<1x14x14xbf16> to vector<14x14xbf16>
    %cst_155 = arith.constant dense<0.000000e+00> : vector<14x256xf32>
    %256 = tpu.matmul %255, %253, %cst_155 {dimension_numbers = #tpu.dot_dimension_numbers<[1], [0], [0], [1], [0, 0, 1, 1], [], []>} : vector<14x14xbf16>, vector<14x256xbf16>, vector<14x256xf32> -> vector<14x256xf32>
    %257 = vector.extract_strided_slice %252 {offsets = [1, 0, 0], sizes = [1, 14, 14], strides = [1, 1, 1]} : vector<3x14x14xbf16> to vector<1x14x14xbf16>
    %258 = vector.shape_cast %257 : vector<1x14x14xbf16> to vector<14x14xbf16>
    %cst_156 = arith.constant dense<0.000000e+00> : vector<14x256xf32>
    %259 = tpu.matmul %258, %253, %cst_156 {dimension_numbers = #tpu.dot_dimension_numbers<[1], [0], [0], [1], [0, 0, 1, 1], [], []>} : vector<14x14xbf16>, vector<14x256xbf16>, vector<14x256xf32> -> vector<14x256xf32>
    %260 = vector.extract_strided_slice %252 {offsets = [2, 0, 0], sizes = [1, 14, 14], strides = [1, 1, 1]} : vector<3x14x14xbf16> to vector<1x14x14xbf16>
    %261 = vector.shape_cast %260 : vector<1x14x14xbf16> to vector<14x14xbf16>
    %cst_157 = arith.constant dense<0.000000e+00> : vector<14x256xf32>
    %262 = tpu.matmul %261, %253, %cst_157 {dimension_numbers = #tpu.dot_dimension_numbers<[1], [0], [0], [1], [0, 0, 1, 1], [], []>} : vector<14x14xbf16>, vector<14x256xbf16>, vector<14x256xf32> -> vector<14x256xf32>
    %263 = tpu.concatenate %256, %259, %262 in 1 : vector<14x256xf32>, vector<14x256xf32>, vector<14x256xf32> -> vector<14x768xf32>
    %264 = arith.truncf %263 : vector<14x768xf32> to vector<14x768xbf16>
    %cst_158 = arith.constant dense<0.000000e+00> : vector<14x256xf32>
    %265 = tpu.matmul %264, %250, %cst_158 {dimension_numbers = #tpu.dot_dimension_numbers<[1], [0], [0], [1], [0, 0, 1, 1], [], []>} : vector<14x768xbf16>, vector<768x256xbf16>, vector<14x256xf32> -> vector<14x256xf32>
    %266 = vector.broadcast %251 : vector<1x256xf32> to vector<14x256xf32>
    %267 = arith.addf %265, %266 : vector<14x256xf32>
    %268 = arith.addf %267, %249 : vector<14x256xf32>
    %cst_159 = arith.constant 0.000000e+00 : f32
    %269 = vector.broadcast %cst_159 : f32 to vector<14x256xf32>
    %270 = arith.maximumf %268, %269 : vector<14x256xf32>
    %c0_160 = arith.constant 0 : index
    %c0_161 = arith.constant 0 : index
    %271 = vector.load %arg41[%c0_160, %c0_161] : memref<768x256xbf16, #tpu.memory_space<vmem>>, vector<768x256xbf16>
    %c0_162 = arith.constant 0 : index
    %c0_163 = arith.constant 0 : index
    %272 = vector.load %arg42[%c0_162, %c0_163] : memref<1x256xf32, #tpu.memory_space<vmem>>, vector<1x256xf32>
    %c0_164 = arith.constant 0 : index
    %c0_165 = arith.constant 0 : index
    %c0_166 = arith.constant 0 : index
    %273 = vector.load %arg43[%c0_164, %c0_165, %c0_166] : memref<3x14x14xbf16, #tpu.memory_space<vmem>>, vector<3x14x14xbf16>
    %274 = arith.truncf %270 : vector<14x256xf32> to vector<14x256xbf16>
    %275 = vector.extract_strided_slice %273 {offsets = [0, 0, 0], sizes = [1, 14, 14], strides = [1, 1, 1]} : vector<3x14x14xbf16> to vector<1x14x14xbf16>
    %276 = vector.shape_cast %275 : vector<1x14x14xbf16> to vector<14x14xbf16>
    %cst_167 = arith.constant dense<0.000000e+00> : vector<14x256xf32>
    %277 = tpu.matmul %276, %274, %cst_167 {dimension_numbers = #tpu.dot_dimension_numbers<[1], [0], [0], [1], [0, 0, 1, 1], [], []>} : vector<14x14xbf16>, vector<14x256xbf16>, vector<14x256xf32> -> vector<14x256xf32>
    %278 = vector.extract_strided_slice %273 {offsets = [1, 0, 0], sizes = [1, 14, 14], strides = [1, 1, 1]} : vector<3x14x14xbf16> to vector<1x14x14xbf16>
    %279 = vector.shape_cast %278 : vector<1x14x14xbf16> to vector<14x14xbf16>
    %cst_168 = arith.constant dense<0.000000e+00> : vector<14x256xf32>
    %280 = tpu.matmul %279, %274, %cst_168 {dimension_numbers = #tpu.dot_dimension_numbers<[1], [0], [0], [1], [0, 0, 1, 1], [], []>} : vector<14x14xbf16>, vector<14x256xbf16>, vector<14x256xf32> -> vector<14x256xf32>
    %281 = vector.extract_strided_slice %273 {offsets = [2, 0, 0], sizes = [1, 14, 14], strides = [1, 1, 1]} : vector<3x14x14xbf16> to vector<1x14x14xbf16>
    %282 = vector.shape_cast %281 : vector<1x14x14xbf16> to vector<14x14xbf16>
    %cst_169 = arith.constant dense<0.000000e+00> : vector<14x256xf32>
    %283 = tpu.matmul %282, %274, %cst_169 {dimension_numbers = #tpu.dot_dimension_numbers<[1], [0], [0], [1], [0, 0, 1, 1], [], []>} : vector<14x14xbf16>, vector<14x256xbf16>, vector<14x256xf32> -> vector<14x256xf32>
    %284 = tpu.concatenate %277, %280, %283 in 1 : vector<14x256xf32>, vector<14x256xf32>, vector<14x256xf32> -> vector<14x768xf32>
    %285 = arith.truncf %284 : vector<14x768xf32> to vector<14x768xbf16>
    %cst_170 = arith.constant dense<0.000000e+00> : vector<14x256xf32>
    %286 = tpu.matmul %285, %271, %cst_170 {dimension_numbers = #tpu.dot_dimension_numbers<[1], [0], [0], [1], [0, 0, 1, 1], [], []>} : vector<14x768xbf16>, vector<768x256xbf16>, vector<14x256xf32> -> vector<14x256xf32>
    %287 = vector.broadcast %272 : vector<1x256xf32> to vector<14x256xf32>
    %288 = arith.addf %286, %287 : vector<14x256xf32>
    %cst_171 = arith.constant 0.000000e+00 : f32
    %289 = vector.broadcast %cst_171 : f32 to vector<14x256xf32>
    %290 = arith.maximumf %288, %289 : vector<14x256xf32>
    %c0_172 = arith.constant 0 : index
    %c0_173 = arith.constant 0 : index
    %291 = vector.load %arg44[%c0_172, %c0_173] : memref<768x256xbf16, #tpu.memory_space<vmem>>, vector<768x256xbf16>
    %c0_174 = arith.constant 0 : index
    %c0_175 = arith.constant 0 : index
    %292 = vector.load %arg45[%c0_174, %c0_175] : memref<1x256xf32, #tpu.memory_space<vmem>>, vector<1x256xf32>
    %c0_176 = arith.constant 0 : index
    %c0_177 = arith.constant 0 : index
    %c0_178 = arith.constant 0 : index
    %293 = vector.load %arg46[%c0_176, %c0_177, %c0_178] : memref<3x14x14xbf16, #tpu.memory_space<vmem>>, vector<3x14x14xbf16>
    %294 = arith.truncf %290 : vector<14x256xf32> to vector<14x256xbf16>
    %295 = vector.extract_strided_slice %293 {offsets = [0, 0, 0], sizes = [1, 14, 14], strides = [1, 1, 1]} : vector<3x14x14xbf16> to vector<1x14x14xbf16>
    %296 = vector.shape_cast %295 : vector<1x14x14xbf16> to vector<14x14xbf16>
    %cst_179 = arith.constant dense<0.000000e+00> : vector<14x256xf32>
    %297 = tpu.matmul %296, %294, %cst_179 {dimension_numbers = #tpu.dot_dimension_numbers<[1], [0], [0], [1], [0, 0, 1, 1], [], []>} : vector<14x14xbf16>, vector<14x256xbf16>, vector<14x256xf32> -> vector<14x256xf32>
    %298 = vector.extract_strided_slice %293 {offsets = [1, 0, 0], sizes = [1, 14, 14], strides = [1, 1, 1]} : vector<3x14x14xbf16> to vector<1x14x14xbf16>
    %299 = vector.shape_cast %298 : vector<1x14x14xbf16> to vector<14x14xbf16>
    %cst_180 = arith.constant dense<0.000000e+00> : vector<14x256xf32>
    %300 = tpu.matmul %299, %294, %cst_180 {dimension_numbers = #tpu.dot_dimension_numbers<[1], [0], [0], [1], [0, 0, 1, 1], [], []>} : vector<14x14xbf16>, vector<14x256xbf16>, vector<14x256xf32> -> vector<14x256xf32>
    %301 = vector.extract_strided_slice %293 {offsets = [2, 0, 0], sizes = [1, 14, 14], strides = [1, 1, 1]} : vector<3x14x14xbf16> to vector<1x14x14xbf16>
    %302 = vector.shape_cast %301 : vector<1x14x14xbf16> to vector<14x14xbf16>
    %cst_181 = arith.constant dense<0.000000e+00> : vector<14x256xf32>
    %303 = tpu.matmul %302, %294, %cst_181 {dimension_numbers = #tpu.dot_dimension_numbers<[1], [0], [0], [1], [0, 0, 1, 1], [], []>} : vector<14x14xbf16>, vector<14x256xbf16>, vector<14x256xf32> -> vector<14x256xf32>
    %304 = tpu.concatenate %297, %300, %303 in 1 : vector<14x256xf32>, vector<14x256xf32>, vector<14x256xf32> -> vector<14x768xf32>
    %305 = arith.truncf %304 : vector<14x768xf32> to vector<14x768xbf16>
    %cst_182 = arith.constant dense<0.000000e+00> : vector<14x256xf32>
    %306 = tpu.matmul %305, %291, %cst_182 {dimension_numbers = #tpu.dot_dimension_numbers<[1], [0], [0], [1], [0, 0, 1, 1], [], []>} : vector<14x768xbf16>, vector<768x256xbf16>, vector<14x256xf32> -> vector<14x256xf32>
    %307 = vector.broadcast %292 : vector<1x256xf32> to vector<14x256xf32>
    %308 = arith.addf %306, %307 : vector<14x256xf32>
    %309 = arith.addf %308, %270 : vector<14x256xf32>
    %cst_183 = arith.constant 0.000000e+00 : f32
    %310 = vector.broadcast %cst_183 : f32 to vector<14x256xf32>
    %311 = arith.maximumf %309, %310 : vector<14x256xf32>
    %c0_184 = arith.constant 0 : index
    %c0_185 = arith.constant 0 : index
    %312 = vector.load %arg47[%c0_184, %c0_185] : memref<2x14xf32, #tpu.memory_space<vmem>>, vector<2x14xf32>
    %c0_186 = arith.constant 0 : index
    %c0_187 = arith.constant 0 : index
    %313 = vector.load %arg48[%c0_186, %c0_187] : memref<256x2xf32, #tpu.memory_space<vmem>>, vector<256x2xf32>
    %c0_188 = arith.constant 0 : index
    %c0_189 = arith.constant 0 : index
    %314 = vector.load %arg49[%c0_188, %c0_189] : memref<1x2xf32, #tpu.memory_space<vmem>>, vector<1x2xf32>
    %cst_190 = arith.constant dense<0.000000e+00> : vector<2x256xf32>
    %315 = tpu.matmul %312, %311, %cst_190 {dimension_numbers = #tpu.dot_dimension_numbers<[1], [0], [0], [1], [0, 0, 1, 1], [], []>} : vector<2x14xf32>, vector<14x256xf32>, vector<2x256xf32> -> vector<2x256xf32>
    %cst_191 = arith.constant dense<0.000000e+00> : vector<2x2xf32>
    %316 = tpu.matmul %315, %313, %cst_191 {dimension_numbers = #tpu.dot_dimension_numbers<[1], [0], [0], [1], [0, 0, 1, 1], [], []>} : vector<2x256xf32>, vector<256x2xf32>, vector<2x2xf32> -> vector<2x2xf32>
    %317 = vector.broadcast %314 : vector<1x2xf32> to vector<2x2xf32>
    %318 = arith.addf %316, %317 : vector<2x2xf32>
    %cst_192 = arith.constant 0.000000e+00 : f32
    %319 = vector.broadcast %cst_192 : f32 to vector<2x2xf32>
    %320 = arith.subf %319, %318 : vector<2x2xf32>
    %321 = math.exp %320 : vector<2x2xf32>
    %cst_193 = arith.constant 1.000000e+00 : f32
    %322 = vector.broadcast %cst_193 : f32 to vector<2x2xf32>
    %323 = arith.addf %322, %321 : vector<2x2xf32>
    %cst_194 = arith.constant 1.000000e+00 : f32
    %324 = vector.broadcast %cst_194 : f32 to vector<2x2xf32>
    %325 = arith.divf %324, %323 : vector<2x2xf32>
    %c0_195 = arith.constant 0 : index
    %c0_196 = arith.constant 0 : index
    %326 = vector.load %arg50[%c0_195, %c0_196] : memref<2x2xf32, #tpu.memory_space<vmem>>, vector<2x2xf32>
    tpu.vector_store %arg50[%c0_195, %c0_196], %325 {strides = array<i32>} : memref<2x2xf32, #tpu.memory_space<vmem>>, vector<2x2xf32>,
    return
  }
}

</mosaic_0001>

<llo_original>
// kernel: forward.1
$region0: #{forward.1}
  #allocation0 [shape = 'u32[]', space=smem, size = 0x4, offset = 0x4, fixed_abs, tag = 'smem constant byte address 0x4 - core index']
  #allocation1 [shape = 'u32[144,128]{1,0:T(1,128)}', space=vmem, size = 0x12000, scoped, tag = 'internal scratch']
  %s0 = inlined_call_operand.smem [shape: u32[51], index: -1, kind: input, shape index: {}]
  %s1 = sld [smem:[%s0]]
  %s2 = scalar_lea.smem %s0, 1
  %s3 = sld [smem:[%s2]]
  %s4 = scalar_lea.smem %s0, 2
  %s5 = sld [smem:[%s4]]
  %s6 = scalar_lea.smem %s0, 3
  %s7 = sld [smem:[%s6]]
  %s8 = scalar_lea.smem %s0, 4
  %s9 = sld [smem:[%s8]]
  %s10 = scalar_lea.smem %s0, 5
  %s11 = sld [smem:[%s10]]
  %s12 = scalar_lea.smem %s0, 6
  %s13 = sld [smem:[%s12]]
  %s14 = scalar_lea.smem %s0, 7
  %s15 = sld [smem:[%s14]]
  %s16 = scalar_lea.smem %s0, 8
  %s17 = sld [smem:[%s16]]
  %s18 = scalar_lea.smem %s0, 9
  %s19 = sld [smem:[%s18]]
  %s20 = scalar_lea.smem %s0, 10
  %s21 = sld [smem:[%s20]]
  %s22 = scalar_lea.smem %s0, 11
  %s23 = sld [smem:[%s22]]
  %s24 = scalar_lea.smem %s0, 12
  %s25 = sld [smem:[%s24]]
  %s26 = scalar_lea.smem %s0, 13
  %s27 = sld [smem:[%s26]]
  %s28 = scalar_lea.smem %s0, 14
  %s29 = sld [smem:[%s28]]
  %s30 = scalar_lea.smem %s0, 15
  %s31 = sld [smem:[%s30]]
  %s32 = scalar_lea.smem %s0, 16
  %s33 = sld [smem:[%s32]]
  %s34 = scalar_lea.smem %s0, 17
  %s35 = sld [smem:[%s34]]
  %s36 = scalar_lea.smem %s0, 18
  %s37 = sld [smem:[%s36]]
  %s38 = scalar_lea.smem %s0, 19
  %s39 = sld [smem:[%s38]]
  %s40 = scalar_lea.smem %s0, 20
  %s41 = sld [smem:[%s40]]
  %s42 = scalar_lea.smem %s0, 21
  %s43 = sld [smem:[%s42]]
  %s44 = scalar_lea.smem %s0, 22
  %s45 = sld [smem:[%s44]]
  %s46 = scalar_lea.smem %s0, 23
  %s47 = sld [smem:[%s46]]
  %s48 = scalar_lea.smem %s0, 24
  %s49 = sld [smem:[%s48]]
  %s50 = scalar_lea.smem %s0, 25
  %s51 = sld [smem:[%s50]]
  %s52 = scalar_lea.smem %s0, 26
  %s53 = sld [smem:[%s52]]
  %s54 = scalar_lea.smem %s0, 27
  %s55 = sld [smem:[%s54]]
  %s56 = scalar_lea.smem %s0, 28
  %s57 = sld [smem:[%s56]]
  %s58 = scalar_lea.smem %s0, 29
  %s59 = sld [smem:[%s58]]
  %s60 = scalar_lea.smem %s0, 30
  %s61 = sld [smem:[%s60]]
  %s62 = scalar_lea.smem %s0, 31
  %s63 = sld [smem:[%s62]]
  %s64 = scalar_lea.smem %s0, 32
  %s65 = sld [smem:[%s64]]
  %s66 = scalar_lea.smem %s0, 33
  %s67 = sld [smem:[%s66]]
  %s68 = scalar_lea.smem %s0, 34
  %s69 = sld [smem:[%s68]]
  %s70 = scalar_lea.smem %s0, 35
  %s71 = sld [smem:[%s70]]
  %s72 = scalar_lea.smem %s0, 36
  %s73 = sld [smem:[%s72]]
  %s74 = scalar_lea.smem %s0, 37
  %s75 = sld [smem:[%s74]]
  %s76 = scalar_lea.smem %s0, 38
  %s77 = sld [smem:[%s76]]
  %s78 = scalar_lea.smem %s0, 39
  %s79 = sld [smem:[%s78]]
  %s80 = scalar_lea.smem %s0, 40
  %s81 = sld [smem:[%s80]]
  %s82 = scalar_lea.smem %s0, 41
  %s83 = sld [smem:[%s82]]
  %s84 = scalar_lea.smem %s0, 42
  %s85 = sld [smem:[%s84]]
  %s86 = scalar_lea.smem %s0, 43
  %s87 = sld [smem:[%s86]]
  %s88 = scalar_lea.smem %s0, 44
  %s89 = sld [smem:[%s88]]
  %s90 = scalar_lea.smem %s0, 45
  %s91 = sld [smem:[%s90]]
  %s92 = scalar_lea.smem %s0, 46
  %s93 = sld [smem:[%s92]]
  %s94 = scalar_lea.smem %s0, 47
  %s95 = sld [smem:[%s94]]
  %s96 = scalar_lea.smem %s0, 48
  %s97 = sld [smem:[%s96]]
  %s98 = scalar_lea.smem %s0, 49
  %s99 = sld [smem:[%s98]]
  %s100 = scalar_lea.smem %s0, 50
  %s101 = sld [smem:[%s100]]
  %s102 = sld [smem:[#allocation0]]
  $region210: #{forward.1} parent=0
    _
  %s104 = ssub.s32 1, %s102
  %s105 = scalar_select 0, %s104, %s102
  $region1: #{forward.1} parent=0
    #allocation2 [shape = 'u8[1024]{0}', space=vmem, size = 0x400, scoped, tag = 'output window, operand 0, single buffered']
    #allocation3 [shape = 's32[1]{0}', space=sflag, size = 0x4, scoped, tag = 'scoped memory for forward.1']
    %106 = vsyncpa [#allocation3], 0
    // Predicated region
    $region2: #{forward.1} parent=1 // pred_check
      _
    $region3: #{forward.1} parent=1 // pred_check_branch
      %108 = sbr.rel (0) target = $region5
    $region4: #{forward.1} parent=1 // pred_region
      _
    $region5: #{forward.1} parent=1 // pred_fallthru
      _
    // Predicated region
    $region6: #{forward.1} parent=1 // pred_check
      _
    $region7: #{forward.1} parent=1 // pred_check_branch
      %110 = sbr.rel (0) target = $region9
    $region8: #{forward.1} parent=1 // pred_region
      _
    $region9: #{forward.1} parent=1 // pred_fallthru
      _
    // Predicated region
    $region10: #{forward.1} parent=1 // pred_check
      _
    $region11: #{forward.1} parent=1 // pred_check_branch
      %112 = sbr.rel (0) target = $region13
    $region12: #{forward.1} parent=1 // pred_region
      _
    $region13: #{forward.1} parent=1 // pred_fallthru
      _
    // Predicated region
    $region14: #{forward.1} parent=1 // pred_check
      _
    $region15: #{forward.1} parent=1 // pred_check_branch
      %114 = sbr.rel (0) target = $region17
    $region16: #{forward.1} parent=1 // pred_region
      _
    $region17: #{forward.1} parent=1 // pred_fallthru
      _
    // Predicated region
    $region18: #{forward.1} parent=1 // pred_check
      _
    $region19: #{forward.1} parent=1 // pred_check_branch
      %116 = sbr.rel (0) target = $region21
    $region20: #{forward.1} parent=1 // pred_region
      _
    $region21: #{forward.1} parent=1 // pred_fallthru
      _
    // Predicated region
    $region22: #{forward.1} parent=1 // pred_check
      _
    $region23: #{forward.1} parent=1 // pred_check_branch
      %118 = sbr.rel (0) target = $region25
    $region24: #{forward.1} parent=1 // pred_region
      _
    $region25: #{forward.1} parent=1 // pred_fallthru
      _
    // Predicated region
    $region26: #{forward.1} parent=1 // pred_check
      _
    $region27: #{forward.1} parent=1 // pred_check_branch
      %120 = sbr.rel (0) target = $region29
    $region28: #{forward.1} parent=1 // pred_region
      _
    $region29: #{forward.1} parent=1 // pred_fallthru
      _
    // Predicated region
    $region30: #{forward.1} parent=1 // pred_check
      _
    $region31: #{forward.1} parent=1 // pred_check_branch
      %122 = sbr.rel (0) target = $region33
    $region32: #{forward.1} parent=1 // pred_region
      _
    $region33: #{forward.1} parent=1 // pred_fallthru
      _
    // Predicated region
    $region34: #{forward.1} parent=1 // pred_check
      _
    $region35: #{forward.1} parent=1 // pred_check_branch
      %124 = sbr.rel (0) target = $region37
    $region36: #{forward.1} parent=1 // pred_region
      _
    $region37: #{forward.1} parent=1 // pred_fallthru
      _
    // Predicated region
    $region38: #{forward.1} parent=1 // pred_check
      _
    $region39: #{forward.1} parent=1 // pred_check_branch
      %126 = sbr.rel (0) target = $region41
    $region40: #{forward.1} parent=1 // pred_region
      _
    $region41: #{forward.1} parent=1 // pred_fallthru
      _
    // Predicated region
    $region42: #{forward.1} parent=1 // pred_check
      _
    $region43: #{forward.1} parent=1 // pred_check_branch
      %128 = sbr.rel (0) target = $region45
    $region44: #{forward.1} parent=1 // pred_region
      _
    $region45: #{forward.1} parent=1 // pred_fallthru
      _
    // Predicated region
    $region46: #{forward.1} parent=1 // pred_check
      _
    $region47: #{forward.1} parent=1 // pred_check_branch
      %130 = sbr.rel (0) target = $region49
    $region48: #{forward.1} parent=1 // pred_region
      _
    $region49: #{forward.1} parent=1 // pred_fallthru
      _
    // Predicated region
    $region50: #{forward.1} parent=1 // pred_check
      _
    $region51: #{forward.1} parent=1 // pred_check_branch
      %132 = sbr.rel (0) target = $region53
    $region52: #{forward.1} parent=1 // pred_region
      _
    $region53: #{forward.1} parent=1 // pred_fallthru
      _
    // Predicated region
    $region54: #{forward.1} parent=1 // pred_check
      _
    $region55: #{forward.1} parent=1 // pred_check_branch
      %134 = sbr.rel (0) target = $region57
    $region56: #{forward.1} parent=1 // pred_region
      _
    $region57: #{forward.1} parent=1 // pred_fallthru
      _
    // Predicated region
    $region58: #{forward.1} parent=1 // pred_check
      _
    $region59: #{forward.1} parent=1 // pred_check_branch
      %136 = sbr.rel (0) target = $region61
    $region60: #{forward.1} parent=1 // pred_region
      _
    $region61: #{forward.1} parent=1 // pred_fallthru
      _
    // Predicated region
    $region62: #{forward.1} parent=1 // pred_check
      _
    $region63: #{forward.1} parent=1 // pred_check_branch
      %138 = sbr.rel (0) target = $region65
    $region64: #{forward.1} parent=1 // pred_region
      _
    $region65: #{forward.1} parent=1 // pred_fallthru
      _
    // Predicated region
    $region66: #{forward.1} parent=1 // pred_check
      _
    $region67: #{forward.1} parent=1 // pred_check_branch
      %140 = sbr.rel (0) target = $region69
    $region68: #{forward.1} parent=1 // pred_region
      _
    $region69: #{forward.1} parent=1 // pred_fallthru
      _
    // Predicated region
    $region70: #{forward.1} parent=1 // pred_check
      _
    $region71: #{forward.1} parent=1 // pred_check_branch
      %142 = sbr.rel (0) target = $region73
    $region72: #{forward.1} parent=1 // pred_region
      _
    $region73: #{forward.1} parent=1 // pred_fallthru
      _
    // Predicated region
    $region74: #{forward.1} parent=1 // pred_check
      _
    $region75: #{forward.1} parent=1 // pred_check_branch
      %144 = sbr.rel (0) target = $region77
    $region76: #{forward.1} parent=1 // pred_region
      _
    $region77: #{forward.1} parent=1 // pred_fallthru
      _
    // Predicated region
    $region78: #{forward.1} parent=1 // pred_check
      _
    $region79: #{forward.1} parent=1 // pred_check_branch
      %146 = sbr.rel (0) target = $region81
    $region80: #{forward.1} parent=1 // pred_region
      _
    $region81: #{forward.1} parent=1 // pred_fallthru
      _
    // Predicated region
    $region82: #{forward.1} parent=1 // pred_check
      _
    $region83: #{forward.1} parent=1 // pred_check_branch
      %148 = sbr.rel (0) target = $region85
    $region84: #{forward.1} parent=1 // pred_region
      _
    $region85: #{forward.1} parent=1 // pred_fallthru
      _
    // Predicated region
    $region86: #{forward.1} parent=1 // pred_check
      _
    $region87: #{forward.1} parent=1 // pred_check_branch
      %150 = sbr.rel (0) target = $region89
    $region88: #{forward.1} parent=1 // pred_region
      _
    $region89: #{forward.1} parent=1 // pred_fallthru
      _
    // Predicated region
    $region90: #{forward.1} parent=1 // pred_check
      _
    $region91: #{forward.1} parent=1 // pred_check_branch
      %152 = sbr.rel (0) target = $region93
    $region92: #{forward.1} parent=1 // pred_region
      _
    $region93: #{forward.1} parent=1 // pred_fallthru
      _
    // Predicated region
    $region94: #{forward.1} parent=1 // pred_check
      _
    $region95: #{forward.1} parent=1 // pred_check_branch
      %154 = sbr.rel (0) target = $region97
    $region96: #{forward.1} parent=1 // pred_region
      _
    $region97: #{forward.1} parent=1 // pred_fallthru
      _
    // Predicated region
    $region98: #{forward.1} parent=1 // pred_check
      _
    $region99: #{forward.1} parent=1 // pred_check_branch
      %156 = sbr.rel (0) target = $region101
    $region100: #{forward.1} parent=1 // pred_region
      _
    $region101: #{forward.1} parent=1 // pred_fallthru
      _
    // Predicated region
    $region102: #{forward.1} parent=1 // pred_check
      _
    $region103: #{forward.1} parent=1 // pred_check_branch
      %158 = sbr.rel (0) target = $region105
    $region104: #{forward.1} parent=1 // pred_region
      _
    $region105: #{forward.1} parent=1 // pred_fallthru
      _
    // Predicated region
    $region106: #{forward.1} parent=1 // pred_check
      _
    $region107: #{forward.1} parent=1 // pred_check_branch
      %160 = sbr.rel (0) target = $region109
    $region108: #{forward.1} parent=1 // pred_region
      _
    $region109: #{forward.1} parent=1 // pred_fallthru
      _
    // Predicated region
    $region110: #{forward.1} parent=1 // pred_check
      _
    $region111: #{forward.1} parent=1 // pred_check_branch
      %162 = sbr.rel (0) target = $region113
    $region112: #{forward.1} parent=1 // pred_region
      _
    $region113: #{forward.1} parent=1 // pred_fallthru
      _
    // Predicated region
    $region114: #{forward.1} parent=1 // pred_check
      _
    $region115: #{forward.1} parent=1 // pred_check_branch
      %164 = sbr.rel (0) target = $region117
    $region116: #{forward.1} parent=1 // pred_region
      _
    $region117: #{forward.1} parent=1 // pred_fallthru
      _
    // Predicated region
    $region118: #{forward.1} parent=1 // pred_check
      _
    $region119: #{forward.1} parent=1 // pred_check_branch
      %166 = sbr.rel (0) target = $region121
    $region120: #{forward.1} parent=1 // pred_region
      _
    $region121: #{forward.1} parent=1 // pred_fallthru
      _
    // Predicated region
    $region122: #{forward.1} parent=1 // pred_check
      _
    $region123: #{forward.1} parent=1 // pred_check_branch
      %168 = sbr.rel (0) target = $region125
    $region124: #{forward.1} parent=1 // pred_region
      _
    $region125: #{forward.1} parent=1 // pred_fallthru
      _
    // Predicated region
    $region126: #{forward.1} parent=1 // pred_check
      _
    $region127: #{forward.1} parent=1 // pred_check_branch
      %170 = sbr.rel (0) target = $region129
    $region128: #{forward.1} parent=1 // pred_region
      _
    $region129: #{forward.1} parent=1 // pred_fallthru
      _
    // Predicated region
    $region130: #{forward.1} parent=1 // pred_check
      _
    $region131: #{forward.1} parent=1 // pred_check_branch
      %172 = sbr.rel (0) target = $region133
    $region132: #{forward.1} parent=1 // pred_region
      _
    $region133: #{forward.1} parent=1 // pred_fallthru
      _
    // Predicated region
    $region134: #{forward.1} parent=1 // pred_check
      _
    $region135: #{forward.1} parent=1 // pred_check_branch
      %174 = sbr.rel (0) target = $region137
    $region136: #{forward.1} parent=1 // pred_region
      _
    $region137: #{forward.1} parent=1 // pred_fallthru
      _
    // Predicated region
    $region138: #{forward.1} parent=1 // pred_check
      _
    $region139: #{forward.1} parent=1 // pred_check_branch
      %176 = sbr.rel (0) target = $region141
    $region140: #{forward.1} parent=1 // pred_region
      _
    $region141: #{forward.1} parent=1 // pred_fallthru
      _
    // Predicated region
    $region142: #{forward.1} parent=1 // pred_check
      _
    $region143: #{forward.1} parent=1 // pred_check_branch
      %178 = sbr.rel (0) target = $region145
    $region144: #{forward.1} parent=1 // pred_region
      _
    $region145: #{forward.1} parent=1 // pred_fallthru
      _
    // Predicated region
    $region146: #{forward.1} parent=1 // pred_check
      _
    $region147: #{forward.1} parent=1 // pred_check_branch
      %180 = sbr.rel (0) target = $region149
    $region148: #{forward.1} parent=1 // pred_region
      _
    $region149: #{forward.1} parent=1 // pred_fallthru
      _
    // Predicated region
    $region150: #{forward.1} parent=1 // pred_check
      _
    $region151: #{forward.1} parent=1 // pred_check_branch
      %182 = sbr.rel (0) target = $region153
    $region152: #{forward.1} parent=1 // pred_region
      _
    $region153: #{forward.1} parent=1 // pred_fallthru
      _
    // Predicated region
    $region154: #{forward.1} parent=1 // pred_check
      _
    $region155: #{forward.1} parent=1 // pred_check_branch
      %184 = sbr.rel (0) target = $region157
    $region156: #{forward.1} parent=1 // pred_region
      _
    $region157: #{forward.1} parent=1 // pred_fallthru
      _
    // Predicated region
    $region158: #{forward.1} parent=1 // pred_check
      _
    $region159: #{forward.1} parent=1 // pred_check_branch
      %186 = sbr.rel (0) target = $region161
    $region160: #{forward.1} parent=1 // pred_region
      _
    $region161: #{forward.1} parent=1 // pred_fallthru
      _
    // Predicated region
    $region162: #{forward.1} parent=1 // pred_check
      _
    $region163: #{forward.1} parent=1 // pred_check_branch
      %188 = sbr.rel (0) target = $region165
    $region164: #{forward.1} parent=1 // pred_region
      _
    $region165: #{forward.1} parent=1 // pred_fallthru
      _
    // Predicated region
    $region166: #{forward.1} parent=1 // pred_check
      _
    $region167: #{forward.1} parent=1 // pred_check_branch
      %190 = sbr.rel (0) target = $region169
    $region168: #{forward.1} parent=1 // pred_region
      _
    $region169: #{forward.1} parent=1 // pred_fallthru
      _
    // Predicated region
    $region170: #{forward.1} parent=1 // pred_check
      _
    $region171: #{forward.1} parent=1 // pred_check_branch
      %192 = sbr.rel (0) target = $region173
    $region172: #{forward.1} parent=1 // pred_region
      _
    $region173: #{forward.1} parent=1 // pred_fallthru
      _
    // Predicated region
    $region174: #{forward.1} parent=1 // pred_check
      _
    $region175: #{forward.1} parent=1 // pred_check_branch
      %194 = sbr.rel (0) target = $region177
    $region176: #{forward.1} parent=1 // pred_region
      _
    $region177: #{forward.1} parent=1 // pred_fallthru
      _
    // Predicated region
    $region178: #{forward.1} parent=1 // pred_check
      _
    $region179: #{forward.1} parent=1 // pred_check_branch
      %196 = sbr.rel (0) target = $region181
    $region180: #{forward.1} parent=1 // pred_region
      _
    $region181: #{forward.1} parent=1 // pred_fallthru
      _
    // Predicated region
    $region182: #{forward.1} parent=1 // pred_check
      _
    $region183: #{forward.1} parent=1 // pred_check_branch
      %198 = sbr.rel (0) target = $region185
    $region184: #{forward.1} parent=1 // pred_region
      _
    $region185: #{forward.1} parent=1 // pred_fallthru
      _
    // Predicated region
    $region186: #{forward.1} parent=1 // pred_check
      _
    $region187: #{forward.1} parent=1 // pred_check_branch
      %200 = sbr.rel (0) target = $region189
    $region188: #{forward.1} parent=1 // pred_region
      _
    $region189: #{forward.1} parent=1 // pred_fallthru
      _
    // Predicated region
    $region190: #{forward.1} parent=1 // pred_check
      _
    $region191: #{forward.1} parent=1 // pred_check_branch
      %202 = sbr.rel (0) target = $region193
    $region192: #{forward.1} parent=1 // pred_region
      _
    $region193: #{forward.1} parent=1 // pred_fallthru
      _
    // Predicated region
    $region194: #{forward.1} parent=1 // pred_check
      _
    $region195: #{forward.1} parent=1 // pred_check_branch
      %204 = sbr.rel (0) target = $region197
    $region196: #{forward.1} parent=1 // pred_region
      _
    $region197: #{forward.1} parent=1 // pred_fallthru
      _
    // Predicated region
    $region198: #{forward.1} parent=1 // pred_check
      _
    $region199: #{forward.1} parent=1 // pred_check_branch
      %206 = sbr.rel (0) target = $region201
    $region200: #{forward.1} parent=1 // pred_region
      _
    $region201: #{forward.1} parent=1 // pred_fallthru
      _
    %v208 = vld [vmem:[%s1] sm:$0xff]
    %v209 = vld [vmem:[%s1 + $0x8] sm:$0xff]
    %v210 = vld [vmem:[%s1 + $0x10] sm:$0xff]
    %v211 = vld [vmem:[%s1 + $0x18] sm:$0xff]
    %v212 = vld [vmem:[%s1 + $0x20] sm:$0xff]
    %v213 = vld [vmem:[%s1 + $0x28] sm:$0xff]
    %v214 = vld [vmem:[%s1 + $0x30] sm:$0xff]
    %v215 = vld [vmem:[%s1 + $0x38] sm:$0xff]
    %v216 = vld [vmem:[%s1 + $0x40] sm:$0xff]
    %v217 = vld [vmem:[%s1 + $0x48] sm:$0xff]
    %v218 = vld [vmem:[%s1 + $0x50] sm:$0xff]
    %v219 = vld [vmem:[%s1 + $0x58] sm:$0xff]
    %v220 = vld [vmem:[%s1 + $0x60] sm:$0xff]
    %v221 = vld [vmem:[%s1 + $0x68] sm:$0xff]
    %v222 = vld [vmem:[%s1 + $0x70] sm:$0xff]
    %v223 = vld [vmem:[%s1 + $0x78] sm:$0xff]
    %v224 = vld [vmem:[%s1 + $0x80] sm:$0xff]
    %v225 = vld [vmem:[%s1 + $0x88] sm:$0xff]
    %v226 = vld [vmem:[%s1 + $0x90] sm:$0xff]
    %v227 = vld [vmem:[%s1 + $0x98] sm:$0xff]
    %v228 = vld [vmem:[%s1 + $0xa0] sm:$0xff]
    %v229 = vld [vmem:[%s1 + $0xa8] sm:$0xff]
    %v230 = vld [vmem:[%s1 + $0xb0] sm:$0xff]
    %v231 = vld [vmem:[%s1 + $0xb8] sm:$0xff]
    %v232 = vld [vmem:[%s1 + $0xc0] sm:$0xff]
    %v233 = vld [vmem:[%s3] sm:$0xf]
    %v234 = vld [vmem:[%s3 + $0x4] sm:$0xf]
    %v235 = vld [vmem:[%s3 + $0x8] sm:$0xf]
    %v236 = vld [vmem:[%s3 + $0xc] sm:$0xf]
    %v237 = vld [vmem:[%s3 + $0x10] sm:$0xf]
    %v238 = vld [vmem:[%s3 + $0x14] sm:$0xf]
    %v239 = vld [vmem:[%s3 + $0x18] sm:$0xf]
    %v240 = vld [vmem:[%s3 + $0x1c] sm:$0xf]
    %v241 = vld [vmem:[%s3 + $0x20] sm:$0xf]
    %v242 = vld [vmem:[%s3 + $0x24] sm:$0xf]
    %v243 = vld [vmem:[%s3 + $0x28] sm:$0xf]
    %v244 = vld [vmem:[%s3 + $0x2c] sm:$0xf]
    %v245 = vld [vmem:[%s3 + $0x30] sm:$0xf]
    %v246 = vld [vmem:[%s3 + $0x34] sm:$0xf]
    %v247 = vld [vmem:[%s5] sm:$0x1]
    %v248 = vld [vmem:[%s7] sm:$0xff]
    %v249 = vld [vmem:[%s7 + $0x8] sm:$0xff]
    %v250 = vld [vmem:[%s7 + $0x10] sm:$0xff]
    %v251 = vld [vmem:[%s7 + $0x18] sm:$0xff]
    %v252 = vld [vmem:[%s7 + $0x20] sm:$0xff]
    %v253 = vld [vmem:[%s7 + $0x28] sm:$0xff]
    %v254 = vld [vmem:[%s7 + $0x30] sm:$0xff]
    %v255 = vld [vmem:[%s7 + $0x38] sm:$0xff]
    %v256 = vld [vmem:[%s7 + $0x40] sm:$0xff]
    %v257 = vld [vmem:[%s7 + $0x48] sm:$0xff]
    %v258 = vld [vmem:[%s7 + $0x50] sm:$0xff]
    %v259 = vld [vmem:[%s7 + $0x58] sm:$0xff]
    %v260 = vld [vmem:[%s7 + $0x60] sm:$0x33]
    %v261 = vld [vmem:[%s7 + $0x68] sm:$0xff]
    %v262 = vld [vmem:[%s7 + $0x70] sm:$0xff]
    %v263 = vld [vmem:[%s7 + $0x78] sm:$0xff]
    %v264 = vld [vmem:[%s7 + $0x80] sm:$0xff]
    %v265 = vld [vmem:[%s7 + $0x88] sm:$0xff]
    %v266 = vld [vmem:[%s7 + $0x90] sm:$0xff]
    %v267 = vld [vmem:[%s7 + $0x98] sm:$0xff]
    %v268 = vld [vmem:[%s7 + $0xa0] sm:$0xff]
    %v269 = vld [vmem:[%s7 + $0xa8] sm:$0xff]
    %v270 = vld [vmem:[%s7 + $0xb0] sm:$0xff]
    %v271 = vld [vmem:[%s7 + $0xb8] sm:$0xff]
    %v272 = vld [vmem:[%s7 + $0xc0] sm:$0xff]
    %v273 = vld [vmem:[%s7 + $0xc8] sm:$0x33]
    %v274 = vld [vmem:[%s7 + $0xd0] sm:$0xff]
    %v275 = vld [vmem:[%s7 + $0xd8] sm:$0xff]
    %v276 = vld [vmem:[%s7 + $0xe0] sm:$0xff]
    %v277 = vld [vmem:[%s7 + $0xe8] sm:$0xff]
    %v278 = vld [vmem:[%s7 + $0xf0] sm:$0xff]
    %v279 = vld [vmem:[%s7 + $0xf8] sm:$0xff]
    %v280 = vld [vmem:[%s7 + $0x100] sm:$0xff]
    %v281 = vld [vmem:[%s7 + $0x108] sm:$0xff]
    %v282 = vld [vmem:[%s7 + $0x110] sm:$0xff]
    %v283 = vld [vmem:[%s7 + $0x118] sm:$0xff]
    %v284 = vld [vmem:[%s7 + $0x120] sm:$0xff]
    %v285 = vld [vmem:[%s7 + $0x128] sm:$0xff]
    %v286 = vld [vmem:[%s7 + $0x130] sm:$0x33]
    %v287 = vld [vmem:[%s7 + $0x138] sm:$0xff]
    %v288 = vld [vmem:[%s7 + $0x140] sm:$0xff]
    %v289 = vld [vmem:[%s7 + $0x148] sm:$0xff]
    %v290 = vld [vmem:[%s7 + $0x150] sm:$0xff]
    %v291 = vld [vmem:[%s7 + $0x158] sm:$0xff]
    %v292 = vld [vmem:[%s7 + $0x160] sm:$0xff]
    %v293 = vld [vmem:[%s7 + $0x168] sm:$0xff]
    %v294 = vld [vmem:[%s7 + $0x170] sm:$0xff]
    %v295 = vld [vmem:[%s7 + $0x178] sm:$0xff]
    %v296 = vld [vmem:[%s7 + $0x180] sm:$0xff]
    %v297 = vld [vmem:[%s7 + $0x188] sm:$0xff]
    %v298 = vld [vmem:[%s7 + $0x190] sm:$0xff]
    %v299 = vld [vmem:[%s7 + $0x198] sm:$0x33]
    %v300 = vld [vmem:[%s7 + $0x1a0] sm:$0xff]
    %v301 = vld [vmem:[%s7 + $0x1a8] sm:$0xff]
    %v302 = vld [vmem:[%s7 + $0x1b0] sm:$0xff]
    %v303 = vld [vmem:[%s7 + $0x1b8] sm:$0xff]
    %v304 = vld [vmem:[%s7 + $0x1c0] sm:$0xff]
    %v305 = vld [vmem:[%s7 + $0x1c8] sm:$0xff]
    %v306 = vld [vmem:[%s7 + $0x1d0] sm:$0xff]
    %v307 = vld [vmem:[%s7 + $0x1d8] sm:$0xff]
    %v308 = vld [vmem:[%s7 + $0x1e0] sm:$0xff]
    %v309 = vld [vmem:[%s7 + $0x1e8] sm:$0xff]
    %v310 = vld [vmem:[%s7 + $0x1f0] sm:$0xff]
    %v311 = vld [vmem:[%s7 + $0x1f8] sm:$0xff]
    %v312 = vld [vmem:[%s7 + $0x200] sm:$0x33]
    %v313 = vld [vmem:[%s7 + $0x208] sm:$0xff]
    %v314 = vld [vmem:[%s7 + $0x210] sm:$0xff]
    %v315 = vld [vmem:[%s7 + $0x218] sm:$0xff]
    %v316 = vld [vmem:[%s7 + $0x220] sm:$0xff]
    %v317 = vld [vmem:[%s7 + $0x228] sm:$0xff]
    %v318 = vld [vmem:[%s7 + $0x230] sm:$0xff]
    %v319 = vld [vmem:[%s7 + $0x238] sm:$0xff]
    %v320 = vld [vmem:[%s7 + $0x240] sm:$0xff]
    %v321 = vld [vmem:[%s7 + $0x248] sm:$0xff]
    %v322 = vld [vmem:[%s7 + $0x250] sm:$0xff]
    %v323 = vld [vmem:[%s7 + $0x258] sm:$0xff]
    %v324 = vld [vmem:[%s7 + $0x260] sm:$0xff]
    %v325 = vld [vmem:[%s7 + $0x268] sm:$0x33]
    %v326 = vld [vmem:[%s7 + $0x270] sm:$0xff]
    %v327 = vld [vmem:[%s7 + $0x278] sm:$0xff]
    %v328 = vld [vmem:[%s7 + $0x280] sm:$0xff]
    %v329 = vld [vmem:[%s7 + $0x288] sm:$0xff]
    %v330 = vld [vmem:[%s7 + $0x290] sm:$0xff]
    %v331 = vld [vmem:[%s7 + $0x298] sm:$0xff]
    %v332 = vld [vmem:[%s7 + $0x2a0] sm:$0xff]
    %v333 = vld [vmem:[%s7 + $0x2a8] sm:$0xff]
    %v334 = vld [vmem:[%s7 + $0x2b0] sm:$0xff]
    %v335 = vld [vmem:[%s7 + $0x2b8] sm:$0xff]
    %v336 = vld [vmem:[%s7 + $0x2c0] sm:$0xff]
    %v337 = vld [vmem:[%s7 + $0x2c8] sm:$0xff]
    %v338 = vld [vmem:[%s7 + $0x2d0] sm:$0x33]
    %v339 = vpack.c.bf16 %v209, %v208
    %v340 = vpack.c.bf16 %v211, %v210
    %v341 = vpack.c.bf16 %v213, %v212
    %v342 = vpack.c.bf16 %v215, %v214
    %v343 = vpack.c.bf16 %v217, %v216
    %v344 = vpack.c.bf16 %v219, %v218
    %v345 = vpack.c.bf16 %v221, %v220
    %v346 = vpack.c.bf16 %v223, %v222
    %v347 = vpack.c.bf16 %v225, %v224
    %v348 = vpack.c.bf16 %v227, %v226
    %v349 = vpack.c.bf16 %v229, %v228
    %v350 = vpack.c.bf16 %v231, %v230
    %v351 = vpack.c.bf16 %v232, %v232
    %v365 = vunpack.c.l.b16 %v248
    %v366 = vunpack.c.h.b16 %v248
    %v367 = vunpack.c.l.b16 %v249
    %v368 = vunpack.c.h.b16 %v249
    %v369 = vunpack.c.l.b16 %v250
    %v370 = vunpack.c.h.b16 %v250
    %v371 = vunpack.c.l.b16 %v251
    %v372 = vunpack.c.h.b16 %v251
    %v373 = vunpack.c.l.b16 %v252
    %v374 = vunpack.c.h.b16 %v252
    %v375 = vunpack.c.l.b16 %v253
    %v376 = vunpack.c.h.b16 %v253
    %v377 = vunpack.c.l.b16 %v254
    %v378 = vunpack.c.h.b16 %v254
    %v379 = vunpack.c.l.b16 %v255
    %v380 = vunpack.c.h.b16 %v255
    %v381 = vunpack.c.l.b16 %v256
    %v382 = vunpack.c.h.b16 %v256
    %v383 = vunpack.c.l.b16 %v257
    %v384 = vunpack.c.h.b16 %v257
    %v385 = vunpack.c.l.b16 %v258
    %v386 = vunpack.c.h.b16 %v258
    %v387 = vunpack.c.l.b16 %v259
    %v388 = vunpack.c.h.b16 %v259
    %v389 = vunpack.c.l.b16 %v260
    %v390 = vunpack.c.h.b16 %v260
    %v391 = vpack.c.b16 %v367, %v365
    %v392 = vpack.c.b16 %v368, %v366
    %v393 = vpack.c.b16 %v371, %v369
    %v394 = vpack.c.b16 %v372, %v370
    %v395 = vpack.c.b16 %v375, %v373
    %v396 = vpack.c.b16 %v376, %v374
    %v397 = vpack.c.b16 %v379, %v377
    %v398 = vpack.c.b16 %v380, %v378
    %v399 = vpack.c.b16 %v383, %v381
    %v400 = vpack.c.b16 %v384, %v382
    %v401 = vpack.c.b16 %v387, %v385
    %v402 = vpack.c.b16 %v388, %v386
    %v403 = vpack.c.b16 %v389, %v389
    %v404 = vpack.c.b16 %v390, %v390
    %vm412 = vcmask 588800
    %v414 = vsel %vm412, %v392, 0
    %v417 = vsel %vm412, %v394, 0
    %v420 = vsel %vm412, %v396, 0
    %v423 = vsel %vm412, %v398, 0
    %v426 = vsel %vm412, %v400, 0
    %v429 = vsel %vm412, %v402, 0
    %v432 = vsel %vm412, %v404, 0
    %vm434 = vcmask 1043456
    %v436 = vsel %vm434, %v351, 0
    %438 = vmatprep.subr.bf16.mxu0 0
    %439 = vmatpush1.bf16.msra.mxu0 %v339
    %440 = vmatprep.subr.bf16.mxu0 0
    %441 = vmatpush1.bf16.msra.mxu0 %v340
    %442 = vmatprep.subr.bf16.mxu0 0
    %443 = vmatpush1.bf16.msra.mxu0 %v341
    %444 = vmatprep.subr.bf16.mxu0 0
    %445 = vmatpush1.bf16.msra.mxu0 %v342
    %446 = vmatprep.subr.bf16.mxu0 0
    %447 = vmatpush1.bf16.msra.mxu0 %v343
    %448 = vmatprep.subr.bf16.mxu0 0
    %449 = vmatpush1.bf16.msra.mxu0 %v344
    %450 = vmatprep.subr.bf16.mxu0 0
    %451 = vmatpush1.bf16.msra.mxu0 %v345
    %452 = vmatprep.subr.bf16.mxu0 0
    %453 = vmatpush1.bf16.msra.mxu0 %v346
    %454 = vmatprep.subr.bf16.mxu0 0
    %455 = vmatpush1.bf16.msra.mxu0 %v347
    %456 = vmatprep.subr.bf16.mxu0 0
    %457 = vmatpush1.bf16.msra.mxu0 %v348
    %458 = vmatprep.subr.bf16.mxu0 0
    %459 = vmatpush1.bf16.msra.mxu0 %v349
    %460 = vmatprep.subr.bf16.mxu0 0
    %461 = vmatpush1.bf16.msra.mxu0 %v350
    %462 = vmatprep.subr.bf16.mxu0 0
    %463 = vmatpush1.bf16.msra.mxu0 %v436
    %464 = vmatprep.subr.bf16.mxu0 0
    %465 = vmatpush1.bf16.msra.mxu0 0
    %466 = vmatprep.subr.bf16.mxu0 0
    %467 = vmatpush1.bf16.msra.mxu0 0
    %468 = vmatprep.subr.bf16.mxu0 0
    %469 = vmatpush1.bf16.msra.mxu0 0
    %470 = vmatprep.mubr.bf16.mxu0 %v414
    %471 = vmatmul.mubr.bf16.gmra.mrb[0].mxu0 %v391
    %v472 = vpop.f32.mrb[0].mxu0
    %v473 = vadd.f32 0.0, %v472
    %v474 = vpop.f32.mrb[0].mxu0
    %v475 = vpop.f32.mrb[0].mxu0
    %v476 = vadd.f32 0.0, %v475
    %v477 = vpop.f32.mrb[0].mxu0
    %478 = vmatprep.mubr.bf16.mxu0 %v417
    %479 = vmatmul.mubr.bf16.gmra.mrb[0].mxu0 %v393
    %v480 = vpop.f32.mrb[0].mxu0
    %v481 = vadd.f32 0.0, %v480
    %v482 = vpop.f32.mrb[0].mxu0
    %v483 = vpop.f32.mrb[0].mxu0
    %v484 = vadd.f32 0.0, %v483
    %v485 = vpop.f32.mrb[0].mxu0
    %486 = vmatprep.mubr.bf16.mxu0 %v420
    %487 = vmatmul.mubr.bf16.gmra.mrb[0].mxu0 %v395
    %v488 = vpop.f32.mrb[0].mxu0
    %v489 = vadd.f32 0.0, %v488
    %v490 = vpop.f32.mrb[0].mxu0
    %v491 = vpop.f32.mrb[0].mxu0
    %v492 = vadd.f32 0.0, %v491
    %v493 = vpop.f32.mrb[0].mxu0
    %494 = vmatprep.mubr.bf16.mxu0 %v423
    %495 = vmatmul.mubr.bf16.gmra.mrb[0].mxu0 %v397
    %v496 = vpop.f32.mrb[0].mxu0
    %v497 = vadd.f32 0.0, %v496
    %v498 = vpop.f32.mrb[0].mxu0
    %v499 = vpop.f32.mrb[0].mxu0
    %v500 = vadd.f32 0.0, %v499
    %v501 = vpop.f32.mrb[0].mxu0
    %502 = vmatprep.mubr.bf16.mxu0 %v426
    %503 = vmatmul.mubr.bf16.gmra.mrb[0].mxu0 %v399
    %v504 = vpop.f32.mrb[0].mxu0
    %v505 = vadd.f32 0.0, %v504
    %v506 = vpop.f32.mrb[0].mxu0
    %v507 = vpop.f32.mrb[0].mxu0
    %v508 = vadd.f32 0.0, %v507
    %v509 = vpop.f32.mrb[0].mxu0
    %510 = vmatprep.mubr.bf16.mxu0 %v429
    %511 = vmatmul.mubr.bf16.gmra.mrb[0].mxu0 %v401
    %v512 = vpop.f32.mrb[0].mxu0
    %v513 = vadd.f32 0.0, %v512
    %v514 = vpop.f32.mrb[0].mxu0
    %v515 = vpop.f32.mrb[0].mxu0
    %v516 = vadd.f32 0.0, %v515
    %v517 = vpop.f32.mrb[0].mxu0
    %518 = vmatprep.mubr.bf16.mxu0 %v432
    %519 = vmatmul.mubr.bf16.gmra.mrb[0].mxu0 %v403
    %v520 = vpop.f32.mrb[0].mxu0
    %v521 = vadd.f32 0.0, %v520
    %v522 = vpop.f32.mrb[0].mxu0
    %v523 = vpop.f32.mrb[0].mxu0
    %v524 = vpop.f32.mrb[0].mxu0
    %525 = vdwg.mxu0
    %v539 = vunpack.c.l.b16 %v261
    %v540 = vunpack.c.h.b16 %v261
    %v541 = vunpack.c.l.b16 %v262
    %v542 = vunpack.c.h.b16 %v262
    %v543 = vunpack.c.l.b16 %v263
    %v544 = vunpack.c.h.b16 %v263
    %v545 = vunpack.c.l.b16 %v264
    %v546 = vunpack.c.h.b16 %v264
    %v547 = vunpack.c.l.b16 %v265
    %v548 = vunpack.c.h.b16 %v265
    %v549 = vunpack.c.l.b16 %v266
    %v550 = vunpack.c.h.b16 %v266
    %v551 = vunpack.c.l.b16 %v267
    %v552 = vunpack.c.h.b16 %v267
    %v553 = vunpack.c.l.b16 %v268
    %v554 = vunpack.c.h.b16 %v268
    %v555 = vunpack.c.l.b16 %v269
    %v556 = vunpack.c.h.b16 %v269
    %v557 = vunpack.c.l.b16 %v270
    %v558 = vunpack.c.h.b16 %v270
    %v559 = vunpack.c.l.b16 %v271
    %v560 = vunpack.c.h.b16 %v271
    %v561 = vunpack.c.l.b16 %v272
    %v562 = vunpack.c.h.b16 %v272
    %v563 = vunpack.c.l.b16 %v273
    %v564 = vunpack.c.h.b16 %v273
    %v565 = vpack.c.b16 %v541, %v539
    %v566 = vpack.c.b16 %v542, %v540
    %v567 = vpack.c.b16 %v545, %v543
    %v568 = vpack.c.b16 %v546, %v544
    %v569 = vpack.c.b16 %v549, %v547
    %v570 = vpack.c.b16 %v550, %v548
    %v571 = vpack.c.b16 %v553, %v551
    %v572 = vpack.c.b16 %v554, %v552
    %v573 = vpack.c.b16 %v557, %v555
    %v574 = vpack.c.b16 %v558, %v556
    %v575 = vpack.c.b16 %v561, %v559
    %v576 = vpack.c.b16 %v562, %v560
    %v577 = vpack.c.b16 %v563, %v563
    %v578 = vpack.c.b16 %v564, %v564
    %v587 = vsel %vm412, %v566, 0
    %v590 = vsel %vm412, %v568, 0
    %v593 = vsel %vm412, %v570, 0
    %v596 = vsel %vm412, %v572, 0
    %v599 = vsel %vm412, %v574, 0
    %v602 = vsel %vm412, %v576, 0
    %v605 = vsel %vm412, %v578, 0
    %607 = vmatprep.subr.bf16.mxu0 0
    %608 = vmatpush1.bf16.msra.mxu0 %v339
    %609 = vmatprep.subr.bf16.mxu0 0
    %610 = vmatpush1.bf16.msra.mxu0 %v340
    %611 = vmatprep.subr.bf16.mxu0 0
    %612 = vmatpush1.bf16.msra.mxu0 %v341
    %613 = vmatprep.subr.bf16.mxu0 0
    %614 = vmatpush1.bf16.msra.mxu0 %v342
    %615 = vmatprep.subr.bf16.mxu0 0
    %616 = vmatpush1.bf16.msra.mxu0 %v343
    %617 = vmatprep.subr.bf16.mxu0 0
    %618 = vmatpush1.bf16.msra.mxu0 %v344
    %619 = vmatprep.subr.bf16.mxu0 0
    %620 = vmatpush1.bf16.msra.mxu0 %v345
    %621 = vmatprep.subr.bf16.mxu0 0
    %622 = vmatpush1.bf16.msra.mxu0 %v346
    %623 = vmatprep.subr.bf16.mxu0 0
    %624 = vmatpush1.bf16.msra.mxu0 %v347
    %625 = vmatprep.subr.bf16.mxu0 0
    %626 = vmatpush1.bf16.msra.mxu0 %v348
    %627 = vmatprep.subr.bf16.mxu0 0
    %628 = vmatpush1.bf16.msra.mxu0 %v349
    %629 = vmatprep.subr.bf16.mxu0 0
    %630 = vmatpush1.bf16.msra.mxu0 %v350
    %631 = vmatprep.subr.bf16.mxu0 0
    %632 = vmatpush1.bf16.msra.mxu0 %v436
    %633 = vmatprep.subr.bf16.mxu0 0
    %634 = vmatpush1.bf16.msra.mxu0 0
    %635 = vmatprep.subr.bf16.mxu0 0
    %636 = vmatpush1.bf16.msra.mxu0 0
    %637 = vmatprep.subr.bf16.mxu0 0
    %638 = vmatpush1.bf16.msra.mxu0 0
    %639 = vmatprep.mubr.bf16.mxu0 %v587
    %640 = vmatmul.mubr.bf16.gmra.mrb[0].mxu0 %v565
    %v641 = vpop.f32.mrb[0].mxu0
    %v642 = vadd.f32 0.0, %v641
    %v643 = vpop.f32.mrb[0].mxu0
    %v644 = vpop.f32.mrb[0].mxu0
    %v645 = vadd.f32 0.0, %v644
    %v646 = vpop.f32.mrb[0].mxu0
    %647 = vmatprep.mubr.bf16.mxu0 %v590
    %648 = vmatmul.mubr.bf16.gmra.mrb[0].mxu0 %v567
    %v649 = vpop.f32.mrb[0].mxu0
    %v650 = vadd.f32 0.0, %v649
    %v651 = vpop.f32.mrb[0].mxu0
    %v652 = vpop.f32.mrb[0].mxu0
    %v653 = vadd.f32 0.0, %v652
    %v654 = vpop.f32.mrb[0].mxu0
    %655 = vmatprep.mubr.bf16.mxu0 %v593
    %656 = vmatmul.mubr.bf16.gmra.mrb[0].mxu0 %v569
    %v657 = vpop.f32.mrb[0].mxu0
    %v658 = vadd.f32 0.0, %v657
    %v659 = vpop.f32.mrb[0].mxu0
    %v660 = vpop.f32.mrb[0].mxu0
    %v661 = vadd.f32 0.0, %v660
    %v662 = vpop.f32.mrb[0].mxu0
    %663 = vmatprep.mubr.bf16.mxu0 %v596
    %664 = vmatmul.mubr.bf16.gmra.mrb[0].mxu0 %v571
    %v665 = vpop.f32.mrb[0].mxu0
    %v666 = vadd.f32 0.0, %v665
    %v667 = vpop.f32.mrb[0].mxu0
    %v668 = vpop.f32.mrb[0].mxu0
    %v669 = vadd.f32 0.0, %v668
    %v670 = vpop.f32.mrb[0].mxu0
    %671 = vmatprep.mubr.bf16.mxu0 %v599
    %672 = vmatmul.mubr.bf16.gmra.mrb[0].mxu0 %v573
    %v673 = vpop.f32.mrb[0].mxu0
    %v674 = vadd.f32 0.0, %v673
    %v675 = vpop.f32.mrb[0].mxu0
    %v676 = vpop.f32.mrb[0].mxu0
    %v677 = vadd.f32 0.0, %v676
    %v678 = vpop.f32.mrb[0].mxu0
    %679 = vmatprep.mubr.bf16.mxu0 %v602
    %680 = vmatmul.mubr.bf16.gmra.mrb[0].mxu0 %v575
    %v681 = vpop.f32.mrb[0].mxu0
    %v682 = vadd.f32 0.0, %v681
    %v683 = vpop.f32.mrb[0].mxu0
    %v684 = vpop.f32.mrb[0].mxu0
    %v685 = vadd.f32 0.0, %v684
    %v686 = vpop.f32.mrb[0].mxu0
    %687 = vmatprep.mubr.bf16.mxu0 %v605
    %688 = vmatmul.mubr.bf16.gmra.mrb[0].mxu0 %v577
    %v689 = vpop.f32.mrb[0].mxu0
    %v690 = vadd.f32 0.0, %v689
    %v691 = vpop.f32.mrb[0].mxu0
    %v692 = vpop.f32.mrb[0].mxu0
    %v693 = vpop.f32.mrb[0].mxu0
    %694 = vdwg.mxu0
    %v708 = vunpack.c.l.b16 %v274
    %v709 = vunpack.c.h.b16 %v274
    %v710 = vunpack.c.l.b16 %v275
    %v711 = vunpack.c.h.b16 %v275
    %v712 = vunpack.c.l.b16 %v276
    %v713 = vunpack.c.h.b16 %v276
    %v714 = vunpack.c.l.b16 %v277
    %v715 = vunpack.c.h.b16 %v277
    %v716 = vunpack.c.l.b16 %v278
    %v717 = vunpack.c.h.b16 %v278
    %v718 = vunpack.c.l.b16 %v279
    %v719 = vunpack.c.h.b16 %v279
    %v720 = vunpack.c.l.b16 %v280
    %v721 = vunpack.c.h.b16 %v280
    %v722 = vunpack.c.l.b16 %v281
    %v723 = vunpack.c.h.b16 %v281
    %v724 = vunpack.c.l.b16 %v282
    %v725 = vunpack.c.h.b16 %v282
    %v726 = vunpack.c.l.b16 %v283
    %v727 = vunpack.c.h.b16 %v283
    %v728 = vunpack.c.l.b16 %v284
    %v729 = vunpack.c.h.b16 %v284
    %v730 = vunpack.c.l.b16 %v285
    %v731 = vunpack.c.h.b16 %v285
    %v732 = vunpack.c.l.b16 %v286
    %v733 = vunpack.c.h.b16 %v286
    %v734 = vpack.c.b16 %v710, %v708
    %v735 = vpack.c.b16 %v711, %v709
    %v736 = vpack.c.b16 %v714, %v712
    %v737 = vpack.c.b16 %v715, %v713
    %v738 = vpack.c.b16 %v718, %v716
    %v739 = vpack.c.b16 %v719, %v717
    %v740 = vpack.c.b16 %v722, %v720
    %v741 = vpack.c.b16 %v723, %v721
    %v742 = vpack.c.b16 %v726, %v724
    %v743 = vpack.c.b16 %v727, %v725
    %v744 = vpack.c.b16 %v730, %v728
    %v745 = vpack.c.b16 %v731, %v729
    %v746 = vpack.c.b16 %v732, %v732
    %v747 = vpack.c.b16 %v733, %v733
    %v756 = vsel %vm412, %v735, 0
    %v759 = vsel %vm412, %v737, 0
    %v762 = vsel %vm412, %v739, 0
    %v765 = vsel %vm412, %v741, 0
    %v768 = vsel %vm412, %v743, 0
    %v771 = vsel %vm412, %v745, 0
    %v774 = vsel %vm412, %v747, 0
    %776 = vmatprep.subr.bf16.mxu0 0
    %777 = vmatpush1.bf16.msra.mxu0 %v339
    %778 = vmatprep.subr.bf16.mxu0 0
    %779 = vmatpush1.bf16.msra.mxu0 %v340
    %780 = vmatprep.subr.bf16.mxu0 0
    %781 = vmatpush1.bf16.msra.mxu0 %v341
    %782 = vmatprep.subr.bf16.mxu0 0
    %783 = vmatpush1.bf16.msra.mxu0 %v342
    %784 = vmatprep.subr.bf16.mxu0 0
    %785 = vmatpush1.bf16.msra.mxu0 %v343
    %786 = vmatprep.subr.bf16.mxu0 0
    %787 = vmatpush1.bf16.msra.mxu0 %v344
    %788 = vmatprep.subr.bf16.mxu0 0
    %789 = vmatpush1.bf16.msra.mxu0 %v345
    %790 = vmatprep.subr.bf16.mxu0 0
    %791 = vmatpush1.bf16.msra.mxu0 %v346
    %792 = vmatprep.subr.bf16.mxu0 0
    %793 = vmatpush1.bf16.msra.mxu0 %v347
    %794 = vmatprep.subr.bf16.mxu0 0
    %795 = vmatpush1.bf16.msra.mxu0 %v348
    %796 = vmatprep.subr.bf16.mxu0 0
    %797 = vmatpush1.bf16.msra.mxu0 %v349
    %798 = vmatprep.subr.bf16.mxu0 0
    %799 = vmatpush1.bf16.msra.mxu0 %v350
    %800 = vmatprep.subr.bf16.mxu0 0
    %801 = vmatpush1.bf16.msra.mxu0 %v436
    %802 = vmatprep.subr.bf16.mxu0 0
    %803 = vmatpush1.bf16.msra.mxu0 0
    %804 = vmatprep.subr.bf16.mxu0 0
    %805 = vmatpush1.bf16.msra.mxu0 0
    %806 = vmatprep.subr.bf16.mxu0 0
    %807 = vmatpush1.bf16.msra.mxu0 0
    %808 = vmatprep.mubr.bf16.mxu0 %v756
    %809 = vmatmul.mubr.bf16.gmra.mrb[0].mxu0 %v734
    %v810 = vpop.f32.mrb[0].mxu0
    %v811 = vadd.f32 0.0, %v810
    %v812 = vpop.f32.mrb[0].mxu0
    %v813 = vpop.f32.mrb[0].mxu0
    %v814 = vadd.f32 0.0, %v813
    %v815 = vpop.f32.mrb[0].mxu0
    %816 = vmatprep.mubr.bf16.mxu0 %v759
    %817 = vmatmul.mubr.bf16.gmra.mrb[0].mxu0 %v736
    %v818 = vpop.f32.mrb[0].mxu0
    %v819 = vadd.f32 0.0, %v818
    %v820 = vpop.f32.mrb[0].mxu0
    %v821 = vpop.f32.mrb[0].mxu0
    %v822 = vadd.f32 0.0, %v821
    %v823 = vpop.f32.mrb[0].mxu0
    %824 = vmatprep.mubr.bf16.mxu0 %v762
    %825 = vmatmul.mubr.bf16.gmra.mrb[0].mxu0 %v738
    %v826 = vpop.f32.mrb[0].mxu0
    %v827 = vadd.f32 0.0, %v826
    %v828 = vpop.f32.mrb[0].mxu0
    %v829 = vpop.f32.mrb[0].mxu0
    %v830 = vadd.f32 0.0, %v829
    %v831 = vpop.f32.mrb[0].mxu0
    %832 = vmatprep.mubr.bf16.mxu0 %v765
    %833 = vmatmul.mubr.bf16.gmra.mrb[0].mxu0 %v740
    %v834 = vpop.f32.mrb[0].mxu0
    %v835 = vadd.f32 0.0, %v834
    %v836 = vpop.f32.mrb[0].mxu0
    %v837 = vpop.f32.mrb[0].mxu0
    %v838 = vadd.f32 0.0, %v837
    %v839 = vpop.f32.mrb[0].mxu0
    %840 = vmatprep.mubr.bf16.mxu0 %v768
    %841 = vmatmul.mubr.bf16.gmra.mrb[0].mxu0 %v742
    %v842 = vpop.f32.mrb[0].mxu0
    %v843 = vadd.f32 0.0, %v842
    %v844 = vpop.f32.mrb[0].mxu0
    %v845 = vpop.f32.mrb[0].mxu0
    %v846 = vadd.f32 0.0, %v845
    %v847 = vpop.f32.mrb[0].mxu0
    %848 = vmatprep.mubr.bf16.mxu0 %v771
    %849 = vmatmul.mubr.bf16.gmra.mrb[0].mxu0 %v744
    %v850 = vpop.f32.mrb[0].mxu0
    %v851 = vadd.f32 0.0, %v850
    %v852 = vpop.f32.mrb[0].mxu0
    %v853 = vpop.f32.mrb[0].mxu0
    %v854 = vadd.f32 0.0, %v853
    %v855 = vpop.f32.mrb[0].mxu0
    %856 = vmatprep.mubr.bf16.mxu0 %v774
    %857 = vmatmul.mubr.bf16.gmra.mrb[0].mxu0 %v746
    %v858 = vpop.f32.mrb[0].mxu0
    %v859 = vadd.f32 0.0, %v858
    %v860 = vpop.f32.mrb[0].mxu0
    %v861 = vpop.f32.mrb[0].mxu0
    %v862 = vpop.f32.mrb[0].mxu0
    %863 = vdwg.mxu0
    %v877 = vunpack.c.l.b16 %v287
    %v878 = vunpack.c.h.b16 %v287
    %v879 = vunpack.c.l.b16 %v288
    %v880 = vunpack.c.h.b16 %v288
    %v881 = vunpack.c.l.b16 %v289
    %v882 = vunpack.c.h.b16 %v289
    %v883 = vunpack.c.l.b16 %v290
    %v884 = vunpack.c.h.b16 %v290
    %v885 = vunpack.c.l.b16 %v291
    %v886 = vunpack.c.h.b16 %v291
    %v887 = vunpack.c.l.b16 %v292
    %v888 = vunpack.c.h.b16 %v292
    %v889 = vunpack.c.l.b16 %v293
    %v890 = vunpack.c.h.b16 %v293
    %v891 = vunpack.c.l.b16 %v294
    %v892 = vunpack.c.h.b16 %v294
    %v893 = vunpack.c.l.b16 %v295
    %v894 = vunpack.c.h.b16 %v295
    %v895 = vunpack.c.l.b16 %v296
    %v896 = vunpack.c.h.b16 %v296
    %v897 = vunpack.c.l.b16 %v297
    %v898 = vunpack.c.h.b16 %v297
    %v899 = vunpack.c.l.b16 %v298
    %v900 = vunpack.c.h.b16 %v298
    %v901 = vunpack.c.l.b16 %v299
    %v902 = vunpack.c.h.b16 %v299
    %v903 = vpack.c.b16 %v879, %v877
    %v904 = vpack.c.b16 %v880, %v878
    %v905 = vpack.c.b16 %v883, %v881
    %v906 = vpack.c.b16 %v884, %v882
    %v907 = vpack.c.b16 %v887, %v885
    %v908 = vpack.c.b16 %v888, %v886
    %v909 = vpack.c.b16 %v891, %v889
    %v910 = vpack.c.b16 %v892, %v890
    %v911 = vpack.c.b16 %v895, %v893
    %v912 = vpack.c.b16 %v896, %v894
    %v913 = vpack.c.b16 %v899, %v897
    %v914 = vpack.c.b16 %v900, %v898
    %v915 = vpack.c.b16 %v901, %v901
    %v916 = vpack.c.b16 %v902, %v902
    %v925 = vsel %vm412, %v904, 0
    %v928 = vsel %vm412, %v906, 0
    %v931 = vsel %vm412, %v908, 0
    %v934 = vsel %vm412, %v910, 0
    %v937 = vsel %vm412, %v912, 0
    %v940 = vsel %vm412, %v914, 0
    %v943 = vsel %vm412, %v916, 0
    %945 = vmatprep.subr.bf16.mxu0 0
    %946 = vmatpush1.bf16.msra.mxu0 %v339
    %947 = vmatprep.subr.bf16.mxu0 0
    %948 = vmatpush1.bf16.msra.mxu0 %v340
    %949 = vmatprep.subr.bf16.mxu0 0
    %950 = vmatpush1.bf16.msra.mxu0 %v341
    %951 = vmatprep.subr.bf16.mxu0 0
    %952 = vmatpush1.bf16.msra.mxu0 %v342
    %953 = vmatprep.subr.bf16.mxu0 0
    %954 = vmatpush1.bf16.msra.mxu0 %v343
    %955 = vmatprep.subr.bf16.mxu0 0
    %956 = vmatpush1.bf16.msra.mxu0 %v344
    %957 = vmatprep.subr.bf16.mxu0 0
    %958 = vmatpush1.bf16.msra.mxu0 %v345
    %959 = vmatprep.subr.bf16.mxu0 0
    %960 = vmatpush1.bf16.msra.mxu0 %v346
    %961 = vmatprep.subr.bf16.mxu0 0
    %962 = vmatpush1.bf16.msra.mxu0 %v347
    %963 = vmatprep.subr.bf16.mxu0 0
    %964 = vmatpush1.bf16.msra.mxu0 %v348
    %965 = vmatprep.subr.bf16.mxu0 0
    %966 = vmatpush1.bf16.msra.mxu0 %v349
    %967 = vmatprep.subr.bf16.mxu0 0
    %968 = vmatpush1.bf16.msra.mxu0 %v350
    %969 = vmatprep.subr.bf16.mxu0 0
    %970 = vmatpush1.bf16.msra.mxu0 %v436
    %971 = vmatprep.subr.bf16.mxu0 0
    %972 = vmatpush1.bf16.msra.mxu0 0
    %973 = vmatprep.subr.bf16.mxu0 0
    %974 = vmatpush1.bf16.msra.mxu0 0
    %975 = vmatprep.subr.bf16.mxu0 0
    %976 = vmatpush1.bf16.msra.mxu0 0
    %977 = vmatprep.mubr.bf16.mxu0 %v925
    %978 = vmatmul.mubr.bf16.gmra.mrb[0].mxu0 %v903
    %v979 = vpop.f32.mrb[0].mxu0
    %v980 = vadd.f32 0.0, %v979
    %v981 = vpop.f32.mrb[0].mxu0
    %v982 = vpop.f32.mrb[0].mxu0
    %v983 = vadd.f32 0.0, %v982
    %v984 = vpop.f32.mrb[0].mxu0
    %985 = vmatprep.mubr.bf16.mxu0 %v928
    %986 = vmatmul.mubr.bf16.gmra.mrb[0].mxu0 %v905
    %v987 = vpop.f32.mrb[0].mxu0
    %v988 = vadd.f32 0.0, %v987
    %v989 = vpop.f32.mrb[0].mxu0
    %v990 = vpop.f32.mrb[0].mxu0
    %v991 = vadd.f32 0.0, %v990
    %v992 = vpop.f32.mrb[0].mxu0
    %993 = vmatprep.mubr.bf16.mxu0 %v931
    %994 = vmatmul.mubr.bf16.gmra.mrb[0].mxu0 %v907
    %v995 = vpop.f32.mrb[0].mxu0
    %v996 = vadd.f32 0.0, %v995
    %v997 = vpop.f32.mrb[0].mxu0
    %v998 = vpop.f32.mrb[0].mxu0
    %v999 = vadd.f32 0.0, %v998
    %v1000 = vpop.f32.mrb[0].mxu0
    %1001 = vmatprep.mubr.bf16.mxu0 %v934
    %1002 = vmatmul.mubr.bf16.gmra.mrb[0].mxu0 %v909
    %v1003 = vpop.f32.mrb[0].mxu0
    %v1004 = vadd.f32 0.0, %v1003
    %v1005 = vpop.f32.mrb[0].mxu0
    %v1006 = vpop.f32.mrb[0].mxu0
    %v1007 = vadd.f32 0.0, %v1006
    %v1008 = vpop.f32.mrb[0].mxu0
    %1009 = vmatprep.mubr.bf16.mxu0 %v937
    %1010 = vmatmul.mubr.bf16.gmra.mrb[0].mxu0 %v911
    %v1011 = vpop.f32.mrb[0].mxu0
    %v1012 = vadd.f32 0.0, %v1011
    %v1013 = vpop.f32.mrb[0].mxu0
    %v1014 = vpop.f32.mrb[0].mxu0
    %v1015 = vadd.f32 0.0, %v1014
    %v1016 = vpop.f32.mrb[0].mxu0
    %1017 = vmatprep.mubr.bf16.mxu0 %v940
    %1018 = vmatmul.mubr.bf16.gmra.mrb[0].mxu0 %v913
    %v1019 = vpop.f32.mrb[0].mxu0
    %v1020 = vadd.f32 0.0, %v1019
    %v1021 = vpop.f32.mrb[0].mxu0
    %v1022 = vpop.f32.mrb[0].mxu0
    %v1023 = vadd.f32 0.0, %v1022
    %v1024 = vpop.f32.mrb[0].mxu0
    %1025 = vmatprep.mubr.bf16.mxu0 %v943
    %1026 = vmatmul.mubr.bf16.gmra.mrb[0].mxu0 %v915
    %v1027 = vpop.f32.mrb[0].mxu0
    %v1028 = vadd.f32 0.0, %v1027
    %v1029 = vpop.f32.mrb[0].mxu0
    %v1030 = vpop.f32.mrb[0].mxu0
    %v1031 = vpop.f32.mrb[0].mxu0
    %1032 = vdwg.mxu0
    %v1046 = vunpack.c.l.b16 %v300
    %v1047 = vunpack.c.h.b16 %v300
    %v1048 = vunpack.c.l.b16 %v301
    %v1049 = vunpack.c.h.b16 %v301
    %v1050 = vunpack.c.l.b16 %v302
    %v1051 = vunpack.c.h.b16 %v302
    %v1052 = vunpack.c.l.b16 %v303
    %v1053 = vunpack.c.h.b16 %v303
    %v1054 = vunpack.c.l.b16 %v304
    %v1055 = vunpack.c.h.b16 %v304
    %v1056 = vunpack.c.l.b16 %v305
    %v1057 = vunpack.c.h.b16 %v305
    %v1058 = vunpack.c.l.b16 %v306
    %v1059 = vunpack.c.h.b16 %v306
    %v1060 = vunpack.c.l.b16 %v307
    %v1061 = vunpack.c.h.b16 %v307
    %v1062 = vunpack.c.l.b16 %v308
    %v1063 = vunpack.c.h.b16 %v308
    %v1064 = vunpack.c.l.b16 %v309
    %v1065 = vunpack.c.h.b16 %v309
    %v1066 = vunpack.c.l.b16 %v310
    %v1067 = vunpack.c.h.b16 %v310
    %v1068 = vunpack.c.l.b16 %v311
    %v1069 = vunpack.c.h.b16 %v311
    %v1070 = vunpack.c.l.b16 %v312
    %v1071 = vunpack.c.h.b16 %v312
    %v1072 = vpack.c.b16 %v1048, %v1046
    %v1073 = vpack.c.b16 %v1049, %v1047
    %v1074 = vpack.c.b16 %v1052, %v1050
    %v1075 = vpack.c.b16 %v1053, %v1051
    %v1076 = vpack.c.b16 %v1056, %v1054
    %v1077 = vpack.c.b16 %v1057, %v1055
    %v1078 = vpack.c.b16 %v1060, %v1058
    %v1079 = vpack.c.b16 %v1061, %v1059
    %v1080 = vpack.c.b16 %v1064, %v1062
    %v1081 = vpack.c.b16 %v1065, %v1063
    %v1082 = vpack.c.b16 %v1068, %v1066
    %v1083 = vpack.c.b16 %v1069, %v1067
    %v1084 = vpack.c.b16 %v1070, %v1070
    %v1085 = vpack.c.b16 %v1071, %v1071
    %v1094 = vsel %vm412, %v1073, 0
    %v1097 = vsel %vm412, %v1075, 0
    %v1100 = vsel %vm412, %v1077, 0
    %v1103 = vsel %vm412, %v1079, 0
    %v1106 = vsel %vm412, %v1081, 0
    %v1109 = vsel %vm412, %v1083, 0
    %v1112 = vsel %vm412, %v1085, 0
    %1114 = vmatprep.subr.bf16.mxu0 0
    %1115 = vmatpush1.bf16.msra.mxu0 %v339
    %1116 = vmatprep.subr.bf16.mxu0 0
    %1117 = vmatpush1.bf16.msra.mxu0 %v340
    %1118 = vmatprep.subr.bf16.mxu0 0
    %1119 = vmatpush1.bf16.msra.mxu0 %v341
    %1120 = vmatprep.subr.bf16.mxu0 0
    %1121 = vmatpush1.bf16.msra.mxu0 %v342
    %1122 = vmatprep.subr.bf16.mxu0 0
    %1123 = vmatpush1.bf16.msra.mxu0 %v343
    %1124 = vmatprep.subr.bf16.mxu0 0
    %1125 = vmatpush1.bf16.msra.mxu0 %v344
    %1126 = vmatprep.subr.bf16.mxu0 0
    %1127 = vmatpush1.bf16.msra.mxu0 %v345
    %1128 = vmatprep.subr.bf16.mxu0 0
    %1129 = vmatpush1.bf16.msra.mxu0 %v346
    %1130 = vmatprep.subr.bf16.mxu0 0
    %1131 = vmatpush1.bf16.msra.mxu0 %v347
    %1132 = vmatprep.subr.bf16.mxu0 0
    %1133 = vmatpush1.bf16.msra.mxu0 %v348
    %1134 = vmatprep.subr.bf16.mxu0 0
    %1135 = vmatpush1.bf16.msra.mxu0 %v349
    %1136 = vmatprep.subr.bf16.mxu0 0
    %1137 = vmatpush1.bf16.msra.mxu0 %v350
    %1138 = vmatprep.subr.bf16.mxu0 0
    %1139 = vmatpush1.bf16.msra.mxu0 %v436
    %1140 = vmatprep.subr.bf16.mxu0 0
    %1141 = vmatpush1.bf16.msra.mxu0 0
    %1142 = vmatprep.subr.bf16.mxu0 0
    %1143 = vmatpush1.bf16.msra.mxu0 0
    %1144 = vmatprep.subr.bf16.mxu0 0
    %1145 = vmatpush1.bf16.msra.mxu0 0
    %1146 = vmatprep.mubr.bf16.mxu0 %v1094
    %1147 = vmatmul.mubr.bf16.gmra.mrb[0].mxu0 %v1072
    %v1148 = vpop.f32.mrb[0].mxu0
    %v1149 = vadd.f32 0.0, %v1148
    %v1150 = vpop.f32.mrb[0].mxu0
    %v1151 = vpop.f32.mrb[0].mxu0
    %v1152 = vadd.f32 0.0, %v1151
    %v1153 = vpop.f32.mrb[0].mxu0
    %1154 = vmatprep.mubr.bf16.mxu0 %v1097
    %1155 = vmatmul.mubr.bf16.gmra.mrb[0].mxu0 %v1074
    %v1156 = vpop.f32.mrb[0].mxu0
    %v1157 = vadd.f32 0.0, %v1156
    %v1158 = vpop.f32.mrb[0].mxu0
    %v1159 = vpop.f32.mrb[0].mxu0
    %v1160 = vadd.f32 0.0, %v1159
    %v1161 = vpop.f32.mrb[0].mxu0
    %1162 = vmatprep.mubr.bf16.mxu0 %v1100
    %1163 = vmatmul.mubr.bf16.gmra.mrb[0].mxu0 %v1076
    %v1164 = vpop.f32.mrb[0].mxu0
    %v1165 = vadd.f32 0.0, %v1164
    %v1166 = vpop.f32.mrb[0].mxu0
    %v1167 = vpop.f32.mrb[0].mxu0
    %v1168 = vadd.f32 0.0, %v1167
    %v1169 = vpop.f32.mrb[0].mxu0
    %1170 = vmatprep.mubr.bf16.mxu0 %v1103
    %1171 = vmatmul.mubr.bf16.gmra.mrb[0].mxu0 %v1078
    %v1172 = vpop.f32.mrb[0].mxu0
    %v1173 = vadd.f32 0.0, %v1172
    %v1174 = vpop.f32.mrb[0].mxu0
    %v1175 = vpop.f32.mrb[0].mxu0
    %v1176 = vadd.f32 0.0, %v1175
    %v1177 = vpop.f32.mrb[0].mxu0
    %1178 = vmatprep.mubr.bf16.mxu0 %v1106
    %1179 = vmatmul.mubr.bf16.gmra.mrb[0].mxu0 %v1080
    %v1180 = vpop.f32.mrb[0].mxu0
    %v1181 = vadd.f32 0.0, %v1180
    %v1182 = vpop.f32.mrb[0].mxu0
    %v1183 = vpop.f32.mrb[0].mxu0
    %v1184 = vadd.f32 0.0, %v1183
    %v1185 = vpop.f32.mrb[0].mxu0
    %1186 = vmatprep.mubr.bf16.mxu0 %v1109
    %1187 = vmatmul.mubr.bf16.gmra.mrb[0].mxu0 %v1082
    %v1188 = vpop.f32.mrb[0].mxu0
    %v1189 = vadd.f32 0.0, %v1188
    %v1190 = vpop.f32.mrb[0].mxu0
    %v1191 = vpop.f32.mrb[0].mxu0
    %v1192 = vadd.f32 0.0, %v1191
    %v1193 = vpop.f32.mrb[0].mxu0
    %1194 = vmatprep.mubr.bf16.mxu0 %v1112
    %1195 = vmatmul.mubr.bf16.gmra.mrb[0].mxu0 %v1084
    %v1196 = vpop.f32.mrb[0].mxu0
    %v1197 = vadd.f32 0.0, %v1196
    %v1198 = vpop.f32.mrb[0].mxu0
    %v1199 = vpop.f32.mrb[0].mxu0
    %v1200 = vpop.f32.mrb[0].mxu0
    %1201 = vdwg.mxu0
    %v1215 = vunpack.c.l.b16 %v313
    %v1216 = vunpack.c.h.b16 %v313
    %v1217 = vunpack.c.l.b16 %v314
    %v1218 = vunpack.c.h.b16 %v314
    %v1219 = vunpack.c.l.b16 %v315
    %v1220 = vunpack.c.h.b16 %v315
    %v1221 = vunpack.c.l.b16 %v316
    %v1222 = vunpack.c.h.b16 %v316
    %v1223 = vunpack.c.l.b16 %v317
    %v1224 = vunpack.c.h.b16 %v317
    %v1225 = vunpack.c.l.b16 %v318
    %v1226 = vunpack.c.h.b16 %v318
    %v1227 = vunpack.c.l.b16 %v319
    %v1228 = vunpack.c.h.b16 %v319
    %v1229 = vunpack.c.l.b16 %v320
    %v1230 = vunpack.c.h.b16 %v320
    %v1231 = vunpack.c.l.b16 %v321
    %v1232 = vunpack.c.h.b16 %v321
    %v1233 = vunpack.c.l.b16 %v322
    %v1234 = vunpack.c.h.b16 %v322
    %v1235 = vunpack.c.l.b16 %v323
    %v1236 = vunpack.c.h.b16 %v323
    %v1237 = vunpack.c.l.b16 %v324
    %v1238 = vunpack.c.h.b16 %v324
    %v1239 = vunpack.c.l.b16 %v325
    %v1240 = vunpack.c.h.b16 %v325
    %v1241 = vpack.c.b16 %v1217, %v1215
    %v1242 = vpack.c.b16 %v1218, %v1216
    %v1243 = vpack.c.b16 %v1221, %v1219
    %v1244 = vpack.c.b16 %v1222, %v1220
    %v1245 = vpack.c.b16 %v1225, %v1223
    %v1246 = vpack.c.b16 %v1226, %v1224
    %v1247 = vpack.c.b16 %v1229, %v1227
    %v1248 = vpack.c.b16 %v1230, %v1228
    %v1249 = vpack.c.b16 %v1233, %v1231
    %v1250 = vpack.c.b16 %v1234, %v1232
    %v1251 = vpack.c.b16 %v1237, %v1235
    %v1252 = vpack.c.b16 %v1238, %v1236
    %v1253 = vpack.c.b16 %v1239, %v1239
    %v1254 = vpack.c.b16 %v1240, %v1240
    %v1263 = vsel %vm412, %v1242, 0
    %v1266 = vsel %vm412, %v1244, 0
    %v1269 = vsel %vm412, %v1246, 0
    %v1272 = vsel %vm412, %v1248, 0
    %v1275 = vsel %vm412, %v1250, 0
    %v1278 = vsel %vm412, %v1252, 0
    %v1281 = vsel %vm412, %v1254, 0
    %1283 = vmatprep.subr.bf16.mxu0 0
    %1284 = vmatpush1.bf16.msra.mxu0 %v339
    %1285 = vmatprep.subr.bf16.mxu0 0
    %1286 = vmatpush1.bf16.msra.mxu0 %v340
    %1287 = vmatprep.subr.bf16.mxu0 0
    %1288 = vmatpush1.bf16.msra.mxu0 %v341
    %1289 = vmatprep.subr.bf16.mxu0 0
    %1290 = vmatpush1.bf16.msra.mxu0 %v342
    %1291 = vmatprep.subr.bf16.mxu0 0
    %1292 = vmatpush1.bf16.msra.mxu0 %v343
    %1293 = vmatprep.subr.bf16.mxu0 0
    %1294 = vmatpush1.bf16.msra.mxu0 %v344
    %1295 = vmatprep.subr.bf16.mxu0 0
    %1296 = vmatpush1.bf16.msra.mxu0 %v345
    %1297 = vmatprep.subr.bf16.mxu0 0
    %1298 = vmatpush1.bf16.msra.mxu0 %v346
    %1299 = vmatprep.subr.bf16.mxu0 0
    %1300 = vmatpush1.bf16.msra.mxu0 %v347
    %1301 = vmatprep.subr.bf16.mxu0 0
    %1302 = vmatpush1.bf16.msra.mxu0 %v348
    %1303 = vmatprep.subr.bf16.mxu0 0
    %1304 = vmatpush1.bf16.msra.mxu0 %v349
    %1305 = vmatprep.subr.bf16.mxu0 0
    %1306 = vmatpush1.bf16.msra.mxu0 %v350
    %1307 = vmatprep.subr.bf16.mxu0 0
    %1308 = vmatpush1.bf16.msra.mxu0 %v436
    %1309 = vmatprep.subr.bf16.mxu0 0
    %1310 = vmatpush1.bf16.msra.mxu0 0
    %1311 = vmatprep.subr.bf16.mxu0 0
    %1312 = vmatpush1.bf16.msra.mxu0 0
    %1313 = vmatprep.subr.bf16.mxu0 0
    %1314 = vmatpush1.bf16.msra.mxu0 0
    %1315 = vmatprep.mubr.bf16.mxu0 %v1263
    %1316 = vmatmul.mubr.bf16.gmra.mrb[0].mxu0 %v1241
    %v1317 = vpop.f32.mrb[0].mxu0
    %v1318 = vadd.f32 0.0, %v1317
    %v1319 = vpop.f32.mrb[0].mxu0
    %v1320 = vpop.f32.mrb[0].mxu0
    %v1321 = vadd.f32 0.0, %v1320
    %v1322 = vpop.f32.mrb[0].mxu0
    %1323 = vmatprep.mubr.bf16.mxu0 %v1266
    %1324 = vmatmul.mubr.bf16.gmra.mrb[0].mxu0 %v1243
    %v1325 = vpop.f32.mrb[0].mxu0
    %v1326 = vadd.f32 0.0, %v1325
    %v1327 = vpop.f32.mrb[0].mxu0
    %v1328 = vpop.f32.mrb[0].mxu0
    %v1329 = vadd.f32 0.0, %v1328
    %v1330 = vpop.f32.mrb[0].mxu0
    %1331 = vmatprep.mubr.bf16.mxu0 %v1269
    %1332 = vmatmul.mubr.bf16.gmra.mrb[0].mxu0 %v1245
    %v1333 = vpop.f32.mrb[0].mxu0
    %v1334 = vadd.f32 0.0, %v1333
    %v1335 = vpop.f32.mrb[0].mxu0
    %v1336 = vpop.f32.mrb[0].mxu0
    %v1337 = vadd.f32 0.0, %v1336
    %v1338 = vpop.f32.mrb[0].mxu0
    %1339 = vmatprep.mubr.bf16.mxu0 %v1272
    %1340 = vmatmul.mubr.bf16.gmra.mrb[0].mxu0 %v1247
    %v1341 = vpop.f32.mrb[0].mxu0
    %v1342 = vadd.f32 0.0, %v1341
    %v1343 = vpop.f32.mrb[0].mxu0
    %v1344 = vpop.f32.mrb[0].mxu0
    %v1345 = vadd.f32 0.0, %v1344
    %v1346 = vpop.f32.mrb[0].mxu0
    %1347 = vmatprep.mubr.bf16.mxu0 %v1275
    %1348 = vmatmul.mubr.bf16.gmra.mrb[0].mxu0 %v1249
    %v1349 = vpop.f32.mrb[0].mxu0
    %v1350 = vadd.f32 0.0, %v1349
    %v1351 = vpop.f32.mrb[0].mxu0
    %v1352 = vpop.f32.mrb[0].mxu0
    %v1353 = vadd.f32 0.0, %v1352
    %v1354 = vpop.f32.mrb[0].mxu0
    %1355 = vmatprep.mubr.bf16.mxu0 %v1278
    %1356 = vmatmul.mubr.bf16.gmra.mrb[0].mxu0 %v1251
    %v1357 = vpop.f32.mrb[0].mxu0
    %v1358 = vadd.f32 0.0, %v1357
    %v1359 = vpop.f32.mrb[0].mxu0
    %v1360 = vpop.f32.mrb[0].mxu0
    %v1361 = vadd.f32 0.0, %v1360
    %v1362 = vpop.f32.mrb[0].mxu0
    %1363 = vmatprep.mubr.bf16.mxu0 %v1281
    %1364 = vmatmul.mubr.bf16.gmra.mrb[0].mxu0 %v1253
    %v1365 = vpop.f32.mrb[0].mxu0
    %v1366 = vadd.f32 0.0, %v1365
    %v1367 = vpop.f32.mrb[0].mxu0
    %v1368 = vpop.f32.mrb[0].mxu0
    %v1369 = vpop.f32.mrb[0].mxu0
    %1370 = vdwg.mxu0
    %v1384 = vunpack.c.l.b16 %v326
    %v1385 = vunpack.c.h.b16 %v326
    %v1386 = vunpack.c.l.b16 %v327
    %v1387 = vunpack.c.h.b16 %v327
    %v1388 = vunpack.c.l.b16 %v328
    %v1389 = vunpack.c.h.b16 %v328
    %v1390 = vunpack.c.l.b16 %v329
    %v1391 = vunpack.c.h.b16 %v329
    %v1392 = vunpack.c.l.b16 %v330
    %v1393 = vunpack.c.h.b16 %v330
    %v1394 = vunpack.c.l.b16 %v331
    %v1395 = vunpack.c.h.b16 %v331
    %v1396 = vunpack.c.l.b16 %v332
    %v1397 = vunpack.c.h.b16 %v332
    %v1398 = vunpack.c.l.b16 %v333
    %v1399 = vunpack.c.h.b16 %v333
    %v1400 = vunpack.c.l.b16 %v334
    %v1401 = vunpack.c.h.b16 %v334
    %v1402 = vunpack.c.l.b16 %v335
    %v1403 = vunpack.c.h.b16 %v335
    %v1404 = vunpack.c.l.b16 %v336
    %v1405 = vunpack.c.h.b16 %v336
    %v1406 = vunpack.c.l.b16 %v337
    %v1407 = vunpack.c.h.b16 %v337
    %v1408 = vunpack.c.l.b16 %v338
    %v1409 = vunpack.c.h.b16 %v338
    %v1410 = vpack.c.b16 %v1386, %v1384
    %v1411 = vpack.c.b16 %v1387, %v1385
    %v1412 = vpack.c.b16 %v1390, %v1388
    %v1413 = vpack.c.b16 %v1391, %v1389
    %v1414 = vpack.c.b16 %v1394, %v1392
    %v1415 = vpack.c.b16 %v1395, %v1393
    %v1416 = vpack.c.b16 %v1398, %v1396
    %v1417 = vpack.c.b16 %v1399, %v1397
    %v1418 = vpack.c.b16 %v1402, %v1400
    %v1419 = vpack.c.b16 %v1403, %v1401
    %v1420 = vpack.c.b16 %v1406, %v1404
    %v1421 = vpack.c.b16 %v1407, %v1405
    %v1422 = vpack.c.b16 %v1408, %v1408
    %v1423 = vpack.c.b16 %v1409, %v1409
    %v1432 = vsel %vm412, %v1411, 0
    %v1435 = vsel %vm412, %v1413, 0
    %v1438 = vsel %vm412, %v1415, 0
    %v1441 = vsel %vm412, %v1417, 0
    %v1444 = vsel %vm412, %v1419, 0
    %v1447 = vsel %vm412, %v1421, 0
    %v1450 = vsel %vm412, %v1423, 0
    %1452 = vmatprep.subr.bf16.mxu0 0
    %1453 = vmatpush1.bf16.msra.mxu0 %v339
    %1454 = vmatprep.subr.bf16.mxu0 0
    %1455 = vmatpush1.bf16.msra.mxu0 %v340
    %1456 = vmatprep.subr.bf16.mxu0 0
    %1457 = vmatpush1.bf16.msra.mxu0 %v341
    %1458 = vmatprep.subr.bf16.mxu0 0
    %1459 = vmatpush1.bf16.msra.mxu0 %v342
    %1460 = vmatprep.subr.bf16.mxu0 0
    %1461 = vmatpush1.bf16.msra.mxu0 %v343
    %1462 = vmatprep.subr.bf16.mxu0 0
    %1463 = vmatpush1.bf16.msra.mxu0 %v344
    %1464 = vmatprep.subr.bf16.mxu0 0
    %1465 = vmatpush1.bf16.msra.mxu0 %v345
    %1466 = vmatprep.subr.bf16.mxu0 0
    %1467 = vmatpush1.bf16.msra.mxu0 %v346
    %1468 = vmatprep.subr.bf16.mxu0 0
    %1469 = vmatpush1.bf16.msra.mxu0 %v347
    %1470 = vmatprep.subr.bf16.mxu0 0
    %1471 = vmatpush1.bf16.msra.mxu0 %v348
    %1472 = vmatprep.subr.bf16.mxu0 0
    %1473 = vmatpush1.bf16.msra.mxu0 %v349
    %1474 = vmatprep.subr.bf16.mxu0 0
    %1475 = vmatpush1.bf16.msra.mxu0 %v350
    %1476 = vmatprep.subr.bf16.mxu0 0
    %1477 = vmatpush1.bf16.msra.mxu0 %v436
    %1478 = vmatprep.subr.bf16.mxu0 0
    %1479 = vmatpush1.bf16.msra.mxu0 0
    %1480 = vmatprep.subr.bf16.mxu0 0
    %1481 = vmatpush1.bf16.msra.mxu0 0
    %1482 = vmatprep.subr.bf16.mxu0 0
    %1483 = vmatpush1.bf16.msra.mxu0 0
    %1484 = vmatprep.mubr.bf16.mxu0 %v1432
    %1485 = vmatmul.mubr.bf16.gmra.mrb[0].mxu0 %v1410
    %v1486 = vpop.f32.mrb[0].mxu0
    %v1487 = vadd.f32 0.0, %v1486
    %v1488 = vpop.f32.mrb[0].mxu0
    %v1489 = vpop.f32.mrb[0].mxu0
    %v1490 = vadd.f32 0.0, %v1489
    %v1491 = vpop.f32.mrb[0].mxu0
    %1492 = vmatprep.mubr.bf16.mxu0 %v1435
    %1493 = vmatmul.mubr.bf16.gmra.mrb[0].mxu0 %v1412
    %v1494 = vpop.f32.mrb[0].mxu0
    %v1495 = vadd.f32 0.0, %v1494
    %v1496 = vpop.f32.mrb[0].mxu0
    %v1497 = vpop.f32.mrb[0].mxu0
    %v1498 = vadd.f32 0.0, %v1497
    %v1499 = vpop.f32.mrb[0].mxu0
    %1500 = vmatprep.mubr.bf16.mxu0 %v1438
    %1501 = vmatmul.mubr.bf16.gmra.mrb[0].mxu0 %v1414
    %v1502 = vpop.f32.mrb[0].mxu0
    %v1503 = vadd.f32 0.0, %v1502
    %v1504 = vpop.f32.mrb[0].mxu0
    %v1505 = vpop.f32.mrb[0].mxu0
    %v1506 = vadd.f32 0.0, %v1505
    %v1507 = vpop.f32.mrb[0].mxu0
    %1508 = vmatprep.mubr.bf16.mxu0 %v1441
    %1509 = vmatmul.mubr.bf16.gmra.mrb[0].mxu0 %v1416
    %v1510 = vpop.f32.mrb[0].mxu0
    %v1511 = vadd.f32 0.0, %v1510
    %v1512 = vpop.f32.mrb[0].mxu0
    %v1513 = vpop.f32.mrb[0].mxu0
    %v1514 = vadd.f32 0.0, %v1513
    %v1515 = vpop.f32.mrb[0].mxu0
    %1516 = vmatprep.mubr.bf16.mxu0 %v1444
    %1517 = vmatmul.mubr.bf16.gmra.mrb[0].mxu0 %v1418
    %v1518 = vpop.f32.mrb[0].mxu0
    %v1519 = vadd.f32 0.0, %v1518
    %v1520 = vpop.f32.mrb[0].mxu0
    %v1521 = vpop.f32.mrb[0].mxu0
    %v1522 = vadd.f32 0.0, %v1521
    %v1523 = vpop.f32.mrb[0].mxu0
    %1524 = vmatprep.mubr.bf16.mxu0 %v1447
    %1525 = vmatmul.mubr.bf16.gmra.mrb[0].mxu0 %v1420
    %v1526 = vpop.f32.mrb[0].mxu0
    %v1527 = vadd.f32 0.0, %v1526
    %v1528 = vpop.f32.mrb[0].mxu0
    %v1529 = vpop.f32.mrb[0].mxu0
    %v1530 = vadd.f32 0.0, %v1529
    %v1531 = vpop.f32.mrb[0].mxu0
    %1532 = vmatprep.mubr.bf16.mxu0 %v1450
    %1533 = vmatmul.mubr.bf16.gmra.mrb[0].mxu0 %v1422
    %v1534 = vpop.f32.mrb[0].mxu0
    %v1535 = vadd.f32 0.0, %v1534
    %v1536 = vpop.f32.mrb[0].mxu0
    %v1537 = vpop.f32.mrb[0].mxu0
    %v1538 = vpop.f32.mrb[0].mxu0
    %1539 = vdwg.mxu0
    %1553 = vrot.lane.b32.xlu0 %v642, 16
    %v1554 = vpop.permute.xlu0 %1553
    %1555 = vrot.lane.b32.xlu0 %v645, 16
    %v1556 = vpop.permute.xlu0 %1555
    %1557 = vrot.lane.b32.xlu0 %v650, 16
    %v1558 = vpop.permute.xlu0 %1557
    %1559 = vrot.lane.b32.xlu0 %v653, 16
    %v1560 = vpop.permute.xlu0 %1559
    %1561 = vrot.lane.b32.xlu0 %v658, 16
    %v1562 = vpop.permute.xlu0 %1561
    %1563 = vrot.lane.b32.xlu0 %v661, 16
    %v1564 = vpop.permute.xlu0 %1563
    %1565 = vrot.lane.b32.xlu0 %v666, 16
    %v1566 = vpop.permute.xlu0 %1565
    %1567 = vrot.lane.b32.xlu0 %v669, 16
    %v1568 = vpop.permute.xlu0 %1567
    %1569 = vrot.lane.b32.xlu0 %v674, 16
    %v1570 = vpop.permute.xlu0 %1569
    %1571 = vrot.lane.b32.xlu0 %v677, 16
    %v1572 = vpop.permute.xlu0 %1571
    %1573 = vrot.lane.b32.xlu0 %v682, 16
    %v1574 = vpop.permute.xlu0 %1573
    %1575 = vrot.lane.b32.xlu0 %v685, 16
    %v1576 = vpop.permute.xlu0 %1575
    %1577 = vrot.lane.b32.xlu0 %v690, 16
    %v1578 = vpop.permute.xlu0 %1577
    %1605 = vrot.lane.b32.xlu0 %v811, 32
    %v1606 = vpop.permute.xlu0 %1605
    %1607 = vrot.lane.b32.xlu0 %v814, 32
    %v1608 = vpop.permute.xlu0 %1607
    %1609 = vrot.lane.b32.xlu0 %v819, 32
    %v1610 = vpop.permute.xlu0 %1609
    %1611 = vrot.lane.b32.xlu0 %v822, 32
    %v1612 = vpop.permute.xlu0 %1611
    %1613 = vrot.lane.b32.xlu0 %v827, 32
    %v1614 = vpop.permute.xlu0 %1613
    %1615 = vrot.lane.b32.xlu0 %v830, 32
    %v1616 = vpop.permute.xlu0 %1615
    %1617 = vrot.lane.b32.xlu0 %v835, 32
    %v1618 = vpop.permute.xlu0 %1617
    %1619 = vrot.lane.b32.xlu0 %v838, 32
    %v1620 = vpop.permute.xlu0 %1619
    %1621 = vrot.lane.b32.xlu0 %v843, 32
    %v1622 = vpop.permute.xlu0 %1621
    %1623 = vrot.lane.b32.xlu0 %v846, 32
    %v1624 = vpop.permute.xlu0 %1623
    %1625 = vrot.lane.b32.xlu0 %v851, 32
    %v1626 = vpop.permute.xlu0 %1625
    %1627 = vrot.lane.b32.xlu0 %v854, 32
    %v1628 = vpop.permute.xlu0 %1627
    %1629 = vrot.lane.b32.xlu0 %v859, 32
    %v1630 = vpop.permute.xlu0 %1629
    %1657 = vrot.lane.b32.xlu0 %v980, 48
    %v1658 = vpop.permute.xlu0 %1657
    %1659 = vrot.lane.b32.xlu0 %v983, 48
    %v1660 = vpop.permute.xlu0 %1659
    %1661 = vrot.lane.b32.xlu0 %v988, 48
    %v1662 = vpop.permute.xlu0 %1661
    %1663 = vrot.lane.b32.xlu0 %v991, 48
    %v1664 = vpop.permute.xlu0 %1663
    %1665 = vrot.lane.b32.xlu0 %v996, 48
    %v1666 = vpop.permute.xlu0 %1665
    %1667 = vrot.lane.b32.xlu0 %v999, 48
    %v1668 = vpop.permute.xlu0 %1667
    %1669 = vrot.lane.b32.xlu0 %v1004, 48
    %v1670 = vpop.permute.xlu0 %1669
    %1671 = vrot.lane.b32.xlu0 %v1007, 48
    %v1672 = vpop.permute.xlu0 %1671
    %1673 = vrot.lane.b32.xlu0 %v1012, 48
    %v1674 = vpop.permute.xlu0 %1673
    %1675 = vrot.lane.b32.xlu0 %v1015, 48
    %v1676 = vpop.permute.xlu0 %1675
    %1677 = vrot.lane.b32.xlu0 %v1020, 48
    %v1678 = vpop.permute.xlu0 %1677
    %1679 = vrot.lane.b32.xlu0 %v1023, 48
    %v1680 = vpop.permute.xlu0 %1679
    %1681 = vrot.lane.b32.xlu0 %v1028, 48
    %v1682 = vpop.permute.xlu0 %1681
    %1709 = vrot.lane.b32.xlu0 %v1149, 64
    %v1710 = vpop.permute.xlu0 %1709
    %1711 = vrot.lane.b32.xlu0 %v1152, 64
    %v1712 = vpop.permute.xlu0 %1711
    %1713 = vrot.lane.b32.xlu0 %v1157, 64
    %v1714 = vpop.permute.xlu0 %1713
    %1715 = vrot.lane.b32.xlu0 %v1160, 64
    %v1716 = vpop.permute.xlu0 %1715
    %1717 = vrot.lane.b32.xlu0 %v1165, 64
    %v1718 = vpop.permute.xlu0 %1717
    %1719 = vrot.lane.b32.xlu0 %v1168, 64
    %v1720 = vpop.permute.xlu0 %1719
    %1721 = vrot.lane.b32.xlu0 %v1173, 64
    %v1722 = vpop.permute.xlu0 %1721
    %1723 = vrot.lane.b32.xlu0 %v1176, 64
    %v1724 = vpop.permute.xlu0 %1723
    %1725 = vrot.lane.b32.xlu0 %v1181, 64
    %v1726 = vpop.permute.xlu0 %1725
    %1727 = vrot.lane.b32.xlu0 %v1184, 64
    %v1728 = vpop.permute.xlu0 %1727
    %1729 = vrot.lane.b32.xlu0 %v1189, 64
    %v1730 = vpop.permute.xlu0 %1729
    %1731 = vrot.lane.b32.xlu0 %v1192, 64
    %v1732 = vpop.permute.xlu0 %1731
    %1733 = vrot.lane.b32.xlu0 %v1197, 64
    %v1734 = vpop.permute.xlu0 %1733
    %1761 = vrot.lane.b32.xlu0 %v1318, 80
    %v1762 = vpop.permute.xlu0 %1761
    %1763 = vrot.lane.b32.xlu0 %v1321, 80
    %v1764 = vpop.permute.xlu0 %1763
    %1765 = vrot.lane.b32.xlu0 %v1326, 80
    %v1766 = vpop.permute.xlu0 %1765
    %1767 = vrot.lane.b32.xlu0 %v1329, 80
    %v1768 = vpop.permute.xlu0 %1767
    %1769 = vrot.lane.b32.xlu0 %v1334, 80
    %v1770 = vpop.permute.xlu0 %1769
    %1771 = vrot.lane.b32.xlu0 %v1337, 80
    %v1772 = vpop.permute.xlu0 %1771
    %1773 = vrot.lane.b32.xlu0 %v1342, 80
    %v1774 = vpop.permute.xlu0 %1773
    %1775 = vrot.lane.b32.xlu0 %v1345, 80
    %v1776 = vpop.permute.xlu0 %1775
    %1777 = vrot.lane.b32.xlu0 %v1350, 80
    %v1778 = vpop.permute.xlu0 %1777
    %1779 = vrot.lane.b32.xlu0 %v1353, 80
    %v1780 = vpop.permute.xlu0 %1779
    %1781 = vrot.lane.b32.xlu0 %v1358, 80
    %v1782 = vpop.permute.xlu0 %1781
    %1783 = vrot.lane.b32.xlu0 %v1361, 80
    %v1784 = vpop.permute.xlu0 %1783
    %1785 = vrot.lane.b32.xlu0 %v1366, 80
    %v1786 = vpop.permute.xlu0 %1785
    %1813 = vrot.lane.b32.xlu0 %v1487, 96
    %v1814 = vpop.permute.xlu0 %1813
    %1815 = vrot.lane.b32.xlu0 %v1490, 96
    %v1816 = vpop.permute.xlu0 %1815
    %1817 = vrot.lane.b32.xlu0 %v1495, 96
    %v1818 = vpop.permute.xlu0 %1817
    %1819 = vrot.lane.b32.xlu0 %v1498, 96
    %v1820 = vpop.permute.xlu0 %1819
    %1821 = vrot.lane.b32.xlu0 %v1503, 96
    %v1822 = vpop.permute.xlu0 %1821
    %1823 = vrot.lane.b32.xlu0 %v1506, 96
    %v1824 = vpop.permute.xlu0 %1823
    %1825 = vrot.lane.b32.xlu0 %v1511, 96
    %v1826 = vpop.permute.xlu0 %1825
    %1827 = vrot.lane.b32.xlu0 %v1514, 96
    %v1828 = vpop.permute.xlu0 %1827
    %1829 = vrot.lane.b32.xlu0 %v1519, 96
    %v1830 = vpop.permute.xlu0 %1829
    %1831 = vrot.lane.b32.xlu0 %v1522, 96
    %v1832 = vpop.permute.xlu0 %1831
    %1833 = vrot.lane.b32.xlu0 %v1527, 96
    %v1834 = vpop.permute.xlu0 %1833
    %1835 = vrot.lane.b32.xlu0 %v1530, 96
    %v1836 = vpop.permute.xlu0 %1835
    %1837 = vrot.lane.b32.xlu0 %v1535, 96
    %v1838 = vpop.permute.xlu0 %1837
    %vm1852 = vcmask 130048
    %v1853 = vsel %vm1852, %v473, %v1554
    %v1854 = vsel %vm1852, %v476, %v1556
    %v1855 = vsel %vm1852, %v481, %v1558
    %v1856 = vsel %vm1852, %v484, %v1560
    %v1857 = vsel %vm1852, %v489, %v1562
    %v1858 = vsel %vm1852, %v492, %v1564
    %v1859 = vsel %vm1852, %v497, %v1566
    %v1860 = vsel %vm1852, %v500, %v1568
    %v1861 = vsel %vm1852, %v505, %v1570
    %v1862 = vsel %vm1852, %v508, %v1572
    %v1863 = vsel %vm1852, %v513, %v1574
    %v1864 = vsel %vm1852, %v516, %v1576
    %v1865 = vsel %vm1852, %v521, %v1578
    %vm1866 = vcmask 261120
    %v1867 = vsel %vm1866, %v1853, %v1606
    %v1868 = vsel %vm1866, %v1854, %v1608
    %v1869 = vsel %vm1866, %v1855, %v1610
    %v1870 = vsel %vm1866, %v1856, %v1612
    %v1871 = vsel %vm1866, %v1857, %v1614
    %v1872 = vsel %vm1866, %v1858, %v1616
    %v1873 = vsel %vm1866, %v1859, %v1618
    %v1874 = vsel %vm1866, %v1860, %v1620
    %v1875 = vsel %vm1866, %v1861, %v1622
    %v1876 = vsel %vm1866, %v1862, %v1624
    %v1877 = vsel %vm1866, %v1863, %v1626
    %v1878 = vsel %vm1866, %v1864, %v1628
    %v1879 = vsel %vm1866, %v1865, %v1630
    %vm1880 = vcmask 392192
    %v1881 = vsel %vm1880, %v1867, %v1658
    %v1882 = vsel %vm1880, %v1868, %v1660
    %v1883 = vsel %vm1880, %v1869, %v1662
    %v1884 = vsel %vm1880, %v1870, %v1664
    %v1885 = vsel %vm1880, %v1871, %v1666
    %v1886 = vsel %vm1880, %v1872, %v1668
    %v1887 = vsel %vm1880, %v1873, %v1670
    %v1888 = vsel %vm1880, %v1874, %v1672
    %v1889 = vsel %vm1880, %v1875, %v1674
    %v1890 = vsel %vm1880, %v1876, %v1676
    %v1891 = vsel %vm1880, %v1877, %v1678
    %v1892 = vsel %vm1880, %v1878, %v1680
    %v1893 = vsel %vm1880, %v1879, %v1682
    %vm1894 = vcmask 523264
    %v1895 = vsel %vm1894, %v1881, %v1710
    %v1896 = vsel %vm1894, %v1882, %v1712
    %v1897 = vsel %vm1894, %v1883, %v1714
    %v1898 = vsel %vm1894, %v1884, %v1716
    %v1899 = vsel %vm1894, %v1885, %v1718
    %v1900 = vsel %vm1894, %v1886, %v1720
    %v1901 = vsel %vm1894, %v1887, %v1722
    %v1902 = vsel %vm1894, %v1888, %v1724
    %v1903 = vsel %vm1894, %v1889, %v1726
    %v1904 = vsel %vm1894, %v1890, %v1728
    %v1905 = vsel %vm1894, %v1891, %v1730
    %v1906 = vsel %vm1894, %v1892, %v1732
    %v1907 = vsel %vm1894, %v1893, %v1734
    %vm1908 = vcmask 654336
    %v1909 = vsel %vm1908, %v1895, %v1762
    %v1910 = vsel %vm1908, %v1896, %v1764
    %v1911 = vsel %vm1908, %v1897, %v1766
    %v1912 = vsel %vm1908, %v1898, %v1768
    %v1913 = vsel %vm1908, %v1899, %v1770
    %v1914 = vsel %vm1908, %v1900, %v1772
    %v1915 = vsel %vm1908, %v1901, %v1774
    %v1916 = vsel %vm1908, %v1902, %v1776
    %v1917 = vsel %vm1908, %v1903, %v1778
    %v1918 = vsel %vm1908, %v1904, %v1780
    %v1919 = vsel %vm1908, %v1905, %v1782
    %v1920 = vsel %vm1908, %v1906, %v1784
    %v1921 = vsel %vm1908, %v1907, %v1786
    %vm1922 = vcmask 785408
    %v1923 = vsel %vm1922, %v1909, %v1814
    %v1924 = vsel %vm1922, %v1910, %v1816
    %v1925 = vsel %vm1922, %v1911, %v1818
    %v1926 = vsel %vm1922, %v1912, %v1820
    %v1927 = vsel %vm1922, %v1913, %v1822
    %v1928 = vsel %vm1922, %v1914, %v1824
    %v1929 = vsel %vm1922, %v1915, %v1826
    %v1930 = vsel %vm1922, %v1916, %v1828
    %v1931 = vsel %vm1922, %v1917, %v1830
    %v1932 = vsel %vm1922, %v1918, %v1832
    %v1933 = vsel %vm1922, %v1919, %v1834
    %v1934 = vsel %vm1922, %v1920, %v1836
    %v1935 = vsel %vm1922, %v1921, %v1838
    %v1936 = vpack.c.bf16 %v1924, %v1923
    %v1937 = vpack.c.bf16 %v1926, %v1925
    %v1938 = vpack.c.bf16 %v1928, %v1927
    %v1939 = vpack.c.bf16 %v1930, %v1929
    %v1940 = vpack.c.bf16 %v1932, %v1931
    %v1941 = vpack.c.bf16 %v1934, %v1933
    %v1942 = vpack.c.bf16 %v1935, %v1935
    %v1944 = vlaneseq
    %v1945 = vshrl.u32 %v1944, 7
    %v1946 = vsub.s32 0, %v1945
    %v1947 = vrot.slane %v247, %v1946
    %v1963 = vunpack.c.l.b16 %v233
    %v1964 = vunpack.c.l.b16 %v234
    %v1965 = vunpack.c.l.b16 %v235
    %v1966 = vunpack.c.l.b16 %v236
    %v1967 = vunpack.c.l.b16 %v237
    %v1968 = vunpack.c.l.b16 %v238
    %v1969 = vunpack.c.l.b16 %v239
    %v1970 = vunpack.c.l.b16 %v240
    %v1971 = vunpack.c.l.b16 %v241
    %v1972 = vunpack.c.l.b16 %v242
    %v1973 = vunpack.c.l.b16 %v243
    %v1974 = vunpack.c.l.b16 %v244
    %v1975 = vunpack.c.l.b16 %v245
    %v1976 = vunpack.c.l.b16 %v246
    %v1977 = vpack.c.b16 %v1964, %v1963
    %v1978 = vpack.c.b16 %v1966, %v1965
    %v1979 = vpack.c.b16 %v1968, %v1967
    %v1980 = vpack.c.b16 %v1970, %v1969
    %v1981 = vpack.c.b16 %v1972, %v1971
    %v1982 = vpack.c.b16 %v1974, %v1973
    %v1983 = vpack.c.b16 %v1976, %v1975
    %vm1991 = vcmask 916480
    %v1993 = vsel %vm1991, %v1936, 0
    %v1996 = vsel %vm1991, %v1937, 0
    %v1999 = vsel %vm1991, %v1938, 0
    %v2002 = vsel %vm1991, %v1939, 0
    %v2005 = vsel %vm1991, %v1940, 0
    %v2008 = vsel %vm1991, %v1941, 0
    %v2011 = vsel %vm1991, %v1942, 0
    %2013 = vmatprep.subr.bf16.mxu0 0
    %2014 = vmatpush1.bf16.msra.mxu0 %v1977
    %2015 = vmatprep.subr.bf16.mxu0 0
    %2016 = vmatpush1.bf16.msra.mxu0 %v1978
    %2017 = vmatprep.subr.bf16.mxu0 0
    %2018 = vmatpush1.bf16.msra.mxu0 %v1979
    %2019 = vmatprep.subr.bf16.mxu0 0
    %2020 = vmatpush1.bf16.msra.mxu0 %v1980
    %2021 = vmatprep.subr.bf16.mxu0 0
    %2022 = vmatpush1.bf16.msra.mxu0 %v1981
    %2023 = vmatprep.subr.bf16.mxu0 0
    %2024 = vmatpush1.bf16.msra.mxu0 %v1982
    %2025 = vmatprep.subr.bf16.mxu0 0
    %2026 = vmatpush1.bf16.msra.mxu0 %v1983
    %2027 = vmatprep.subr.bf16.mxu0 0
    %2028 = vmatpush1.bf16.msra.mxu0 0
    %2029 = vmatprep.subr.bf16.mxu0 0
    %2030 = vmatpush1.bf16.msra.mxu0 0
    %2031 = vmatprep.subr.bf16.mxu0 0
    %2032 = vmatpush1.bf16.msra.mxu0 0
    %2033 = vmatprep.subr.bf16.mxu0 0
    %2034 = vmatpush1.bf16.msra.mxu0 0
    %2035 = vmatprep.subr.bf16.mxu0 0
    %2036 = vmatpush1.bf16.msra.mxu0 0
    %2037 = vmatprep.subr.bf16.mxu0 0
    %2038 = vmatpush1.bf16.msra.mxu0 0
    %2039 = vmatprep.subr.bf16.mxu0 0
    %2040 = vmatpush1.bf16.msra.mxu0 0
    %2041 = vmatprep.subr.bf16.mxu0 0
    %2042 = vmatpush1.bf16.msra.mxu0 0
    %2043 = vmatprep.subr.bf16.mxu0 0
    %2044 = vmatpush1.bf16.msra.mxu0 0
    %2045 = vmatprep.mubr.bf16.mxu0 0
    %2046 = vmatmul.mubr.bf16.gmra.mrb[0].mxu0 %v1993
    %v2047 = vpop.f32.mrb[0].mxu0
    %v2048 = vadd.f32 %v1947, %v2047
    %v2049 = vpop.f32.mrb[0].mxu0
    %v2050 = vpop.f32.mrb[0].mxu0
    %v2051 = vadd.f32 %v1947, %v2050
    %v2052 = vpop.f32.mrb[0].mxu0
    %2053 = vmatprep.mubr.bf16.mxu0 0
    %2054 = vmatmul.mubr.bf16.gmra.mrb[0].mxu0 %v1996
    %v2055 = vpop.f32.mrb[0].mxu0
    %v2056 = vadd.f32 %v1947, %v2055
    %v2057 = vpop.f32.mrb[0].mxu0
    %v2058 = vpop.f32.mrb[0].mxu0
    %v2059 = vadd.f32 %v1947, %v2058
    %v2060 = vpop.f32.mrb[0].mxu0
    %2061 = vmatprep.mubr.bf16.mxu0 0
    %2062 = vmatmul.mubr.bf16.gmra.mrb[0].mxu0 %v1999
    %v2063 = vpop.f32.mrb[0].mxu0
    %v2064 = vadd.f32 %v1947, %v2063
    %v2065 = vpop.f32.mrb[0].mxu0
    %v2066 = vpop.f32.mrb[0].mxu0
    %v2067 = vadd.f32 %v1947, %v2066
    %v2068 = vpop.f32.mrb[0].mxu0
    %2069 = vmatprep.mubr.bf16.mxu0 0
    %2070 = vmatmul.mubr.bf16.gmra.mrb[0].mxu0 %v2002
    %v2071 = vpop.f32.mrb[0].mxu0
    %v2072 = vadd.f32 %v1947, %v2071
    %v2073 = vpop.f32.mrb[0].mxu0
    %v2074 = vpop.f32.mrb[0].mxu0
    %v2075 = vadd.f32 %v1947, %v2074
    %v2076 = vpop.f32.mrb[0].mxu0
    %2077 = vmatprep.mubr.bf16.mxu0 0
    %2078 = vmatmul.mubr.bf16.gmra.mrb[0].mxu0 %v2005
    %v2079 = vpop.f32.mrb[0].mxu0
    %v2080 = vadd.f32 %v1947, %v2079
    %v2081 = vpop.f32.mrb[0].mxu0
    %v2082 = vpop.f32.mrb[0].mxu0
    %v2083 = vadd.f32 %v1947, %v2082
    %v2084 = vpop.f32.mrb[0].mxu0
    %2085 = vmatprep.mubr.bf16.mxu0 0
    %2086 = vmatmul.mubr.bf16.gmra.mrb[0].mxu0 %v2008
    %v2087 = vpop.f32.mrb[0].mxu0
    %v2088 = vadd.f32 %v1947, %v2087
    %v2089 = vpop.f32.mrb[0].mxu0
    %v2090 = vpop.f32.mrb[0].mxu0
    %v2091 = vadd.f32 %v1947, %v2090
    %v2092 = vpop.f32.mrb[0].mxu0
    %2093 = vmatprep.mubr.bf16.mxu0 0
    %2094 = vmatmul.mubr.bf16.gmra.mrb[0].mxu0 %v2011
    %v2095 = vpop.f32.mrb[0].mxu0
    %v2096 = vadd.f32 %v1947, %v2095
    %v2097 = vpop.f32.mrb[0].mxu0
    %v2098 = vpop.f32.mrb[0].mxu0
    %v2099 = vpop.f32.mrb[0].mxu0
    %2100 = vdwg.mxu0
    %v2101 = vmax.f32 %v2048, 0.0
    %v2102 = vmax.f32 %v2051, 0.0
    %v2103 = vmax.f32 %v2056, 0.0
    %v2104 = vmax.f32 %v2059, 0.0
    %v2105 = vmax.f32 %v2064, 0.0
    %v2106 = vmax.f32 %v2067, 0.0
    %v2107 = vmax.f32 %v2072, 0.0
    %v2108 = vmax.f32 %v2075, 0.0
    %v2109 = vmax.f32 %v2080, 0.0
    %v2110 = vmax.f32 %v2083, 0.0
    %v2111 = vmax.f32 %v2088, 0.0
    %v2112 = vmax.f32 %v2091, 0.0
    %v2113 = vmax.f32 %v2096, 0.0
    %v2114 = vld [vmem:[%s9] sm:$0xf]
    %v2115 = vld [vmem:[%s9 + $0x4] sm:$0xf]
    %v2116 = vld [vmem:[%s9 + $0x8] sm:$0xf]
    %v2117 = vld [vmem:[%s9 + $0xc] sm:$0xf]
    %v2118 = vld [vmem:[%s9 + $0x10] sm:$0xf]
    %v2119 = vld [vmem:[%s9 + $0x14] sm:$0xf]
    %v2120 = vld [vmem:[%s9 + $0x18] sm:$0x1]
    %v2121 = vld [vmem:[%s9 + $0x1c] sm:$0xf]
    %v2122 = vld [vmem:[%s9 + $0x20] sm:$0xf]
    %v2123 = vld [vmem:[%s9 + $0x24] sm:$0xf]
    %v2124 = vld [vmem:[%s9 + $0x28] sm:$0xf]
    %v2125 = vld [vmem:[%s9 + $0x2c] sm:$0xf]
    %v2126 = vld [vmem:[%s9 + $0x30] sm:$0xf]
    %v2127 = vld [vmem:[%s9 + $0x34] sm:$0x1]
    %v2128 = vld [vmem:[%s9 + $0x38] sm:$0xf]
    %v2129 = vld [vmem:[%s9 + $0x3c] sm:$0xf]
    %v2130 = vld [vmem:[%s9 + $0x40] sm:$0xf]
    %v2131 = vld [vmem:[%s9 + $0x44] sm:$0xf]
    %v2132 = vld [vmem:[%s9 + $0x48] sm:$0xf]
    %v2133 = vld [vmem:[%s9 + $0x4c] sm:$0xf]
    %v2134 = vld [vmem:[%s9 + $0x50] sm:$0x1]
    %v2135 = vpack.c.bf16 %v2102, %v2101
    %v2136 = vpack.c.bf16 %v2104, %v2103
    %v2137 = vpack.c.bf16 %v2106, %v2105
    %v2138 = vpack.c.bf16 %v2108, %v2107
    %v2139 = vpack.c.bf16 %v2110, %v2109
    %v2140 = vpack.c.bf16 %v2112, %v2111
    %v2141 = vpack.c.bf16 %v2113, %v2113
    %v2149 = vunpack.c.l.b16 %v2114
    %v2150 = vunpack.c.l.b16 %v2115
    %v2151 = vunpack.c.l.b16 %v2116
    %v2152 = vunpack.c.l.b16 %v2117
    %v2153 = vunpack.c.l.b16 %v2118
    %v2154 = vunpack.c.l.b16 %v2119
    %v2155 = vunpack.c.l.b16 %v2120
    %v2156 = vpack.c.b16 %v2150, %v2149
    %v2157 = vpack.c.b16 %v2152, %v2151
    %v2158 = vpack.c.b16 %v2154, %v2153
    %v2159 = vpack.c.b16 %v2155, %v2155
    %vm2160 = vcmask 818176
    %v2162 = vsel %vm2160, %v2156, 0
    %v2165 = vsel %vm2160, %v2157, 0
    %v2168 = vsel %vm2160, %v2158, 0
    %v2171 = vsel %vm2160, %v2159, 0
    %vm2173 = vcmask 1041408
    %v2175 = vsel %vm2173, %v2141, 0
    %2177 = vmatprep.subr.bf16.mxu0 0
    %2178 = vmatpush1.bf16.msra.mxu0 %v2135
    %2179 = vmatprep.subr.bf16.mxu0 0
    %2180 = vmatpush1.bf16.msra.mxu0 %v2136
    %2181 = vmatprep.subr.bf16.mxu0 0
    %2182 = vmatpush1.bf16.msra.mxu0 %v2137
    %2183 = vmatprep.subr.bf16.mxu0 0
    %2184 = vmatpush1.bf16.msra.mxu0 %v2138
    %2185 = vmatprep.subr.bf16.mxu0 0
    %2186 = vmatpush1.bf16.msra.mxu0 %v2139
    %2187 = vmatprep.subr.bf16.mxu0 0
    %2188 = vmatpush1.bf16.msra.mxu0 %v2140
    %2189 = vmatprep.subr.bf16.mxu0 0
    %2190 = vmatpush1.bf16.msra.mxu0 %v2175
    %2191 = vmatprep.subr.bf16.mxu0 0
    %2192 = vmatpush1.bf16.msra.mxu0 0
    %2193 = vmatprep.subr.bf16.mxu0 0
    %2194 = vmatpush1.bf16.msra.mxu0 0
    %2195 = vmatprep.subr.bf16.mxu0 0
    %2196 = vmatpush1.bf16.msra.mxu0 0
    %2197 = vmatprep.subr.bf16.mxu0 0
    %2198 = vmatpush1.bf16.msra.mxu0 0
    %2199 = vmatprep.subr.bf16.mxu0 0
    %2200 = vmatpush1.bf16.msra.mxu0 0
    %2201 = vmatprep.subr.bf16.mxu0 0
    %2202 = vmatpush1.bf16.msra.mxu0 0
    %2203 = vmatprep.subr.bf16.mxu0 0
    %2204 = vmatpush1.bf16.msra.mxu0 0
    %2205 = vmatprep.subr.bf16.mxu0 0
    %2206 = vmatpush1.bf16.msra.mxu0 0
    %2207 = vmatprep.subr.bf16.mxu0 0
    %2208 = vmatpush1.bf16.msra.mxu0 0
    %2209 = vmatprep.mubr.bf16.mxu0 0
    %2210 = vmatmul.mubr.bf16.gmra.mrb[0].mxu0 %v2162
    %v2211 = vpop.f32.mrb[0].mxu0
    %v2212 = vadd.f32 0.0, %v2211
    %v2213 = vpop.f32.mrb[0].mxu0
    %v2214 = vpop.f32.mrb[0].mxu0
    %v2215 = vadd.f32 0.0, %v2214
    %v2216 = vpop.f32.mrb[0].mxu0
    %2217 = vmatprep.mubr.bf16.mxu0 0
    %2218 = vmatmul.mubr.bf16.gmra.mrb[0].mxu0 %v2165
    %v2219 = vpop.f32.mrb[0].mxu0
    %v2220 = vadd.f32 0.0, %v2219
    %v2221 = vpop.f32.mrb[0].mxu0
    %v2222 = vpop.f32.mrb[0].mxu0
    %v2223 = vadd.f32 0.0, %v2222
    %v2224 = vpop.f32.mrb[0].mxu0
    %2225 = vmatprep.mubr.bf16.mxu0 0
    %2226 = vmatmul.mubr.bf16.gmra.mrb[0].mxu0 %v2168
    %v2227 = vpop.f32.mrb[0].mxu0
    %v2228 = vadd.f32 0.0, %v2227
    %v2229 = vpop.f32.mrb[0].mxu0
    %v2230 = vpop.f32.mrb[0].mxu0
    %v2231 = vadd.f32 0.0, %v2230
    %v2232 = vpop.f32.mrb[0].mxu0
    %2233 = vmatprep.mubr.bf16.mxu0 0
    %2234 = vmatmul.mubr.bf16.gmra.mrb[0].mxu0 %v2171
    %v2235 = vpop.f32.mrb[0].mxu0
    %v2236 = vadd.f32 0.0, %v2235
    %v2237 = vpop.f32.mrb[0].mxu0
    %v2238 = vpop.f32.mrb[0].mxu0
    %v2239 = vpop.f32.mrb[0].mxu0
    %2240 = vdwg.mxu0
    %v2248 = vunpack.c.l.b16 %v2121
    %v2249 = vunpack.c.l.b16 %v2122
    %v2250 = vunpack.c.l.b16 %v2123
    %v2251 = vunpack.c.l.b16 %v2124
    %v2252 = vunpack.c.l.b16 %v2125
    %v2253 = vunpack.c.l.b16 %v2126
    %v2254 = vunpack.c.l.b16 %v2127
    %v2255 = vpack.c.b16 %v2249, %v2248
    %v2256 = vpack.c.b16 %v2251, %v2250
    %v2257 = vpack.c.b16 %v2253, %v2252
    %v2258 = vpack.c.b16 %v2254, %v2254
    %v2260 = vsel %vm2160, %v2255, 0
    %v2263 = vsel %vm2160, %v2256, 0
    %v2266 = vsel %vm2160, %v2257, 0
    %v2269 = vsel %vm2160, %v2258, 0
    %2271 = vmatprep.subr.bf16.mxu0 0
    %2272 = vmatpush1.bf16.msra.mxu0 %v2135
    %2273 = vmatprep.subr.bf16.mxu0 0
    %2274 = vmatpush1.bf16.msra.mxu0 %v2136
    %2275 = vmatprep.subr.bf16.mxu0 0
    %2276 = vmatpush1.bf16.msra.mxu0 %v2137
    %2277 = vmatprep.subr.bf16.mxu0 0
    %2278 = vmatpush1.bf16.msra.mxu0 %v2138
    %2279 = vmatprep.subr.bf16.mxu0 0
    %2280 = vmatpush1.bf16.msra.mxu0 %v2139
    %2281 = vmatprep.subr.bf16.mxu0 0
    %2282 = vmatpush1.bf16.msra.mxu0 %v2140
    %2283 = vmatprep.subr.bf16.mxu0 0
    %2284 = vmatpush1.bf16.msra.mxu0 %v2175
    %2285 = vmatprep.subr.bf16.mxu0 0
    %2286 = vmatpush1.bf16.msra.mxu0 0
    %2287 = vmatprep.subr.bf16.mxu0 0
    %2288 = vmatpush1.bf16.msra.mxu0 0
    %2289 = vmatprep.subr.bf16.mxu0 0
    %2290 = vmatpush1.bf16.msra.mxu0 0
    %2291 = vmatprep.subr.bf16.mxu0 0
    %2292 = vmatpush1.bf16.msra.mxu0 0
    %2293 = vmatprep.subr.bf16.mxu0 0
    %2294 = vmatpush1.bf16.msra.mxu0 0
    %2295 = vmatprep.subr.bf16.mxu0 0
    %2296 = vmatpush1.bf16.msra.mxu0 0
    %2297 = vmatprep.subr.bf16.mxu0 0
    %2298 = vmatpush1.bf16.msra.mxu0 0
    %2299 = vmatprep.subr.bf16.mxu0 0
    %2300 = vmatpush1.bf16.msra.mxu0 0
    %2301 = vmatprep.subr.bf16.mxu0 0
    %2302 = vmatpush1.bf16.msra.mxu0 0
    %2303 = vmatprep.mubr.bf16.mxu0 0
    %2304 = vmatmul.mubr.bf16.gmra.mrb[0].mxu0 %v2260
    %v2305 = vpop.f32.mrb[0].mxu0
    %v2306 = vadd.f32 0.0, %v2305
    %v2307 = vpop.f32.mrb[0].mxu0
    %v2308 = vpop.f32.mrb[0].mxu0
    %v2309 = vadd.f32 0.0, %v2308
    %v2310 = vpop.f32.mrb[0].mxu0
    %2311 = vmatprep.mubr.bf16.mxu0 0
    %2312 = vmatmul.mubr.bf16.gmra.mrb[0].mxu0 %v2263
    %v2313 = vpop.f32.mrb[0].mxu0
    %v2314 = vadd.f32 0.0, %v2313
    %v2315 = vpop.f32.mrb[0].mxu0
    %v2316 = vpop.f32.mrb[0].mxu0
    %v2317 = vadd.f32 0.0, %v2316
    %v2318 = vpop.f32.mrb[0].mxu0
    %2319 = vmatprep.mubr.bf16.mxu0 0
    %2320 = vmatmul.mubr.bf16.gmra.mrb[0].mxu0 %v2266
    %v2321 = vpop.f32.mrb[0].mxu0
    %v2322 = vadd.f32 0.0, %v2321
    %v2323 = vpop.f32.mrb[0].mxu0
    %v2324 = vpop.f32.mrb[0].mxu0
    %v2325 = vadd.f32 0.0, %v2324
    %v2326 = vpop.f32.mrb[0].mxu0
    %2327 = vmatprep.mubr.bf16.mxu0 0
    %2328 = vmatmul.mubr.bf16.gmra.mrb[0].mxu0 %v2269
    %v2329 = vpop.f32.mrb[0].mxu0
    %v2330 = vadd.f32 0.0, %v2329
    %v2331 = vpop.f32.mrb[0].mxu0
    %v2332 = vpop.f32.mrb[0].mxu0
    %v2333 = vpop.f32.mrb[0].mxu0
    %2334 = vdwg.mxu0
    %v2335 = vmax.f32 %v2212, %v2306
    %v2336 = vmax.f32 %v2215, %v2309
    %v2337 = vmax.f32 %v2220, %v2314
    %v2338 = vmax.f32 %v2223, %v2317
    %v2339 = vmax.f32 %v2228, %v2322
    %v2340 = vmax.f32 %v2231, %v2325
    %v2341 = vmax.f32 %v2236, %v2330
    %v2349 = vunpack.c.l.b16 %v2128
    %v2350 = vunpack.c.l.b16 %v2129
    %v2351 = vunpack.c.l.b16 %v2130
    %v2352 = vunpack.c.l.b16 %v2131
    %v2353 = vunpack.c.l.b16 %v2132
    %v2354 = vunpack.c.l.b16 %v2133
    %v2355 = vunpack.c.l.b16 %v2134
    %v2356 = vpack.c.b16 %v2350, %v2349
    %v2357 = vpack.c.b16 %v2352, %v2351
    %v2358 = vpack.c.b16 %v2354, %v2353
    %v2359 = vpack.c.b16 %v2355, %v2355
    %v2361 = vsel %vm2160, %v2356, 0
    %v2364 = vsel %vm2160, %v2357, 0
    %v2367 = vsel %vm2160, %v2358, 0
    %v2370 = vsel %vm2160, %v2359, 0
    %2372 = vmatprep.subr.bf16.mxu0 0
    %2373 = vmatpush1.bf16.msra.mxu0 %v2135
    %2374 = vmatprep.subr.bf16.mxu0 0
    %2375 = vmatpush1.bf16.msra.mxu0 %v2136
    %2376 = vmatprep.subr.bf16.mxu0 0
    %2377 = vmatpush1.bf16.msra.mxu0 %v2137
    %2378 = vmatprep.subr.bf16.mxu0 0
    %2379 = vmatpush1.bf16.msra.mxu0 %v2138
    %2380 = vmatprep.subr.bf16.mxu0 0
    %2381 = vmatpush1.bf16.msra.mxu0 %v2139
    %2382 = vmatprep.subr.bf16.mxu0 0
    %2383 = vmatpush1.bf16.msra.mxu0 %v2140
    %2384 = vmatprep.subr.bf16.mxu0 0
    %2385 = vmatpush1.bf16.msra.mxu0 %v2175
    %2386 = vmatprep.subr.bf16.mxu0 0
    %2387 = vmatpush1.bf16.msra.mxu0 0
    %2388 = vmatprep.subr.bf16.mxu0 0
    %2389 = vmatpush1.bf16.msra.mxu0 0
    %2390 = vmatprep.subr.bf16.mxu0 0
    %2391 = vmatpush1.bf16.msra.mxu0 0
    %2392 = vmatprep.subr.bf16.mxu0 0
    %2393 = vmatpush1.bf16.msra.mxu0 0
    %2394 = vmatprep.subr.bf16.mxu0 0
    %2395 = vmatpush1.bf16.msra.mxu0 0
    %2396 = vmatprep.subr.bf16.mxu0 0
    %2397 = vmatpush1.bf16.msra.mxu0 0
    %2398 = vmatprep.subr.bf16.mxu0 0
    %2399 = vmatpush1.bf16.msra.mxu0 0
    %2400 = vmatprep.subr.bf16.mxu0 0
    %2401 = vmatpush1.bf16.msra.mxu0 0
    %2402 = vmatprep.subr.bf16.mxu0 0
    %2403 = vmatpush1.bf16.msra.mxu0 0
    %2404 = vmatprep.mubr.bf16.mxu0 0
    %2405 = vmatmul.mubr.bf16.gmra.mrb[0].mxu0 %v2361
    %v2406 = vpop.f32.mrb[0].mxu0
    %v2407 = vadd.f32 0.0, %v2406
    %v2408 = vpop.f32.mrb[0].mxu0
    %v2409 = vpop.f32.mrb[0].mxu0
    %v2410 = vadd.f32 0.0, %v2409
    %v2411 = vpop.f32.mrb[0].mxu0
    %2412 = vmatprep.mubr.bf16.mxu0 0
    %2413 = vmatmul.mubr.bf16.gmra.mrb[0].mxu0 %v2364
    %v2414 = vpop.f32.mrb[0].mxu0
    %v2415 = vadd.f32 0.0, %v2414
    %v2416 = vpop.f32.mrb[0].mxu0
    %v2417 = vpop.f32.mrb[0].mxu0
    %v2418 = vadd.f32 0.0, %v2417
    %v2419 = vpop.f32.mrb[0].mxu0
    %2420 = vmatprep.mubr.bf16.mxu0 0
    %2421 = vmatmul.mubr.bf16.gmra.mrb[0].mxu0 %v2367
    %v2422 = vpop.f32.mrb[0].mxu0
    %v2423 = vadd.f32 0.0, %v2422
    %v2424 = vpop.f32.mrb[0].mxu0
    %v2425 = vpop.f32.mrb[0].mxu0
    %v2426 = vadd.f32 0.0, %v2425
    %v2427 = vpop.f32.mrb[0].mxu0
    %2428 = vmatprep.mubr.bf16.mxu0 0
    %2429 = vmatmul.mubr.bf16.gmra.mrb[0].mxu0 %v2370
    %v2430 = vpop.f32.mrb[0].mxu0
    %v2431 = vadd.f32 0.0, %v2430
    %v2432 = vpop.f32.mrb[0].mxu0
    %v2433 = vpop.f32.mrb[0].mxu0
    %v2434 = vpop.f32.mrb[0].mxu0
    %2435 = vdwg.mxu0
    %v2436 = vmax.f32 %v2335, %v2407
    %v2437 = vmax.f32 %v2336, %v2410
    %v2438 = vmax.f32 %v2337, %v2415
    %v2439 = vmax.f32 %v2338, %v2418
    %v2440 = vmax.f32 %v2339, %v2423
    %v2441 = vmax.f32 %v2340, %v2426
    %v2442 = vmax.f32 %v2341, %v2431
    %v2443 = vld [vmem:[%s11] sm:$0xf]
    %v2444 = vld [vmem:[%s11 + $0x4] sm:$0xf]
    %v2445 = vld [vmem:[%s11 + $0x8] sm:$0xf]
    %v2446 = vld [vmem:[%s11 + $0xc] sm:$0xf]
    %v2447 = vld [vmem:[%s11 + $0x10] sm:$0xf]
    %v2448 = vld [vmem:[%s11 + $0x14] sm:$0xf]
    %v2449 = vld [vmem:[%s11 + $0x18] sm:$0xf]
    %v2450 = vld [vmem:[%s11 + $0x1c] sm:$0xf]
    %v2451 = vld [vmem:[%s11 + $0x20] sm:$0xf]
    %v2452 = vld [vmem:[%s11 + $0x24] sm:$0xf]
    %v2453 = vld [vmem:[%s11 + $0x28] sm:$0xf]
    %v2454 = vld [vmem:[%s11 + $0x2c] sm:$0xf]
    %v2455 = vld [vmem:[%s11 + $0x30] sm:$0xf]
    %v2456 = vld [vmem:[%s11 + $0x34] sm:$0xf]
    %v2457 = vld [vmem:[%s11 + $0x38] sm:$0xf]
    %v2458 = vld [vmem:[%s11 + $0x3c] sm:$0xf]
    %v2459 = vld [vmem:[%s11 + $0x40] sm:$0xf]
    %v2460 = vld [vmem:[%s11 + $0x44] sm:$0xf]
    %v2461 = vld [vmem:[%s11 + $0x48] sm:$0xf]
    %v2462 = vld [vmem:[%s11 + $0x4c] sm:$0xf]
    %v2463 = vld [vmem:[%s11 + $0x50] sm:$0xf]
    %v2464 = vld [vmem:[%s11 + $0x54] sm:$0xf]
    %v2465 = vld [vmem:[%s11 + $0x58] sm:$0xf]
    %v2466 = vld [vmem:[%s11 + $0x5c] sm:$0xf]
    %v2467 = vld [vmem:[%s13] sm:$0x1]
    %v2468 = vld [vmem:[%s15] sm:$0xf]
    %v2469 = vld [vmem:[%s15 + $0x4] sm:$0xf]
    %v2470 = vld [vmem:[%s15 + $0x8] sm:$0xf]
    %v2471 = vld [vmem:[%s15 + $0xc] sm:$0xf]
    %v2472 = vld [vmem:[%s15 + $0x10] sm:$0xf]
    %v2473 = vld [vmem:[%s15 + $0x14] sm:$0xf]
    %v2474 = vld [vmem:[%s15 + $0x18] sm:$0x1]
    %v2475 = vld [vmem:[%s15 + $0x1c] sm:$0xf]
    %v2476 = vld [vmem:[%s15 + $0x20] sm:$0xf]
    %v2477 = vld [vmem:[%s15 + $0x24] sm:$0xf]
    %v2478 = vld [vmem:[%s15 + $0x28] sm:$0xf]
    %v2479 = vld [vmem:[%s15 + $0x2c] sm:$0xf]
    %v2480 = vld [vmem:[%s15 + $0x30] sm:$0xf]
    %v2481 = vld [vmem:[%s15 + $0x34] sm:$0x1]
    %v2482 = vld [vmem:[%s15 + $0x38] sm:$0xf]
    %v2483 = vld [vmem:[%s15 + $0x3c] sm:$0xf]
    %v2484 = vld [vmem:[%s15 + $0x40] sm:$0xf]
    %v2485 = vld [vmem:[%s15 + $0x44] sm:$0xf]
    %v2486 = vld [vmem:[%s15 + $0x48] sm:$0xf]
    %v2487 = vld [vmem:[%s15 + $0x4c] sm:$0xf]
    %v2488 = vld [vmem:[%s15 + $0x50] sm:$0x1]
    %v2489 = vpack.c.bf16 %v2437, %v2436
    %v2490 = vpack.c.bf16 %v2439, %v2438
    %v2491 = vpack.c.bf16 %v2441, %v2440
    %v2492 = vpack.c.bf16 %v2442, %v2442
    %v2500 = vunpack.c.l.b16 %v2468
    %v2501 = vunpack.c.l.b16 %v2469
    %v2502 = vunpack.c.l.b16 %v2470
    %v2503 = vunpack.c.l.b16 %v2471
    %v2504 = vunpack.c.l.b16 %v2472
    %v2505 = vunpack.c.l.b16 %v2473
    %v2506 = vunpack.c.l.b16 %v2474
    %v2507 = vpack.c.b16 %v2501, %v2500
    %v2508 = vpack.c.b16 %v2503, %v2502
    %v2509 = vpack.c.b16 %v2505, %v2504
    %v2510 = vpack.c.b16 %v2506, %v2506
    %vm2511 = vcmask 408576
    %v2513 = vsel %vm2511, %v2507, 0
    %v2516 = vsel %vm2511, %v2508, 0
    %v2519 = vsel %vm2511, %v2509, 0
    %v2522 = vsel %vm2511, %v2510, 0
    %vm2524 = vcmask 1040384
    %v2526 = vsel %vm2524, %v2492, 0
    %2528 = vmatprep.subr.bf16.mxu0 0
    %2529 = vmatpush1.bf16.msra.mxu0 %v2489
    %2530 = vmatprep.subr.bf16.mxu0 0
    %2531 = vmatpush1.bf16.msra.mxu0 %v2490
    %2532 = vmatprep.subr.bf16.mxu0 0
    %2533 = vmatpush1.bf16.msra.mxu0 %v2491
    %2534 = vmatprep.subr.bf16.mxu0 0
    %2535 = vmatpush1.bf16.msra.mxu0 %v2526
    %2536 = vmatprep.subr.bf16.mxu0 0
    %2537 = vmatpush1.bf16.msra.mxu0 0
    %2538 = vmatprep.subr.bf16.mxu0 0
    %2539 = vmatpush1.bf16.msra.mxu0 0
    %2540 = vmatprep.subr.bf16.mxu0 0
    %2541 = vmatpush1.bf16.msra.mxu0 0
    %2542 = vmatprep.subr.bf16.mxu0 0
    %2543 = vmatpush1.bf16.msra.mxu0 0
    %2544 = vmatprep.subr.bf16.mxu0 0
    %2545 = vmatpush1.bf16.msra.mxu0 0
    %2546 = vmatprep.subr.bf16.mxu0 0
    %2547 = vmatpush1.bf16.msra.mxu0 0
    %2548 = vmatprep.subr.bf16.mxu0 0
    %2549 = vmatpush1.bf16.msra.mxu0 0
    %2550 = vmatprep.subr.bf16.mxu0 0
    %2551 = vmatpush1.bf16.msra.mxu0 0
    %2552 = vmatprep.subr.bf16.mxu0 0
    %2553 = vmatpush1.bf16.msra.mxu0 0
    %2554 = vmatprep.subr.bf16.mxu0 0
    %2555 = vmatpush1.bf16.msra.mxu0 0
    %2556 = vmatprep.subr.bf16.mxu0 0
    %2557 = vmatpush1.bf16.msra.mxu0 0
    %2558 = vmatprep.subr.bf16.mxu0 0
    %2559 = vmatpush1.bf16.msra.mxu0 0
    %2560 = vmatprep.mubr.bf16.mxu0 0
    %2561 = vmatmul.mubr.bf16.gmra.mrb[0].mxu0 %v2513
    %v2562 = vpop.f32.mrb[0].mxu0
    %v2563 = vadd.f32 0.0, %v2562
    %v2564 = vpop.f32.mrb[0].mxu0
    %v2565 = vpop.f32.mrb[0].mxu0
    %v2566 = vadd.f32 0.0, %v2565
    %v2567 = vpop.f32.mrb[0].mxu0
    %2568 = vmatprep.mubr.bf16.mxu0 0
    %2569 = vmatmul.mubr.bf16.gmra.mrb[0].mxu0 %v2516
    %v2570 = vpop.f32.mrb[0].mxu0
    %v2571 = vadd.f32 0.0, %v2570
    %v2572 = vpop.f32.mrb[0].mxu0
    %v2573 = vpop.f32.mrb[0].mxu0
    %v2574 = vadd.f32 0.0, %v2573
    %v2575 = vpop.f32.mrb[0].mxu0
    %2576 = vmatprep.mubr.bf16.mxu0 0
    %2577 = vmatmul.mubr.bf16.gmra.mrb[0].mxu0 %v2519
    %v2578 = vpop.f32.mrb[0].mxu0
    %v2579 = vadd.f32 0.0, %v2578
    %v2580 = vpop.f32.mrb[0].mxu0
    %v2581 = vpop.f32.mrb[0].mxu0
    %v2582 = vadd.f32 0.0, %v2581
    %v2583 = vpop.f32.mrb[0].mxu0
    %2584 = vmatprep.mubr.bf16.mxu0 0
    %2585 = vmatmul.mubr.bf16.gmra.mrb[0].mxu0 %v2522
    %v2586 = vpop.f32.mrb[0].mxu0
    %v2587 = vadd.f32 0.0, %v2586
    %v2588 = vpop.f32.mrb[0].mxu0
    %v2589 = vpop.f32.mrb[0].mxu0
    %v2590 = vpop.f32.mrb[0].mxu0
    %2591 = vdwg.mxu0
    %v2599 = vunpack.c.l.b16 %v2475
    %v2600 = vunpack.c.l.b16 %v2476
    %v2601 = vunpack.c.l.b16 %v2477
    %v2602 = vunpack.c.l.b16 %v2478
    %v2603 = vunpack.c.l.b16 %v2479
    %v2604 = vunpack.c.l.b16 %v2480
    %v2605 = vunpack.c.l.b16 %v2481
    %v2606 = vpack.c.b16 %v2600, %v2599
    %v2607 = vpack.c.b16 %v2602, %v2601
    %v2608 = vpack.c.b16 %v2604, %v2603
    %v2609 = vpack.c.b16 %v2605, %v2605
    %v2611 = vsel %vm2511, %v2606, 0
    %v2614 = vsel %vm2511, %v2607, 0
    %v2617 = vsel %vm2511, %v2608, 0
    %v2620 = vsel %vm2511, %v2609, 0
    %2622 = vmatprep.subr.bf16.mxu0 0
    %2623 = vmatpush1.bf16.msra.mxu0 %v2489
    %2624 = vmatprep.subr.bf16.mxu0 0
    %2625 = vmatpush1.bf16.msra.mxu0 %v2490
    %2626 = vmatprep.subr.bf16.mxu0 0
    %2627 = vmatpush1.bf16.msra.mxu0 %v2491
    %2628 = vmatprep.subr.bf16.mxu0 0
    %2629 = vmatpush1.bf16.msra.mxu0 %v2526
    %2630 = vmatprep.subr.bf16.mxu0 0
    %2631 = vmatpush1.bf16.msra.mxu0 0
    %2632 = vmatprep.subr.bf16.mxu0 0
    %2633 = vmatpush1.bf16.msra.mxu0 0
    %2634 = vmatprep.subr.bf16.mxu0 0
    %2635 = vmatpush1.bf16.msra.mxu0 0
    %2636 = vmatprep.subr.bf16.mxu0 0
    %2637 = vmatpush1.bf16.msra.mxu0 0
    %2638 = vmatprep.subr.bf16.mxu0 0
    %2639 = vmatpush1.bf16.msra.mxu0 0
    %2640 = vmatprep.subr.bf16.mxu0 0
    %2641 = vmatpush1.bf16.msra.mxu0 0
    %2642 = vmatprep.subr.bf16.mxu0 0
    %2643 = vmatpush1.bf16.msra.mxu0 0
    %2644 = vmatprep.subr.bf16.mxu0 0
    %2645 = vmatpush1.bf16.msra.mxu0 0
    %2646 = vmatprep.subr.bf16.mxu0 0
    %2647 = vmatpush1.bf16.msra.mxu0 0
    %2648 = vmatprep.subr.bf16.mxu0 0
    %2649 = vmatpush1.bf16.msra.mxu0 0
    %2650 = vmatprep.subr.bf16.mxu0 0
    %2651 = vmatpush1.bf16.msra.mxu0 0
    %2652 = vmatprep.subr.bf16.mxu0 0
    %2653 = vmatpush1.bf16.msra.mxu0 0
    %2654 = vmatprep.mubr.bf16.mxu0 0
    %2655 = vmatmul.mubr.bf16.gmra.mrb[0].mxu0 %v2611
    %v2656 = vpop.f32.mrb[0].mxu0
    %v2657 = vadd.f32 0.0, %v2656
    %v2658 = vpop.f32.mrb[0].mxu0
    %v2659 = vpop.f32.mrb[0].mxu0
    %v2660 = vadd.f32 0.0, %v2659
    %v2661 = vpop.f32.mrb[0].mxu0
    %2662 = vmatprep.mubr.bf16.mxu0 0
    %2663 = vmatmul.mubr.bf16.gmra.mrb[0].mxu0 %v2614
    %v2664 = vpop.f32.mrb[0].mxu0
    %v2665 = vadd.f32 0.0, %v2664
    %v2666 = vpop.f32.mrb[0].mxu0
    %v2667 = vpop.f32.mrb[0].mxu0
    %v2668 = vadd.f32 0.0, %v2667
    %v2669 = vpop.f32.mrb[0].mxu0
    %2670 = vmatprep.mubr.bf16.mxu0 0
    %2671 = vmatmul.mubr.bf16.gmra.mrb[0].mxu0 %v2617
    %v2672 = vpop.f32.mrb[0].mxu0
    %v2673 = vadd.f32 0.0, %v2672
    %v2674 = vpop.f32.mrb[0].mxu0
    %v2675 = vpop.f32.mrb[0].mxu0
    %v2676 = vadd.f32 0.0, %v2675
    %v2677 = vpop.f32.mrb[0].mxu0
    %2678 = vmatprep.mubr.bf16.mxu0 0
    %2679 = vmatmul.mubr.bf16.gmra.mrb[0].mxu0 %v2620
    %v2680 = vpop.f32.mrb[0].mxu0
    %v2681 = vadd.f32 0.0, %v2680
    %v2682 = vpop.f32.mrb[0].mxu0
    %v2683 = vpop.f32.mrb[0].mxu0
    %v2684 = vpop.f32.mrb[0].mxu0
    %2685 = vdwg.mxu0
    %v2693 = vunpack.c.l.b16 %v2482
    %v2694 = vunpack.c.l.b16 %v2483
    %v2695 = vunpack.c.l.b16 %v2484
    %v2696 = vunpack.c.l.b16 %v2485
    %v2697 = vunpack.c.l.b16 %v2486
    %v2698 = vunpack.c.l.b16 %v2487
    %v2699 = vunpack.c.l.b16 %v2488
    %v2700 = vpack.c.b16 %v2694, %v2693
    %v2701 = vpack.c.b16 %v2696, %v2695
    %v2702 = vpack.c.b16 %v2698, %v2697
    %v2703 = vpack.c.b16 %v2699, %v2699
    %v2705 = vsel %vm2511, %v2700, 0
    %v2708 = vsel %vm2511, %v2701, 0
    %v2711 = vsel %vm2511, %v2702, 0
    %v2714 = vsel %vm2511, %v2703, 0
    %2716 = vmatprep.subr.bf16.mxu0 0
    %2717 = vmatpush1.bf16.msra.mxu0 %v2489
    %2718 = vmatprep.subr.bf16.mxu0 0
    %2719 = vmatpush1.bf16.msra.mxu0 %v2490
    %2720 = vmatprep.subr.bf16.mxu0 0
    %2721 = vmatpush1.bf16.msra.mxu0 %v2491
    %2722 = vmatprep.subr.bf16.mxu0 0
    %2723 = vmatpush1.bf16.msra.mxu0 %v2526
    %2724 = vmatprep.subr.bf16.mxu0 0
    %2725 = vmatpush1.bf16.msra.mxu0 0
    %2726 = vmatprep.subr.bf16.mxu0 0
    %2727 = vmatpush1.bf16.msra.mxu0 0
    %2728 = vmatprep.subr.bf16.mxu0 0
    %2729 = vmatpush1.bf16.msra.mxu0 0
    %2730 = vmatprep.subr.bf16.mxu0 0
    %2731 = vmatpush1.bf16.msra.mxu0 0
    %2732 = vmatprep.subr.bf16.mxu0 0
    %2733 = vmatpush1.bf16.msra.mxu0 0
    %2734 = vmatprep.subr.bf16.mxu0 0
    %2735 = vmatpush1.bf16.msra.mxu0 0
    %2736 = vmatprep.subr.bf16.mxu0 0
    %2737 = vmatpush1.bf16.msra.mxu0 0
    %2738 = vmatprep.subr.bf16.mxu0 0
    %2739 = vmatpush1.bf16.msra.mxu0 0
    %2740 = vmatprep.subr.bf16.mxu0 0
    %2741 = vmatpush1.bf16.msra.mxu0 0
    %2742 = vmatprep.subr.bf16.mxu0 0
    %2743 = vmatpush1.bf16.msra.mxu0 0
    %2744 = vmatprep.subr.bf16.mxu0 0
    %2745 = vmatpush1.bf16.msra.mxu0 0
    %2746 = vmatprep.subr.bf16.mxu0 0
    %2747 = vmatpush1.bf16.msra.mxu0 0
    %2748 = vmatprep.mubr.bf16.mxu0 0
    %2749 = vmatmul.mubr.bf16.gmra.mrb[0].mxu0 %v2705
    %v2750 = vpop.f32.mrb[0].mxu0
    %v2751 = vadd.f32 0.0, %v2750
    %v2752 = vpop.f32.mrb[0].mxu0
    %v2753 = vpop.f32.mrb[0].mxu0
    %v2754 = vadd.f32 0.0, %v2753
    %v2755 = vpop.f32.mrb[0].mxu0
    %2756 = vmatprep.mubr.bf16.mxu0 0
    %2757 = vmatmul.mubr.bf16.gmra.mrb[0].mxu0 %v2708
    %v2758 = vpop.f32.mrb[0].mxu0
    %v2759 = vadd.f32 0.0, %v2758
    %v2760 = vpop.f32.mrb[0].mxu0
    %v2761 = vpop.f32.mrb[0].mxu0
    %v2762 = vadd.f32 0.0, %v2761
    %v2763 = vpop.f32.mrb[0].mxu0
    %2764 = vmatprep.mubr.bf16.mxu0 0
    %2765 = vmatmul.mubr.bf16.gmra.mrb[0].mxu0 %v2711
    %v2766 = vpop.f32.mrb[0].mxu0
    %v2767 = vadd.f32 0.0, %v2766
    %v2768 = vpop.f32.mrb[0].mxu0
    %v2769 = vpop.f32.mrb[0].mxu0
    %v2770 = vadd.f32 0.0, %v2769
    %v2771 = vpop.f32.mrb[0].mxu0
    %2772 = vmatprep.mubr.bf16.mxu0 0
    %2773 = vmatmul.mubr.bf16.gmra.mrb[0].mxu0 %v2714
    %v2774 = vpop.f32.mrb[0].mxu0
    %v2775 = vadd.f32 0.0, %v2774
    %v2776 = vpop.f32.mrb[0].mxu0
    %v2777 = vpop.f32.mrb[0].mxu0
    %v2778 = vpop.f32.mrb[0].mxu0
    %2779 = vdwg.mxu0
    %2787 = vrot.lane.b32.xlu0 %v2657, 64
    %v2788 = vpop.permute.xlu0 %2787
    %2789 = vrot.lane.b32.xlu0 %v2660, 64
    %v2790 = vpop.permute.xlu0 %2789
    %2791 = vrot.lane.b32.xlu0 %v2665, 64
    %v2792 = vpop.permute.xlu0 %2791
    %2793 = vrot.lane.b32.xlu0 %v2668, 64
    %v2794 = vpop.permute.xlu0 %2793
    %2795 = vrot.lane.b32.xlu0 %v2673, 64
    %v2796 = vpop.permute.xlu0 %2795
    %2797 = vrot.lane.b32.xlu0 %v2676, 64
    %v2798 = vpop.permute.xlu0 %2797
    %2799 = vrot.lane.b32.xlu0 %v2681, 64
    %v2800 = vpop.permute.xlu0 %2799
    %v2808 = vsel %vm1894, %v2563, %v2788
    %v2809 = vsel %vm1894, %v2566, %v2790
    %v2810 = vsel %vm1894, %v2571, %v2792
    %v2811 = vsel %vm1894, %v2574, %v2794
    %v2812 = vsel %vm1894, %v2579, %v2796
    %v2813 = vsel %vm1894, %v2582, %v2798
    %v2814 = vsel %vm1894, %v2587, %v2800
    %v2815 = vpack.c.bf16 %v2809, %v2808
    %v2816 = vpack.c.bf16 %v2754, %v2751
    %v2817 = vpack.c.bf16 %v2811, %v2810
    %v2818 = vpack.c.bf16 %v2762, %v2759
    %v2819 = vpack.c.bf16 %v2813, %v2812
    %v2820 = vpack.c.bf16 %v2770, %v2767
    %v2821 = vpack.c.bf16 %v2814, %v2814
    %v2822 = vpack.c.bf16 %v2775, %v2775
    %v2824 = vlaneseq
    %v2825 = vshrl.u32 %v2824, 7
    %v2826 = vsub.s32 0, %v2825
    %v2827 = vrot.slane %v2467, %v2826
    %v2853 = vunpack.c.l.b16 %v2443
    %v2854 = vunpack.c.l.b16 %v2444
    %v2855 = vunpack.c.l.b16 %v2445
    %v2856 = vunpack.c.l.b16 %v2446
    %v2857 = vunpack.c.l.b16 %v2447
    %v2858 = vunpack.c.l.b16 %v2448
    %v2859 = vunpack.c.l.b16 %v2449
    %v2860 = vunpack.c.l.b16 %v2450
    %v2861 = vunpack.c.l.b16 %v2451
    %v2862 = vunpack.c.l.b16 %v2452
    %v2863 = vunpack.c.l.b16 %v2453
    %v2864 = vunpack.c.l.b16 %v2454
    %v2865 = vunpack.c.l.b16 %v2455
    %v2866 = vunpack.c.l.b16 %v2456
    %v2867 = vunpack.c.l.b16 %v2457
    %v2868 = vunpack.c.l.b16 %v2458
    %v2869 = vunpack.c.l.b16 %v2459
    %v2870 = vunpack.c.l.b16 %v2460
    %v2871 = vunpack.c.l.b16 %v2461
    %v2872 = vunpack.c.l.b16 %v2462
    %v2873 = vunpack.c.l.b16 %v2463
    %v2874 = vunpack.c.l.b16 %v2464
    %v2875 = vunpack.c.l.b16 %v2465
    %v2876 = vunpack.c.l.b16 %v2466
    %v2877 = vpack.c.b16 %v2854, %v2853
    %v2878 = vpack.c.b16 %v2856, %v2855
    %v2879 = vpack.c.b16 %v2858, %v2857
    %v2880 = vpack.c.b16 %v2860, %v2859
    %v2881 = vpack.c.b16 %v2862, %v2861
    %v2882 = vpack.c.b16 %v2864, %v2863
    %v2883 = vpack.c.b16 %v2866, %v2865
    %v2884 = vpack.c.b16 %v2868, %v2867
    %v2885 = vpack.c.b16 %v2870, %v2869
    %v2886 = vpack.c.b16 %v2872, %v2871
    %v2887 = vpack.c.b16 %v2874, %v2873
    %v2888 = vpack.c.b16 %v2876, %v2875
    %v2902 = vsel %vm1894, %v2816, 0
    %v2905 = vsel %vm1894, %v2818, 0
    %v2908 = vsel %vm1894, %v2820, 0
    %v2911 = vsel %vm1894, %v2822, 0
    %2913 = vmatprep.subr.bf16.mxu0 0
    %2914 = vmatpush1.bf16.msra.mxu0 %v2877
    %2915 = vmatprep.subr.bf16.mxu0 0
    %2916 = vmatpush1.bf16.msra.mxu0 %v2878
    %2917 = vmatprep.subr.bf16.mxu0 0
    %2918 = vmatpush1.bf16.msra.mxu0 %v2879
    %2919 = vmatprep.subr.bf16.mxu0 0
    %2920 = vmatpush1.bf16.msra.mxu0 %v2880
    %2921 = vmatprep.subr.bf16.mxu0 0
    %2922 = vmatpush1.bf16.msra.mxu0 %v2881
    %2923 = vmatprep.subr.bf16.mxu0 0
    %2924 = vmatpush1.bf16.msra.mxu0 %v2882
    %2925 = vmatprep.subr.bf16.mxu0 0
    %2926 = vmatpush1.bf16.msra.mxu0 %v2883
    %2927 = vmatprep.subr.bf16.mxu0 0
    %2928 = vmatpush1.bf16.msra.mxu0 %v2884
    %2929 = vmatprep.subr.bf16.mxu0 0
    %2930 = vmatpush1.bf16.msra.mxu0 %v2885
    %2931 = vmatprep.subr.bf16.mxu0 0
    %2932 = vmatpush1.bf16.msra.mxu0 %v2886
    %2933 = vmatprep.subr.bf16.mxu0 0
    %2934 = vmatpush1.bf16.msra.mxu0 %v2887
    %2935 = vmatprep.subr.bf16.mxu0 0
    %2936 = vmatpush1.bf16.msra.mxu0 %v2888
    %2937 = vmatprep.subr.bf16.mxu0 0
    %2938 = vmatpush1.bf16.msra.mxu0 0
    %2939 = vmatprep.subr.bf16.mxu0 0
    %2940 = vmatpush1.bf16.msra.mxu0 0
    %2941 = vmatprep.subr.bf16.mxu0 0
    %2942 = vmatpush1.bf16.msra.mxu0 0
    %2943 = vmatprep.subr.bf16.mxu0 0
    %2944 = vmatpush1.bf16.msra.mxu0 0
    %2945 = vmatprep.mubr.bf16.mxu0 %v2902
    %2946 = vmatmul.mubr.bf16.gmra.mrb[0].mxu0 %v2815
    %v2947 = vpop.f32.mrb[0].mxu0
    %v2948 = vadd.f32 %v2827, %v2947
    %v2949 = vpop.f32.mrb[0].mxu0
    %v2950 = vpop.f32.mrb[0].mxu0
    %v2951 = vadd.f32 %v2827, %v2950
    %v2952 = vpop.f32.mrb[0].mxu0
    %2953 = vmatprep.mubr.bf16.mxu0 %v2905
    %2954 = vmatmul.mubr.bf16.gmra.mrb[0].mxu0 %v2817
    %v2955 = vpop.f32.mrb[0].mxu0
    %v2956 = vadd.f32 %v2827, %v2955
    %v2957 = vpop.f32.mrb[0].mxu0
    %v2958 = vpop.f32.mrb[0].mxu0
    %v2959 = vadd.f32 %v2827, %v2958
    %v2960 = vpop.f32.mrb[0].mxu0
    %2961 = vmatprep.mubr.bf16.mxu0 %v2908
    %2962 = vmatmul.mubr.bf16.gmra.mrb[0].mxu0 %v2819
    %v2963 = vpop.f32.mrb[0].mxu0
    %v2964 = vadd.f32 %v2827, %v2963
    %v2965 = vpop.f32.mrb[0].mxu0
    %v2966 = vpop.f32.mrb[0].mxu0
    %v2967 = vadd.f32 %v2827, %v2966
    %v2968 = vpop.f32.mrb[0].mxu0
    %2969 = vmatprep.mubr.bf16.mxu0 %v2911
    %2970 = vmatmul.mubr.bf16.gmra.mrb[0].mxu0 %v2821
    %v2971 = vpop.f32.mrb[0].mxu0
    %v2972 = vadd.f32 %v2827, %v2971
    %v2973 = vpop.f32.mrb[0].mxu0
    %v2974 = vpop.f32.mrb[0].mxu0
    %v2975 = vpop.f32.mrb[0].mxu0
    %2976 = vdwg.mxu0
    %v2977 = vmax.f32 %v2948, 0.0
    %v2978 = vmax.f32 %v2951, 0.0
    %v2979 = vmax.f32 %v2956, 0.0
    %v2980 = vmax.f32 %v2959, 0.0
    %v2981 = vmax.f32 %v2964, 0.0
    %v2982 = vmax.f32 %v2967, 0.0
    %v2983 = vmax.f32 %v2972, 0.0
    %v2984 = vld [vmem:[%s17] sm:$0xf]
    %v2985 = vld [vmem:[%s17 + $0x4] sm:$0xf]
    %v2986 = vld [vmem:[%s17 + $0x8] sm:$0xf]
    %v2987 = vld [vmem:[%s17 + $0xc] sm:$0xf]
    %v2988 = vld [vmem:[%s17 + $0x10] sm:$0xf]
    %v2989 = vld [vmem:[%s17 + $0x14] sm:$0xf]
    %v2990 = vld [vmem:[%s17 + $0x18] sm:$0xf]
    %v2991 = vld [vmem:[%s17 + $0x1c] sm:$0xf]
    %v2992 = vld [vmem:[%s17 + $0x20] sm:$0xf]
    %v2993 = vld [vmem:[%s17 + $0x24] sm:$0xf]
    %v2994 = vld [vmem:[%s17 + $0x28] sm:$0xf]
    %v2995 = vld [vmem:[%s17 + $0x2c] sm:$0xf]
    %v2996 = vld [vmem:[%s17 + $0x30] sm:$0xf]
    %v2997 = vld [vmem:[%s17 + $0x34] sm:$0xf]
    %v2998 = vld [vmem:[%s17 + $0x38] sm:$0xf]
    %v2999 = vld [vmem:[%s17 + $0x3c] sm:$0xf]
    %v3000 = vld [vmem:[%s17 + $0x40] sm:$0xf]
    %v3001 = vld [vmem:[%s17 + $0x44] sm:$0xf]
    %v3002 = vld [vmem:[%s17 + $0x48] sm:$0xf]
    %v3003 = vld [vmem:[%s17 + $0x4c] sm:$0xf]
    %v3004 = vld [vmem:[%s17 + $0x50] sm:$0xf]
    %v3005 = vld [vmem:[%s17 + $0x54] sm:$0xf]
    %v3006 = vld [vmem:[%s17 + $0x58] sm:$0xf]
    %v3007 = vld [vmem:[%s17 + $0x5c] sm:$0xf]
    %v3008 = vld [vmem:[%s19] sm:$0x1]
    %v3009 = vld [vmem:[%s21] sm:$0xf]
    %v3010 = vld [vmem:[%s21 + $0x4] sm:$0xf]
    %v3011 = vld [vmem:[%s21 + $0x8] sm:$0xf]
    %v3012 = vld [vmem:[%s21 + $0xc] sm:$0xf]
    %v3013 = vld [vmem:[%s21 + $0x10] sm:$0xf]
    %v3014 = vld [vmem:[%s21 + $0x14] sm:$0xf]
    %v3015 = vld [vmem:[%s21 + $0x18] sm:$0x1]
    %v3016 = vld [vmem:[%s21 + $0x1c] sm:$0xf]
    %v3017 = vld [vmem:[%s21 + $0x20] sm:$0xf]
    %v3018 = vld [vmem:[%s21 + $0x24] sm:$0xf]
    %v3019 = vld [vmem:[%s21 + $0x28] sm:$0xf]
    %v3020 = vld [vmem:[%s21 + $0x2c] sm:$0xf]
    %v3021 = vld [vmem:[%s21 + $0x30] sm:$0xf]
    %v3022 = vld [vmem:[%s21 + $0x34] sm:$0x1]
    %v3023 = vld [vmem:[%s21 + $0x38] sm:$0xf]
    %v3024 = vld [vmem:[%s21 + $0x3c] sm:$0xf]
    %v3025 = vld [vmem:[%s21 + $0x40] sm:$0xf]
    %v3026 = vld [vmem:[%s21 + $0x44] sm:$0xf]
    %v3027 = vld [vmem:[%s21 + $0x48] sm:$0xf]
    %v3028 = vld [vmem:[%s21 + $0x4c] sm:$0xf]
    %v3029 = vld [vmem:[%s21 + $0x50] sm:$0x1]
    %v3030 = vpack.c.bf16 %v2978, %v2977
    %v3031 = vpack.c.bf16 %v2980, %v2979
    %v3032 = vpack.c.bf16 %v2982, %v2981
    %v3033 = vpack.c.bf16 %v2983, %v2983
    %v3041 = vunpack.c.l.b16 %v3009
    %v3042 = vunpack.c.l.b16 %v3010
    %v3043 = vunpack.c.l.b16 %v3011
    %v3044 = vunpack.c.l.b16 %v3012
    %v3045 = vunpack.c.l.b16 %v3013
    %v3046 = vunpack.c.l.b16 %v3014
    %v3047 = vunpack.c.l.b16 %v3015
    %v3048 = vpack.c.b16 %v3042, %v3041
    %v3049 = vpack.c.b16 %v3044, %v3043
    %v3050 = vpack.c.b16 %v3046, %v3045
    %v3051 = vpack.c.b16 %v3047, %v3047
    %v3053 = vsel %vm2511, %v3048, 0
    %v3056 = vsel %vm2511, %v3049, 0
    %v3059 = vsel %vm2511, %v3050, 0
    %v3062 = vsel %vm2511, %v3051, 0
    %v3065 = vsel %vm2524, %v3033, 0
    %3067 = vmatprep.subr.bf16.mxu0 0
    %3068 = vmatpush1.bf16.msra.mxu0 %v3030
    %3069 = vmatprep.subr.bf16.mxu0 0
    %3070 = vmatpush1.bf16.msra.mxu0 %v3031
    %3071 = vmatprep.subr.bf16.mxu0 0
    %3072 = vmatpush1.bf16.msra.mxu0 %v3032
    %3073 = vmatprep.subr.bf16.mxu0 0
    %3074 = vmatpush1.bf16.msra.mxu0 %v3065
    %3075 = vmatprep.subr.bf16.mxu0 0
    %3076 = vmatpush1.bf16.msra.mxu0 0
    %3077 = vmatprep.subr.bf16.mxu0 0
    %3078 = vmatpush1.bf16.msra.mxu0 0
    %3079 = vmatprep.subr.bf16.mxu0 0
    %3080 = vmatpush1.bf16.msra.mxu0 0
    %3081 = vmatprep.subr.bf16.mxu0 0
    %3082 = vmatpush1.bf16.msra.mxu0 0
    %3083 = vmatprep.subr.bf16.mxu0 0
    %3084 = vmatpush1.bf16.msra.mxu0 0
    %3085 = vmatprep.subr.bf16.mxu0 0
    %3086 = vmatpush1.bf16.msra.mxu0 0
    %3087 = vmatprep.subr.bf16.mxu0 0
    %3088 = vmatpush1.bf16.msra.mxu0 0
    %3089 = vmatprep.subr.bf16.mxu0 0
    %3090 = vmatpush1.bf16.msra.mxu0 0
    %3091 = vmatprep.subr.bf16.mxu0 0
    %3092 = vmatpush1.bf16.msra.mxu0 0
    %3093 = vmatprep.subr.bf16.mxu0 0
    %3094 = vmatpush1.bf16.msra.mxu0 0
    %3095 = vmatprep.subr.bf16.mxu0 0
    %3096 = vmatpush1.bf16.msra.mxu0 0
    %3097 = vmatprep.subr.bf16.mxu0 0
    %3098 = vmatpush1.bf16.msra.mxu0 0
    %3099 = vmatprep.mubr.bf16.mxu0 0
    %3100 = vmatmul.mubr.bf16.gmra.mrb[0].mxu0 %v3053
    %v3101 = vpop.f32.mrb[0].mxu0
    %v3102 = vadd.f32 0.0, %v3101
    %v3103 = vpop.f32.mrb[0].mxu0
    %v3104 = vpop.f32.mrb[0].mxu0
    %v3105 = vadd.f32 0.0, %v3104
    %v3106 = vpop.f32.mrb[0].mxu0
    %3107 = vmatprep.mubr.bf16.mxu0 0
    %3108 = vmatmul.mubr.bf16.gmra.mrb[0].mxu0 %v3056
    %v3109 = vpop.f32.mrb[0].mxu0
    %v3110 = vadd.f32 0.0, %v3109
    %v3111 = vpop.f32.mrb[0].mxu0
    %v3112 = vpop.f32.mrb[0].mxu0
    %v3113 = vadd.f32 0.0, %v3112
    %v3114 = vpop.f32.mrb[0].mxu0
    %3115 = vmatprep.mubr.bf16.mxu0 0
    %3116 = vmatmul.mubr.bf16.gmra.mrb[0].mxu0 %v3059
    %v3117 = vpop.f32.mrb[0].mxu0
    %v3118 = vadd.f32 0.0, %v3117
    %v3119 = vpop.f32.mrb[0].mxu0
    %v3120 = vpop.f32.mrb[0].mxu0
    %v3121 = vadd.f32 0.0, %v3120
    %v3122 = vpop.f32.mrb[0].mxu0
    %3123 = vmatprep.mubr.bf16.mxu0 0
    %3124 = vmatmul.mubr.bf16.gmra.mrb[0].mxu0 %v3062
    %v3125 = vpop.f32.mrb[0].mxu0
    %v3126 = vadd.f32 0.0, %v3125
    %v3127 = vpop.f32.mrb[0].mxu0
    %v3128 = vpop.f32.mrb[0].mxu0
    %v3129 = vpop.f32.mrb[0].mxu0
    %3130 = vdwg.mxu0
    %v3138 = vunpack.c.l.b16 %v3016
    %v3139 = vunpack.c.l.b16 %v3017
    %v3140 = vunpack.c.l.b16 %v3018
    %v3141 = vunpack.c.l.b16 %v3019
    %v3142 = vunpack.c.l.b16 %v3020
    %v3143 = vunpack.c.l.b16 %v3021
    %v3144 = vunpack.c.l.b16 %v3022
    %v3145 = vpack.c.b16 %v3139, %v3138
    %v3146 = vpack.c.b16 %v3141, %v3140
    %v3147 = vpack.c.b16 %v3143, %v3142
    %v3148 = vpack.c.b16 %v3144, %v3144
    %v3150 = vsel %vm2511, %v3145, 0
    %v3153 = vsel %vm2511, %v3146, 0
    %v3156 = vsel %vm2511, %v3147, 0
    %v3159 = vsel %vm2511, %v3148, 0
    %3161 = vmatprep.subr.bf16.mxu0 0
    %3162 = vmatpush1.bf16.msra.mxu0 %v3030
    %3163 = vmatprep.subr.bf16.mxu0 0
    %3164 = vmatpush1.bf16.msra.mxu0 %v3031
    %3165 = vmatprep.subr.bf16.mxu0 0
    %3166 = vmatpush1.bf16.msra.mxu0 %v3032
    %3167 = vmatprep.subr.bf16.mxu0 0
    %3168 = vmatpush1.bf16.msra.mxu0 %v3065
    %3169 = vmatprep.subr.bf16.mxu0 0
    %3170 = vmatpush1.bf16.msra.mxu0 0
    %3171 = vmatprep.subr.bf16.mxu0 0
    %3172 = vmatpush1.bf16.msra.mxu0 0
    %3173 = vmatprep.subr.bf16.mxu0 0
    %3174 = vmatpush1.bf16.msra.mxu0 0
    %3175 = vmatprep.subr.bf16.mxu0 0
    %3176 = vmatpush1.bf16.msra.mxu0 0
    %3177 = vmatprep.subr.bf16.mxu0 0
    %3178 = vmatpush1.bf16.msra.mxu0 0
    %3179 = vmatprep.subr.bf16.mxu0 0
    %3180 = vmatpush1.bf16.msra.mxu0 0
    %3181 = vmatprep.subr.bf16.mxu0 0
    %3182 = vmatpush1.bf16.msra.mxu0 0
    %3183 = vmatprep.subr.bf16.mxu0 0
    %3184 = vmatpush1.bf16.msra.mxu0 0
    %3185 = vmatprep.subr.bf16.mxu0 0
    %3186 = vmatpush1.bf16.msra.mxu0 0
    %3187 = vmatprep.subr.bf16.mxu0 0
    %3188 = vmatpush1.bf16.msra.mxu0 0
    %3189 = vmatprep.subr.bf16.mxu0 0
    %3190 = vmatpush1.bf16.msra.mxu0 0
    %3191 = vmatprep.subr.bf16.mxu0 0
    %3192 = vmatpush1.bf16.msra.mxu0 0
    %3193 = vmatprep.mubr.bf16.mxu0 0
    %3194 = vmatmul.mubr.bf16.gmra.mrb[0].mxu0 %v3150
    %v3195 = vpop.f32.mrb[0].mxu0
    %v3196 = vadd.f32 0.0, %v3195
    %v3197 = vpop.f32.mrb[0].mxu0
    %v3198 = vpop.f32.mrb[0].mxu0
    %v3199 = vadd.f32 0.0, %v3198
    %v3200 = vpop.f32.mrb[0].mxu0
    %3201 = vmatprep.mubr.bf16.mxu0 0
    %3202 = vmatmul.mubr.bf16.gmra.mrb[0].mxu0 %v3153
    %v3203 = vpop.f32.mrb[0].mxu0
    %v3204 = vadd.f32 0.0, %v3203
    %v3205 = vpop.f32.mrb[0].mxu0
    %v3206 = vpop.f32.mrb[0].mxu0
    %v3207 = vadd.f32 0.0, %v3206
    %v3208 = vpop.f32.mrb[0].mxu0
    %3209 = vmatprep.mubr.bf16.mxu0 0
    %3210 = vmatmul.mubr.bf16.gmra.mrb[0].mxu0 %v3156
    %v3211 = vpop.f32.mrb[0].mxu0
    %v3212 = vadd.f32 0.0, %v3211
    %v3213 = vpop.f32.mrb[0].mxu0
    %v3214 = vpop.f32.mrb[0].mxu0
    %v3215 = vadd.f32 0.0, %v3214
    %v3216 = vpop.f32.mrb[0].mxu0
    %3217 = vmatprep.mubr.bf16.mxu0 0
    %3218 = vmatmul.mubr.bf16.gmra.mrb[0].mxu0 %v3159
    %v3219 = vpop.f32.mrb[0].mxu0
    %v3220 = vadd.f32 0.0, %v3219
    %v3221 = vpop.f32.mrb[0].mxu0
    %v3222 = vpop.f32.mrb[0].mxu0
    %v3223 = vpop.f32.mrb[0].mxu0
    %3224 = vdwg.mxu0
    %v3232 = vunpack.c.l.b16 %v3023
    %v3233 = vunpack.c.l.b16 %v3024
    %v3234 = vunpack.c.l.b16 %v3025
    %v3235 = vunpack.c.l.b16 %v3026
    %v3236 = vunpack.c.l.b16 %v3027
    %v3237 = vunpack.c.l.b16 %v3028
    %v3238 = vunpack.c.l.b16 %v3029
    %v3239 = vpack.c.b16 %v3233, %v3232
    %v3240 = vpack.c.b16 %v3235, %v3234
    %v3241 = vpack.c.b16 %v3237, %v3236
    %v3242 = vpack.c.b16 %v3238, %v3238
    %v3244 = vsel %vm2511, %v3239, 0
    %v3247 = vsel %vm2511, %v3240, 0
    %v3250 = vsel %vm2511, %v3241, 0
    %v3253 = vsel %vm2511, %v3242, 0
    %3255 = vmatprep.subr.bf16.mxu0 0
    %3256 = vmatpush1.bf16.msra.mxu0 %v3030
    %3257 = vmatprep.subr.bf16.mxu0 0
    %3258 = vmatpush1.bf16.msra.mxu0 %v3031
    %3259 = vmatprep.subr.bf16.mxu0 0
    %3260 = vmatpush1.bf16.msra.mxu0 %v3032
    %3261 = vmatprep.subr.bf16.mxu0 0
    %3262 = vmatpush1.bf16.msra.mxu0 %v3065
    %3263 = vmatprep.subr.bf16.mxu0 0
    %3264 = vmatpush1.bf16.msra.mxu0 0
    %3265 = vmatprep.subr.bf16.mxu0 0
    %3266 = vmatpush1.bf16.msra.mxu0 0
    %3267 = vmatprep.subr.bf16.mxu0 0
    %3268 = vmatpush1.bf16.msra.mxu0 0
    %3269 = vmatprep.subr.bf16.mxu0 0
    %3270 = vmatpush1.bf16.msra.mxu0 0
    %3271 = vmatprep.subr.bf16.mxu0 0
    %3272 = vmatpush1.bf16.msra.mxu0 0
    %3273 = vmatprep.subr.bf16.mxu0 0
    %3274 = vmatpush1.bf16.msra.mxu0 0
    %3275 = vmatprep.subr.bf16.mxu0 0
    %3276 = vmatpush1.bf16.msra.mxu0 0
    %3277 = vmatprep.subr.bf16.mxu0 0
    %3278 = vmatpush1.bf16.msra.mxu0 0
    %3279 = vmatprep.subr.bf16.mxu0 0
    %3280 = vmatpush1.bf16.msra.mxu0 0
    %3281 = vmatprep.subr.bf16.mxu0 0
    %3282 = vmatpush1.bf16.msra.mxu0 0
    %3283 = vmatprep.subr.bf16.mxu0 0
    %3284 = vmatpush1.bf16.msra.mxu0 0
    %3285 = vmatprep.subr.bf16.mxu0 0
    %3286 = vmatpush1.bf16.msra.mxu0 0
    %3287 = vmatprep.mubr.bf16.mxu0 0
    %3288 = vmatmul.mubr.bf16.gmra.mrb[0].mxu0 %v3244
    %v3289 = vpop.f32.mrb[0].mxu0
    %v3290 = vadd.f32 0.0, %v3289
    %v3291 = vpop.f32.mrb[0].mxu0
    %v3292 = vpop.f32.mrb[0].mxu0
    %v3293 = vadd.f32 0.0, %v3292
    %v3294 = vpop.f32.mrb[0].mxu0
    %3295 = vmatprep.mubr.bf16.mxu0 0
    %3296 = vmatmul.mubr.bf16.gmra.mrb[0].mxu0 %v3247
    %v3297 = vpop.f32.mrb[0].mxu0
    %v3298 = vadd.f32 0.0, %v3297
    %v3299 = vpop.f32.mrb[0].mxu0
    %v3300 = vpop.f32.mrb[0].mxu0
    %v3301 = vadd.f32 0.0, %v3300
    %v3302 = vpop.f32.mrb[0].mxu0
    %3303 = vmatprep.mubr.bf16.mxu0 0
    %3304 = vmatmul.mubr.bf16.gmra.mrb[0].mxu0 %v3250
    %v3305 = vpop.f32.mrb[0].mxu0
    %v3306 = vadd.f32 0.0, %v3305
    %v3307 = vpop.f32.mrb[0].mxu0
    %v3308 = vpop.f32.mrb[0].mxu0
    %v3309 = vadd.f32 0.0, %v3308
    %v3310 = vpop.f32.mrb[0].mxu0
    %3311 = vmatprep.mubr.bf16.mxu0 0
    %3312 = vmatmul.mubr.bf16.gmra.mrb[0].mxu0 %v3253
    %v3313 = vpop.f32.mrb[0].mxu0
    %v3314 = vadd.f32 0.0, %v3313
    %v3315 = vpop.f32.mrb[0].mxu0
    %v3316 = vpop.f32.mrb[0].mxu0
    %v3317 = vpop.f32.mrb[0].mxu0
    %3318 = vdwg.mxu0
    %3326 = vrot.lane.b32.xlu0 %v3196, 64
    %v3327 = vpop.permute.xlu0 %3326
    %3328 = vrot.lane.b32.xlu0 %v3199, 64
    %v3329 = vpop.permute.xlu0 %3328
    %3330 = vrot.lane.b32.xlu0 %v3204, 64
    %v3331 = vpop.permute.xlu0 %3330
    %3332 = vrot.lane.b32.xlu0 %v3207, 64
    %v3333 = vpop.permute.xlu0 %3332
    %3334 = vrot.lane.b32.xlu0 %v3212, 64
    %v3335 = vpop.permute.xlu0 %3334
    %3336 = vrot.lane.b32.xlu0 %v3215, 64
    %v3337 = vpop.permute.xlu0 %3336
    %3338 = vrot.lane.b32.xlu0 %v3220, 64
    %v3339 = vpop.permute.xlu0 %3338
    %v3347 = vsel %vm1894, %v3102, %v3327
    %v3348 = vsel %vm1894, %v3105, %v3329
    %v3349 = vsel %vm1894, %v3110, %v3331
    %v3350 = vsel %vm1894, %v3113, %v3333
    %v3351 = vsel %vm1894, %v3118, %v3335
    %v3352 = vsel %vm1894, %v3121, %v3337
    %v3353 = vsel %vm1894, %v3126, %v3339
    %v3354 = vpack.c.bf16 %v3348, %v3347
    %v3355 = vpack.c.bf16 %v3293, %v3290
    %v3356 = vpack.c.bf16 %v3350, %v3349
    %v3357 = vpack.c.bf16 %v3301, %v3298
    %v3358 = vpack.c.bf16 %v3352, %v3351
    %v3359 = vpack.c.bf16 %v3309, %v3306
    %v3360 = vpack.c.bf16 %v3353, %v3353
    %v3361 = vpack.c.bf16 %v3314, %v3314
    %v3363 = vlaneseq
    %v3364 = vshrl.u32 %v3363, 7
    %v3365 = vsub.s32 0, %v3364
    %v3366 = vrot.slane %v3008, %v3365
    %v3392 = vunpack.c.l.b16 %v2984
    %v3393 = vunpack.c.l.b16 %v2985
    %v3394 = vunpack.c.l.b16 %v2986
    %v3395 = vunpack.c.l.b16 %v2987
    %v3396 = vunpack.c.l.b16 %v2988
    %v3397 = vunpack.c.l.b16 %v2989
    %v3398 = vunpack.c.l.b16 %v2990
    %v3399 = vunpack.c.l.b16 %v2991
    %v3400 = vunpack.c.l.b16 %v2992
    %v3401 = vunpack.c.l.b16 %v2993
    %v3402 = vunpack.c.l.b16 %v2994
    %v3403 = vunpack.c.l.b16 %v2995
    %v3404 = vunpack.c.l.b16 %v2996
    %v3405 = vunpack.c.l.b16 %v2997
    %v3406 = vunpack.c.l.b16 %v2998
    %v3407 = vunpack.c.l.b16 %v2999
    %v3408 = vunpack.c.l.b16 %v3000
    %v3409 = vunpack.c.l.b16 %v3001
    %v3410 = vunpack.c.l.b16 %v3002
    %v3411 = vunpack.c.l.b16 %v3003
    %v3412 = vunpack.c.l.b16 %v3004
    %v3413 = vunpack.c.l.b16 %v3005
    %v3414 = vunpack.c.l.b16 %v3006
    %v3415 = vunpack.c.l.b16 %v3007
    %v3416 = vpack.c.b16 %v3393, %v3392
    %v3417 = vpack.c.b16 %v3395, %v3394
    %v3418 = vpack.c.b16 %v3397, %v3396
    %v3419 = vpack.c.b16 %v3399, %v3398
    %v3420 = vpack.c.b16 %v3401, %v3400
    %v3421 = vpack.c.b16 %v3403, %v3402
    %v3422 = vpack.c.b16 %v3405, %v3404
    %v3423 = vpack.c.b16 %v3407, %v3406
    %v3424 = vpack.c.b16 %v3409, %v3408
    %v3425 = vpack.c.b16 %v3411, %v3410
    %v3426 = vpack.c.b16 %v3413, %v3412
    %v3427 = vpack.c.b16 %v3415, %v3414
    %v3441 = vsel %vm1894, %v3355, 0
    %v3444 = vsel %vm1894, %v3357, 0
    %v3447 = vsel %vm1894, %v3359, 0
    %v3450 = vsel %vm1894, %v3361, 0
    %3452 = vmatprep.subr.bf16.mxu0 0
    %3453 = vmatpush1.bf16.msra.mxu0 %v3416
    %3454 = vmatprep.subr.bf16.mxu0 0
    %3455 = vmatpush1.bf16.msra.mxu0 %v3417
    %3456 = vmatprep.subr.bf16.mxu0 0
    %3457 = vmatpush1.bf16.msra.mxu0 %v3418
    %3458 = vmatprep.subr.bf16.mxu0 0
    %3459 = vmatpush1.bf16.msra.mxu0 %v3419
    %3460 = vmatprep.subr.bf16.mxu0 0
    %3461 = vmatpush1.bf16.msra.mxu0 %v3420
    %3462 = vmatprep.subr.bf16.mxu0 0
    %3463 = vmatpush1.bf16.msra.mxu0 %v3421
    %3464 = vmatprep.subr.bf16.mxu0 0
    %3465 = vmatpush1.bf16.msra.mxu0 %v3422
    %3466 = vmatprep.subr.bf16.mxu0 0
    %3467 = vmatpush1.bf16.msra.mxu0 %v3423
    %3468 = vmatprep.subr.bf16.mxu0 0
    %3469 = vmatpush1.bf16.msra.mxu0 %v3424
    %3470 = vmatprep.subr.bf16.mxu0 0
    %3471 = vmatpush1.bf16.msra.mxu0 %v3425
    %3472 = vmatprep.subr.bf16.mxu0 0
    %3473 = vmatpush1.bf16.msra.mxu0 %v3426
    %3474 = vmatprep.subr.bf16.mxu0 0
    %3475 = vmatpush1.bf16.msra.mxu0 %v3427
    %3476 = vmatprep.subr.bf16.mxu0 0
    %3477 = vmatpush1.bf16.msra.mxu0 0
    %3478 = vmatprep.subr.bf16.mxu0 0
    %3479 = vmatpush1.bf16.msra.mxu0 0
    %3480 = vmatprep.subr.bf16.mxu0 0
    %3481 = vmatpush1.bf16.msra.mxu0 0
    %3482 = vmatprep.subr.bf16.mxu0 0
    %3483 = vmatpush1.bf16.msra.mxu0 0
    %3484 = vmatprep.mubr.bf16.mxu0 %v3441
    %3485 = vmatmul.mubr.bf16.gmra.mrb[0].mxu0 %v3354
    %v3486 = vpop.f32.mrb[0].mxu0
    %v3487 = vadd.f32 %v3366, %v3486
    %v3488 = vpop.f32.mrb[0].mxu0
    %v3489 = vpop.f32.mrb[0].mxu0
    %v3490 = vadd.f32 %v3366, %v3489
    %v3491 = vpop.f32.mrb[0].mxu0
    %3492 = vmatprep.mubr.bf16.mxu0 %v3444
    %3493 = vmatmul.mubr.bf16.gmra.mrb[0].mxu0 %v3356
    %v3494 = vpop.f32.mrb[0].mxu0
    %v3495 = vadd.f32 %v3366, %v3494
    %v3496 = vpop.f32.mrb[0].mxu0
    %v3497 = vpop.f32.mrb[0].mxu0
    %v3498 = vadd.f32 %v3366, %v3497
    %v3499 = vpop.f32.mrb[0].mxu0
    %3500 = vmatprep.mubr.bf16.mxu0 %v3447
    %3501 = vmatmul.mubr.bf16.gmra.mrb[0].mxu0 %v3358
    %v3502 = vpop.f32.mrb[0].mxu0
    %v3503 = vadd.f32 %v3366, %v3502
    %v3504 = vpop.f32.mrb[0].mxu0
    %v3505 = vpop.f32.mrb[0].mxu0
    %v3506 = vadd.f32 %v3366, %v3505
    %v3507 = vpop.f32.mrb[0].mxu0
    %3508 = vmatprep.mubr.bf16.mxu0 %v3450
    %3509 = vmatmul.mubr.bf16.gmra.mrb[0].mxu0 %v3360
    %v3510 = vpop.f32.mrb[0].mxu0
    %v3511 = vadd.f32 %v3366, %v3510
    %v3512 = vpop.f32.mrb[0].mxu0
    %v3513 = vpop.f32.mrb[0].mxu0
    %v3514 = vpop.f32.mrb[0].mxu0
    %3515 = vdwg.mxu0
    %v3516 = vadd.f32 %v3487, %v2436
    %v3517 = vadd.f32 %v3490, %v2437
    %v3518 = vadd.f32 %v3495, %v2438
    %v3519 = vadd.f32 %v3498, %v2439
    %v3520 = vadd.f32 %v3503, %v2440
    %v3521 = vadd.f32 %v3506, %v2441
    %v3522 = vadd.f32 %v3511, %v2442
    %v3523 = vmax.f32 %v3516, 0.0
    %v3524 = vmax.f32 %v3517, 0.0
    %v3525 = vmax.f32 %v3518, 0.0
    %v3526 = vmax.f32 %v3519, 0.0
    %v3527 = vmax.f32 %v3520, 0.0
    %v3528 = vmax.f32 %v3521, 0.0
    %v3529 = vmax.f32 %v3522, 0.0
    %v3530 = vld [vmem:[%s23] sm:$0xf]
    %v3531 = vld [vmem:[%s23 + $0x4] sm:$0xf]
    %v3532 = vld [vmem:[%s23 + $0x8] sm:$0xf]
    %v3533 = vld [vmem:[%s23 + $0xc] sm:$0xf]
    %v3534 = vld [vmem:[%s23 + $0x10] sm:$0xf]
    %v3535 = vld [vmem:[%s23 + $0x14] sm:$0xf]
    %v3536 = vld [vmem:[%s23 + $0x18] sm:$0xf]
    %v3537 = vld [vmem:[%s23 + $0x1c] sm:$0xf]
    %v3538 = vld [vmem:[%s23 + $0x20] sm:$0xf]
    %v3539 = vld [vmem:[%s23 + $0x24] sm:$0xf]
    %v3540 = vld [vmem:[%s23 + $0x28] sm:$0xf]
    %v3541 = vld [vmem:[%s23 + $0x2c] sm:$0xf]
    %v3542 = vld [vmem:[%s23 + $0x30] sm:$0xf]
    %v3543 = vld [vmem:[%s23 + $0x34] sm:$0xf]
    %v3544 = vld [vmem:[%s23 + $0x38] sm:$0xf]
    %v3545 = vld [vmem:[%s23 + $0x3c] sm:$0xf]
    %v3546 = vld [vmem:[%s23 + $0x40] sm:$0xf]
    %v3547 = vld [vmem:[%s23 + $0x44] sm:$0xf]
    %v3548 = vld [vmem:[%s23 + $0x48] sm:$0xf]
    %v3549 = vld [vmem:[%s23 + $0x4c] sm:$0xf]
    %v3550 = vld [vmem:[%s23 + $0x50] sm:$0xf]
    %v3551 = vld [vmem:[%s23 + $0x54] sm:$0xf]
    %v3552 = vld [vmem:[%s23 + $0x58] sm:$0xf]
    %v3553 = vld [vmem:[%s23 + $0x5c] sm:$0xf]
    %v3554 = vld [vmem:[%s25] sm:$0x1]
    %v3555 = vld [vmem:[%s27] sm:$0xf]
    %v3556 = vld [vmem:[%s27 + $0x4] sm:$0xf]
    %v3557 = vld [vmem:[%s27 + $0x8] sm:$0xf]
    %v3558 = vld [vmem:[%s27 + $0xc] sm:$0xf]
    %v3559 = vld [vmem:[%s27 + $0x10] sm:$0xf]
    %v3560 = vld [vmem:[%s27 + $0x14] sm:$0xf]
    %v3561 = vld [vmem:[%s27 + $0x18] sm:$0x1]
    %v3562 = vld [vmem:[%s27 + $0x1c] sm:$0xf]
    %v3563 = vld [vmem:[%s27 + $0x20] sm:$0xf]
    %v3564 = vld [vmem:[%s27 + $0x24] sm:$0xf]
    %v3565 = vld [vmem:[%s27 + $0x28] sm:$0xf]
    %v3566 = vld [vmem:[%s27 + $0x2c] sm:$0xf]
    %v3567 = vld [vmem:[%s27 + $0x30] sm:$0xf]
    %v3568 = vld [vmem:[%s27 + $0x34] sm:$0x1]
    %v3569 = vld [vmem:[%s27 + $0x38] sm:$0xf]
    %v3570 = vld [vmem:[%s27 + $0x3c] sm:$0xf]
    %v3571 = vld [vmem:[%s27 + $0x40] sm:$0xf]
    %v3572 = vld [vmem:[%s27 + $0x44] sm:$0xf]
    %v3573 = vld [vmem:[%s27 + $0x48] sm:$0xf]
    %v3574 = vld [vmem:[%s27 + $0x4c] sm:$0xf]
    %v3575 = vld [vmem:[%s27 + $0x50] sm:$0x1]
    %v3576 = vpack.c.bf16 %v3524, %v3523
    %v3577 = vpack.c.bf16 %v3526, %v3525
    %v3578 = vpack.c.bf16 %v3528, %v3527
    %v3579 = vpack.c.bf16 %v3529, %v3529
    %v3587 = vunpack.c.l.b16 %v3555
    %v3588 = vunpack.c.l.b16 %v3556
    %v3589 = vunpack.c.l.b16 %v3557
    %v3590 = vunpack.c.l.b16 %v3558
    %v3591 = vunpack.c.l.b16 %v3559
    %v3592 = vunpack.c.l.b16 %v3560
    %v3593 = vunpack.c.l.b16 %v3561
    %v3594 = vpack.c.b16 %v3588, %v3587
    %v3595 = vpack.c.b16 %v3590, %v3589
    %v3596 = vpack.c.b16 %v3592, %v3591
    %v3597 = vpack.c.b16 %v3593, %v3593
    %v3599 = vsel %vm2511, %v3594, 0
    %v3602 = vsel %vm2511, %v3595, 0
    %v3605 = vsel %vm2511, %v3596, 0
    %v3608 = vsel %vm2511, %v3597, 0
    %v3611 = vsel %vm2524, %v3579, 0
    %3613 = vmatprep.subr.bf16.mxu0 0
    %3614 = vmatpush1.bf16.msra.mxu0 %v3576
    %3615 = vmatprep.subr.bf16.mxu0 0
    %3616 = vmatpush1.bf16.msra.mxu0 %v3577
    %3617 = vmatprep.subr.bf16.mxu0 0
    %3618 = vmatpush1.bf16.msra.mxu0 %v3578
    %3619 = vmatprep.subr.bf16.mxu0 0
    %3620 = vmatpush1.bf16.msra.mxu0 %v3611
    %3621 = vmatprep.subr.bf16.mxu0 0
    %3622 = vmatpush1.bf16.msra.mxu0 0
    %3623 = vmatprep.subr.bf16.mxu0 0
    %3624 = vmatpush1.bf16.msra.mxu0 0
    %3625 = vmatprep.subr.bf16.mxu0 0
    %3626 = vmatpush1.bf16.msra.mxu0 0
    %3627 = vmatprep.subr.bf16.mxu0 0
    %3628 = vmatpush1.bf16.msra.mxu0 0
    %3629 = vmatprep.subr.bf16.mxu0 0
    %3630 = vmatpush1.bf16.msra.mxu0 0
    %3631 = vmatprep.subr.bf16.mxu0 0
    %3632 = vmatpush1.bf16.msra.mxu0 0
    %3633 = vmatprep.subr.bf16.mxu0 0
    %3634 = vmatpush1.bf16.msra.mxu0 0
    %3635 = vmatprep.subr.bf16.mxu0 0
    %3636 = vmatpush1.bf16.msra.mxu0 0
    %3637 = vmatprep.subr.bf16.mxu0 0
    %3638 = vmatpush1.bf16.msra.mxu0 0
    %3639 = vmatprep.subr.bf16.mxu0 0
    %3640 = vmatpush1.bf16.msra.mxu0 0
    %3641 = vmatprep.subr.bf16.mxu0 0
    %3642 = vmatpush1.bf16.msra.mxu0 0
    %3643 = vmatprep.subr.bf16.mxu0 0
    %3644 = vmatpush1.bf16.msra.mxu0 0
    %3645 = vmatprep.mubr.bf16.mxu0 0
    %3646 = vmatmul.mubr.bf16.gmra.mrb[0].mxu0 %v3599
    %v3647 = vpop.f32.mrb[0].mxu0
    %v3648 = vadd.f32 0.0, %v3647
    %v3649 = vpop.f32.mrb[0].mxu0
    %v3650 = vpop.f32.mrb[0].mxu0
    %v3651 = vadd.f32 0.0, %v3650
    %v3652 = vpop.f32.mrb[0].mxu0
    %3653 = vmatprep.mubr.bf16.mxu0 0
    %3654 = vmatmul.mubr.bf16.gmra.mrb[0].mxu0 %v3602
    %v3655 = vpop.f32.mrb[0].mxu0
    %v3656 = vadd.f32 0.0, %v3655
    %v3657 = vpop.f32.mrb[0].mxu0
    %v3658 = vpop.f32.mrb[0].mxu0
    %v3659 = vadd.f32 0.0, %v3658
    %v3660 = vpop.f32.mrb[0].mxu0
    %3661 = vmatprep.mubr.bf16.mxu0 0
    %3662 = vmatmul.mubr.bf16.gmra.mrb[0].mxu0 %v3605
    %v3663 = vpop.f32.mrb[0].mxu0
    %v3664 = vadd.f32 0.0, %v3663
    %v3665 = vpop.f32.mrb[0].mxu0
    %v3666 = vpop.f32.mrb[0].mxu0
    %v3667 = vadd.f32 0.0, %v3666
    %v3668 = vpop.f32.mrb[0].mxu0
    %3669 = vmatprep.mubr.bf16.mxu0 0
    %3670 = vmatmul.mubr.bf16.gmra.mrb[0].mxu0 %v3608
    %v3671 = vpop.f32.mrb[0].mxu0
    %v3672 = vadd.f32 0.0, %v3671
    %v3673 = vpop.f32.mrb[0].mxu0
    %v3674 = vpop.f32.mrb[0].mxu0
    %v3675 = vpop.f32.mrb[0].mxu0
    %3676 = vdwg.mxu0
    %v3684 = vunpack.c.l.b16 %v3562
    %v3685 = vunpack.c.l.b16 %v3563
    %v3686 = vunpack.c.l.b16 %v3564
    %v3687 = vunpack.c.l.b16 %v3565
    %v3688 = vunpack.c.l.b16 %v3566
    %v3689 = vunpack.c.l.b16 %v3567
    %v3690 = vunpack.c.l.b16 %v3568
    %v3691 = vpack.c.b16 %v3685, %v3684
    %v3692 = vpack.c.b16 %v3687, %v3686
    %v3693 = vpack.c.b16 %v3689, %v3688
    %v3694 = vpack.c.b16 %v3690, %v3690
    %v3696 = vsel %vm2511, %v3691, 0
    %v3699 = vsel %vm2511, %v3692, 0
    %v3702 = vsel %vm2511, %v3693, 0
    %v3705 = vsel %vm2511, %v3694, 0
    %3707 = vmatprep.subr.bf16.mxu0 0
    %3708 = vmatpush1.bf16.msra.mxu0 %v3576
    %3709 = vmatprep.subr.bf16.mxu0 0
    %3710 = vmatpush1.bf16.msra.mxu0 %v3577
    %3711 = vmatprep.subr.bf16.mxu0 0
    %3712 = vmatpush1.bf16.msra.mxu0 %v3578
    %3713 = vmatprep.subr.bf16.mxu0 0
    %3714 = vmatpush1.bf16.msra.mxu0 %v3611
    %3715 = vmatprep.subr.bf16.mxu0 0
    %3716 = vmatpush1.bf16.msra.mxu0 0
    %3717 = vmatprep.subr.bf16.mxu0 0
    %3718 = vmatpush1.bf16.msra.mxu0 0
    %3719 = vmatprep.subr.bf16.mxu0 0
    %3720 = vmatpush1.bf16.msra.mxu0 0
    %3721 = vmatprep.subr.bf16.mxu0 0
    %3722 = vmatpush1.bf16.msra.mxu0 0
    %3723 = vmatprep.subr.bf16.mxu0 0
    %3724 = vmatpush1.bf16.msra.mxu0 0
    %3725 = vmatprep.subr.bf16.mxu0 0
    %3726 = vmatpush1.bf16.msra.mxu0 0
    %3727 = vmatprep.subr.bf16.mxu0 0
    %3728 = vmatpush1.bf16.msra.mxu0 0
    %3729 = vmatprep.subr.bf16.mxu0 0
    %3730 = vmatpush1.bf16.msra.mxu0 0
    %3731 = vmatprep.subr.bf16.mxu0 0
    %3732 = vmatpush1.bf16.msra.mxu0 0
    %3733 = vmatprep.subr.bf16.mxu0 0
    %3734 = vmatpush1.bf16.msra.mxu0 0
    %3735 = vmatprep.subr.bf16.mxu0 0
    %3736 = vmatpush1.bf16.msra.mxu0 0
    %3737 = vmatprep.subr.bf16.mxu0 0
    %3738 = vmatpush1.bf16.msra.mxu0 0
    %3739 = vmatprep.mubr.bf16.mxu0 0
    %3740 = vmatmul.mubr.bf16.gmra.mrb[0].mxu0 %v3696
    %v3741 = vpop.f32.mrb[0].mxu0
    %v3742 = vadd.f32 0.0, %v3741
    %v3743 = vpop.f32.mrb[0].mxu0
    %v3744 = vpop.f32.mrb[0].mxu0
    %v3745 = vadd.f32 0.0, %v3744
    %v3746 = vpop.f32.mrb[0].mxu0
    %3747 = vmatprep.mubr.bf16.mxu0 0
    %3748 = vmatmul.mubr.bf16.gmra.mrb[0].mxu0 %v3699
    %v3749 = vpop.f32.mrb[0].mxu0
    %v3750 = vadd.f32 0.0, %v3749
    %v3751 = vpop.f32.mrb[0].mxu0
    %v3752 = vpop.f32.mrb[0].mxu0
    %v3753 = vadd.f32 0.0, %v3752
    %v3754 = vpop.f32.mrb[0].mxu0
    %3755 = vmatprep.mubr.bf16.mxu0 0
    %3756 = vmatmul.mubr.bf16.gmra.mrb[0].mxu0 %v3702
    %v3757 = vpop.f32.mrb[0].mxu0
    %v3758 = vadd.f32 0.0, %v3757
    %v3759 = vpop.f32.mrb[0].mxu0
    %v3760 = vpop.f32.mrb[0].mxu0
    %v3761 = vadd.f32 0.0, %v3760
    %v3762 = vpop.f32.mrb[0].mxu0
    %3763 = vmatprep.mubr.bf16.mxu0 0
    %3764 = vmatmul.mubr.bf16.gmra.mrb[0].mxu0 %v3705
    %v3765 = vpop.f32.mrb[0].mxu0
    %v3766 = vadd.f32 0.0, %v3765
    %v3767 = vpop.f32.mrb[0].mxu0
    %v3768 = vpop.f32.mrb[0].mxu0
    %v3769 = vpop.f32.mrb[0].mxu0
    %3770 = vdwg.mxu0
    %v3778 = vunpack.c.l.b16 %v3569
    %v3779 = vunpack.c.l.b16 %v3570
    %v3780 = vunpack.c.l.b16 %v3571
    %v3781 = vunpack.c.l.b16 %v3572
    %v3782 = vunpack.c.l.b16 %v3573
    %v3783 = vunpack.c.l.b16 %v3574
    %v3784 = vunpack.c.l.b16 %v3575
    %v3785 = vpack.c.b16 %v3779, %v3778
    %v3786 = vpack.c.b16 %v3781, %v3780
    %v3787 = vpack.c.b16 %v3783, %v3782
    %v3788 = vpack.c.b16 %v3784, %v3784
    %v3790 = vsel %vm2511, %v3785, 0
    %v3793 = vsel %vm2511, %v3786, 0
    %v3796 = vsel %vm2511, %v3787, 0
    %v3799 = vsel %vm2511, %v3788, 0
    %3801 = vmatprep.subr.bf16.mxu0 0
    %3802 = vmatpush1.bf16.msra.mxu0 %v3576
    %3803 = vmatprep.subr.bf16.mxu0 0
    %3804 = vmatpush1.bf16.msra.mxu0 %v3577
    %3805 = vmatprep.subr.bf16.mxu0 0
    %3806 = vmatpush1.bf16.msra.mxu0 %v3578
    %3807 = vmatprep.subr.bf16.mxu0 0
    %3808 = vmatpush1.bf16.msra.mxu0 %v3611
    %3809 = vmatprep.subr.bf16.mxu0 0
    %3810 = vmatpush1.bf16.msra.mxu0 0
    %3811 = vmatprep.subr.bf16.mxu0 0
    %3812 = vmatpush1.bf16.msra.mxu0 0
    %3813 = vmatprep.subr.bf16.mxu0 0
    %3814 = vmatpush1.bf16.msra.mxu0 0
    %3815 = vmatprep.subr.bf16.mxu0 0
    %3816 = vmatpush1.bf16.msra.mxu0 0
    %3817 = vmatprep.subr.bf16.mxu0 0
    %3818 = vmatpush1.bf16.msra.mxu0 0
    %3819 = vmatprep.subr.bf16.mxu0 0
    %3820 = vmatpush1.bf16.msra.mxu0 0
    %3821 = vmatprep.subr.bf16.mxu0 0
    %3822 = vmatpush1.bf16.msra.mxu0 0
    %3823 = vmatprep.subr.bf16.mxu0 0
    %3824 = vmatpush1.bf16.msra.mxu0 0
    %3825 = vmatprep.subr.bf16.mxu0 0
    %3826 = vmatpush1.bf16.msra.mxu0 0
    %3827 = vmatprep.subr.bf16.mxu0 0
    %3828 = vmatpush1.bf16.msra.mxu0 0
    %3829 = vmatprep.subr.bf16.mxu0 0
    %3830 = vmatpush1.bf16.msra.mxu0 0
    %3831 = vmatprep.subr.bf16.mxu0 0
    %3832 = vmatpush1.bf16.msra.mxu0 0
    %3833 = vmatprep.mubr.bf16.mxu0 0
    %3834 = vmatmul.mubr.bf16.gmra.mrb[0].mxu0 %v3790
    %v3835 = vpop.f32.mrb[0].mxu0
    %v3836 = vadd.f32 0.0, %v3835
    %v3837 = vpop.f32.mrb[0].mxu0
    %v3838 = vpop.f32.mrb[0].mxu0
    %v3839 = vadd.f32 0.0, %v3838
    %v3840 = vpop.f32.mrb[0].mxu0
    %3841 = vmatprep.mubr.bf16.mxu0 0
    %3842 = vmatmul.mubr.bf16.gmra.mrb[0].mxu0 %v3793
    %v3843 = vpop.f32.mrb[0].mxu0
    %v3844 = vadd.f32 0.0, %v3843
    %v3845 = vpop.f32.mrb[0].mxu0
    %v3846 = vpop.f32.mrb[0].mxu0
    %v3847 = vadd.f32 0.0, %v3846
    %v3848 = vpop.f32.mrb[0].mxu0
    %3849 = vmatprep.mubr.bf16.mxu0 0
    %3850 = vmatmul.mubr.bf16.gmra.mrb[0].mxu0 %v3796
    %v3851 = vpop.f32.mrb[0].mxu0
    %v3852 = vadd.f32 0.0, %v3851
    %v3853 = vpop.f32.mrb[0].mxu0
    %v3854 = vpop.f32.mrb[0].mxu0
    %v3855 = vadd.f32 0.0, %v3854
    %v3856 = vpop.f32.mrb[0].mxu0
    %3857 = vmatprep.mubr.bf16.mxu0 0
    %3858 = vmatmul.mubr.bf16.gmra.mrb[0].mxu0 %v3799
    %v3859 = vpop.f32.mrb[0].mxu0
    %v3860 = vadd.f32 0.0, %v3859
    %v3861 = vpop.f32.mrb[0].mxu0
    %v3862 = vpop.f32.mrb[0].mxu0
    %v3863 = vpop.f32.mrb[0].mxu0
    %3864 = vdwg.mxu0
    %3872 = vrot.lane.b32.xlu0 %v3742, 64
    %v3873 = vpop.permute.xlu0 %3872
    %3874 = vrot.lane.b32.xlu0 %v3745, 64
    %v3875 = vpop.permute.xlu0 %3874
    %3876 = vrot.lane.b32.xlu0 %v3750, 64
    %v3877 = vpop.permute.xlu0 %3876
    %3878 = vrot.lane.b32.xlu0 %v3753, 64
    %v3879 = vpop.permute.xlu0 %3878
    %3880 = vrot.lane.b32.xlu0 %v3758, 64
    %v3881 = vpop.permute.xlu0 %3880
    %3882 = vrot.lane.b32.xlu0 %v3761, 64
    %v3883 = vpop.permute.xlu0 %3882
    %3884 = vrot.lane.b32.xlu0 %v3766, 64
    %v3885 = vpop.permute.xlu0 %3884
    %v3893 = vsel %vm1894, %v3648, %v3873
    %v3894 = vsel %vm1894, %v3651, %v3875
    %v3895 = vsel %vm1894, %v3656, %v3877
    %v3896 = vsel %vm1894, %v3659, %v3879
    %v3897 = vsel %vm1894, %v3664, %v3881
    %v3898 = vsel %vm1894, %v3667, %v3883
    %v3899 = vsel %vm1894, %v3672, %v3885
    %v3900 = vpack.c.bf16 %v3894, %v3893
    %v3901 = vpack.c.bf16 %v3839, %v3836
    %v3902 = vpack.c.bf16 %v3896, %v3895
    %v3903 = vpack.c.bf16 %v3847, %v3844
    %v3904 = vpack.c.bf16 %v3898, %v3897
    %v3905 = vpack.c.bf16 %v3855, %v3852
    %v3906 = vpack.c.bf16 %v3899, %v3899
    %v3907 = vpack.c.bf16 %v3860, %v3860
    %v3909 = vlaneseq
    %v3910 = vshrl.u32 %v3909, 7
    %v3911 = vsub.s32 0, %v3910
    %v3912 = vrot.slane %v3554, %v3911
    %v3938 = vunpack.c.l.b16 %v3530
    %v3939 = vunpack.c.l.b16 %v3531
    %v3940 = vunpack.c.l.b16 %v3532
    %v3941 = vunpack.c.l.b16 %v3533
    %v3942 = vunpack.c.l.b16 %v3534
    %v3943 = vunpack.c.l.b16 %v3535
    %v3944 = vunpack.c.l.b16 %v3536
    %v3945 = vunpack.c.l.b16 %v3537
    %v3946 = vunpack.c.l.b16 %v3538
    %v3947 = vunpack.c.l.b16 %v3539
    %v3948 = vunpack.c.l.b16 %v3540
    %v3949 = vunpack.c.l.b16 %v3541
    %v3950 = vunpack.c.l.b16 %v3542
    %v3951 = vunpack.c.l.b16 %v3543
    %v3952 = vunpack.c.l.b16 %v3544
    %v3953 = vunpack.c.l.b16 %v3545
    %v3954 = vunpack.c.l.b16 %v3546
    %v3955 = vunpack.c.l.b16 %v3547
    %v3956 = vunpack.c.l.b16 %v3548
    %v3957 = vunpack.c.l.b16 %v3549
    %v3958 = vunpack.c.l.b16 %v3550
    %v3959 = vunpack.c.l.b16 %v3551
    %v3960 = vunpack.c.l.b16 %v3552
    %v3961 = vunpack.c.l.b16 %v3553
    %v3962 = vpack.c.b16 %v3939, %v3938
    %v3963 = vpack.c.b16 %v3941, %v3940
    %v3964 = vpack.c.b16 %v3943, %v3942
    %v3965 = vpack.c.b16 %v3945, %v3944
    %v3966 = vpack.c.b16 %v3947, %v3946
    %v3967 = vpack.c.b16 %v3949, %v3948
    %v3968 = vpack.c.b16 %v3951, %v3950
    %v3969 = vpack.c.b16 %v3953, %v3952
    %v3970 = vpack.c.b16 %v3955, %v3954
    %v3971 = vpack.c.b16 %v3957, %v3956
    %v3972 = vpack.c.b16 %v3959, %v3958
    %v3973 = vpack.c.b16 %v3961, %v3960
    %v3987 = vsel %vm1894, %v3901, 0
    %v3990 = vsel %vm1894, %v3903, 0
    %v3993 = vsel %vm1894, %v3905, 0
    %v3996 = vsel %vm1894, %v3907, 0
    %3998 = vmatprep.subr.bf16.mxu0 0
    %3999 = vmatpush1.bf16.msra.mxu0 %v3962
    %4000 = vmatprep.subr.bf16.mxu0 0
    %4001 = vmatpush1.bf16.msra.mxu0 %v3963
    %4002 = vmatprep.subr.bf16.mxu0 0
    %4003 = vmatpush1.bf16.msra.mxu0 %v3964
    %4004 = vmatprep.subr.bf16.mxu0 0
    %4005 = vmatpush1.bf16.msra.mxu0 %v3965
    %4006 = vmatprep.subr.bf16.mxu0 0
    %4007 = vmatpush1.bf16.msra.mxu0 %v3966
    %4008 = vmatprep.subr.bf16.mxu0 0
    %4009 = vmatpush1.bf16.msra.mxu0 %v3967
    %4010 = vmatprep.subr.bf16.mxu0 0
    %4011 = vmatpush1.bf16.msra.mxu0 %v3968
    %4012 = vmatprep.subr.bf16.mxu0 0
    %4013 = vmatpush1.bf16.msra.mxu0 %v3969
    %4014 = vmatprep.subr.bf16.mxu0 0
    %4015 = vmatpush1.bf16.msra.mxu0 %v3970
    %4016 = vmatprep.subr.bf16.mxu0 0
    %4017 = vmatpush1.bf16.msra.mxu0 %v3971
    %4018 = vmatprep.subr.bf16.mxu0 0
    %4019 = vmatpush1.bf16.msra.mxu0 %v3972
    %4020 = vmatprep.subr.bf16.mxu0 0
    %4021 = vmatpush1.bf16.msra.mxu0 %v3973
    %4022 = vmatprep.subr.bf16.mxu0 0
    %4023 = vmatpush1.bf16.msra.mxu0 0
    %4024 = vmatprep.subr.bf16.mxu0 0
    %4025 = vmatpush1.bf16.msra.mxu0 0
    %4026 = vmatprep.subr.bf16.mxu0 0
    %4027 = vmatpush1.bf16.msra.mxu0 0
    %4028 = vmatprep.subr.bf16.mxu0 0
    %4029 = vmatpush1.bf16.msra.mxu0 0
    %4030 = vmatprep.mubr.bf16.mxu0 %v3987
    %4031 = vmatmul.mubr.bf16.gmra.mrb[0].mxu0 %v3900
    %v4032 = vpop.f32.mrb[0].mxu0
    %v4033 = vadd.f32 %v3912, %v4032
    %v4034 = vpop.f32.mrb[0].mxu0
    %v4035 = vpop.f32.mrb[0].mxu0
    %v4036 = vadd.f32 %v3912, %v4035
    %v4037 = vpop.f32.mrb[0].mxu0
    %4038 = vmatprep.mubr.bf16.mxu0 %v3990
    %4039 = vmatmul.mubr.bf16.gmra.mrb[0].mxu0 %v3902
    %v4040 = vpop.f32.mrb[0].mxu0
    %v4041 = vadd.f32 %v3912, %v4040
    %v4042 = vpop.f32.mrb[0].mxu0
    %v4043 = vpop.f32.mrb[0].mxu0
    %v4044 = vadd.f32 %v3912, %v4043
    %v4045 = vpop.f32.mrb[0].mxu0
    %4046 = vmatprep.mubr.bf16.mxu0 %v3993
    %4047 = vmatmul.mubr.bf16.gmra.mrb[0].mxu0 %v3904
    %v4048 = vpop.f32.mrb[0].mxu0
    %v4049 = vadd.f32 %v3912, %v4048
    %v4050 = vpop.f32.mrb[0].mxu0
    %v4051 = vpop.f32.mrb[0].mxu0
    %v4052 = vadd.f32 %v3912, %v4051
    %v4053 = vpop.f32.mrb[0].mxu0
    %4054 = vmatprep.mubr.bf16.mxu0 %v3996
    %4055 = vmatmul.mubr.bf16.gmra.mrb[0].mxu0 %v3906
    %v4056 = vpop.f32.mrb[0].mxu0
    %v4057 = vadd.f32 %v3912, %v4056
    %v4058 = vpop.f32.mrb[0].mxu0
    %v4059 = vpop.f32.mrb[0].mxu0
    %v4060 = vpop.f32.mrb[0].mxu0
    %4061 = vdwg.mxu0
    %v4062 = vmax.f32 %v4033, 0.0
    %v4063 = vmax.f32 %v4036, 0.0
    %v4064 = vmax.f32 %v4041, 0.0
    %v4065 = vmax.f32 %v4044, 0.0
    %v4066 = vmax.f32 %v4049, 0.0
    %v4067 = vmax.f32 %v4052, 0.0
    %v4068 = vmax.f32 %v4057, 0.0
    %v4069 = vld [vmem:[%s29] sm:$0xf]
    %v4070 = vld [vmem:[%s29 + $0x4] sm:$0xf]
    %v4071 = vld [vmem:[%s29 + $0x8] sm:$0xf]
    %v4072 = vld [vmem:[%s29 + $0xc] sm:$0xf]
    %v4073 = vld [vmem:[%s29 + $0x10] sm:$0xf]
    %v4074 = vld [vmem:[%s29 + $0x14] sm:$0xf]
    %v4075 = vld [vmem:[%s29 + $0x18] sm:$0xf]
    %v4076 = vld [vmem:[%s29 + $0x1c] sm:$0xf]
    %v4077 = vld [vmem:[%s29 + $0x20] sm:$0xf]
    %v4078 = vld [vmem:[%s29 + $0x24] sm:$0xf]
    %v4079 = vld [vmem:[%s29 + $0x28] sm:$0xf]
    %v4080 = vld [vmem:[%s29 + $0x2c] sm:$0xf]
    %v4081 = vld [vmem:[%s29 + $0x30] sm:$0xf]
    %v4082 = vld [vmem:[%s29 + $0x34] sm:$0xf]
    %v4083 = vld [vmem:[%s29 + $0x38] sm:$0xf]
    %v4084 = vld [vmem:[%s29 + $0x3c] sm:$0xf]
    %v4085 = vld [vmem:[%s29 + $0x40] sm:$0xf]
    %v4086 = vld [vmem:[%s29 + $0x44] sm:$0xf]
    %v4087 = vld [vmem:[%s29 + $0x48] sm:$0xf]
    %v4088 = vld [vmem:[%s29 + $0x4c] sm:$0xf]
    %v4089 = vld [vmem:[%s29 + $0x50] sm:$0xf]
    %v4090 = vld [vmem:[%s29 + $0x54] sm:$0xf]
    %v4091 = vld [vmem:[%s29 + $0x58] sm:$0xf]
    %v4092 = vld [vmem:[%s29 + $0x5c] sm:$0xf]
    %v4093 = vld [vmem:[%s31] sm:$0x1]
    %v4094 = vld [vmem:[%s33] sm:$0xf]
    %v4095 = vld [vmem:[%s33 + $0x4] sm:$0xf]
    %v4096 = vld [vmem:[%s33 + $0x8] sm:$0xf]
    %v4097 = vld [vmem:[%s33 + $0xc] sm:$0xf]
    %v4098 = vld [vmem:[%s33 + $0x10] sm:$0xf]
    %v4099 = vld [vmem:[%s33 + $0x14] sm:$0xf]
    %v4100 = vld [vmem:[%s33 + $0x18] sm:$0x1]
    %v4101 = vld [vmem:[%s33 + $0x1c] sm:$0xf]
    %v4102 = vld [vmem:[%s33 + $0x20] sm:$0xf]
    %v4103 = vld [vmem:[%s33 + $0x24] sm:$0xf]
    %v4104 = vld [vmem:[%s33 + $0x28] sm:$0xf]
    %v4105 = vld [vmem:[%s33 + $0x2c] sm:$0xf]
    %v4106 = vld [vmem:[%s33 + $0x30] sm:$0xf]
    %v4107 = vld [vmem:[%s33 + $0x34] sm:$0x1]
    %v4108 = vld [vmem:[%s33 + $0x38] sm:$0xf]
    %v4109 = vld [vmem:[%s33 + $0x3c] sm:$0xf]
    %v4110 = vld [vmem:[%s33 + $0x40] sm:$0xf]
    %v4111 = vld [vmem:[%s33 + $0x44] sm:$0xf]
    %v4112 = vld [vmem:[%s33 + $0x48] sm:$0xf]
    %v4113 = vld [vmem:[%s33 + $0x4c] sm:$0xf]
    %v4114 = vld [vmem:[%s33 + $0x50] sm:$0x1]
    %v4115 = vpack.c.bf16 %v4063, %v4062
    %v4116 = vpack.c.bf16 %v4065, %v4064
    %v4117 = vpack.c.bf16 %v4067, %v4066
    %v4118 = vpack.c.bf16 %v4068, %v4068
    %v4126 = vunpack.c.l.b16 %v4094
    %v4127 = vunpack.c.l.b16 %v4095
    %v4128 = vunpack.c.l.b16 %v4096
    %v4129 = vunpack.c.l.b16 %v4097
    %v4130 = vunpack.c.l.b16 %v4098
    %v4131 = vunpack.c.l.b16 %v4099
    %v4132 = vunpack.c.l.b16 %v4100
    %v4133 = vpack.c.b16 %v4127, %v4126
    %v4134 = vpack.c.b16 %v4129, %v4128
    %v4135 = vpack.c.b16 %v4131, %v4130
    %v4136 = vpack.c.b16 %v4132, %v4132
    %v4138 = vsel %vm2511, %v4133, 0
    %v4141 = vsel %vm2511, %v4134, 0
    %v4144 = vsel %vm2511, %v4135, 0
    %v4147 = vsel %vm2511, %v4136, 0
    %v4150 = vsel %vm2524, %v4118, 0
    %4152 = vmatprep.subr.bf16.mxu0 0
    %4153 = vmatpush1.bf16.msra.mxu0 %v4115
    %4154 = vmatprep.subr.bf16.mxu0 0
    %4155 = vmatpush1.bf16.msra.mxu0 %v4116
    %4156 = vmatprep.subr.bf16.mxu0 0
    %4157 = vmatpush1.bf16.msra.mxu0 %v4117
    %4158 = vmatprep.subr.bf16.mxu0 0
    %4159 = vmatpush1.bf16.msra.mxu0 %v4150
    %4160 = vmatprep.subr.bf16.mxu0 0
    %4161 = vmatpush1.bf16.msra.mxu0 0
    %4162 = vmatprep.subr.bf16.mxu0 0
    %4163 = vmatpush1.bf16.msra.mxu0 0
    %4164 = vmatprep.subr.bf16.mxu0 0
    %4165 = vmatpush1.bf16.msra.mxu0 0
    %4166 = vmatprep.subr.bf16.mxu0 0
    %4167 = vmatpush1.bf16.msra.mxu0 0
    %4168 = vmatprep.subr.bf16.mxu0 0
    %4169 = vmatpush1.bf16.msra.mxu0 0
    %4170 = vmatprep.subr.bf16.mxu0 0
    %4171 = vmatpush1.bf16.msra.mxu0 0
    %4172 = vmatprep.subr.bf16.mxu0 0
    %4173 = vmatpush1.bf16.msra.mxu0 0
    %4174 = vmatprep.subr.bf16.mxu0 0
    %4175 = vmatpush1.bf16.msra.mxu0 0
    %4176 = vmatprep.subr.bf16.mxu0 0
    %4177 = vmatpush1.bf16.msra.mxu0 0
    %4178 = vmatprep.subr.bf16.mxu0 0
    %4179 = vmatpush1.bf16.msra.mxu0 0
    %4180 = vmatprep.subr.bf16.mxu0 0
    %4181 = vmatpush1.bf16.msra.mxu0 0
    %4182 = vmatprep.subr.bf16.mxu0 0
    %4183 = vmatpush1.bf16.msra.mxu0 0
    %4184 = vmatprep.mubr.bf16.mxu0 0
    %4185 = vmatmul.mubr.bf16.gmra.mrb[0].mxu0 %v4138
    %v4186 = vpop.f32.mrb[0].mxu0
    %v4187 = vadd.f32 0.0, %v4186
    %v4188 = vpop.f32.mrb[0].mxu0
    %v4189 = vpop.f32.mrb[0].mxu0
    %v4190 = vadd.f32 0.0, %v4189
    %v4191 = vpop.f32.mrb[0].mxu0
    %4192 = vmatprep.mubr.bf16.mxu0 0
    %4193 = vmatmul.mubr.bf16.gmra.mrb[0].mxu0 %v4141
    %v4194 = vpop.f32.mrb[0].mxu0
    %v4195 = vadd.f32 0.0, %v4194
    %v4196 = vpop.f32.mrb[0].mxu0
    %v4197 = vpop.f32.mrb[0].mxu0
    %v4198 = vadd.f32 0.0, %v4197
    %v4199 = vpop.f32.mrb[0].mxu0
    %4200 = vmatprep.mubr.bf16.mxu0 0
    %4201 = vmatmul.mubr.bf16.gmra.mrb[0].mxu0 %v4144
    %v4202 = vpop.f32.mrb[0].mxu0
    %v4203 = vadd.f32 0.0, %v4202
    %v4204 = vpop.f32.mrb[0].mxu0
    %v4205 = vpop.f32.mrb[0].mxu0
    %v4206 = vadd.f32 0.0, %v4205
    %v4207 = vpop.f32.mrb[0].mxu0
    %4208 = vmatprep.mubr.bf16.mxu0 0
    %4209 = vmatmul.mubr.bf16.gmra.mrb[0].mxu0 %v4147
    %v4210 = vpop.f32.mrb[0].mxu0
    %v4211 = vadd.f32 0.0, %v4210
    %v4212 = vpop.f32.mrb[0].mxu0
    %v4213 = vpop.f32.mrb[0].mxu0
    %v4214 = vpop.f32.mrb[0].mxu0
    %4215 = vdwg.mxu0
    %v4223 = vunpack.c.l.b16 %v4101
    %v4224 = vunpack.c.l.b16 %v4102
    %v4225 = vunpack.c.l.b16 %v4103
    %v4226 = vunpack.c.l.b16 %v4104
    %v4227 = vunpack.c.l.b16 %v4105
    %v4228 = vunpack.c.l.b16 %v4106
    %v4229 = vunpack.c.l.b16 %v4107
    %v4230 = vpack.c.b16 %v4224, %v4223
    %v4231 = vpack.c.b16 %v4226, %v4225
    %v4232 = vpack.c.b16 %v4228, %v4227
    %v4233 = vpack.c.b16 %v4229, %v4229
    %v4235 = vsel %vm2511, %v4230, 0
    %v4238 = vsel %vm2511, %v4231, 0
    %v4241 = vsel %vm2511, %v4232, 0
    %v4244 = vsel %vm2511, %v4233, 0
    %4246 = vmatprep.subr.bf16.mxu0 0
    %4247 = vmatpush1.bf16.msra.mxu0 %v4115
    %4248 = vmatprep.subr.bf16.mxu0 0
    %4249 = vmatpush1.bf16.msra.mxu0 %v4116
    %4250 = vmatprep.subr.bf16.mxu0 0
    %4251 = vmatpush1.bf16.msra.mxu0 %v4117
    %4252 = vmatprep.subr.bf16.mxu0 0
    %4253 = vmatpush1.bf16.msra.mxu0 %v4150
    %4254 = vmatprep.subr.bf16.mxu0 0
    %4255 = vmatpush1.bf16.msra.mxu0 0
    %4256 = vmatprep.subr.bf16.mxu0 0
    %4257 = vmatpush1.bf16.msra.mxu0 0
    %4258 = vmatprep.subr.bf16.mxu0 0
    %4259 = vmatpush1.bf16.msra.mxu0 0
    %4260 = vmatprep.subr.bf16.mxu0 0
    %4261 = vmatpush1.bf16.msra.mxu0 0
    %4262 = vmatprep.subr.bf16.mxu0 0
    %4263 = vmatpush1.bf16.msra.mxu0 0
    %4264 = vmatprep.subr.bf16.mxu0 0
    %4265 = vmatpush1.bf16.msra.mxu0 0
    %4266 = vmatprep.subr.bf16.mxu0 0
    %4267 = vmatpush1.bf16.msra.mxu0 0
    %4268 = vmatprep.subr.bf16.mxu0 0
    %4269 = vmatpush1.bf16.msra.mxu0 0
    %4270 = vmatprep.subr.bf16.mxu0 0
    %4271 = vmatpush1.bf16.msra.mxu0 0
    %4272 = vmatprep.subr.bf16.mxu0 0
    %4273 = vmatpush1.bf16.msra.mxu0 0
    %4274 = vmatprep.subr.bf16.mxu0 0
    %4275 = vmatpush1.bf16.msra.mxu0 0
    %4276 = vmatprep.subr.bf16.mxu0 0
    %4277 = vmatpush1.bf16.msra.mxu0 0
    %4278 = vmatprep.mubr.bf16.mxu0 0
    %4279 = vmatmul.mubr.bf16.gmra.mrb[0].mxu0 %v4235
    %v4280 = vpop.f32.mrb[0].mxu0
    %v4281 = vadd.f32 0.0, %v4280
    %v4282 = vpop.f32.mrb[0].mxu0
    %v4283 = vpop.f32.mrb[0].mxu0
    %v4284 = vadd.f32 0.0, %v4283
    %v4285 = vpop.f32.mrb[0].mxu0
    %4286 = vmatprep.mubr.bf16.mxu0 0
    %4287 = vmatmul.mubr.bf16.gmra.mrb[0].mxu0 %v4238
    %v4288 = vpop.f32.mrb[0].mxu0
    %v4289 = vadd.f32 0.0, %v4288
    %v4290 = vpop.f32.mrb[0].mxu0
    %v4291 = vpop.f32.mrb[0].mxu0
    %v4292 = vadd.f32 0.0, %v4291
    %v4293 = vpop.f32.mrb[0].mxu0
    %4294 = vmatprep.mubr.bf16.mxu0 0
    %4295 = vmatmul.mubr.bf16.gmra.mrb[0].mxu0 %v4241
    %v4296 = vpop.f32.mrb[0].mxu0
    %v4297 = vadd.f32 0.0, %v4296
    %v4298 = vpop.f32.mrb[0].mxu0
    %v4299 = vpop.f32.mrb[0].mxu0
    %v4300 = vadd.f32 0.0, %v4299
    %v4301 = vpop.f32.mrb[0].mxu0
    %4302 = vmatprep.mubr.bf16.mxu0 0
    %4303 = vmatmul.mubr.bf16.gmra.mrb[0].mxu0 %v4244
    %v4304 = vpop.f32.mrb[0].mxu0
    %v4305 = vadd.f32 0.0, %v4304
    %v4306 = vpop.f32.mrb[0].mxu0
    %v4307 = vpop.f32.mrb[0].mxu0
    %v4308 = vpop.f32.mrb[0].mxu0
    %4309 = vdwg.mxu0
    %v4317 = vunpack.c.l.b16 %v4108
    %v4318 = vunpack.c.l.b16 %v4109
    %v4319 = vunpack.c.l.b16 %v4110
    %v4320 = vunpack.c.l.b16 %v4111
    %v4321 = vunpack.c.l.b16 %v4112
    %v4322 = vunpack.c.l.b16 %v4113
    %v4323 = vunpack.c.l.b16 %v4114
    %v4324 = vpack.c.b16 %v4318, %v4317
    %v4325 = vpack.c.b16 %v4320, %v4319
    %v4326 = vpack.c.b16 %v4322, %v4321
    %v4327 = vpack.c.b16 %v4323, %v4323
    %v4329 = vsel %vm2511, %v4324, 0
    %v4332 = vsel %vm2511, %v4325, 0
    %v4335 = vsel %vm2511, %v4326, 0
    %v4338 = vsel %vm2511, %v4327, 0
    %4340 = vmatprep.subr.bf16.mxu0 0
    %4341 = vmatpush1.bf16.msra.mxu0 %v4115
    %4342 = vmatprep.subr.bf16.mxu0 0
    %4343 = vmatpush1.bf16.msra.mxu0 %v4116
    %4344 = vmatprep.subr.bf16.mxu0 0
    %4345 = vmatpush1.bf16.msra.mxu0 %v4117
    %4346 = vmatprep.subr.bf16.mxu0 0
    %4347 = vmatpush1.bf16.msra.mxu0 %v4150
    %4348 = vmatprep.subr.bf16.mxu0 0
    %4349 = vmatpush1.bf16.msra.mxu0 0
    %4350 = vmatprep.subr.bf16.mxu0 0
    %4351 = vmatpush1.bf16.msra.mxu0 0
    %4352 = vmatprep.subr.bf16.mxu0 0
    %4353 = vmatpush1.bf16.msra.mxu0 0
    %4354 = vmatprep.subr.bf16.mxu0 0
    %4355 = vmatpush1.bf16.msra.mxu0 0
    %4356 = vmatprep.subr.bf16.mxu0 0
    %4357 = vmatpush1.bf16.msra.mxu0 0
    %4358 = vmatprep.subr.bf16.mxu0 0
    %4359 = vmatpush1.bf16.msra.mxu0 0
    %4360 = vmatprep.subr.bf16.mxu0 0
    %4361 = vmatpush1.bf16.msra.mxu0 0
    %4362 = vmatprep.subr.bf16.mxu0 0
    %4363 = vmatpush1.bf16.msra.mxu0 0
    %4364 = vmatprep.subr.bf16.mxu0 0
    %4365 = vmatpush1.bf16.msra.mxu0 0
    %4366 = vmatprep.subr.bf16.mxu0 0
    %4367 = vmatpush1.bf16.msra.mxu0 0
    %4368 = vmatprep.subr.bf16.mxu0 0
    %4369 = vmatpush1.bf16.msra.mxu0 0
    %4370 = vmatprep.subr.bf16.mxu0 0
    %4371 = vmatpush1.bf16.msra.mxu0 0
    %4372 = vmatprep.mubr.bf16.mxu0 0
    %4373 = vmatmul.mubr.bf16.gmra.mrb[0].mxu0 %v4329
    %v4374 = vpop.f32.mrb[0].mxu0
    %v4375 = vadd.f32 0.0, %v4374
    %v4376 = vpop.f32.mrb[0].mxu0
    %v4377 = vpop.f32.mrb[0].mxu0
    %v4378 = vadd.f32 0.0, %v4377
    %v4379 = vpop.f32.mrb[0].mxu0
    %4380 = vmatprep.mubr.bf16.mxu0 0
    %4381 = vmatmul.mubr.bf16.gmra.mrb[0].mxu0 %v4332
    %v4382 = vpop.f32.mrb[0].mxu0
    %v4383 = vadd.f32 0.0, %v4382
    %v4384 = vpop.f32.mrb[0].mxu0
    %v4385 = vpop.f32.mrb[0].mxu0
    %v4386 = vadd.f32 0.0, %v4385
    %v4387 = vpop.f32.mrb[0].mxu0
    %4388 = vmatprep.mubr.bf16.mxu0 0
    %4389 = vmatmul.mubr.bf16.gmra.mrb[0].mxu0 %v4335
    %v4390 = vpop.f32.mrb[0].mxu0
    %v4391 = vadd.f32 0.0, %v4390
    %v4392 = vpop.f32.mrb[0].mxu0
    %v4393 = vpop.f32.mrb[0].mxu0
    %v4394 = vadd.f32 0.0, %v4393
    %v4395 = vpop.f32.mrb[0].mxu0
    %4396 = vmatprep.mubr.bf16.mxu0 0
    %4397 = vmatmul.mubr.bf16.gmra.mrb[0].mxu0 %v4338
    %v4398 = vpop.f32.mrb[0].mxu0
    %v4399 = vadd.f32 0.0, %v4398
    %v4400 = vpop.f32.mrb[0].mxu0
    %v4401 = vpop.f32.mrb[0].mxu0
    %v4402 = vpop.f32.mrb[0].mxu0
    %4403 = vdwg.mxu0
    %4411 = vrot.lane.b32.xlu0 %v4281, 64
    %v4412 = vpop.permute.xlu0 %4411
    %4413 = vrot.lane.b32.xlu0 %v4284, 64
    %v4414 = vpop.permute.xlu0 %4413
    %4415 = vrot.lane.b32.xlu0 %v4289, 64
    %v4416 = vpop.permute.xlu0 %4415
    %4417 = vrot.lane.b32.xlu0 %v4292, 64
    %v4418 = vpop.permute.xlu0 %4417
    %4419 = vrot.lane.b32.xlu0 %v4297, 64
    %v4420 = vpop.permute.xlu0 %4419
    %4421 = vrot.lane.b32.xlu0 %v4300, 64
    %v4422 = vpop.permute.xlu0 %4421
    %4423 = vrot.lane.b32.xlu0 %v4305, 64
    %v4424 = vpop.permute.xlu0 %4423
    %v4432 = vsel %vm1894, %v4187, %v4412
    %v4433 = vsel %vm1894, %v4190, %v4414
    %v4434 = vsel %vm1894, %v4195, %v4416
    %v4435 = vsel %vm1894, %v4198, %v4418
    %v4436 = vsel %vm1894, %v4203, %v4420
    %v4437 = vsel %vm1894, %v4206, %v4422
    %v4438 = vsel %vm1894, %v4211, %v4424
    %v4439 = vpack.c.bf16 %v4433, %v4432
    %v4440 = vpack.c.bf16 %v4378, %v4375
    %v4441 = vpack.c.bf16 %v4435, %v4434
    %v4442 = vpack.c.bf16 %v4386, %v4383
    %v4443 = vpack.c.bf16 %v4437, %v4436
    %v4444 = vpack.c.bf16 %v4394, %v4391
    %v4445 = vpack.c.bf16 %v4438, %v4438
    %v4446 = vpack.c.bf16 %v4399, %v4399
    %v4448 = vlaneseq
    %v4449 = vshrl.u32 %v4448, 7
    %v4450 = vsub.s32 0, %v4449
    %v4451 = vrot.slane %v4093, %v4450
    %v4477 = vunpack.c.l.b16 %v4069
    %v4478 = vunpack.c.l.b16 %v4070
    %v4479 = vunpack.c.l.b16 %v4071
    %v4480 = vunpack.c.l.b16 %v4072
    %v4481 = vunpack.c.l.b16 %v4073
    %v4482 = vunpack.c.l.b16 %v4074
    %v4483 = vunpack.c.l.b16 %v4075
    %v4484 = vunpack.c.l.b16 %v4076
    %v4485 = vunpack.c.l.b16 %v4077
    %v4486 = vunpack.c.l.b16 %v4078
    %v4487 = vunpack.c.l.b16 %v4079
    %v4488 = vunpack.c.l.b16 %v4080
    %v4489 = vunpack.c.l.b16 %v4081
    %v4490 = vunpack.c.l.b16 %v4082
    %v4491 = vunpack.c.l.b16 %v4083
    %v4492 = vunpack.c.l.b16 %v4084
    %v4493 = vunpack.c.l.b16 %v4085
    %v4494 = vunpack.c.l.b16 %v4086
    %v4495 = vunpack.c.l.b16 %v4087
    %v4496 = vunpack.c.l.b16 %v4088
    %v4497 = vunpack.c.l.b16 %v4089
    %v4498 = vunpack.c.l.b16 %v4090
    %v4499 = vunpack.c.l.b16 %v4091
    %v4500 = vunpack.c.l.b16 %v4092
    %v4501 = vpack.c.b16 %v4478, %v4477
    %v4502 = vpack.c.b16 %v4480, %v4479
    %v4503 = vpack.c.b16 %v4482, %v4481
    %v4504 = vpack.c.b16 %v4484, %v4483
    %v4505 = vpack.c.b16 %v4486, %v4485
    %v4506 = vpack.c.b16 %v4488, %v4487
    %v4507 = vpack.c.b16 %v4490, %v4489
    %v4508 = vpack.c.b16 %v4492, %v4491
    %v4509 = vpack.c.b16 %v4494, %v4493
    %v4510 = vpack.c.b16 %v4496, %v4495
    %v4511 = vpack.c.b16 %v4498, %v4497
    %v4512 = vpack.c.b16 %v4500, %v4499
    %v4526 = vsel %vm1894, %v4440, 0
    %v4529 = vsel %vm1894, %v4442, 0
    %v4532 = vsel %vm1894, %v4444, 0
    %v4535 = vsel %vm1894, %v4446, 0
    %4537 = vmatprep.subr.bf16.mxu0 0
    %4538 = vmatpush1.bf16.msra.mxu0 %v4501
    %4539 = vmatprep.subr.bf16.mxu0 0
    %4540 = vmatpush1.bf16.msra.mxu0 %v4502
    %4541 = vmatprep.subr.bf16.mxu0 0
    %4542 = vmatpush1.bf16.msra.mxu0 %v4503
    %4543 = vmatprep.subr.bf16.mxu0 0
    %4544 = vmatpush1.bf16.msra.mxu0 %v4504
    %4545 = vmatprep.subr.bf16.mxu0 0
    %4546 = vmatpush1.bf16.msra.mxu0 %v4505
    %4547 = vmatprep.subr.bf16.mxu0 0
    %4548 = vmatpush1.bf16.msra.mxu0 %v4506
    %4549 = vmatprep.subr.bf16.mxu0 0
    %4550 = vmatpush1.bf16.msra.mxu0 %v4507
    %4551 = vmatprep.subr.bf16.mxu0 0
    %4552 = vmatpush1.bf16.msra.mxu0 %v4508
    %4553 = vmatprep.subr.bf16.mxu0 0
    %4554 = vmatpush1.bf16.msra.mxu0 %v4509
    %4555 = vmatprep.subr.bf16.mxu0 0
    %4556 = vmatpush1.bf16.msra.mxu0 %v4510
    %4557 = vmatprep.subr.bf16.mxu0 0
    %4558 = vmatpush1.bf16.msra.mxu0 %v4511
    %4559 = vmatprep.subr.bf16.mxu0 0
    %4560 = vmatpush1.bf16.msra.mxu0 %v4512
    %4561 = vmatprep.subr.bf16.mxu0 0
    %4562 = vmatpush1.bf16.msra.mxu0 0
    %4563 = vmatprep.subr.bf16.mxu0 0
    %4564 = vmatpush1.bf16.msra.mxu0 0
    %4565 = vmatprep.subr.bf16.mxu0 0
    %4566 = vmatpush1.bf16.msra.mxu0 0
    %4567 = vmatprep.subr.bf16.mxu0 0
    %4568 = vmatpush1.bf16.msra.mxu0 0
    %4569 = vmatprep.mubr.bf16.mxu0 %v4526
    %4570 = vmatmul.mubr.bf16.gmra.mrb[0].mxu0 %v4439
    %v4571 = vpop.f32.mrb[0].mxu0
    %v4572 = vadd.f32 %v4451, %v4571
    %v4573 = vpop.f32.mrb[0].mxu0
    %v4574 = vpop.f32.mrb[0].mxu0
    %v4575 = vadd.f32 %v4451, %v4574
    %v4576 = vpop.f32.mrb[0].mxu0
    %4577 = vmatprep.mubr.bf16.mxu0 %v4529
    %4578 = vmatmul.mubr.bf16.gmra.mrb[0].mxu0 %v4441
    %v4579 = vpop.f32.mrb[0].mxu0
    %v4580 = vadd.f32 %v4451, %v4579
    %v4581 = vpop.f32.mrb[0].mxu0
    %v4582 = vpop.f32.mrb[0].mxu0
    %v4583 = vadd.f32 %v4451, %v4582
    %v4584 = vpop.f32.mrb[0].mxu0
    %4585 = vmatprep.mubr.bf16.mxu0 %v4532
    %4586 = vmatmul.mubr.bf16.gmra.mrb[0].mxu0 %v4443
    %v4587 = vpop.f32.mrb[0].mxu0
    %v4588 = vadd.f32 %v4451, %v4587
    %v4589 = vpop.f32.mrb[0].mxu0
    %v4590 = vpop.f32.mrb[0].mxu0
    %v4591 = vadd.f32 %v4451, %v4590
    %v4592 = vpop.f32.mrb[0].mxu0
    %4593 = vmatprep.mubr.bf16.mxu0 %v4535
    %4594 = vmatmul.mubr.bf16.gmra.mrb[0].mxu0 %v4445
    %v4595 = vpop.f32.mrb[0].mxu0
    %v4596 = vadd.f32 %v4451, %v4595
    %v4597 = vpop.f32.mrb[0].mxu0
    %v4598 = vpop.f32.mrb[0].mxu0
    %v4599 = vpop.f32.mrb[0].mxu0
    %4600 = vdwg.mxu0
    %v4601 = vadd.f32 %v4572, %v3523
    %v4602 = vadd.f32 %v4575, %v3524
    %v4603 = vadd.f32 %v4580, %v3525
    %v4604 = vadd.f32 %v4583, %v3526
    %v4605 = vadd.f32 %v4588, %v3527
    %v4606 = vadd.f32 %v4591, %v3528
    %v4607 = vadd.f32 %v4596, %v3529
    %v4608 = vmax.f32 %v4601, 0.0
    %v4609 = vmax.f32 %v4602, 0.0
    %v4610 = vmax.f32 %v4603, 0.0
    %v4611 = vmax.f32 %v4604, 0.0
    %v4612 = vmax.f32 %v4605, 0.0
    %v4613 = vmax.f32 %v4606, 0.0
    %v4614 = vmax.f32 %v4607, 0.0
    %v4615 = vld [vmem:[%s35] sm:$0xf]
    %v4616 = vld [vmem:[%s35 + $0x4] sm:$0xf]
    %v4617 = vld [vmem:[%s35 + $0x8] sm:$0xf]
    %v4618 = vld [vmem:[%s35 + $0xc] sm:$0xf]
    %v4619 = vld [vmem:[%s35 + $0x10] sm:$0xf]
    %v4620 = vld [vmem:[%s35 + $0x14] sm:$0xf]
    %v4621 = vld [vmem:[%s35 + $0x18] sm:$0xf]
    %v4622 = vld [vmem:[%s35 + $0x1c] sm:$0xf]
    %v4623 = vld [vmem:[%s35 + $0x20] sm:$0xf]
    %v4624 = vld [vmem:[%s35 + $0x24] sm:$0xf]
    %v4625 = vld [vmem:[%s35 + $0x28] sm:$0xf]
    %v4626 = vld [vmem:[%s35 + $0x2c] sm:$0xf]
    %v4627 = vld [vmem:[%s35 + $0x30] sm:$0xf]
    %v4628 = vld [vmem:[%s35 + $0x34] sm:$0xf]
    %v4629 = vld [vmem:[%s35 + $0x38] sm:$0xf]
    %v4630 = vld [vmem:[%s35 + $0x3c] sm:$0xf]
    %v4631 = vld [vmem:[%s35 + $0x40] sm:$0xf]
    %v4632 = vld [vmem:[%s35 + $0x44] sm:$0xf]
    %v4633 = vld [vmem:[%s35 + $0x48] sm:$0xf]
    %v4634 = vld [vmem:[%s35 + $0x4c] sm:$0xf]
    %v4635 = vld [vmem:[%s35 + $0x50] sm:$0xf]
    %v4636 = vld [vmem:[%s35 + $0x54] sm:$0xf]
    %v4637 = vld [vmem:[%s35 + $0x58] sm:$0xf]
    %v4638 = vld [vmem:[%s35 + $0x5c] sm:$0xf]
    %v4639 = vld [vmem:[%s37] sm:$0x1]
    %v4640 = vld [vmem:[%s39] sm:$0xf]
    %v4641 = vld [vmem:[%s39 + $0x4] sm:$0xf]
    %v4642 = vld [vmem:[%s39 + $0x8] sm:$0xf]
    %v4643 = vld [vmem:[%s39 + $0xc] sm:$0x1]
    %v4644 = vld [vmem:[%s39 + $0x10] sm:$0xf]
    %v4645 = vld [vmem:[%s39 + $0x14] sm:$0xf]
    %v4646 = vld [vmem:[%s39 + $0x18] sm:$0xf]
    %v4647 = vld [vmem:[%s39 + $0x1c] sm:$0x1]
    %v4648 = vld [vmem:[%s39 + $0x20] sm:$0xf]
    %v4649 = vld [vmem:[%s39 + $0x24] sm:$0xf]
    %v4650 = vld [vmem:[%s39 + $0x28] sm:$0xf]
    %v4651 = vld [vmem:[%s39 + $0x2c] sm:$0x1]
    %v4652 = vpack.c.bf16 %v4609, %v4608
    %v4653 = vpack.c.bf16 %v4611, %v4610
    %v4654 = vpack.c.bf16 %v4613, %v4612
    %v4655 = vpack.c.bf16 %v4614, %v4614
    %v4660 = vunpack.c.l.b16 %v4640
    %v4661 = vunpack.c.l.b16 %v4641
    %v4662 = vunpack.c.l.b16 %v4642
    %v4663 = vunpack.c.l.b16 %v4643
    %v4664 = vpack.c.b16 %v4661, %v4660
    %v4665 = vpack.c.b16 %v4663, %v4662
    %v4667 = vsel %vm2511, %v4664, 0
    %v4670 = vsel %vm2511, %v4665, 0
    %v4673 = vsel %vm2524, %v4655, 0
    %4675 = vmatprep.subr.bf16.mxu0 0
    %4676 = vmatpush1.bf16.msra.mxu0 %v4652
    %4677 = vmatprep.subr.bf16.mxu0 0
    %4678 = vmatpush1.bf16.msra.mxu0 %v4653
    %4679 = vmatprep.subr.bf16.mxu0 0
    %4680 = vmatpush1.bf16.msra.mxu0 %v4654
    %4681 = vmatprep.subr.bf16.mxu0 0
    %4682 = vmatpush1.bf16.msra.mxu0 %v4673
    %4683 = vmatprep.subr.bf16.mxu0 0
    %4684 = vmatpush1.bf16.msra.mxu0 0
    %4685 = vmatprep.subr.bf16.mxu0 0
    %4686 = vmatpush1.bf16.msra.mxu0 0
    %4687 = vmatprep.subr.bf16.mxu0 0
    %4688 = vmatpush1.bf16.msra.mxu0 0
    %4689 = vmatprep.subr.bf16.mxu0 0
    %4690 = vmatpush1.bf16.msra.mxu0 0
    %4691 = vmatprep.subr.bf16.mxu0 0
    %4692 = vmatpush1.bf16.msra.mxu0 0
    %4693 = vmatprep.subr.bf16.mxu0 0
    %4694 = vmatpush1.bf16.msra.mxu0 0
    %4695 = vmatprep.subr.bf16.mxu0 0
    %4696 = vmatpush1.bf16.msra.mxu0 0
    %4697 = vmatprep.subr.bf16.mxu0 0
    %4698 = vmatpush1.bf16.msra.mxu0 0
    %4699 = vmatprep.subr.bf16.mxu0 0
    %4700 = vmatpush1.bf16.msra.mxu0 0
    %4701 = vmatprep.subr.bf16.mxu0 0
    %4702 = vmatpush1.bf16.msra.mxu0 0
    %4703 = vmatprep.subr.bf16.mxu0 0
    %4704 = vmatpush1.bf16.msra.mxu0 0
    %4705 = vmatprep.subr.bf16.mxu0 0
    %4706 = vmatpush1.bf16.msra.mxu0 0
    %4707 = vmatprep.mubr.bf16.mxu0 0
    %4708 = vmatmul.mubr.bf16.gmra.mrb[0].mxu0 %v4667
    %v4709 = vpop.f32.mrb[0].mxu0
    %v4710 = vadd.f32 0.0, %v4709
    %v4711 = vpop.f32.mrb[0].mxu0
    %v4712 = vpop.f32.mrb[0].mxu0
    %v4713 = vadd.f32 0.0, %v4712
    %v4714 = vpop.f32.mrb[0].mxu0
    %4715 = vmatprep.mubr.bf16.mxu0 0
    %4716 = vmatmul.mubr.bf16.gmra.mrb[0].mxu0 %v4670
    %v4717 = vpop.f32.mrb[0].mxu0
    %v4718 = vadd.f32 0.0, %v4717
    %v4719 = vpop.f32.mrb[0].mxu0
    %v4720 = vpop.f32.mrb[0].mxu0
    %v4721 = vadd.f32 0.0, %v4720
    %v4722 = vpop.f32.mrb[0].mxu0
    %4723 = vdwg.mxu0
    %v4728 = vunpack.c.l.b16 %v4644
    %v4729 = vunpack.c.l.b16 %v4645
    %v4730 = vunpack.c.l.b16 %v4646
    %v4731 = vunpack.c.l.b16 %v4647
    %v4732 = vpack.c.b16 %v4729, %v4728
    %v4733 = vpack.c.b16 %v4731, %v4730
    %v4735 = vsel %vm2511, %v4732, 0
    %v4738 = vsel %vm2511, %v4733, 0
    %4740 = vmatprep.subr.bf16.mxu0 0
    %4741 = vmatpush1.bf16.msra.mxu0 %v4652
    %4742 = vmatprep.subr.bf16.mxu0 0
    %4743 = vmatpush1.bf16.msra.mxu0 %v4653
    %4744 = vmatprep.subr.bf16.mxu0 0
    %4745 = vmatpush1.bf16.msra.mxu0 %v4654
    %4746 = vmatprep.subr.bf16.mxu0 0
    %4747 = vmatpush1.bf16.msra.mxu0 %v4673
    %4748 = vmatprep.subr.bf16.mxu0 0
    %4749 = vmatpush1.bf16.msra.mxu0 0
    %4750 = vmatprep.subr.bf16.mxu0 0
    %4751 = vmatpush1.bf16.msra.mxu0 0
    %4752 = vmatprep.subr.bf16.mxu0 0
    %4753 = vmatpush1.bf16.msra.mxu0 0
    %4754 = vmatprep.subr.bf16.mxu0 0
    %4755 = vmatpush1.bf16.msra.mxu0 0
    %4756 = vmatprep.subr.bf16.mxu0 0
    %4757 = vmatpush1.bf16.msra.mxu0 0
    %4758 = vmatprep.subr.bf16.mxu0 0
    %4759 = vmatpush1.bf16.msra.mxu0 0
    %4760 = vmatprep.subr.bf16.mxu0 0
    %4761 = vmatpush1.bf16.msra.mxu0 0
    %4762 = vmatprep.subr.bf16.mxu0 0
    %4763 = vmatpush1.bf16.msra.mxu0 0
    %4764 = vmatprep.subr.bf16.mxu0 0
    %4765 = vmatpush1.bf16.msra.mxu0 0
    %4766 = vmatprep.subr.bf16.mxu0 0
    %4767 = vmatpush1.bf16.msra.mxu0 0
    %4768 = vmatprep.subr.bf16.mxu0 0
    %4769 = vmatpush1.bf16.msra.mxu0 0
    %4770 = vmatprep.subr.bf16.mxu0 0
    %4771 = vmatpush1.bf16.msra.mxu0 0
    %4772 = vmatprep.mubr.bf16.mxu0 0
    %4773 = vmatmul.mubr.bf16.gmra.mrb[0].mxu0 %v4735
    %v4774 = vpop.f32.mrb[0].mxu0
    %v4775 = vadd.f32 0.0, %v4774
    %v4776 = vpop.f32.mrb[0].mxu0
    %v4777 = vpop.f32.mrb[0].mxu0
    %v4778 = vadd.f32 0.0, %v4777
    %v4779 = vpop.f32.mrb[0].mxu0
    %4780 = vmatprep.mubr.bf16.mxu0 0
    %4781 = vmatmul.mubr.bf16.gmra.mrb[0].mxu0 %v4738
    %v4782 = vpop.f32.mrb[0].mxu0
    %v4783 = vadd.f32 0.0, %v4782
    %v4784 = vpop.f32.mrb[0].mxu0
    %v4785 = vpop.f32.mrb[0].mxu0
    %v4786 = vadd.f32 0.0, %v4785
    %v4787 = vpop.f32.mrb[0].mxu0
    %4788 = vdwg.mxu0
    %v4793 = vunpack.c.l.b16 %v4648
    %v4794 = vunpack.c.l.b16 %v4649
    %v4795 = vunpack.c.l.b16 %v4650
    %v4796 = vunpack.c.l.b16 %v4651
    %v4797 = vpack.c.b16 %v4794, %v4793
    %v4798 = vpack.c.b16 %v4796, %v4795
    %v4800 = vsel %vm2511, %v4797, 0
    %v4803 = vsel %vm2511, %v4798, 0
    %4805 = vmatprep.subr.bf16.mxu0 0
    %4806 = vmatpush1.bf16.msra.mxu0 %v4652
    %4807 = vmatprep.subr.bf16.mxu0 0
    %4808 = vmatpush1.bf16.msra.mxu0 %v4653
    %4809 = vmatprep.subr.bf16.mxu0 0
    %4810 = vmatpush1.bf16.msra.mxu0 %v4654
    %4811 = vmatprep.subr.bf16.mxu0 0
    %4812 = vmatpush1.bf16.msra.mxu0 %v4673
    %4813 = vmatprep.subr.bf16.mxu0 0
    %4814 = vmatpush1.bf16.msra.mxu0 0
    %4815 = vmatprep.subr.bf16.mxu0 0
    %4816 = vmatpush1.bf16.msra.mxu0 0
    %4817 = vmatprep.subr.bf16.mxu0 0
    %4818 = vmatpush1.bf16.msra.mxu0 0
    %4819 = vmatprep.subr.bf16.mxu0 0
    %4820 = vmatpush1.bf16.msra.mxu0 0
    %4821 = vmatprep.subr.bf16.mxu0 0
    %4822 = vmatpush1.bf16.msra.mxu0 0
    %4823 = vmatprep.subr.bf16.mxu0 0
    %4824 = vmatpush1.bf16.msra.mxu0 0
    %4825 = vmatprep.subr.bf16.mxu0 0
    %4826 = vmatpush1.bf16.msra.mxu0 0
    %4827 = vmatprep.subr.bf16.mxu0 0
    %4828 = vmatpush1.bf16.msra.mxu0 0
    %4829 = vmatprep.subr.bf16.mxu0 0
    %4830 = vmatpush1.bf16.msra.mxu0 0
    %4831 = vmatprep.subr.bf16.mxu0 0
    %4832 = vmatpush1.bf16.msra.mxu0 0
    %4833 = vmatprep.subr.bf16.mxu0 0
    %4834 = vmatpush1.bf16.msra.mxu0 0
    %4835 = vmatprep.subr.bf16.mxu0 0
    %4836 = vmatpush1.bf16.msra.mxu0 0
    %4837 = vmatprep.mubr.bf16.mxu0 0
    %4838 = vmatmul.mubr.bf16.gmra.mrb[0].mxu0 %v4800
    %v4839 = vpop.f32.mrb[0].mxu0
    %v4840 = vadd.f32 0.0, %v4839
    %v4841 = vpop.f32.mrb[0].mxu0
    %v4842 = vpop.f32.mrb[0].mxu0
    %v4843 = vadd.f32 0.0, %v4842
    %v4844 = vpop.f32.mrb[0].mxu0
    %4845 = vmatprep.mubr.bf16.mxu0 0
    %4846 = vmatmul.mubr.bf16.gmra.mrb[0].mxu0 %v4803
    %v4847 = vpop.f32.mrb[0].mxu0
    %v4848 = vadd.f32 0.0, %v4847
    %v4849 = vpop.f32.mrb[0].mxu0
    %v4850 = vpop.f32.mrb[0].mxu0
    %v4851 = vadd.f32 0.0, %v4850
    %v4852 = vpop.f32.mrb[0].mxu0
    %4853 = vdwg.mxu0
    %4858 = vrot.lane.b32.xlu0 %v4775, 64
    %v4859 = vpop.permute.xlu0 %4858
    %4860 = vrot.lane.b32.xlu0 %v4778, 64
    %v4861 = vpop.permute.xlu0 %4860
    %4862 = vrot.lane.b32.xlu0 %v4783, 64
    %v4863 = vpop.permute.xlu0 %4862
    %4864 = vrot.lane.b32.xlu0 %v4786, 64
    %v4865 = vpop.permute.xlu0 %4864
    %v4870 = vsel %vm1894, %v4710, %v4859
    %v4871 = vsel %vm1894, %v4713, %v4861
    %v4872 = vsel %vm1894, %v4718, %v4863
    %v4873 = vsel %vm1894, %v4721, %v4865
    %v4874 = vpack.c.bf16 %v4871, %v4870
    %v4875 = vpack.c.bf16 %v4843, %v4840
    %v4876 = vpack.c.bf16 %v4873, %v4872
    %v4877 = vpack.c.bf16 %v4851, %v4848
    %v4879 = vlaneseq
    %v4880 = vshrl.u32 %v4879, 7
    %v4881 = vsub.s32 0, %v4880
    %v4882 = vrot.slane %v4639, %v4881
    %v4908 = vunpack.c.l.b16 %v4615
    %v4909 = vunpack.c.l.b16 %v4616
    %v4910 = vunpack.c.l.b16 %v4617
    %v4911 = vunpack.c.l.b16 %v4618
    %v4912 = vunpack.c.l.b16 %v4619
    %v4913 = vunpack.c.l.b16 %v4620
    %v4914 = vunpack.c.l.b16 %v4621
    %v4915 = vunpack.c.l.b16 %v4622
    %v4916 = vunpack.c.l.b16 %v4623
    %v4917 = vunpack.c.l.b16 %v4624
    %v4918 = vunpack.c.l.b16 %v4625
    %v4919 = vunpack.c.l.b16 %v4626
    %v4920 = vunpack.c.l.b16 %v4627
    %v4921 = vunpack.c.l.b16 %v4628
    %v4922 = vunpack.c.l.b16 %v4629
    %v4923 = vunpack.c.l.b16 %v4630
    %v4924 = vunpack.c.l.b16 %v4631
    %v4925 = vunpack.c.l.b16 %v4632
    %v4926 = vunpack.c.l.b16 %v4633
    %v4927 = vunpack.c.l.b16 %v4634
    %v4928 = vunpack.c.l.b16 %v4635
    %v4929 = vunpack.c.l.b16 %v4636
    %v4930 = vunpack.c.l.b16 %v4637
    %v4931 = vunpack.c.l.b16 %v4638
    %v4932 = vpack.c.b16 %v4909, %v4908
    %v4933 = vpack.c.b16 %v4911, %v4910
    %v4934 = vpack.c.b16 %v4913, %v4912
    %v4935 = vpack.c.b16 %v4915, %v4914
    %v4936 = vpack.c.b16 %v4917, %v4916
    %v4937 = vpack.c.b16 %v4919, %v4918
    %v4938 = vpack.c.b16 %v4921, %v4920
    %v4939 = vpack.c.b16 %v4923, %v4922
    %v4940 = vpack.c.b16 %v4925, %v4924
    %v4941 = vpack.c.b16 %v4927, %v4926
    %v4942 = vpack.c.b16 %v4929, %v4928
    %v4943 = vpack.c.b16 %v4931, %v4930
    %v4957 = vsel %vm1894, %v4875, 0
    %v4960 = vsel %vm1894, %v4877, 0
    %4962 = vmatprep.subr.bf16.mxu0 0
    %4963 = vmatpush1.bf16.msra.mxu0 %v4932
    %4964 = vmatprep.subr.bf16.mxu0 0
    %4965 = vmatpush1.bf16.msra.mxu0 %v4933
    %4966 = vmatprep.subr.bf16.mxu0 0
    %4967 = vmatpush1.bf16.msra.mxu0 %v4934
    %4968 = vmatprep.subr.bf16.mxu0 0
    %4969 = vmatpush1.bf16.msra.mxu0 %v4935
    %4970 = vmatprep.subr.bf16.mxu0 0
    %4971 = vmatpush1.bf16.msra.mxu0 %v4936
    %4972 = vmatprep.subr.bf16.mxu0 0
    %4973 = vmatpush1.bf16.msra.mxu0 %v4937
    %4974 = vmatprep.subr.bf16.mxu0 0
    %4975 = vmatpush1.bf16.msra.mxu0 %v4938
    %4976 = vmatprep.subr.bf16.mxu0 0
    %4977 = vmatpush1.bf16.msra.mxu0 %v4939
    %4978 = vmatprep.subr.bf16.mxu0 0
    %4979 = vmatpush1.bf16.msra.mxu0 %v4940
    %4980 = vmatprep.subr.bf16.mxu0 0
    %4981 = vmatpush1.bf16.msra.mxu0 %v4941
    %4982 = vmatprep.subr.bf16.mxu0 0
    %4983 = vmatpush1.bf16.msra.mxu0 %v4942
    %4984 = vmatprep.subr.bf16.mxu0 0
    %4985 = vmatpush1.bf16.msra.mxu0 %v4943
    %4986 = vmatprep.subr.bf16.mxu0 0
    %4987 = vmatpush1.bf16.msra.mxu0 0
    %4988 = vmatprep.subr.bf16.mxu0 0
    %4989 = vmatpush1.bf16.msra.mxu0 0
    %4990 = vmatprep.subr.bf16.mxu0 0
    %4991 = vmatpush1.bf16.msra.mxu0 0
    %4992 = vmatprep.subr.bf16.mxu0 0
    %4993 = vmatpush1.bf16.msra.mxu0 0
    %4994 = vmatprep.mubr.bf16.mxu0 %v4957
    %4995 = vmatmul.mubr.bf16.gmra.mrb[0].mxu0 %v4874
    %v4996 = vpop.f32.mrb[0].mxu0
    %v4997 = vadd.f32 %v4882, %v4996
    %v4998 = vpop.f32.mrb[0].mxu0
    %v4999 = vpop.f32.mrb[0].mxu0
    %v5000 = vadd.f32 %v4882, %v4999
    %v5001 = vpop.f32.mrb[0].mxu0
    %5002 = vmatprep.mubr.bf16.mxu0 %v4960
    %5003 = vmatmul.mubr.bf16.gmra.mrb[0].mxu0 %v4876
    %v5004 = vpop.f32.mrb[0].mxu0
    %v5005 = vadd.f32 %v4882, %v5004
    %v5006 = vpop.f32.mrb[0].mxu0
    %v5007 = vpop.f32.mrb[0].mxu0
    %v5008 = vadd.f32 %v4882, %v5007
    %v5009 = vpop.f32.mrb[0].mxu0
    %5010 = vdwg.mxu0
    %v5011 = vmax.f32 %v4997, 0.0
    %v5012 = vmax.f32 %v5000, 0.0
    %v5013 = vmax.f32 %v5005, 0.0
    %v5014 = vmax.f32 %v5008, 0.0
    %v5015 = vld [vmem:[%s41] sm:$0xf]
    %v5016 = vld [vmem:[%s41 + $0x4] sm:$0xf]
    %v5017 = vld [vmem:[%s41 + $0x8] sm:$0xf]
    %v5018 = vld [vmem:[%s41 + $0xc] sm:$0xf]
    %v5019 = vld [vmem:[%s41 + $0x10] sm:$0xf]
    %v5020 = vld [vmem:[%s41 + $0x14] sm:$0xf]
    %v5021 = vld [vmem:[%s41 + $0x18] sm:$0xf]
    %v5022 = vld [vmem:[%s41 + $0x1c] sm:$0xf]
    %v5023 = vld [vmem:[%s43] sm:$0x1]
    %v5024 = vld [vmem:[%s45] sm:$0xf]
    %v5025 = vld [vmem:[%s45 + $0x4] sm:$0xf]
    %v5026 = vld [vmem:[%s45 + $0x8] sm:$0xf]
    %v5027 = vld [vmem:[%s45 + $0xc] sm:$0x1]
    %v5032 = vunpack.c.l.b16 %v5024
    %v5033 = vunpack.c.l.b16 %v5025
    %v5034 = vunpack.c.l.b16 %v5026
    %v5035 = vunpack.c.l.b16 %v5027
    %v5036 = vpack.c.b16 %v5033, %v5032
    %v5037 = vpack.c.b16 %v5035, %v5034
    %v5039 = vsel %vm2511, %v5036, 0
    %v5042 = vsel %vm2511, %v5037, 0
    %5044 = vmatprep.subr.bf16.mxu0 0
    %5045 = vmatpush1.bf16.msra.mxu0 %v4652
    %5046 = vmatprep.subr.bf16.mxu0 0
    %5047 = vmatpush1.bf16.msra.mxu0 %v4653
    %5048 = vmatprep.subr.bf16.mxu0 0
    %5049 = vmatpush1.bf16.msra.mxu0 %v4654
    %5050 = vmatprep.subr.bf16.mxu0 0
    %5051 = vmatpush1.bf16.msra.mxu0 %v4673
    %5052 = vmatprep.subr.bf16.mxu0 0
    %5053 = vmatpush1.bf16.msra.mxu0 0
    %5054 = vmatprep.subr.bf16.mxu0 0
    %5055 = vmatpush1.bf16.msra.mxu0 0
    %5056 = vmatprep.subr.bf16.mxu0 0
    %5057 = vmatpush1.bf16.msra.mxu0 0
    %5058 = vmatprep.subr.bf16.mxu0 0
    %5059 = vmatpush1.bf16.msra.mxu0 0
    %5060 = vmatprep.subr.bf16.mxu0 0
    %5061 = vmatpush1.bf16.msra.mxu0 0
    %5062 = vmatprep.subr.bf16.mxu0 0
    %5063 = vmatpush1.bf16.msra.mxu0 0
    %5064 = vmatprep.subr.bf16.mxu0 0
    %5065 = vmatpush1.bf16.msra.mxu0 0
    %5066 = vmatprep.subr.bf16.mxu0 0
    %5067 = vmatpush1.bf16.msra.mxu0 0
    %5068 = vmatprep.subr.bf16.mxu0 0
    %5069 = vmatpush1.bf16.msra.mxu0 0
    %5070 = vmatprep.subr.bf16.mxu0 0
    %5071 = vmatpush1.bf16.msra.mxu0 0
    %5072 = vmatprep.subr.bf16.mxu0 0
    %5073 = vmatpush1.bf16.msra.mxu0 0
    %5074 = vmatprep.subr.bf16.mxu0 0
    %5075 = vmatpush1.bf16.msra.mxu0 0
    %5076 = vmatprep.mubr.bf16.mxu0 0
    %5077 = vmatmul.mubr.bf16.gmra.mrb[0].mxu0 %v5039
    %v5078 = vpop.f32.mrb[0].mxu0
    %v5079 = vadd.f32 0.0, %v5078
    %v5080 = vpop.f32.mrb[0].mxu0
    %v5081 = vpop.f32.mrb[0].mxu0
    %v5082 = vadd.f32 0.0, %v5081
    %v5083 = vpop.f32.mrb[0].mxu0
    %5084 = vmatprep.mubr.bf16.mxu0 0
    %5085 = vmatmul.mubr.bf16.gmra.mrb[0].mxu0 %v5042
    %v5086 = vpop.f32.mrb[0].mxu0
    %v5087 = vadd.f32 0.0, %v5086
    %v5088 = vpop.f32.mrb[0].mxu0
    %v5089 = vpop.f32.mrb[0].mxu0
    %v5090 = vadd.f32 0.0, %v5089
    %v5091 = vpop.f32.mrb[0].mxu0
    %5092 = vdwg.mxu0
    %v5093 = vpack.c.bf16 %v5082, %v5079
    %v5094 = vpack.c.bf16 %v5090, %v5087
    %v5096 = vlaneseq
    %v5097 = vshrl.u32 %v5096, 7
    %v5098 = vsub.s32 0, %v5097
    %v5099 = vrot.slane %v5023, %v5098
    %v5109 = vunpack.c.l.b16 %v5015
    %v5110 = vunpack.c.l.b16 %v5016
    %v5111 = vunpack.c.l.b16 %v5017
    %v5112 = vunpack.c.l.b16 %v5018
    %v5113 = vunpack.c.l.b16 %v5019
    %v5114 = vunpack.c.l.b16 %v5020
    %v5115 = vunpack.c.l.b16 %v5021
    %v5116 = vunpack.c.l.b16 %v5022
    %v5117 = vpack.c.b16 %v5110, %v5109
    %v5118 = vpack.c.b16 %v5112, %v5111
    %v5119 = vpack.c.b16 %v5114, %v5113
    %v5120 = vpack.c.b16 %v5116, %v5115
    %v5126 = vsel %vm1894, %v5093, 0
    %v5129 = vsel %vm1894, %v5094, 0
    %5131 = vmatprep.subr.bf16.mxu0 0
    %5132 = vmatpush1.bf16.msra.mxu0 %v5117
    %5133 = vmatprep.subr.bf16.mxu0 0
    %5134 = vmatpush1.bf16.msra.mxu0 %v5118
    %5135 = vmatprep.subr.bf16.mxu0 0
    %5136 = vmatpush1.bf16.msra.mxu0 %v5119
    %5137 = vmatprep.subr.bf16.mxu0 0
    %5138 = vmatpush1.bf16.msra.mxu0 %v5120
    %5139 = vmatprep.subr.bf16.mxu0 0
    %5140 = vmatpush1.bf16.msra.mxu0 0
    %5141 = vmatprep.subr.bf16.mxu0 0
    %5142 = vmatpush1.bf16.msra.mxu0 0
    %5143 = vmatprep.subr.bf16.mxu0 0
    %5144 = vmatpush1.bf16.msra.mxu0 0
    %5145 = vmatprep.subr.bf16.mxu0 0
    %5146 = vmatpush1.bf16.msra.mxu0 0
    %5147 = vmatprep.subr.bf16.mxu0 0
    %5148 = vmatpush1.bf16.msra.mxu0 0
    %5149 = vmatprep.subr.bf16.mxu0 0
    %5150 = vmatpush1.bf16.msra.mxu0 0
    %5151 = vmatprep.subr.bf16.mxu0 0
    %5152 = vmatpush1.bf16.msra.mxu0 0
    %5153 = vmatprep.subr.bf16.mxu0 0
    %5154 = vmatpush1.bf16.msra.mxu0 0
    %5155 = vmatprep.subr.bf16.mxu0 0
    %5156 = vmatpush1.bf16.msra.mxu0 0
    %5157 = vmatprep.subr.bf16.mxu0 0
    %5158 = vmatpush1.bf16.msra.mxu0 0
    %5159 = vmatprep.subr.bf16.mxu0 0
    %5160 = vmatpush1.bf16.msra.mxu0 0
    %5161 = vmatprep.subr.bf16.mxu0 0
    %5162 = vmatpush1.bf16.msra.mxu0 0
    %5163 = vmatprep.mubr.bf16.mxu0 0
    %5164 = vmatmul.mubr.bf16.gmra.mrb[0].mxu0 %v5126
    %v5165 = vpop.f32.mrb[0].mxu0
    %v5166 = vadd.f32 %v5099, %v5165
    %v5167 = vpop.f32.mrb[0].mxu0
    %v5168 = vpop.f32.mrb[0].mxu0
    %v5169 = vadd.f32 %v5099, %v5168
    %v5170 = vpop.f32.mrb[0].mxu0
    %5171 = vmatprep.mubr.bf16.mxu0 0
    %5172 = vmatmul.mubr.bf16.gmra.mrb[0].mxu0 %v5129
    %v5173 = vpop.f32.mrb[0].mxu0
    %v5174 = vadd.f32 %v5099, %v5173
    %v5175 = vpop.f32.mrb[0].mxu0
    %v5176 = vpop.f32.mrb[0].mxu0
    %v5177 = vadd.f32 %v5099, %v5176
    %v5178 = vpop.f32.mrb[0].mxu0
    %5179 = vdwg.mxu0
    %v5180 = vld [vmem:[%s47] sm:$0xf]
    %v5181 = vld [vmem:[%s47 + $0x4] sm:$0xf]
    %v5182 = vld [vmem:[%s47 + $0x8] sm:$0xf]
    %v5183 = vld [vmem:[%s47 + $0xc] sm:$0xf]
    %v5184 = vld [vmem:[%s47 + $0x10] sm:$0xf]
    %v5185 = vld [vmem:[%s47 + $0x14] sm:$0xf]
    %v5186 = vld [vmem:[%s47 + $0x18] sm:$0xf]
    %v5187 = vld [vmem:[%s47 + $0x1c] sm:$0xf]
    %v5188 = vld [vmem:[%s47 + $0x20] sm:$0xf]
    %v5189 = vld [vmem:[%s47 + $0x24] sm:$0xf]
    %v5190 = vld [vmem:[%s47 + $0x28] sm:$0xf]
    %v5191 = vld [vmem:[%s47 + $0x2c] sm:$0xf]
    %v5192 = vld [vmem:[%s47 + $0x30] sm:$0xf]
    %v5193 = vld [vmem:[%s47 + $0x34] sm:$0xf]
    %v5194 = vld [vmem:[%s47 + $0x38] sm:$0xf]
    %v5195 = vld [vmem:[%s47 + $0x3c] sm:$0xf]
    %v5196 = vld [vmem:[%s47 + $0x40] sm:$0xf]
    %v5197 = vld [vmem:[%s47 + $0x44] sm:$0xf]
    %v5198 = vld [vmem:[%s47 + $0x48] sm:$0xf]
    %v5199 = vld [vmem:[%s47 + $0x4c] sm:$0xf]
    %v5200 = vld [vmem:[%s47 + $0x50] sm:$0xf]
    %v5201 = vld [vmem:[%s47 + $0x54] sm:$0xf]
    %v5202 = vld [vmem:[%s47 + $0x58] sm:$0xf]
    %v5203 = vld [vmem:[%s47 + $0x5c] sm:$0xf]
    %v5204 = vld [vmem:[%s47 + $0x60] sm:$0xf]
    %v5205 = vld [vmem:[%s47 + $0x64] sm:$0xf]
    %v5206 = vld [vmem:[%s47 + $0x68] sm:$0xf]
    %v5207 = vld [vmem:[%s47 + $0x6c] sm:$0xf]
    %v5208 = vld [vmem:[%s47 + $0x70] sm:$0xf]
    %v5209 = vld [vmem:[%s47 + $0x74] sm:$0xf]
    %v5210 = vld [vmem:[%s47 + $0x78] sm:$0xf]
    %v5211 = vld [vmem:[%s47 + $0x7c] sm:$0xf]
    %v5212 = vld [vmem:[%s47 + $0x80] sm:$0xf]
    %v5213 = vld [vmem:[%s47 + $0x84] sm:$0xf]
    %v5214 = vld [vmem:[%s47 + $0x88] sm:$0xf]
    %v5215 = vld [vmem:[%s47 + $0x8c] sm:$0xf]
    %v5216 = vld [vmem:[%s47 + $0x90] sm:$0xf]
    %v5217 = vld [vmem:[%s47 + $0x94] sm:$0xf]
    %v5218 = vld [vmem:[%s47 + $0x98] sm:$0xf]
    %v5219 = vld [vmem:[%s47 + $0x9c] sm:$0xf]
    %v5220 = vld [vmem:[%s47 + $0xa0] sm:$0xf]
    %v5221 = vld [vmem:[%s47 + $0xa4] sm:$0xf]
    %v5222 = vld [vmem:[%s47 + $0xa8] sm:$0xf]
    %v5223 = vld [vmem:[%s47 + $0xac] sm:$0xf]
    %v5224 = vld [vmem:[%s47 + $0xb0] sm:$0xf]
    %v5225 = vld [vmem:[%s47 + $0xb4] sm:$0xf]
    %v5226 = vld [vmem:[%s47 + $0xb8] sm:$0xf]
    %v5227 = vld [vmem:[%s47 + $0xbc] sm:$0xf]
    %v5228 = vld [vmem:[%s49] sm:$0x1]
    %v5229 = vld [vmem:[%s51] sm:$0xf]
    %v5230 = vld [vmem:[%s51 + $0x4] sm:$0xf]
    %v5231 = vld [vmem:[%s51 + $0x8] sm:$0xf]
    %v5232 = vld [vmem:[%s51 + $0xc] sm:$0x1]
    %v5233 = vld [vmem:[%s51 + $0x10] sm:$0xf]
    %v5234 = vld [vmem:[%s51 + $0x14] sm:$0xf]
    %v5235 = vld [vmem:[%s51 + $0x18] sm:$0xf]
    %v5236 = vld [vmem:[%s51 + $0x1c] sm:$0x1]
    %v5237 = vld [vmem:[%s51 + $0x20] sm:$0xf]
    %v5238 = vld [vmem:[%s51 + $0x24] sm:$0xf]
    %v5239 = vld [vmem:[%s51 + $0x28] sm:$0xf]
    %v5240 = vld [vmem:[%s51 + $0x2c] sm:$0x1]
    %v5241 = vpack.c.bf16 %v5012, %v5011
    %v5242 = vpack.c.bf16 %v5014, %v5013
    %v5247 = vunpack.c.l.b16 %v5229
    %v5248 = vunpack.c.l.b16 %v5230
    %v5249 = vunpack.c.l.b16 %v5231
    %v5250 = vunpack.c.l.b16 %v5232
    %v5251 = vpack.c.b16 %v5248, %v5247
    %v5252 = vpack.c.b16 %v5250, %v5249
    %vm5253 = vcmask 211968
    %v5255 = vsel %vm5253, %v5251, 0
    %v5258 = vsel %vm5253, %v5252, 0
    %vm5260 = vcmask 1044480
    %v5262 = vsel %vm5260, %v5242, 0
    %5264 = vmatprep.subr.bf16.mxu0 0
    %5265 = vmatpush1.bf16.msra.mxu0 %v5241
    %5266 = vmatprep.subr.bf16.mxu0 0
    %5267 = vmatpush1.bf16.msra.mxu0 %v5262
    %5268 = vmatprep.subr.bf16.mxu0 0
    %5269 = vmatpush1.bf16.msra.mxu0 0
    %5270 = vmatprep.subr.bf16.mxu0 0
    %5271 = vmatpush1.bf16.msra.mxu0 0
    %5272 = vmatprep.subr.bf16.mxu0 0
    %5273 = vmatpush1.bf16.msra.mxu0 0
    %5274 = vmatprep.subr.bf16.mxu0 0
    %5275 = vmatpush1.bf16.msra.mxu0 0
    %5276 = vmatprep.subr.bf16.mxu0 0
    %5277 = vmatpush1.bf16.msra.mxu0 0
    %5278 = vmatprep.subr.bf16.mxu0 0
    %5279 = vmatpush1.bf16.msra.mxu0 0
    %5280 = vmatprep.subr.bf16.mxu0 0
    %5281 = vmatpush1.bf16.msra.mxu0 0
    %5282 = vmatprep.subr.bf16.mxu0 0
    %5283 = vmatpush1.bf16.msra.mxu0 0
    %5284 = vmatprep.subr.bf16.mxu0 0
    %5285 = vmatpush1.bf16.msra.mxu0 0
    %5286 = vmatprep.subr.bf16.mxu0 0
    %5287 = vmatpush1.bf16.msra.mxu0 0
    %5288 = vmatprep.subr.bf16.mxu0 0
    %5289 = vmatpush1.bf16.msra.mxu0 0
    %5290 = vmatprep.subr.bf16.mxu0 0
    %5291 = vmatpush1.bf16.msra.mxu0 0
    %5292 = vmatprep.subr.bf16.mxu0 0
    %5293 = vmatpush1.bf16.msra.mxu0 0
    %5294 = vmatprep.subr.bf16.mxu0 0
    %5295 = vmatpush1.bf16.msra.mxu0 0
    %5296 = vmatprep.mubr.bf16.mxu0 0
    %5297 = vmatmul.mubr.bf16.gmra.mrb[0].mxu0 %v5255
    %v5298 = vpop.f32.mrb[0].mxu0
    %v5299 = vadd.f32 0.0, %v5298
    %v5300 = vpop.f32.mrb[0].mxu0
    %v5301 = vpop.f32.mrb[0].mxu0
    %v5302 = vadd.f32 0.0, %v5301
    %v5303 = vpop.f32.mrb[0].mxu0
    %5304 = vmatprep.mubr.bf16.mxu0 0
    %5305 = vmatmul.mubr.bf16.gmra.mrb[0].mxu0 %v5258
    %v5306 = vpop.f32.mrb[0].mxu0
    %v5307 = vadd.f32 0.0, %v5306
    %v5308 = vpop.f32.mrb[0].mxu0
    %v5309 = vpop.f32.mrb[0].mxu0
    %v5310 = vadd.f32 0.0, %v5309
    %v5311 = vpop.f32.mrb[0].mxu0
    %5312 = vdwg.mxu0
    %v5317 = vunpack.c.l.b16 %v5233
    %v5318 = vunpack.c.l.b16 %v5234
    %v5319 = vunpack.c.l.b16 %v5235
    %v5320 = vunpack.c.l.b16 %v5236
    %v5321 = vpack.c.b16 %v5318, %v5317
    %v5322 = vpack.c.b16 %v5320, %v5319
    %v5324 = vsel %vm5253, %v5321, 0
    %v5327 = vsel %vm5253, %v5322, 0
    %5329 = vmatprep.subr.bf16.mxu0 0
    %5330 = vmatpush1.bf16.msra.mxu0 %v5241
    %5331 = vmatprep.subr.bf16.mxu0 0
    %5332 = vmatpush1.bf16.msra.mxu0 %v5262
    %5333 = vmatprep.subr.bf16.mxu0 0
    %5334 = vmatpush1.bf16.msra.mxu0 0
    %5335 = vmatprep.subr.bf16.mxu0 0
    %5336 = vmatpush1.bf16.msra.mxu0 0
    %5337 = vmatprep.subr.bf16.mxu0 0
    %5338 = vmatpush1.bf16.msra.mxu0 0
    %5339 = vmatprep.subr.bf16.mxu0 0
    %5340 = vmatpush1.bf16.msra.mxu0 0
    %5341 = vmatprep.subr.bf16.mxu0 0
    %5342 = vmatpush1.bf16.msra.mxu0 0
    %5343 = vmatprep.subr.bf16.mxu0 0
    %5344 = vmatpush1.bf16.msra.mxu0 0
    %5345 = vmatprep.subr.bf16.mxu0 0
    %5346 = vmatpush1.bf16.msra.mxu0 0
    %5347 = vmatprep.subr.bf16.mxu0 0
    %5348 = vmatpush1.bf16.msra.mxu0 0
    %5349 = vmatprep.subr.bf16.mxu0 0
    %5350 = vmatpush1.bf16.msra.mxu0 0
    %5351 = vmatprep.subr.bf16.mxu0 0
    %5352 = vmatpush1.bf16.msra.mxu0 0
    %5353 = vmatprep.subr.bf16.mxu0 0
    %5354 = vmatpush1.bf16.msra.mxu0 0
    %5355 = vmatprep.subr.bf16.mxu0 0
    %5356 = vmatpush1.bf16.msra.mxu0 0
    %5357 = vmatprep.subr.bf16.mxu0 0
    %5358 = vmatpush1.bf16.msra.mxu0 0
    %5359 = vmatprep.subr.bf16.mxu0 0
    %5360 = vmatpush1.bf16.msra.mxu0 0
    %5361 = vmatprep.mubr.bf16.mxu0 0
    %5362 = vmatmul.mubr.bf16.gmra.mrb[0].mxu0 %v5324
    %v5363 = vpop.f32.mrb[0].mxu0
    %v5364 = vadd.f32 0.0, %v5363
    %v5365 = vpop.f32.mrb[0].mxu0
    %v5366 = vpop.f32.mrb[0].mxu0
    %v5367 = vadd.f32 0.0, %v5366
    %v5368 = vpop.f32.mrb[0].mxu0
    %5369 = vmatprep.mubr.bf16.mxu0 0
    %5370 = vmatmul.mubr.bf16.gmra.mrb[0].mxu0 %v5327
    %v5371 = vpop.f32.mrb[0].mxu0
    %v5372 = vadd.f32 0.0, %v5371
    %v5373 = vpop.f32.mrb[0].mxu0
    %v5374 = vpop.f32.mrb[0].mxu0
    %v5375 = vadd.f32 0.0, %v5374
    %v5376 = vpop.f32.mrb[0].mxu0
    %5377 = vdwg.mxu0
    %v5382 = vunpack.c.l.b16 %v5237
    %v5383 = vunpack.c.l.b16 %v5238
    %v5384 = vunpack.c.l.b16 %v5239
    %v5385 = vunpack.c.l.b16 %v5240
    %v5386 = vpack.c.b16 %v5383, %v5382
    %v5387 = vpack.c.b16 %v5385, %v5384
    %v5389 = vsel %vm5253, %v5386, 0
    %v5392 = vsel %vm5253, %v5387, 0
    %5394 = vmatprep.subr.bf16.mxu0 0
    %5395 = vmatpush1.bf16.msra.mxu0 %v5241
    %5396 = vmatprep.subr.bf16.mxu0 0
    %5397 = vmatpush1.bf16.msra.mxu0 %v5262
    %5398 = vmatprep.subr.bf16.mxu0 0
    %5399 = vmatpush1.bf16.msra.mxu0 0
    %5400 = vmatprep.subr.bf16.mxu0 0
    %5401 = vmatpush1.bf16.msra.mxu0 0
    %5402 = vmatprep.subr.bf16.mxu0 0
    %5403 = vmatpush1.bf16.msra.mxu0 0
    %5404 = vmatprep.subr.bf16.mxu0 0
    %5405 = vmatpush1.bf16.msra.mxu0 0
    %5406 = vmatprep.subr.bf16.mxu0 0
    %5407 = vmatpush1.bf16.msra.mxu0 0
    %5408 = vmatprep.subr.bf16.mxu0 0
    %5409 = vmatpush1.bf16.msra.mxu0 0
    %5410 = vmatprep.subr.bf16.mxu0 0
    %5411 = vmatpush1.bf16.msra.mxu0 0
    %5412 = vmatprep.subr.bf16.mxu0 0
    %5413 = vmatpush1.bf16.msra.mxu0 0
    %5414 = vmatprep.subr.bf16.mxu0 0
    %5415 = vmatpush1.bf16.msra.mxu0 0
    %5416 = vmatprep.subr.bf16.mxu0 0
    %5417 = vmatpush1.bf16.msra.mxu0 0
    %5418 = vmatprep.subr.bf16.mxu0 0
    %5419 = vmatpush1.bf16.msra.mxu0 0
    %5420 = vmatprep.subr.bf16.mxu0 0
    %5421 = vmatpush1.bf16.msra.mxu0 0
    %5422 = vmatprep.subr.bf16.mxu0 0
    %5423 = vmatpush1.bf16.msra.mxu0 0
    %5424 = vmatprep.subr.bf16.mxu0 0
    %5425 = vmatpush1.bf16.msra.mxu0 0
    %5426 = vmatprep.mubr.bf16.mxu0 0
    %5427 = vmatmul.mubr.bf16.gmra.mrb[0].mxu0 %v5389
    %v5428 = vpop.f32.mrb[0].mxu0
    %v5429 = vadd.f32 0.0, %v5428
    %v5430 = vpop.f32.mrb[0].mxu0
    %v5431 = vpop.f32.mrb[0].mxu0
    %v5432 = vadd.f32 0.0, %v5431
    %v5433 = vpop.f32.mrb[0].mxu0
    %5434 = vmatprep.mubr.bf16.mxu0 0
    %5435 = vmatmul.mubr.bf16.gmra.mrb[0].mxu0 %v5392
    %v5436 = vpop.f32.mrb[0].mxu0
    %v5437 = vadd.f32 0.0, %v5436
    %v5438 = vpop.f32.mrb[0].mxu0
    %v5439 = vpop.f32.mrb[0].mxu0
    %v5440 = vadd.f32 0.0, %v5439
    %v5441 = vpop.f32.mrb[0].mxu0
    %5442 = vdwg.mxu0
    %v5443 = vpack.c.bf16 %v5302, %v5299
    %v5444 = vpack.c.bf16 %v5367, %v5364
    %v5445 = vpack.c.bf16 %v5432, %v5429
    %v5446 = vpack.c.bf16 %v5310, %v5307
    %v5447 = vpack.c.bf16 %v5375, %v5372
    %v5448 = vpack.c.bf16 %v5440, %v5437
    %v5450 = vlaneseq
    %v5451 = vshrl.u32 %v5450, 7
    %v5452 = vsub.s32 0, %v5451
    %v5453 = vrot.slane %v5228, %v5452
    %v5503 = vunpack.c.l.b16 %v5180
    %v5504 = vunpack.c.l.b16 %v5181
    %v5505 = vunpack.c.l.b16 %v5182
    %v5506 = vunpack.c.l.b16 %v5183
    %v5507 = vunpack.c.l.b16 %v5184
    %v5508 = vunpack.c.l.b16 %v5185
    %v5509 = vunpack.c.l.b16 %v5186
    %v5510 = vunpack.c.l.b16 %v5187
    %v5511 = vunpack.c.l.b16 %v5188
    %v5512 = vunpack.c.l.b16 %v5189
    %v5513 = vunpack.c.l.b16 %v5190
    %v5514 = vunpack.c.l.b16 %v5191
    %v5515 = vunpack.c.l.b16 %v5192
    %v5516 = vunpack.c.l.b16 %v5193
    %v5517 = vunpack.c.l.b16 %v5194
    %v5518 = vunpack.c.l.b16 %v5195
    %v5519 = vunpack.c.l.b16 %v5196
    %v5520 = vunpack.c.l.b16 %v5197
    %v5521 = vunpack.c.l.b16 %v5198
    %v5522 = vunpack.c.l.b16 %v5199
    %v5523 = vunpack.c.l.b16 %v5200
    %v5524 = vunpack.c.l.b16 %v5201
    %v5525 = vunpack.c.l.b16 %v5202
    %v5526 = vunpack.c.l.b16 %v5203
    %v5527 = vunpack.c.l.b16 %v5204
    %v5528 = vunpack.c.l.b16 %v5205
    %v5529 = vunpack.c.l.b16 %v5206
    %v5530 = vunpack.c.l.b16 %v5207
    %v5531 = vunpack.c.l.b16 %v5208
    %v5532 = vunpack.c.l.b16 %v5209
    %v5533 = vunpack.c.l.b16 %v5210
    %v5534 = vunpack.c.l.b16 %v5211
    %v5535 = vunpack.c.l.b16 %v5212
    %v5536 = vunpack.c.l.b16 %v5213
    %v5537 = vunpack.c.l.b16 %v5214
    %v5538 = vunpack.c.l.b16 %v5215
    %v5539 = vunpack.c.l.b16 %v5216
    %v5540 = vunpack.c.l.b16 %v5217
    %v5541 = vunpack.c.l.b16 %v5218
    %v5542 = vunpack.c.l.b16 %v5219
    %v5543 = vunpack.c.l.b16 %v5220
    %v5544 = vunpack.c.l.b16 %v5221
    %v5545 = vunpack.c.l.b16 %v5222
    %v5546 = vunpack.c.l.b16 %v5223
    %v5547 = vunpack.c.l.b16 %v5224
    %v5548 = vunpack.c.l.b16 %v5225
    %v5549 = vunpack.c.l.b16 %v5226
    %v5550 = vunpack.c.l.b16 %v5227
    %v5551 = vpack.c.b16 %v5504, %v5503
    %v5552 = vpack.c.b16 %v5506, %v5505
    %v5553 = vpack.c.b16 %v5508, %v5507
    %v5554 = vpack.c.b16 %v5510, %v5509
    %v5555 = vpack.c.b16 %v5512, %v5511
    %v5556 = vpack.c.b16 %v5514, %v5513
    %v5557 = vpack.c.b16 %v5516, %v5515
    %v5558 = vpack.c.b16 %v5518, %v5517
    %v5559 = vpack.c.b16 %v5520, %v5519
    %v5560 = vpack.c.b16 %v5522, %v5521
    %v5561 = vpack.c.b16 %v5524, %v5523
    %v5562 = vpack.c.b16 %v5526, %v5525
    %v5563 = vpack.c.b16 %v5528, %v5527
    %v5564 = vpack.c.b16 %v5530, %v5529
    %v5565 = vpack.c.b16 %v5532, %v5531
    %v5566 = vpack.c.b16 %v5534, %v5533
    %v5567 = vpack.c.b16 %v5536, %v5535
    %v5568 = vpack.c.b16 %v5538, %v5537
    %v5569 = vpack.c.b16 %v5540, %v5539
    %v5570 = vpack.c.b16 %v5542, %v5541
    %v5571 = vpack.c.b16 %v5544, %v5543
    %v5572 = vpack.c.b16 %v5546, %v5545
    %v5573 = vpack.c.b16 %v5548, %v5547
    %v5574 = vpack.c.b16 %v5550, %v5549
    %5599 = vmatprep.subr.bf16.mxu0 0
    %5600 = vmatpush1.bf16.msra.mxu0 %v5551
    %5601 = vmatprep.subr.bf16.mxu0 0
    %5602 = vmatpush1.bf16.msra.mxu0 %v5552
    %5603 = vmatprep.subr.bf16.mxu0 0
    %5604 = vmatpush1.bf16.msra.mxu0 %v5553
    %5605 = vmatprep.subr.bf16.mxu0 0
    %5606 = vmatpush1.bf16.msra.mxu0 %v5554
    %5607 = vmatprep.subr.bf16.mxu0 0
    %5608 = vmatpush1.bf16.msra.mxu0 %v5555
    %5609 = vmatprep.subr.bf16.mxu0 0
    %5610 = vmatpush1.bf16.msra.mxu0 %v5556
    %5611 = vmatprep.subr.bf16.mxu0 0
    %5612 = vmatpush1.bf16.msra.mxu0 %v5557
    %5613 = vmatprep.subr.bf16.mxu0 0
    %5614 = vmatpush1.bf16.msra.mxu0 %v5558
    %5615 = vmatprep.subr.bf16.mxu0 0
    %5616 = vmatpush1.bf16.msra.mxu0 %v5559
    %5617 = vmatprep.subr.bf16.mxu0 0
    %5618 = vmatpush1.bf16.msra.mxu0 %v5560
    %5619 = vmatprep.subr.bf16.mxu0 0
    %5620 = vmatpush1.bf16.msra.mxu0 %v5561
    %5621 = vmatprep.subr.bf16.mxu0 0
    %5622 = vmatpush1.bf16.msra.mxu0 %v5562
    %5623 = vmatprep.subr.bf16.mxu0 0
    %5624 = vmatpush1.bf16.msra.mxu0 %v5563
    %5625 = vmatprep.subr.bf16.mxu0 0
    %5626 = vmatpush1.bf16.msra.mxu0 %v5564
    %5627 = vmatprep.subr.bf16.mxu0 0
    %5628 = vmatpush1.bf16.msra.mxu0 %v5565
    %5629 = vmatprep.subr.bf16.mxu0 0
    %5630 = vmatpush1.bf16.msra.mxu0 %v5566
    %5631 = vmatprep.mubr.bf16.mxu0 %v5444
    %5632 = vmatmul.mubr.bf16.gmra.mrb[0].mxu0 %v5443
    %v5633 = vpop.f32.mrb[0].mxu0
    %v5634 = vadd.f32 %v5453, %v5633
    %v5635 = vpop.f32.mrb[0].mxu0
    %v5636 = vpop.f32.mrb[0].mxu0
    %v5637 = vadd.f32 %v5453, %v5636
    %v5638 = vpop.f32.mrb[0].mxu0
    %5639 = vmatprep.mubr.bf16.mxu0 %v5447
    %5640 = vmatmul.mubr.bf16.gmra.mrb[0].mxu0 %v5446
    %v5641 = vpop.f32.mrb[0].mxu0
    %v5642 = vadd.f32 %v5453, %v5641
    %v5643 = vpop.f32.mrb[0].mxu0
    %v5644 = vpop.f32.mrb[0].mxu0
    %v5645 = vadd.f32 %v5453, %v5644
    %v5646 = vpop.f32.mrb[0].mxu0
    %5647 = vdwg.mxu0
    %5648 = vmatprep.subr.bf16.mxu0 0
    %5649 = vmatpush1.bf16.msra.mxu0 %v5567
    %5650 = vmatprep.subr.bf16.mxu0 0
    %5651 = vmatpush1.bf16.msra.mxu0 %v5568
    %5652 = vmatprep.subr.bf16.mxu0 0
    %5653 = vmatpush1.bf16.msra.mxu0 %v5569
    %5654 = vmatprep.subr.bf16.mxu0 0
    %5655 = vmatpush1.bf16.msra.mxu0 %v5570
    %5656 = vmatprep.subr.bf16.mxu0 0
    %5657 = vmatpush1.bf16.msra.mxu0 %v5571
    %5658 = vmatprep.subr.bf16.mxu0 0
    %5659 = vmatpush1.bf16.msra.mxu0 %v5572
    %5660 = vmatprep.subr.bf16.mxu0 0
    %5661 = vmatpush1.bf16.msra.mxu0 %v5573
    %5662 = vmatprep.subr.bf16.mxu0 0
    %5663 = vmatpush1.bf16.msra.mxu0 %v5574
    %5664 = vmatprep.subr.bf16.mxu0 0
    %5665 = vmatpush1.bf16.msra.mxu0 0
    %5666 = vmatprep.subr.bf16.mxu0 0
    %5667 = vmatpush1.bf16.msra.mxu0 0
    %5668 = vmatprep.subr.bf16.mxu0 0
    %5669 = vmatpush1.bf16.msra.mxu0 0
    %5670 = vmatprep.subr.bf16.mxu0 0
    %5671 = vmatpush1.bf16.msra.mxu0 0
    %5672 = vmatprep.subr.bf16.mxu0 0
    %5673 = vmatpush1.bf16.msra.mxu0 0
    %5674 = vmatprep.subr.bf16.mxu0 0
    %5675 = vmatpush1.bf16.msra.mxu0 0
    %5676 = vmatprep.subr.bf16.mxu0 0
    %5677 = vmatpush1.bf16.msra.mxu0 0
    %5678 = vmatprep.subr.bf16.mxu0 0
    %5679 = vmatpush1.bf16.msra.mxu0 0
    %5680 = vmatprep.mubr.bf16.mxu0 0
    %5681 = vmatmul.mubr.bf16.gmra.mrb[0].mxu0 %v5445
    %v5682 = vpop.f32.mrb[0].mxu0
    %v5683 = vadd.f32 %v5634, %v5682
    %v5684 = vpop.f32.mrb[0].mxu0
    %v5685 = vpop.f32.mrb[0].mxu0
    %v5686 = vadd.f32 %v5637, %v5685
    %v5687 = vpop.f32.mrb[0].mxu0
    %5688 = vmatprep.mubr.bf16.mxu0 0
    %5689 = vmatmul.mubr.bf16.gmra.mrb[0].mxu0 %v5448
    %v5690 = vpop.f32.mrb[0].mxu0
    %v5691 = vadd.f32 %v5642, %v5690
    %v5692 = vpop.f32.mrb[0].mxu0
    %v5693 = vpop.f32.mrb[0].mxu0
    %v5694 = vadd.f32 %v5645, %v5693
    %v5695 = vpop.f32.mrb[0].mxu0
    %5696 = vdwg.mxu0
    %v5697 = vadd.f32 %v5683, %v5166
    %v5698 = vadd.f32 %v5686, %v5169
    %v5699 = vadd.f32 %v5691, %v5174
    %v5700 = vadd.f32 %v5694, %v5177
    %v5701 = vmax.f32 %v5697, 0.0
    %v5702 = vmax.f32 %v5698, 0.0
    %v5703 = vmax.f32 %v5699, 0.0
    %v5704 = vmax.f32 %v5700, 0.0
    %v5705 = vld [vmem:[%s53] sm:$0xf]
    %v5706 = vld [vmem:[%s53 + $0x4] sm:$0xf]
    %v5707 = vld [vmem:[%s53 + $0x8] sm:$0xf]
    %v5708 = vld [vmem:[%s53 + $0xc] sm:$0xf]
    %v5709 = vld [vmem:[%s53 + $0x10] sm:$0xf]
    %v5710 = vld [vmem:[%s53 + $0x14] sm:$0xf]
    %v5711 = vld [vmem:[%s53 + $0x18] sm:$0xf]
    %v5712 = vld [vmem:[%s53 + $0x1c] sm:$0xf]
    %v5713 = vld [vmem:[%s53 + $0x20] sm:$0xf]
    %v5714 = vld [vmem:[%s53 + $0x24] sm:$0xf]
    %v5715 = vld [vmem:[%s53 + $0x28] sm:$0xf]
    %v5716 = vld [vmem:[%s53 + $0x2c] sm:$0xf]
    %v5717 = vld [vmem:[%s53 + $0x30] sm:$0xf]
    %v5718 = vld [vmem:[%s53 + $0x34] sm:$0xf]
    %v5719 = vld [vmem:[%s53 + $0x38] sm:$0xf]
    %v5720 = vld [vmem:[%s53 + $0x3c] sm:$0xf]
    %v5721 = vld [vmem:[%s53 + $0x40] sm:$0xf]
    %v5722 = vld [vmem:[%s53 + $0x44] sm:$0xf]
    %v5723 = vld [vmem:[%s53 + $0x48] sm:$0xf]
    %v5724 = vld [vmem:[%s53 + $0x4c] sm:$0xf]
    %v5725 = vld [vmem:[%s53 + $0x50] sm:$0xf]
    %v5726 = vld [vmem:[%s53 + $0x54] sm:$0xf]
    %v5727 = vld [vmem:[%s53 + $0x58] sm:$0xf]
    %v5728 = vld [vmem:[%s53 + $0x5c] sm:$0xf]
    %v5729 = vld [vmem:[%s53 + $0x60] sm:$0xf]
    %v5730 = vld [vmem:[%s53 + $0x64] sm:$0xf]
    %v5731 = vld [vmem:[%s53 + $0x68] sm:$0xf]
    %v5732 = vld [vmem:[%s53 + $0x6c] sm:$0xf]
    %v5733 = vld [vmem:[%s53 + $0x70] sm:$0xf]
    %v5734 = vld [vmem:[%s53 + $0x74] sm:$0xf]
    %v5735 = vld [vmem:[%s53 + $0x78] sm:$0xf]
    %v5736 = vld [vmem:[%s53 + $0x7c] sm:$0xf]
    %v5737 = vld [vmem:[%s53 + $0x80] sm:$0xf]
    %v5738 = vld [vmem:[%s53 + $0x84] sm:$0xf]
    %v5739 = vld [vmem:[%s53 + $0x88] sm:$0xf]
    %v5740 = vld [vmem:[%s53 + $0x8c] sm:$0xf]
    %v5741 = vld [vmem:[%s53 + $0x90] sm:$0xf]
    %v5742 = vld [vmem:[%s53 + $0x94] sm:$0xf]
    %v5743 = vld [vmem:[%s53 + $0x98] sm:$0xf]
    %v5744 = vld [vmem:[%s53 + $0x9c] sm:$0xf]
    %v5745 = vld [vmem:[%s53 + $0xa0] sm:$0xf]
    %v5746 = vld [vmem:[%s53 + $0xa4] sm:$0xf]
    %v5747 = vld [vmem:[%s53 + $0xa8] sm:$0xf]
    %v5748 = vld [vmem:[%s53 + $0xac] sm:$0xf]
    %v5749 = vld [vmem:[%s53 + $0xb0] sm:$0xf]
    %v5750 = vld [vmem:[%s53 + $0xb4] sm:$0xf]
    %v5751 = vld [vmem:[%s53 + $0xb8] sm:$0xf]
    %v5752 = vld [vmem:[%s53 + $0xbc] sm:$0xf]
    %v5753 = vld [vmem:[%s55] sm:$0x1]
    %v5754 = vld [vmem:[%s57] sm:$0xf]
    %v5755 = vld [vmem:[%s57 + $0x4] sm:$0xf]
    %v5756 = vld [vmem:[%s57 + $0x8] sm:$0xf]
    %v5757 = vld [vmem:[%s57 + $0xc] sm:$0x1]
    %v5758 = vld [vmem:[%s57 + $0x10] sm:$0xf]
    %v5759 = vld [vmem:[%s57 + $0x14] sm:$0xf]
    %v5760 = vld [vmem:[%s57 + $0x18] sm:$0xf]
    %v5761 = vld [vmem:[%s57 + $0x1c] sm:$0x1]
    %v5762 = vld [vmem:[%s57 + $0x20] sm:$0xf]
    %v5763 = vld [vmem:[%s57 + $0x24] sm:$0xf]
    %v5764 = vld [vmem:[%s57 + $0x28] sm:$0xf]
    %v5765 = vld [vmem:[%s57 + $0x2c] sm:$0x1]
    %v5766 = vpack.c.bf16 %v5702, %v5701
    %v5767 = vpack.c.bf16 %v5704, %v5703
    %v5772 = vunpack.c.l.b16 %v5754
    %v5773 = vunpack.c.l.b16 %v5755
    %v5774 = vunpack.c.l.b16 %v5756
    %v5775 = vunpack.c.l.b16 %v5757
    %v5776 = vpack.c.b16 %v5773, %v5772
    %v5777 = vpack.c.b16 %v5775, %v5774
    %v5779 = vsel %vm5253, %v5776, 0
    %v5782 = vsel %vm5253, %v5777, 0
    %v5785 = vsel %vm5260, %v5767, 0
    %5787 = vmatprep.subr.bf16.mxu0 0
    %5788 = vmatpush1.bf16.msra.mxu0 %v5766
    %5789 = vmatprep.subr.bf16.mxu0 0
    %5790 = vmatpush1.bf16.msra.mxu0 %v5785
    %5791 = vmatprep.subr.bf16.mxu0 0
    %5792 = vmatpush1.bf16.msra.mxu0 0
    %5793 = vmatprep.subr.bf16.mxu0 0
    %5794 = vmatpush1.bf16.msra.mxu0 0
    %5795 = vmatprep.subr.bf16.mxu0 0
    %5796 = vmatpush1.bf16.msra.mxu0 0
    %5797 = vmatprep.subr.bf16.mxu0 0
    %5798 = vmatpush1.bf16.msra.mxu0 0
    %5799 = vmatprep.subr.bf16.mxu0 0
    %5800 = vmatpush1.bf16.msra.mxu0 0
    %5801 = vmatprep.subr.bf16.mxu0 0
    %5802 = vmatpush1.bf16.msra.mxu0 0
    %5803 = vmatprep.subr.bf16.mxu0 0
    %5804 = vmatpush1.bf16.msra.mxu0 0
    %5805 = vmatprep.subr.bf16.mxu0 0
    %5806 = vmatpush1.bf16.msra.mxu0 0
    %5807 = vmatprep.subr.bf16.mxu0 0
    %5808 = vmatpush1.bf16.msra.mxu0 0
    %5809 = vmatprep.subr.bf16.mxu0 0
    %5810 = vmatpush1.bf16.msra.mxu0 0
    %5811 = vmatprep.subr.bf16.mxu0 0
    %5812 = vmatpush1.bf16.msra.mxu0 0
    %5813 = vmatprep.subr.bf16.mxu0 0
    %5814 = vmatpush1.bf16.msra.mxu0 0
    %5815 = vmatprep.subr.bf16.mxu0 0
    %5816 = vmatpush1.bf16.msra.mxu0 0
    %5817 = vmatprep.subr.bf16.mxu0 0
    %5818 = vmatpush1.bf16.msra.mxu0 0
    %5819 = vmatprep.mubr.bf16.mxu0 0
    %5820 = vmatmul.mubr.bf16.gmra.mrb[0].mxu0 %v5779
    %v5821 = vpop.f32.mrb[0].mxu0
    %v5822 = vadd.f32 0.0, %v5821
    %v5823 = vpop.f32.mrb[0].mxu0
    %v5824 = vpop.f32.mrb[0].mxu0
    %v5825 = vadd.f32 0.0, %v5824
    %v5826 = vpop.f32.mrb[0].mxu0
    %5827 = vmatprep.mubr.bf16.mxu0 0
    %5828 = vmatmul.mubr.bf16.gmra.mrb[0].mxu0 %v5782
    %v5829 = vpop.f32.mrb[0].mxu0
    %v5830 = vadd.f32 0.0, %v5829
    %v5831 = vpop.f32.mrb[0].mxu0
    %v5832 = vpop.f32.mrb[0].mxu0
    %v5833 = vadd.f32 0.0, %v5832
    %v5834 = vpop.f32.mrb[0].mxu0
    %5835 = vdwg.mxu0
    %v5840 = vunpack.c.l.b16 %v5758
    %v5841 = vunpack.c.l.b16 %v5759
    %v5842 = vunpack.c.l.b16 %v5760
    %v5843 = vunpack.c.l.b16 %v5761
    %v5844 = vpack.c.b16 %v5841, %v5840
    %v5845 = vpack.c.b16 %v5843, %v5842
    %v5847 = vsel %vm5253, %v5844, 0
    %v5850 = vsel %vm5253, %v5845, 0
    %5852 = vmatprep.subr.bf16.mxu0 0
    %5853 = vmatpush1.bf16.msra.mxu0 %v5766
    %5854 = vmatprep.subr.bf16.mxu0 0
    %5855 = vmatpush1.bf16.msra.mxu0 %v5785
    %5856 = vmatprep.subr.bf16.mxu0 0
    %5857 = vmatpush1.bf16.msra.mxu0 0
    %5858 = vmatprep.subr.bf16.mxu0 0
    %5859 = vmatpush1.bf16.msra.mxu0 0
    %5860 = vmatprep.subr.bf16.mxu0 0
    %5861 = vmatpush1.bf16.msra.mxu0 0
    %5862 = vmatprep.subr.bf16.mxu0 0
    %5863 = vmatpush1.bf16.msra.mxu0 0
    %5864 = vmatprep.subr.bf16.mxu0 0
    %5865 = vmatpush1.bf16.msra.mxu0 0
    %5866 = vmatprep.subr.bf16.mxu0 0
    %5867 = vmatpush1.bf16.msra.mxu0 0
    %5868 = vmatprep.subr.bf16.mxu0 0
    %5869 = vmatpush1.bf16.msra.mxu0 0
    %5870 = vmatprep.subr.bf16.mxu0 0
    %5871 = vmatpush1.bf16.msra.mxu0 0
    %5872 = vmatprep.subr.bf16.mxu0 0
    %5873 = vmatpush1.bf16.msra.mxu0 0
    %5874 = vmatprep.subr.bf16.mxu0 0
    %5875 = vmatpush1.bf16.msra.mxu0 0
    %5876 = vmatprep.subr.bf16.mxu0 0
    %5877 = vmatpush1.bf16.msra.mxu0 0
    %5878 = vmatprep.subr.bf16.mxu0 0
    %5879 = vmatpush1.bf16.msra.mxu0 0
    %5880 = vmatprep.subr.bf16.mxu0 0
    %5881 = vmatpush1.bf16.msra.mxu0 0
    %5882 = vmatprep.subr.bf16.mxu0 0
    %5883 = vmatpush1.bf16.msra.mxu0 0
    %5884 = vmatprep.mubr.bf16.mxu0 0
    %5885 = vmatmul.mubr.bf16.gmra.mrb[0].mxu0 %v5847
    %v5886 = vpop.f32.mrb[0].mxu0
    %v5887 = vadd.f32 0.0, %v5886
    %v5888 = vpop.f32.mrb[0].mxu0
    %v5889 = vpop.f32.mrb[0].mxu0
    %v5890 = vadd.f32 0.0, %v5889
    %v5891 = vpop.f32.mrb[0].mxu0
    %5892 = vmatprep.mubr.bf16.mxu0 0
    %5893 = vmatmul.mubr.bf16.gmra.mrb[0].mxu0 %v5850
    %v5894 = vpop.f32.mrb[0].mxu0
    %v5895 = vadd.f32 0.0, %v5894
    %v5896 = vpop.f32.mrb[0].mxu0
    %v5897 = vpop.f32.mrb[0].mxu0
    %v5898 = vadd.f32 0.0, %v5897
    %v5899 = vpop.f32.mrb[0].mxu0
    %5900 = vdwg.mxu0
    %v5905 = vunpack.c.l.b16 %v5762
    %v5906 = vunpack.c.l.b16 %v5763
    %v5907 = vunpack.c.l.b16 %v5764
    %v5908 = vunpack.c.l.b16 %v5765
    %v5909 = vpack.c.b16 %v5906, %v5905
    %v5910 = vpack.c.b16 %v5908, %v5907
    %v5912 = vsel %vm5253, %v5909, 0
    %v5915 = vsel %vm5253, %v5910, 0
    %5917 = vmatprep.subr.bf16.mxu0 0
    %5918 = vmatpush1.bf16.msra.mxu0 %v5766
    %5919 = vmatprep.subr.bf16.mxu0 0
    %5920 = vmatpush1.bf16.msra.mxu0 %v5785
    %5921 = vmatprep.subr.bf16.mxu0 0
    %5922 = vmatpush1.bf16.msra.mxu0 0
    %5923 = vmatprep.subr.bf16.mxu0 0
    %5924 = vmatpush1.bf16.msra.mxu0 0
    %5925 = vmatprep.subr.bf16.mxu0 0
    %5926 = vmatpush1.bf16.msra.mxu0 0
    %5927 = vmatprep.subr.bf16.mxu0 0
    %5928 = vmatpush1.bf16.msra.mxu0 0
    %5929 = vmatprep.subr.bf16.mxu0 0
    %5930 = vmatpush1.bf16.msra.mxu0 0
    %5931 = vmatprep.subr.bf16.mxu0 0
    %5932 = vmatpush1.bf16.msra.mxu0 0
    %5933 = vmatprep.subr.bf16.mxu0 0
    %5934 = vmatpush1.bf16.msra.mxu0 0
    %5935 = vmatprep.subr.bf16.mxu0 0
    %5936 = vmatpush1.bf16.msra.mxu0 0
    %5937 = vmatprep.subr.bf16.mxu0 0
    %5938 = vmatpush1.bf16.msra.mxu0 0
    %5939 = vmatprep.subr.bf16.mxu0 0
    %5940 = vmatpush1.bf16.msra.mxu0 0
    %5941 = vmatprep.subr.bf16.mxu0 0
    %5942 = vmatpush1.bf16.msra.mxu0 0
    %5943 = vmatprep.subr.bf16.mxu0 0
    %5944 = vmatpush1.bf16.msra.mxu0 0
    %5945 = vmatprep.subr.bf16.mxu0 0
    %5946 = vmatpush1.bf16.msra.mxu0 0
    %5947 = vmatprep.subr.bf16.mxu0 0
    %5948 = vmatpush1.bf16.msra.mxu0 0
    %5949 = vmatprep.mubr.bf16.mxu0 0
    %5950 = vmatmul.mubr.bf16.gmra.mrb[0].mxu0 %v5912
    %v5951 = vpop.f32.mrb[0].mxu0
    %v5952 = vadd.f32 0.0, %v5951
    %v5953 = vpop.f32.mrb[0].mxu0
    %v5954 = vpop.f32.mrb[0].mxu0
    %v5955 = vadd.f32 0.0, %v5954
    %v5956 = vpop.f32.mrb[0].mxu0
    %5957 = vmatprep.mubr.bf16.mxu0 0
    %5958 = vmatmul.mubr.bf16.gmra.mrb[0].mxu0 %v5915
    %v5959 = vpop.f32.mrb[0].mxu0
    %v5960 = vadd.f32 0.0, %v5959
    %v5961 = vpop.f32.mrb[0].mxu0
    %v5962 = vpop.f32.mrb[0].mxu0
    %v5963 = vadd.f32 0.0, %v5962
    %v5964 = vpop.f32.mrb[0].mxu0
    %5965 = vdwg.mxu0
    %v5966 = vpack.c.bf16 %v5825, %v5822
    %v5967 = vpack.c.bf16 %v5890, %v5887
    %v5968 = vpack.c.bf16 %v5955, %v5952
    %v5969 = vpack.c.bf16 %v5833, %v5830
    %v5970 = vpack.c.bf16 %v5898, %v5895
    %v5971 = vpack.c.bf16 %v5963, %v5960
    %v5973 = vlaneseq
    %v5974 = vshrl.u32 %v5973, 7
    %v5975 = vsub.s32 0, %v5974
    %v5976 = vrot.slane %v5753, %v5975
    %v6026 = vunpack.c.l.b16 %v5705
    %v6027 = vunpack.c.l.b16 %v5706
    %v6028 = vunpack.c.l.b16 %v5707
    %v6029 = vunpack.c.l.b16 %v5708
    %v6030 = vunpack.c.l.b16 %v5709
    %v6031 = vunpack.c.l.b16 %v5710
    %v6032 = vunpack.c.l.b16 %v5711
    %v6033 = vunpack.c.l.b16 %v5712
    %v6034 = vunpack.c.l.b16 %v5713
    %v6035 = vunpack.c.l.b16 %v5714
    %v6036 = vunpack.c.l.b16 %v5715
    %v6037 = vunpack.c.l.b16 %v5716
    %v6038 = vunpack.c.l.b16 %v5717
    %v6039 = vunpack.c.l.b16 %v5718
    %v6040 = vunpack.c.l.b16 %v5719
    %v6041 = vunpack.c.l.b16 %v5720
    %v6042 = vunpack.c.l.b16 %v5721
    %v6043 = vunpack.c.l.b16 %v5722
    %v6044 = vunpack.c.l.b16 %v5723
    %v6045 = vunpack.c.l.b16 %v5724
    %v6046 = vunpack.c.l.b16 %v5725
    %v6047 = vunpack.c.l.b16 %v5726
    %v6048 = vunpack.c.l.b16 %v5727
    %v6049 = vunpack.c.l.b16 %v5728
    %v6050 = vunpack.c.l.b16 %v5729
    %v6051 = vunpack.c.l.b16 %v5730
    %v6052 = vunpack.c.l.b16 %v5731
    %v6053 = vunpack.c.l.b16 %v5732
    %v6054 = vunpack.c.l.b16 %v5733
    %v6055 = vunpack.c.l.b16 %v5734
    %v6056 = vunpack.c.l.b16 %v5735
    %v6057 = vunpack.c.l.b16 %v5736
    %v6058 = vunpack.c.l.b16 %v5737
    %v6059 = vunpack.c.l.b16 %v5738
    %v6060 = vunpack.c.l.b16 %v5739
    %v6061 = vunpack.c.l.b16 %v5740
    %v6062 = vunpack.c.l.b16 %v5741
    %v6063 = vunpack.c.l.b16 %v5742
    %v6064 = vunpack.c.l.b16 %v5743
    %v6065 = vunpack.c.l.b16 %v5744
    %v6066 = vunpack.c.l.b16 %v5745
    %v6067 = vunpack.c.l.b16 %v5746
    %v6068 = vunpack.c.l.b16 %v5747
    %v6069 = vunpack.c.l.b16 %v5748
    %v6070 = vunpack.c.l.b16 %v5749
    %v6071 = vunpack.c.l.b16 %v5750
    %v6072 = vunpack.c.l.b16 %v5751
    %v6073 = vunpack.c.l.b16 %v5752
    %v6074 = vpack.c.b16 %v6027, %v6026
    %v6075 = vpack.c.b16 %v6029, %v6028
    %v6076 = vpack.c.b16 %v6031, %v6030
    %v6077 = vpack.c.b16 %v6033, %v6032
    %v6078 = vpack.c.b16 %v6035, %v6034
    %v6079 = vpack.c.b16 %v6037, %v6036
    %v6080 = vpack.c.b16 %v6039, %v6038
    %v6081 = vpack.c.b16 %v6041, %v6040
    %v6082 = vpack.c.b16 %v6043, %v6042
    %v6083 = vpack.c.b16 %v6045, %v6044
    %v6084 = vpack.c.b16 %v6047, %v6046
    %v6085 = vpack.c.b16 %v6049, %v6048
    %v6086 = vpack.c.b16 %v6051, %v6050
    %v6087 = vpack.c.b16 %v6053, %v6052
    %v6088 = vpack.c.b16 %v6055, %v6054
    %v6089 = vpack.c.b16 %v6057, %v6056
    %v6090 = vpack.c.b16 %v6059, %v6058
    %v6091 = vpack.c.b16 %v6061, %v6060
    %v6092 = vpack.c.b16 %v6063, %v6062
    %v6093 = vpack.c.b16 %v6065, %v6064
    %v6094 = vpack.c.b16 %v6067, %v6066
    %v6095 = vpack.c.b16 %v6069, %v6068
    %v6096 = vpack.c.b16 %v6071, %v6070
    %v6097 = vpack.c.b16 %v6073, %v6072
    %6122 = vmatprep.subr.bf16.mxu0 0
    %6123 = vmatpush1.bf16.msra.mxu0 %v6074
    %6124 = vmatprep.subr.bf16.mxu0 0
    %6125 = vmatpush1.bf16.msra.mxu0 %v6075
    %6126 = vmatprep.subr.bf16.mxu0 0
    %6127 = vmatpush1.bf16.msra.mxu0 %v6076
    %6128 = vmatprep.subr.bf16.mxu0 0
    %6129 = vmatpush1.bf16.msra.mxu0 %v6077
    %6130 = vmatprep.subr.bf16.mxu0 0
    %6131 = vmatpush1.bf16.msra.mxu0 %v6078
    %6132 = vmatprep.subr.bf16.mxu0 0
    %6133 = vmatpush1.bf16.msra.mxu0 %v6079
    %6134 = vmatprep.subr.bf16.mxu0 0
    %6135 = vmatpush1.bf16.msra.mxu0 %v6080
    %6136 = vmatprep.subr.bf16.mxu0 0
    %6137 = vmatpush1.bf16.msra.mxu0 %v6081
    %6138 = vmatprep.subr.bf16.mxu0 0
    %6139 = vmatpush1.bf16.msra.mxu0 %v6082
    %6140 = vmatprep.subr.bf16.mxu0 0
    %6141 = vmatpush1.bf16.msra.mxu0 %v6083
    %6142 = vmatprep.subr.bf16.mxu0 0
    %6143 = vmatpush1.bf16.msra.mxu0 %v6084
    %6144 = vmatprep.subr.bf16.mxu0 0
    %6145 = vmatpush1.bf16.msra.mxu0 %v6085
    %6146 = vmatprep.subr.bf16.mxu0 0
    %6147 = vmatpush1.bf16.msra.mxu0 %v6086
    %6148 = vmatprep.subr.bf16.mxu0 0
    %6149 = vmatpush1.bf16.msra.mxu0 %v6087
    %6150 = vmatprep.subr.bf16.mxu0 0
    %6151 = vmatpush1.bf16.msra.mxu0 %v6088
    %6152 = vmatprep.subr.bf16.mxu0 0
    %6153 = vmatpush1.bf16.msra.mxu0 %v6089
    %6154 = vmatprep.mubr.bf16.mxu0 %v5967
    %6155 = vmatmul.mubr.bf16.gmra.mrb[0].mxu0 %v5966
    %v6156 = vpop.f32.mrb[0].mxu0
    %v6157 = vadd.f32 %v5976, %v6156
    %v6158 = vpop.f32.mrb[0].mxu0
    %v6159 = vpop.f32.mrb[0].mxu0
    %v6160 = vadd.f32 %v5976, %v6159
    %v6161 = vpop.f32.mrb[0].mxu0
    %6162 = vmatprep.mubr.bf16.mxu0 %v5970
    %6163 = vmatmul.mubr.bf16.gmra.mrb[0].mxu0 %v5969
    %v6164 = vpop.f32.mrb[0].mxu0
    %v6165 = vadd.f32 %v5976, %v6164
    %v6166 = vpop.f32.mrb[0].mxu0
    %v6167 = vpop.f32.mrb[0].mxu0
    %v6168 = vadd.f32 %v5976, %v6167
    %v6169 = vpop.f32.mrb[0].mxu0
    %6170 = vdwg.mxu0
    %6171 = vmatprep.subr.bf16.mxu0 0
    %6172 = vmatpush1.bf16.msra.mxu0 %v6090
    %6173 = vmatprep.subr.bf16.mxu0 0
    %6174 = vmatpush1.bf16.msra.mxu0 %v6091
    %6175 = vmatprep.subr.bf16.mxu0 0
    %6176 = vmatpush1.bf16.msra.mxu0 %v6092
    %6177 = vmatprep.subr.bf16.mxu0 0
    %6178 = vmatpush1.bf16.msra.mxu0 %v6093
    %6179 = vmatprep.subr.bf16.mxu0 0
    %6180 = vmatpush1.bf16.msra.mxu0 %v6094
    %6181 = vmatprep.subr.bf16.mxu0 0
    %6182 = vmatpush1.bf16.msra.mxu0 %v6095
    %6183 = vmatprep.subr.bf16.mxu0 0
    %6184 = vmatpush1.bf16.msra.mxu0 %v6096
    %6185 = vmatprep.subr.bf16.mxu0 0
    %6186 = vmatpush1.bf16.msra.mxu0 %v6097
    %6187 = vmatprep.subr.bf16.mxu0 0
    %6188 = vmatpush1.bf16.msra.mxu0 0
    %6189 = vmatprep.subr.bf16.mxu0 0
    %6190 = vmatpush1.bf16.msra.mxu0 0
    %6191 = vmatprep.subr.bf16.mxu0 0
    %6192 = vmatpush1.bf16.msra.mxu0 0
    %6193 = vmatprep.subr.bf16.mxu0 0
    %6194 = vmatpush1.bf16.msra.mxu0 0
    %6195 = vmatprep.subr.bf16.mxu0 0
    %6196 = vmatpush1.bf16.msra.mxu0 0
    %6197 = vmatprep.subr.bf16.mxu0 0
    %6198 = vmatpush1.bf16.msra.mxu0 0
    %6199 = vmatprep.subr.bf16.mxu0 0
    %6200 = vmatpush1.bf16.msra.mxu0 0
    %6201 = vmatprep.subr.bf16.mxu0 0
    %6202 = vmatpush1.bf16.msra.mxu0 0
    %6203 = vmatprep.mubr.bf16.mxu0 0
    %6204 = vmatmul.mubr.bf16.gmra.mrb[0].mxu0 %v5968
    %v6205 = vpop.f32.mrb[0].mxu0
    %v6206 = vadd.f32 %v6157, %v6205
    %v6207 = vpop.f32.mrb[0].mxu0
    %v6208 = vpop.f32.mrb[0].mxu0
    %v6209 = vadd.f32 %v6160, %v6208
    %v6210 = vpop.f32.mrb[0].mxu0
    %6211 = vmatprep.mubr.bf16.mxu0 0
    %6212 = vmatmul.mubr.bf16.gmra.mrb[0].mxu0 %v5971
    %v6213 = vpop.f32.mrb[0].mxu0
    %v6214 = vadd.f32 %v6165, %v6213
    %v6215 = vpop.f32.mrb[0].mxu0
    %v6216 = vpop.f32.mrb[0].mxu0
    %v6217 = vadd.f32 %v6168, %v6216
    %v6218 = vpop.f32.mrb[0].mxu0
    %6219 = vdwg.mxu0
    %v6220 = vmax.f32 %v6206, 0.0
    %v6221 = vmax.f32 %v6209, 0.0
    %v6222 = vmax.f32 %v6214, 0.0
    %v6223 = vmax.f32 %v6217, 0.0
    %v6224 = vld [vmem:[%s59] sm:$0xf]
    %v6225 = vld [vmem:[%s59 + $0x4] sm:$0xf]
    %v6226 = vld [vmem:[%s59 + $0x8] sm:$0xf]
    %v6227 = vld [vmem:[%s59 + $0xc] sm:$0xf]
    %v6228 = vld [vmem:[%s59 + $0x10] sm:$0xf]
    %v6229 = vld [vmem:[%s59 + $0x14] sm:$0xf]
    %v6230 = vld [vmem:[%s59 + $0x18] sm:$0xf]
    %v6231 = vld [vmem:[%s59 + $0x1c] sm:$0xf]
    %v6232 = vld [vmem:[%s59 + $0x20] sm:$0xf]
    %v6233 = vld [vmem:[%s59 + $0x24] sm:$0xf]
    %v6234 = vld [vmem:[%s59 + $0x28] sm:$0xf]
    %v6235 = vld [vmem:[%s59 + $0x2c] sm:$0xf]
    %v6236 = vld [vmem:[%s59 + $0x30] sm:$0xf]
    %v6237 = vld [vmem:[%s59 + $0x34] sm:$0xf]
    %v6238 = vld [vmem:[%s59 + $0x38] sm:$0xf]
    %v6239 = vld [vmem:[%s59 + $0x3c] sm:$0xf]
    %v6240 = vld [vmem:[%s59 + $0x40] sm:$0xf]
    %v6241 = vld [vmem:[%s59 + $0x44] sm:$0xf]
    %v6242 = vld [vmem:[%s59 + $0x48] sm:$0xf]
    %v6243 = vld [vmem:[%s59 + $0x4c] sm:$0xf]
    %v6244 = vld [vmem:[%s59 + $0x50] sm:$0xf]
    %v6245 = vld [vmem:[%s59 + $0x54] sm:$0xf]
    %v6246 = vld [vmem:[%s59 + $0x58] sm:$0xf]
    %v6247 = vld [vmem:[%s59 + $0x5c] sm:$0xf]
    %v6248 = vld [vmem:[%s59 + $0x60] sm:$0xf]
    %v6249 = vld [vmem:[%s59 + $0x64] sm:$0xf]
    %v6250 = vld [vmem:[%s59 + $0x68] sm:$0xf]
    %v6251 = vld [vmem:[%s59 + $0x6c] sm:$0xf]
    %v6252 = vld [vmem:[%s59 + $0x70] sm:$0xf]
    %v6253 = vld [vmem:[%s59 + $0x74] sm:$0xf]
    %v6254 = vld [vmem:[%s59 + $0x78] sm:$0xf]
    %v6255 = vld [vmem:[%s59 + $0x7c] sm:$0xf]
    %v6256 = vld [vmem:[%s59 + $0x80] sm:$0xf]
    %v6257 = vld [vmem:[%s59 + $0x84] sm:$0xf]
    %v6258 = vld [vmem:[%s59 + $0x88] sm:$0xf]
    %v6259 = vld [vmem:[%s59 + $0x8c] sm:$0xf]
    %v6260 = vld [vmem:[%s59 + $0x90] sm:$0xf]
    %v6261 = vld [vmem:[%s59 + $0x94] sm:$0xf]
    %v6262 = vld [vmem:[%s59 + $0x98] sm:$0xf]
    %v6263 = vld [vmem:[%s59 + $0x9c] sm:$0xf]
    %v6264 = vld [vmem:[%s59 + $0xa0] sm:$0xf]
    %v6265 = vld [vmem:[%s59 + $0xa4] sm:$0xf]
    %v6266 = vld [vmem:[%s59 + $0xa8] sm:$0xf]
    %v6267 = vld [vmem:[%s59 + $0xac] sm:$0xf]
    %v6268 = vld [vmem:[%s59 + $0xb0] sm:$0xf]
    %v6269 = vld [vmem:[%s59 + $0xb4] sm:$0xf]
    %v6270 = vld [vmem:[%s59 + $0xb8] sm:$0xf]
    %v6271 = vld [vmem:[%s59 + $0xbc] sm:$0xf]
    %v6272 = vld [vmem:[%s61] sm:$0x1]
    %v6273 = vld [vmem:[%s63] sm:$0xf]
    %v6274 = vld [vmem:[%s63 + $0x4] sm:$0xf]
    %v6275 = vld [vmem:[%s63 + $0x8] sm:$0xf]
    %v6276 = vld [vmem:[%s63 + $0xc] sm:$0x1]
    %v6277 = vld [vmem:[%s63 + $0x10] sm:$0xf]
    %v6278 = vld [vmem:[%s63 + $0x14] sm:$0xf]
    %v6279 = vld [vmem:[%s63 + $0x18] sm:$0xf]
    %v6280 = vld [vmem:[%s63 + $0x1c] sm:$0x1]
    %v6281 = vld [vmem:[%s63 + $0x20] sm:$0xf]
    %v6282 = vld [vmem:[%s63 + $0x24] sm:$0xf]
    %v6283 = vld [vmem:[%s63 + $0x28] sm:$0xf]
    %v6284 = vld [vmem:[%s63 + $0x2c] sm:$0x1]
    %v6285 = vpack.c.bf16 %v6221, %v6220
    %v6286 = vpack.c.bf16 %v6223, %v6222
    %v6291 = vunpack.c.l.b16 %v6273
    %v6292 = vunpack.c.l.b16 %v6274
    %v6293 = vunpack.c.l.b16 %v6275
    %v6294 = vunpack.c.l.b16 %v6276
    %v6295 = vpack.c.b16 %v6292, %v6291
    %v6296 = vpack.c.b16 %v6294, %v6293
    %v6298 = vsel %vm5253, %v6295, 0
    %v6301 = vsel %vm5253, %v6296, 0
    %v6304 = vsel %vm5260, %v6286, 0
    %6306 = vmatprep.subr.bf16.mxu0 0
    %6307 = vmatpush1.bf16.msra.mxu0 %v6285
    %6308 = vmatprep.subr.bf16.mxu0 0
    %6309 = vmatpush1.bf16.msra.mxu0 %v6304
    %6310 = vmatprep.subr.bf16.mxu0 0
    %6311 = vmatpush1.bf16.msra.mxu0 0
    %6312 = vmatprep.subr.bf16.mxu0 0
    %6313 = vmatpush1.bf16.msra.mxu0 0
    %6314 = vmatprep.subr.bf16.mxu0 0
    %6315 = vmatpush1.bf16.msra.mxu0 0
    %6316 = vmatprep.subr.bf16.mxu0 0
    %6317 = vmatpush1.bf16.msra.mxu0 0
    %6318 = vmatprep.subr.bf16.mxu0 0
    %6319 = vmatpush1.bf16.msra.mxu0 0
    %6320 = vmatprep.subr.bf16.mxu0 0
    %6321 = vmatpush1.bf16.msra.mxu0 0
    %6322 = vmatprep.subr.bf16.mxu0 0
    %6323 = vmatpush1.bf16.msra.mxu0 0
    %6324 = vmatprep.subr.bf16.mxu0 0
    %6325 = vmatpush1.bf16.msra.mxu0 0
    %6326 = vmatprep.subr.bf16.mxu0 0
    %6327 = vmatpush1.bf16.msra.mxu0 0
    %6328 = vmatprep.subr.bf16.mxu0 0
    %6329 = vmatpush1.bf16.msra.mxu0 0
    %6330 = vmatprep.subr.bf16.mxu0 0
    %6331 = vmatpush1.bf16.msra.mxu0 0
    %6332 = vmatprep.subr.bf16.mxu0 0
    %6333 = vmatpush1.bf16.msra.mxu0 0
    %6334 = vmatprep.subr.bf16.mxu0 0
    %6335 = vmatpush1.bf16.msra.mxu0 0
    %6336 = vmatprep.subr.bf16.mxu0 0
    %6337 = vmatpush1.bf16.msra.mxu0 0
    %6338 = vmatprep.mubr.bf16.mxu0 0
    %6339 = vmatmul.mubr.bf16.gmra.mrb[0].mxu0 %v6298
    %v6340 = vpop.f32.mrb[0].mxu0
    %v6341 = vadd.f32 0.0, %v6340
    %v6342 = vpop.f32.mrb[0].mxu0
    %v6343 = vpop.f32.mrb[0].mxu0
    %v6344 = vadd.f32 0.0, %v6343
    %v6345 = vpop.f32.mrb[0].mxu0
    %6346 = vmatprep.mubr.bf16.mxu0 0
    %6347 = vmatmul.mubr.bf16.gmra.mrb[0].mxu0 %v6301
    %v6348 = vpop.f32.mrb[0].mxu0
    %v6349 = vadd.f32 0.0, %v6348
    %v6350 = vpop.f32.mrb[0].mxu0
    %v6351 = vpop.f32.mrb[0].mxu0
    %v6352 = vadd.f32 0.0, %v6351
    %v6353 = vpop.f32.mrb[0].mxu0
    %6354 = vdwg.mxu0
    %v6359 = vunpack.c.l.b16 %v6277
    %v6360 = vunpack.c.l.b16 %v6278
    %v6361 = vunpack.c.l.b16 %v6279
    %v6362 = vunpack.c.l.b16 %v6280
    %v6363 = vpack.c.b16 %v6360, %v6359
    %v6364 = vpack.c.b16 %v6362, %v6361
    %v6366 = vsel %vm5253, %v6363, 0
    %v6369 = vsel %vm5253, %v6364, 0
    %6371 = vmatprep.subr.bf16.mxu0 0
    %6372 = vmatpush1.bf16.msra.mxu0 %v6285
    %6373 = vmatprep.subr.bf16.mxu0 0
    %6374 = vmatpush1.bf16.msra.mxu0 %v6304
    %6375 = vmatprep.subr.bf16.mxu0 0
    %6376 = vmatpush1.bf16.msra.mxu0 0
    %6377 = vmatprep.subr.bf16.mxu0 0
    %6378 = vmatpush1.bf16.msra.mxu0 0
    %6379 = vmatprep.subr.bf16.mxu0 0
    %6380 = vmatpush1.bf16.msra.mxu0 0
    %6381 = vmatprep.subr.bf16.mxu0 0
    %6382 = vmatpush1.bf16.msra.mxu0 0
    %6383 = vmatprep.subr.bf16.mxu0 0
    %6384 = vmatpush1.bf16.msra.mxu0 0
    %6385 = vmatprep.subr.bf16.mxu0 0
    %6386 = vmatpush1.bf16.msra.mxu0 0
    %6387 = vmatprep.subr.bf16.mxu0 0
    %6388 = vmatpush1.bf16.msra.mxu0 0
    %6389 = vmatprep.subr.bf16.mxu0 0
    %6390 = vmatpush1.bf16.msra.mxu0 0
    %6391 = vmatprep.subr.bf16.mxu0 0
    %6392 = vmatpush1.bf16.msra.mxu0 0
    %6393 = vmatprep.subr.bf16.mxu0 0
    %6394 = vmatpush1.bf16.msra.mxu0 0
    %6395 = vmatprep.subr.bf16.mxu0 0
    %6396 = vmatpush1.bf16.msra.mxu0 0
    %6397 = vmatprep.subr.bf16.mxu0 0
    %6398 = vmatpush1.bf16.msra.mxu0 0
    %6399 = vmatprep.subr.bf16.mxu0 0
    %6400 = vmatpush1.bf16.msra.mxu0 0
    %6401 = vmatprep.subr.bf16.mxu0 0
    %6402 = vmatpush1.bf16.msra.mxu0 0
    %6403 = vmatprep.mubr.bf16.mxu0 0
    %6404 = vmatmul.mubr.bf16.gmra.mrb[0].mxu0 %v6366
    %v6405 = vpop.f32.mrb[0].mxu0
    %v6406 = vadd.f32 0.0, %v6405
    %v6407 = vpop.f32.mrb[0].mxu0
    %v6408 = vpop.f32.mrb[0].mxu0
    %v6409 = vadd.f32 0.0, %v6408
    %v6410 = vpop.f32.mrb[0].mxu0
    %6411 = vmatprep.mubr.bf16.mxu0 0
    %6412 = vmatmul.mubr.bf16.gmra.mrb[0].mxu0 %v6369
    %v6413 = vpop.f32.mrb[0].mxu0
    %v6414 = vadd.f32 0.0, %v6413
    %v6415 = vpop.f32.mrb[0].mxu0
    %v6416 = vpop.f32.mrb[0].mxu0
    %v6417 = vadd.f32 0.0, %v6416
    %v6418 = vpop.f32.mrb[0].mxu0
    %6419 = vdwg.mxu0
    %v6424 = vunpack.c.l.b16 %v6281
    %v6425 = vunpack.c.l.b16 %v6282
    %v6426 = vunpack.c.l.b16 %v6283
    %v6427 = vunpack.c.l.b16 %v6284
    %v6428 = vpack.c.b16 %v6425, %v6424
    %v6429 = vpack.c.b16 %v6427, %v6426
    %v6431 = vsel %vm5253, %v6428, 0
    %v6434 = vsel %vm5253, %v6429, 0
    %6436 = vmatprep.subr.bf16.mxu0 0
    %6437 = vmatpush1.bf16.msra.mxu0 %v6285
    %6438 = vmatprep.subr.bf16.mxu0 0
    %6439 = vmatpush1.bf16.msra.mxu0 %v6304
    %6440 = vmatprep.subr.bf16.mxu0 0
    %6441 = vmatpush1.bf16.msra.mxu0 0
    %6442 = vmatprep.subr.bf16.mxu0 0
    %6443 = vmatpush1.bf16.msra.mxu0 0
    %6444 = vmatprep.subr.bf16.mxu0 0
    %6445 = vmatpush1.bf16.msra.mxu0 0
    %6446 = vmatprep.subr.bf16.mxu0 0
    %6447 = vmatpush1.bf16.msra.mxu0 0
    %6448 = vmatprep.subr.bf16.mxu0 0
    %6449 = vmatpush1.bf16.msra.mxu0 0
    %6450 = vmatprep.subr.bf16.mxu0 0
    %6451 = vmatpush1.bf16.msra.mxu0 0
    %6452 = vmatprep.subr.bf16.mxu0 0
    %6453 = vmatpush1.bf16.msra.mxu0 0
    %6454 = vmatprep.subr.bf16.mxu0 0
    %6455 = vmatpush1.bf16.msra.mxu0 0
    %6456 = vmatprep.subr.bf16.mxu0 0
    %6457 = vmatpush1.bf16.msra.mxu0 0
    %6458 = vmatprep.subr.bf16.mxu0 0
    %6459 = vmatpush1.bf16.msra.mxu0 0
    %6460 = vmatprep.subr.bf16.mxu0 0
    %6461 = vmatpush1.bf16.msra.mxu0 0
    %6462 = vmatprep.subr.bf16.mxu0 0
    %6463 = vmatpush1.bf16.msra.mxu0 0
    %6464 = vmatprep.subr.bf16.mxu0 0
    %6465 = vmatpush1.bf16.msra.mxu0 0
    %6466 = vmatprep.subr.bf16.mxu0 0
    %6467 = vmatpush1.bf16.msra.mxu0 0
    %6468 = vmatprep.mubr.bf16.mxu0 0
    %6469 = vmatmul.mubr.bf16.gmra.mrb[0].mxu0 %v6431
    %v6470 = vpop.f32.mrb[0].mxu0
    %v6471 = vadd.f32 0.0, %v6470
    %v6472 = vpop.f32.mrb[0].mxu0
    %v6473 = vpop.f32.mrb[0].mxu0
    %v6474 = vadd.f32 0.0, %v6473
    %v6475 = vpop.f32.mrb[0].mxu0
    %6476 = vmatprep.mubr.bf16.mxu0 0
    %6477 = vmatmul.mubr.bf16.gmra.mrb[0].mxu0 %v6434
    %v6478 = vpop.f32.mrb[0].mxu0
    %v6479 = vadd.f32 0.0, %v6478
    %v6480 = vpop.f32.mrb[0].mxu0
    %v6481 = vpop.f32.mrb[0].mxu0
    %v6482 = vadd.f32 0.0, %v6481
    %v6483 = vpop.f32.mrb[0].mxu0
    %6484 = vdwg.mxu0
    %v6485 = vpack.c.bf16 %v6344, %v6341
    %v6486 = vpack.c.bf16 %v6409, %v6406
    %v6487 = vpack.c.bf16 %v6474, %v6471
    %v6488 = vpack.c.bf16 %v6352, %v6349
    %v6489 = vpack.c.bf16 %v6417, %v6414
    %v6490 = vpack.c.bf16 %v6482, %v6479
    %v6492 = vlaneseq
    %v6493 = vshrl.u32 %v6492, 7
    %v6494 = vsub.s32 0, %v6493
    %v6495 = vrot.slane %v6272, %v6494
    %v6545 = vunpack.c.l.b16 %v6224
    %v6546 = vunpack.c.l.b16 %v6225
    %v6547 = vunpack.c.l.b16 %v6226
    %v6548 = vunpack.c.l.b16 %v6227
    %v6549 = vunpack.c.l.b16 %v6228
    %v6550 = vunpack.c.l.b16 %v6229
    %v6551 = vunpack.c.l.b16 %v6230
    %v6552 = vunpack.c.l.b16 %v6231
    %v6553 = vunpack.c.l.b16 %v6232
    %v6554 = vunpack.c.l.b16 %v6233
    %v6555 = vunpack.c.l.b16 %v6234
    %v6556 = vunpack.c.l.b16 %v6235
    %v6557 = vunpack.c.l.b16 %v6236
    %v6558 = vunpack.c.l.b16 %v6237
    %v6559 = vunpack.c.l.b16 %v6238
    %v6560 = vunpack.c.l.b16 %v6239
    %v6561 = vunpack.c.l.b16 %v6240
    %v6562 = vunpack.c.l.b16 %v6241
    %v6563 = vunpack.c.l.b16 %v6242
    %v6564 = vunpack.c.l.b16 %v6243
    %v6565 = vunpack.c.l.b16 %v6244
    %v6566 = vunpack.c.l.b16 %v6245
    %v6567 = vunpack.c.l.b16 %v6246
    %v6568 = vunpack.c.l.b16 %v6247
    %v6569 = vunpack.c.l.b16 %v6248
    %v6570 = vunpack.c.l.b16 %v6249
    %v6571 = vunpack.c.l.b16 %v6250
    %v6572 = vunpack.c.l.b16 %v6251
    %v6573 = vunpack.c.l.b16 %v6252
    %v6574 = vunpack.c.l.b16 %v6253
    %v6575 = vunpack.c.l.b16 %v6254
    %v6576 = vunpack.c.l.b16 %v6255
    %v6577 = vunpack.c.l.b16 %v6256
    %v6578 = vunpack.c.l.b16 %v6257
    %v6579 = vunpack.c.l.b16 %v6258
    %v6580 = vunpack.c.l.b16 %v6259
    %v6581 = vunpack.c.l.b16 %v6260
    %v6582 = vunpack.c.l.b16 %v6261
    %v6583 = vunpack.c.l.b16 %v6262
    %v6584 = vunpack.c.l.b16 %v6263
    %v6585 = vunpack.c.l.b16 %v6264
    %v6586 = vunpack.c.l.b16 %v6265
    %v6587 = vunpack.c.l.b16 %v6266
    %v6588 = vunpack.c.l.b16 %v6267
    %v6589 = vunpack.c.l.b16 %v6268
    %v6590 = vunpack.c.l.b16 %v6269
    %v6591 = vunpack.c.l.b16 %v6270
    %v6592 = vunpack.c.l.b16 %v6271
    %v6593 = vpack.c.b16 %v6546, %v6545
    %v6594 = vpack.c.b16 %v6548, %v6547
    %v6595 = vpack.c.b16 %v6550, %v6549
    %v6596 = vpack.c.b16 %v6552, %v6551
    %v6597 = vpack.c.b16 %v6554, %v6553
    %v6598 = vpack.c.b16 %v6556, %v6555
    %v6599 = vpack.c.b16 %v6558, %v6557
    %v6600 = vpack.c.b16 %v6560, %v6559
    %v6601 = vpack.c.b16 %v6562, %v6561
    %v6602 = vpack.c.b16 %v6564, %v6563
    %v6603 = vpack.c.b16 %v6566, %v6565
    %v6604 = vpack.c.b16 %v6568, %v6567
    %v6605 = vpack.c.b16 %v6570, %v6569
    %v6606 = vpack.c.b16 %v6572, %v6571
    %v6607 = vpack.c.b16 %v6574, %v6573
    %v6608 = vpack.c.b16 %v6576, %v6575
    %v6609 = vpack.c.b16 %v6578, %v6577
    %v6610 = vpack.c.b16 %v6580, %v6579
    %v6611 = vpack.c.b16 %v6582, %v6581
    %v6612 = vpack.c.b16 %v6584, %v6583
    %v6613 = vpack.c.b16 %v6586, %v6585
    %v6614 = vpack.c.b16 %v6588, %v6587
    %v6615 = vpack.c.b16 %v6590, %v6589
    %v6616 = vpack.c.b16 %v6592, %v6591
    %6641 = vmatprep.subr.bf16.mxu0 0
    %6642 = vmatpush1.bf16.msra.mxu0 %v6593
    %6643 = vmatprep.subr.bf16.mxu0 0
    %6644 = vmatpush1.bf16.msra.mxu0 %v6594
    %6645 = vmatprep.subr.bf16.mxu0 0
    %6646 = vmatpush1.bf16.msra.mxu0 %v6595
    %6647 = vmatprep.subr.bf16.mxu0 0
    %6648 = vmatpush1.bf16.msra.mxu0 %v6596
    %6649 = vmatprep.subr.bf16.mxu0 0
    %6650 = vmatpush1.bf16.msra.mxu0 %v6597
    %6651 = vmatprep.subr.bf16.mxu0 0
    %6652 = vmatpush1.bf16.msra.mxu0 %v6598
    %6653 = vmatprep.subr.bf16.mxu0 0
    %6654 = vmatpush1.bf16.msra.mxu0 %v6599
    %6655 = vmatprep.subr.bf16.mxu0 0
    %6656 = vmatpush1.bf16.msra.mxu0 %v6600
    %6657 = vmatprep.subr.bf16.mxu0 0
    %6658 = vmatpush1.bf16.msra.mxu0 %v6601
    %6659 = vmatprep.subr.bf16.mxu0 0
    %6660 = vmatpush1.bf16.msra.mxu0 %v6602
    %6661 = vmatprep.subr.bf16.mxu0 0
    %6662 = vmatpush1.bf16.msra.mxu0 %v6603
    %6663 = vmatprep.subr.bf16.mxu0 0
    %6664 = vmatpush1.bf16.msra.mxu0 %v6604
    %6665 = vmatprep.subr.bf16.mxu0 0
    %6666 = vmatpush1.bf16.msra.mxu0 %v6605
    %6667 = vmatprep.subr.bf16.mxu0 0
    %6668 = vmatpush1.bf16.msra.mxu0 %v6606
    %6669 = vmatprep.subr.bf16.mxu0 0
    %6670 = vmatpush1.bf16.msra.mxu0 %v6607
    %6671 = vmatprep.subr.bf16.mxu0 0
    %6672 = vmatpush1.bf16.msra.mxu0 %v6608
    %6673 = vmatprep.mubr.bf16.mxu0 %v6486
    %6674 = vmatmul.mubr.bf16.gmra.mrb[0].mxu0 %v6485
    %v6675 = vpop.f32.mrb[0].mxu0
    %v6676 = vadd.f32 %v6495, %v6675
    %v6677 = vpop.f32.mrb[0].mxu0
    %v6678 = vpop.f32.mrb[0].mxu0
    %v6679 = vadd.f32 %v6495, %v6678
    %v6680 = vpop.f32.mrb[0].mxu0
    %6681 = vmatprep.mubr.bf16.mxu0 %v6489
    %6682 = vmatmul.mubr.bf16.gmra.mrb[0].mxu0 %v6488
    %v6683 = vpop.f32.mrb[0].mxu0
    %v6684 = vadd.f32 %v6495, %v6683
    %v6685 = vpop.f32.mrb[0].mxu0
    %v6686 = vpop.f32.mrb[0].mxu0
    %v6687 = vadd.f32 %v6495, %v6686
    %v6688 = vpop.f32.mrb[0].mxu0
    %6689 = vdwg.mxu0
    %6690 = vmatprep.subr.bf16.mxu0 0
    %6691 = vmatpush1.bf16.msra.mxu0 %v6609
    %6692 = vmatprep.subr.bf16.mxu0 0
    %6693 = vmatpush1.bf16.msra.mxu0 %v6610
    %6694 = vmatprep.subr.bf16.mxu0 0
    %6695 = vmatpush1.bf16.msra.mxu0 %v6611
    %6696 = vmatprep.subr.bf16.mxu0 0
    %6697 = vmatpush1.bf16.msra.mxu0 %v6612
    %6698 = vmatprep.subr.bf16.mxu0 0
    %6699 = vmatpush1.bf16.msra.mxu0 %v6613
    %6700 = vmatprep.subr.bf16.mxu0 0
    %6701 = vmatpush1.bf16.msra.mxu0 %v6614
    %6702 = vmatprep.subr.bf16.mxu0 0
    %6703 = vmatpush1.bf16.msra.mxu0 %v6615
    %6704 = vmatprep.subr.bf16.mxu0 0
    %6705 = vmatpush1.bf16.msra.mxu0 %v6616
    %6706 = vmatprep.subr.bf16.mxu0 0
    %6707 = vmatpush1.bf16.msra.mxu0 0
    %6708 = vmatprep.subr.bf16.mxu0 0
    %6709 = vmatpush1.bf16.msra.mxu0 0
    %6710 = vmatprep.subr.bf16.mxu0 0
    %6711 = vmatpush1.bf16.msra.mxu0 0
    %6712 = vmatprep.subr.bf16.mxu0 0
    %6713 = vmatpush1.bf16.msra.mxu0 0
    %6714 = vmatprep.subr.bf16.mxu0 0
    %6715 = vmatpush1.bf16.msra.mxu0 0
    %6716 = vmatprep.subr.bf16.mxu0 0
    %6717 = vmatpush1.bf16.msra.mxu0 0
    %6718 = vmatprep.subr.bf16.mxu0 0
    %6719 = vmatpush1.bf16.msra.mxu0 0
    %6720 = vmatprep.subr.bf16.mxu0 0
    %6721 = vmatpush1.bf16.msra.mxu0 0
    %6722 = vmatprep.mubr.bf16.mxu0 0
    %6723 = vmatmul.mubr.bf16.gmra.mrb[0].mxu0 %v6487
    %v6724 = vpop.f32.mrb[0].mxu0
    %v6725 = vadd.f32 %v6676, %v6724
    %v6726 = vpop.f32.mrb[0].mxu0
    %v6727 = vpop.f32.mrb[0].mxu0
    %v6728 = vadd.f32 %v6679, %v6727
    %v6729 = vpop.f32.mrb[0].mxu0
    %6730 = vmatprep.mubr.bf16.mxu0 0
    %6731 = vmatmul.mubr.bf16.gmra.mrb[0].mxu0 %v6490
    %v6732 = vpop.f32.mrb[0].mxu0
    %v6733 = vadd.f32 %v6684, %v6732
    %v6734 = vpop.f32.mrb[0].mxu0
    %v6735 = vpop.f32.mrb[0].mxu0
    %v6736 = vadd.f32 %v6687, %v6735
    %v6737 = vpop.f32.mrb[0].mxu0
    %6738 = vdwg.mxu0
    %v6739 = vadd.f32 %v6725, %v5701
    %v6740 = vadd.f32 %v6728, %v5702
    %v6741 = vadd.f32 %v6733, %v5703
    %v6742 = vadd.f32 %v6736, %v5704
    %v6743 = vmax.f32 %v6739, 0.0
    %v6744 = vmax.f32 %v6740, 0.0
    %v6745 = vmax.f32 %v6741, 0.0
    %v6746 = vmax.f32 %v6742, 0.0
    %v6747 = vld [vmem:[%s65] sm:$0xff]
    %v6748 = vld [vmem:[%s65 + $0x8] sm:$0xff]
    %v6749 = vld [vmem:[%s65 + $0x10] sm:$0xff]
    %v6750 = vld [vmem:[%s65 + $0x18] sm:$0xff]
    %v6751 = vld [vmem:[%s65 + $0x20] sm:$0xff]
    %v6752 = vld [vmem:[%s65 + $0x28] sm:$0xff]
    %v6753 = vld [vmem:[%s65 + $0x30] sm:$0xff]
    %v6754 = vld [vmem:[%s65 + $0x38] sm:$0xff]
    %v6755 = vld [vmem:[%s65 + $0x40] sm:$0xff]
    %v6756 = vld [vmem:[%s65 + $0x48] sm:$0xff]
    %v6757 = vld [vmem:[%s65 + $0x50] sm:$0xff]
    %v6758 = vld [vmem:[%s65 + $0x58] sm:$0xff]
    %v6759 = vld [vmem:[%s65 + $0x60] sm:$0xff]
    %v6760 = vld [vmem:[%s65 + $0x68] sm:$0xff]
    %v6761 = vld [vmem:[%s65 + $0x70] sm:$0xff]
    %v6762 = vld [vmem:[%s65 + $0x78] sm:$0xff]
    %v6763 = vld [vmem:[%s65 + $0x80] sm:$0xff]
    %v6764 = vld [vmem:[%s65 + $0x88] sm:$0xff]
    %v6765 = vld [vmem:[%s65 + $0x90] sm:$0xff]
    %v6766 = vld [vmem:[%s65 + $0x98] sm:$0xff]
    %v6767 = vld [vmem:[%s65 + $0xa0] sm:$0xff]
    %v6768 = vld [vmem:[%s65 + $0xa8] sm:$0xff]
    %v6769 = vld [vmem:[%s65 + $0xb0] sm:$0xff]
    %v6770 = vld [vmem:[%s65 + $0xb8] sm:$0xff]
    %v6771 = vld [vmem:[%s65 + $0xc0] sm:$0xff]
    %v6772 = vld [vmem:[%s65 + $0xc8] sm:$0xff]
    %v6773 = vld [vmem:[%s65 + $0xd0] sm:$0xff]
    %v6774 = vld [vmem:[%s65 + $0xd8] sm:$0xff]
    %v6775 = vld [vmem:[%s65 + $0xe0] sm:$0xff]
    %v6776 = vld [vmem:[%s65 + $0xe8] sm:$0xff]
    %v6777 = vld [vmem:[%s65 + $0xf0] sm:$0xff]
    %v6778 = vld [vmem:[%s65 + $0xf8] sm:$0xff]
    %v6779 = vld [vmem:[%s65 + $0x100] sm:$0xff]
    %v6780 = vld [vmem:[%s65 + $0x108] sm:$0xff]
    %v6781 = vld [vmem:[%s65 + $0x110] sm:$0xff]
    %v6782 = vld [vmem:[%s65 + $0x118] sm:$0xff]
    %v6783 = vld [vmem:[%s65 + $0x120] sm:$0xff]
    %v6784 = vld [vmem:[%s65 + $0x128] sm:$0xff]
    %v6785 = vld [vmem:[%s65 + $0x130] sm:$0xff]
    %v6786 = vld [vmem:[%s65 + $0x138] sm:$0xff]
    %v6787 = vld [vmem:[%s65 + $0x140] sm:$0xff]
    %v6788 = vld [vmem:[%s65 + $0x148] sm:$0xff]
    %v6789 = vld [vmem:[%s65 + $0x150] sm:$0xff]
    %v6790 = vld [vmem:[%s65 + $0x158] sm:$0xff]
    %v6791 = vld [vmem:[%s65 + $0x160] sm:$0xff]
    %v6792 = vld [vmem:[%s65 + $0x168] sm:$0xff]
    %v6793 = vld [vmem:[%s65 + $0x170] sm:$0xff]
    %v6794 = vld [vmem:[%s65 + $0x178] sm:$0xff]
    %v6795 = vld [vmem:[%s67] sm:$0x3]
    %v6796 = vld [vmem:[%s69] sm:$0xf]
    %v6797 = vld [vmem:[%s69 + $0x4] sm:$0x7]
    %v6798 = vld [vmem:[%s69 + $0x8] sm:$0xf]
    %v6799 = vld [vmem:[%s69 + $0xc] sm:$0x7]
    %v6800 = vld [vmem:[%s69 + $0x10] sm:$0xf]
    %v6801 = vld [vmem:[%s69 + $0x14] sm:$0x7]
    %v6802 = vpack.c.bf16 %v6744, %v6743
    %v6803 = vpack.c.bf16 %v6746, %v6745
    %v6806 = vunpack.c.l.b16 %v6796
    %v6807 = vunpack.c.l.b16 %v6797
    %v6808 = vpack.c.b16 %v6807, %v6806
    %v6810 = vsel %vm5253, %v6808, 0
    %v6813 = vsel %vm5260, %v6803, 0
    %6815 = vmatprep.subr.bf16.mxu0 0
    %6816 = vmatpush1.bf16.msra.mxu0 %v6802
    %6817 = vmatprep.subr.bf16.mxu0 0
    %6818 = vmatpush1.bf16.msra.mxu0 %v6813
    %6819 = vmatprep.subr.bf16.mxu0 0
    %6820 = vmatpush1.bf16.msra.mxu0 0
    %6821 = vmatprep.subr.bf16.mxu0 0
    %6822 = vmatpush1.bf16.msra.mxu0 0
    %6823 = vmatprep.subr.bf16.mxu0 0
    %6824 = vmatpush1.bf16.msra.mxu0 0
    %6825 = vmatprep.subr.bf16.mxu0 0
    %6826 = vmatpush1.bf16.msra.mxu0 0
    %6827 = vmatprep.subr.bf16.mxu0 0
    %6828 = vmatpush1.bf16.msra.mxu0 0
    %6829 = vmatprep.subr.bf16.mxu0 0
    %6830 = vmatpush1.bf16.msra.mxu0 0
    %6831 = vmatprep.subr.bf16.mxu0 0
    %6832 = vmatpush1.bf16.msra.mxu0 0
    %6833 = vmatprep.subr.bf16.mxu0 0
    %6834 = vmatpush1.bf16.msra.mxu0 0
    %6835 = vmatprep.subr.bf16.mxu0 0
    %6836 = vmatpush1.bf16.msra.mxu0 0
    %6837 = vmatprep.subr.bf16.mxu0 0
    %6838 = vmatpush1.bf16.msra.mxu0 0
    %6839 = vmatprep.subr.bf16.mxu0 0
    %6840 = vmatpush1.bf16.msra.mxu0 0
    %6841 = vmatprep.subr.bf16.mxu0 0
    %6842 = vmatpush1.bf16.msra.mxu0 0
    %6843 = vmatprep.subr.bf16.mxu0 0
    %6844 = vmatpush1.bf16.msra.mxu0 0
    %6845 = vmatprep.subr.bf16.mxu0 0
    %6846 = vmatpush1.bf16.msra.mxu0 0
    %6847 = vmatprep.mubr.bf16.mxu0 0
    %6848 = vmatmul.mubr.bf16.gmra.mrb[0].mxu0 %v6810
    %v6849 = vpop.f32.mrb[0].mxu0
    %v6850 = vadd.f32 0.0, %v6849
    %v6851 = vpop.f32.mrb[0].mxu0
    %v6852 = vpop.f32.mrb[0].mxu0
    %v6853 = vadd.f32 0.0, %v6852
    %v6854 = vpop.f32.mrb[0].mxu0
    %6855 = vdwg.mxu0
    %v6858 = vunpack.c.l.b16 %v6798
    %v6859 = vunpack.c.l.b16 %v6799
    %v6860 = vpack.c.b16 %v6859, %v6858
    %v6862 = vsel %vm5253, %v6860, 0
    %6864 = vmatprep.subr.bf16.mxu0 0
    %6865 = vmatpush1.bf16.msra.mxu0 %v6802
    %6866 = vmatprep.subr.bf16.mxu0 0
    %6867 = vmatpush1.bf16.msra.mxu0 %v6813
    %6868 = vmatprep.subr.bf16.mxu0 0
    %6869 = vmatpush1.bf16.msra.mxu0 0
    %6870 = vmatprep.subr.bf16.mxu0 0
    %6871 = vmatpush1.bf16.msra.mxu0 0
    %6872 = vmatprep.subr.bf16.mxu0 0
    %6873 = vmatpush1.bf16.msra.mxu0 0
    %6874 = vmatprep.subr.bf16.mxu0 0
    %6875 = vmatpush1.bf16.msra.mxu0 0
    %6876 = vmatprep.subr.bf16.mxu0 0
    %6877 = vmatpush1.bf16.msra.mxu0 0
    %6878 = vmatprep.subr.bf16.mxu0 0
    %6879 = vmatpush1.bf16.msra.mxu0 0
    %6880 = vmatprep.subr.bf16.mxu0 0
    %6881 = vmatpush1.bf16.msra.mxu0 0
    %6882 = vmatprep.subr.bf16.mxu0 0
    %6883 = vmatpush1.bf16.msra.mxu0 0
    %6884 = vmatprep.subr.bf16.mxu0 0
    %6885 = vmatpush1.bf16.msra.mxu0 0
    %6886 = vmatprep.subr.bf16.mxu0 0
    %6887 = vmatpush1.bf16.msra.mxu0 0
    %6888 = vmatprep.subr.bf16.mxu0 0
    %6889 = vmatpush1.bf16.msra.mxu0 0
    %6890 = vmatprep.subr.bf16.mxu0 0
    %6891 = vmatpush1.bf16.msra.mxu0 0
    %6892 = vmatprep.subr.bf16.mxu0 0
    %6893 = vmatpush1.bf16.msra.mxu0 0
    %6894 = vmatprep.subr.bf16.mxu0 0
    %6895 = vmatpush1.bf16.msra.mxu0 0
    %6896 = vmatprep.mubr.bf16.mxu0 0
    %6897 = vmatmul.mubr.bf16.gmra.mrb[0].mxu0 %v6862
    %v6898 = vpop.f32.mrb[0].mxu0
    %v6899 = vadd.f32 0.0, %v6898
    %v6900 = vpop.f32.mrb[0].mxu0
    %v6901 = vpop.f32.mrb[0].mxu0
    %v6902 = vadd.f32 0.0, %v6901
    %v6903 = vpop.f32.mrb[0].mxu0
    %6904 = vdwg.mxu0
    %v6907 = vunpack.c.l.b16 %v6800
    %v6908 = vunpack.c.l.b16 %v6801
    %v6909 = vpack.c.b16 %v6908, %v6907
    %v6911 = vsel %vm5253, %v6909, 0
    %6913 = vmatprep.subr.bf16.mxu0 0
    %6914 = vmatpush1.bf16.msra.mxu0 %v6802
    %6915 = vmatprep.subr.bf16.mxu0 0
    %6916 = vmatpush1.bf16.msra.mxu0 %v6813
    %6917 = vmatprep.subr.bf16.mxu0 0
    %6918 = vmatpush1.bf16.msra.mxu0 0
    %6919 = vmatprep.subr.bf16.mxu0 0
    %6920 = vmatpush1.bf16.msra.mxu0 0
    %6921 = vmatprep.subr.bf16.mxu0 0
    %6922 = vmatpush1.bf16.msra.mxu0 0
    %6923 = vmatprep.subr.bf16.mxu0 0
    %6924 = vmatpush1.bf16.msra.mxu0 0
    %6925 = vmatprep.subr.bf16.mxu0 0
    %6926 = vmatpush1.bf16.msra.mxu0 0
    %6927 = vmatprep.subr.bf16.mxu0 0
    %6928 = vmatpush1.bf16.msra.mxu0 0
    %6929 = vmatprep.subr.bf16.mxu0 0
    %6930 = vmatpush1.bf16.msra.mxu0 0
    %6931 = vmatprep.subr.bf16.mxu0 0
    %6932 = vmatpush1.bf16.msra.mxu0 0
    %6933 = vmatprep.subr.bf16.mxu0 0
    %6934 = vmatpush1.bf16.msra.mxu0 0
    %6935 = vmatprep.subr.bf16.mxu0 0
    %6936 = vmatpush1.bf16.msra.mxu0 0
    %6937 = vmatprep.subr.bf16.mxu0 0
    %6938 = vmatpush1.bf16.msra.mxu0 0
    %6939 = vmatprep.subr.bf16.mxu0 0
    %6940 = vmatpush1.bf16.msra.mxu0 0
    %6941 = vmatprep.subr.bf16.mxu0 0
    %6942 = vmatpush1.bf16.msra.mxu0 0
    %6943 = vmatprep.subr.bf16.mxu0 0
    %6944 = vmatpush1.bf16.msra.mxu0 0
    %6945 = vmatprep.mubr.bf16.mxu0 0
    %6946 = vmatmul.mubr.bf16.gmra.mrb[0].mxu0 %v6911
    %v6947 = vpop.f32.mrb[0].mxu0
    %v6948 = vadd.f32 0.0, %v6947
    %v6949 = vpop.f32.mrb[0].mxu0
    %v6950 = vpop.f32.mrb[0].mxu0
    %v6951 = vadd.f32 0.0, %v6950
    %v6952 = vpop.f32.mrb[0].mxu0
    %6953 = vdwg.mxu0
    %v6954 = vpack.c.bf16 %v6853, %v6850
    %v6955 = vpack.c.bf16 %v6902, %v6899
    %v6956 = vpack.c.bf16 %v6951, %v6948
    %v6958 = vlaneseq
    %v6959 = vshrl.u32 %v6958, 7
    %v6960 = vsub.s32 0, %v6959
    %v6961 = vrot.slane %v6795, %v6960
    %v6962 = vlaneseq
    %v6963 = vshrl.u32 %v6962, 7
    %v6964 = vsub.s32 1, %v6963
    %v6965 = vrot.slane %v6795, %v6964
    %v7016 = vunpack.c.l.b16 %v6747
    %v7017 = vunpack.c.h.b16 %v6747
    %v7018 = vunpack.c.l.b16 %v6748
    %v7019 = vunpack.c.h.b16 %v6748
    %v7020 = vunpack.c.l.b16 %v6749
    %v7021 = vunpack.c.h.b16 %v6749
    %v7022 = vunpack.c.l.b16 %v6750
    %v7023 = vunpack.c.h.b16 %v6750
    %v7024 = vunpack.c.l.b16 %v6751
    %v7025 = vunpack.c.h.b16 %v6751
    %v7026 = vunpack.c.l.b16 %v6752
    %v7027 = vunpack.c.h.b16 %v6752
    %v7028 = vunpack.c.l.b16 %v6753
    %v7029 = vunpack.c.h.b16 %v6753
    %v7030 = vunpack.c.l.b16 %v6754
    %v7031 = vunpack.c.h.b16 %v6754
    %v7032 = vunpack.c.l.b16 %v6755
    %v7033 = vunpack.c.h.b16 %v6755
    %v7034 = vunpack.c.l.b16 %v6756
    %v7035 = vunpack.c.h.b16 %v6756
    %v7036 = vunpack.c.l.b16 %v6757
    %v7037 = vunpack.c.h.b16 %v6757
    %v7038 = vunpack.c.l.b16 %v6758
    %v7039 = vunpack.c.h.b16 %v6758
    %v7040 = vunpack.c.l.b16 %v6759
    %v7041 = vunpack.c.h.b16 %v6759
    %v7042 = vunpack.c.l.b16 %v6760
    %v7043 = vunpack.c.h.b16 %v6760
    %v7044 = vunpack.c.l.b16 %v6761
    %v7045 = vunpack.c.h.b16 %v6761
    %v7046 = vunpack.c.l.b16 %v6762
    %v7047 = vunpack.c.h.b16 %v6762
    %v7048 = vunpack.c.l.b16 %v6763
    %v7049 = vunpack.c.h.b16 %v6763
    %v7050 = vunpack.c.l.b16 %v6764
    %v7051 = vunpack.c.h.b16 %v6764
    %v7052 = vunpack.c.l.b16 %v6765
    %v7053 = vunpack.c.h.b16 %v6765
    %v7054 = vunpack.c.l.b16 %v6766
    %v7055 = vunpack.c.h.b16 %v6766
    %v7056 = vunpack.c.l.b16 %v6767
    %v7057 = vunpack.c.h.b16 %v6767
    %v7058 = vunpack.c.l.b16 %v6768
    %v7059 = vunpack.c.h.b16 %v6768
    %v7060 = vunpack.c.l.b16 %v6769
    %v7061 = vunpack.c.h.b16 %v6769
    %v7062 = vunpack.c.l.b16 %v6770
    %v7063 = vunpack.c.h.b16 %v6770
    %v7064 = vunpack.c.l.b16 %v6771
    %v7065 = vunpack.c.h.b16 %v6771
    %v7066 = vunpack.c.l.b16 %v6772
    %v7067 = vunpack.c.h.b16 %v6772
    %v7068 = vunpack.c.l.b16 %v6773
    %v7069 = vunpack.c.h.b16 %v6773
    %v7070 = vunpack.c.l.b16 %v6774
    %v7071 = vunpack.c.h.b16 %v6774
    %v7072 = vunpack.c.l.b16 %v6775
    %v7073 = vunpack.c.h.b16 %v6775
    %v7074 = vunpack.c.l.b16 %v6776
    %v7075 = vunpack.c.h.b16 %v6776
    %v7076 = vunpack.c.l.b16 %v6777
    %v7077 = vunpack.c.h.b16 %v6777
    %v7078 = vunpack.c.l.b16 %v6778
    %v7079 = vunpack.c.h.b16 %v6778
    %v7080 = vunpack.c.l.b16 %v6779
    %v7081 = vunpack.c.h.b16 %v6779
    %v7082 = vunpack.c.l.b16 %v6780
    %v7083 = vunpack.c.h.b16 %v6780
    %v7084 = vunpack.c.l.b16 %v6781
    %v7085 = vunpack.c.h.b16 %v6781
    %v7086 = vunpack.c.l.b16 %v6782
    %v7087 = vunpack.c.h.b16 %v6782
    %v7088 = vunpack.c.l.b16 %v6783
    %v7089 = vunpack.c.h.b16 %v6783
    %v7090 = vunpack.c.l.b16 %v6784
    %v7091 = vunpack.c.h.b16 %v6784
    %v7092 = vunpack.c.l.b16 %v6785
    %v7093 = vunpack.c.h.b16 %v6785
    %v7094 = vunpack.c.l.b16 %v6786
    %v7095 = vunpack.c.h.b16 %v6786
    %v7096 = vunpack.c.l.b16 %v6787
    %v7097 = vunpack.c.h.b16 %v6787
    %v7098 = vunpack.c.l.b16 %v6788
    %v7099 = vunpack.c.h.b16 %v6788
    %v7100 = vunpack.c.l.b16 %v6789
    %v7101 = vunpack.c.h.b16 %v6789
    %v7102 = vunpack.c.l.b16 %v6790
    %v7103 = vunpack.c.h.b16 %v6790
    %v7104 = vunpack.c.l.b16 %v6791
    %v7105 = vunpack.c.h.b16 %v6791
    %v7106 = vunpack.c.l.b16 %v6792
    %v7107 = vunpack.c.h.b16 %v6792
    %v7108 = vunpack.c.l.b16 %v6793
    %v7109 = vunpack.c.h.b16 %v6793
    %v7110 = vunpack.c.l.b16 %v6794
    %v7111 = vunpack.c.h.b16 %v6794
    %v7112 = vpack.c.b16 %v7018, %v7016
    %v7113 = vpack.c.b16 %v7019, %v7017
    %v7114 = vpack.c.b16 %v7022, %v7020
    %v7115 = vpack.c.b16 %v7023, %v7021
    %v7116 = vpack.c.b16 %v7026, %v7024
    %v7117 = vpack.c.b16 %v7027, %v7025
    %v7118 = vpack.c.b16 %v7030, %v7028
    %v7119 = vpack.c.b16 %v7031, %v7029
    %v7120 = vpack.c.b16 %v7034, %v7032
    %v7121 = vpack.c.b16 %v7035, %v7033
    %v7122 = vpack.c.b16 %v7038, %v7036
    %v7123 = vpack.c.b16 %v7039, %v7037
    %v7124 = vpack.c.b16 %v7042, %v7040
    %v7125 = vpack.c.b16 %v7043, %v7041
    %v7126 = vpack.c.b16 %v7046, %v7044
    %v7127 = vpack.c.b16 %v7047, %v7045
    %v7128 = vpack.c.b16 %v7050, %v7048
    %v7129 = vpack.c.b16 %v7051, %v7049
    %v7130 = vpack.c.b16 %v7054, %v7052
    %v7131 = vpack.c.b16 %v7055, %v7053
    %v7132 = vpack.c.b16 %v7058, %v7056
    %v7133 = vpack.c.b16 %v7059, %v7057
    %v7134 = vpack.c.b16 %v7062, %v7060
    %v7135 = vpack.c.b16 %v7063, %v7061
    %v7136 = vpack.c.b16 %v7066, %v7064
    %v7137 = vpack.c.b16 %v7067, %v7065
    %v7138 = vpack.c.b16 %v7070, %v7068
    %v7139 = vpack.c.b16 %v7071, %v7069
    %v7140 = vpack.c.b16 %v7074, %v7072
    %v7141 = vpack.c.b16 %v7075, %v7073
    %v7142 = vpack.c.b16 %v7078, %v7076
    %v7143 = vpack.c.b16 %v7079, %v7077
    %v7144 = vpack.c.b16 %v7082, %v7080
    %v7145 = vpack.c.b16 %v7083, %v7081
    %v7146 = vpack.c.b16 %v7086, %v7084
    %v7147 = vpack.c.b16 %v7087, %v7085
    %v7148 = vpack.c.b16 %v7090, %v7088
    %v7149 = vpack.c.b16 %v7091, %v7089
    %v7150 = vpack.c.b16 %v7094, %v7092
    %v7151 = vpack.c.b16 %v7095, %v7093
    %v7152 = vpack.c.b16 %v7098, %v7096
    %v7153 = vpack.c.b16 %v7099, %v7097
    %v7154 = vpack.c.b16 %v7102, %v7100
    %v7155 = vpack.c.b16 %v7103, %v7101
    %v7156 = vpack.c.b16 %v7106, %v7104
    %v7157 = vpack.c.b16 %v7107, %v7105
    %v7158 = vpack.c.b16 %v7110, %v7108
    %v7159 = vpack.c.b16 %v7111, %v7109
    %7208 = vmatprep.subr.bf16.mxu0 %v7113
    %7209 = vmatpush1.bf16.msra.mxu0 %v7112
    %7210 = vmatprep.subr.bf16.mxu0 %v7115
    %7211 = vmatpush1.bf16.msra.mxu0 %v7114
    %7212 = vmatprep.subr.bf16.mxu0 %v7117
    %7213 = vmatpush1.bf16.msra.mxu0 %v7116
    %7214 = vmatprep.subr.bf16.mxu0 %v7119
    %7215 = vmatpush1.bf16.msra.mxu0 %v7118
    %7216 = vmatprep.subr.bf16.mxu0 %v7121
    %7217 = vmatpush1.bf16.msra.mxu0 %v7120
    %7218 = vmatprep.subr.bf16.mxu0 %v7123
    %7219 = vmatpush1.bf16.msra.mxu0 %v7122
    %7220 = vmatprep.subr.bf16.mxu0 %v7125
    %7221 = vmatpush1.bf16.msra.mxu0 %v7124
    %7222 = vmatprep.subr.bf16.mxu0 %v7127
    %7223 = vmatpush1.bf16.msra.mxu0 %v7126
    %7224 = vmatprep.subr.bf16.mxu0 %v7129
    %7225 = vmatpush1.bf16.msra.mxu0 %v7128
    %7226 = vmatprep.subr.bf16.mxu0 %v7131
    %7227 = vmatpush1.bf16.msra.mxu0 %v7130
    %7228 = vmatprep.subr.bf16.mxu0 %v7133
    %7229 = vmatpush1.bf16.msra.mxu0 %v7132
    %7230 = vmatprep.subr.bf16.mxu0 %v7135
    %7231 = vmatpush1.bf16.msra.mxu0 %v7134
    %7232 = vmatprep.subr.bf16.mxu0 %v7137
    %7233 = vmatpush1.bf16.msra.mxu0 %v7136
    %7234 = vmatprep.subr.bf16.mxu0 %v7139
    %7235 = vmatpush1.bf16.msra.mxu0 %v7138
    %7236 = vmatprep.subr.bf16.mxu0 %v7141
    %7237 = vmatpush1.bf16.msra.mxu0 %v7140
    %7238 = vmatprep.subr.bf16.mxu0 %v7143
    %7239 = vmatpush1.bf16.msra.mxu0 %v7142
    %7240 = vmatprep.mubr.bf16.mxu0 %v6955
    %7241 = vmatmul.mubr.bf16.gmra.mrb[0].mxu0 %v6954
    %v7242 = vpop.f32.mrb[0].mxu0
    %v7243 = vadd.f32 %v6961, %v7242
    %v7244 = vpop.f32.mrb[0].mxu0
    %v7245 = vadd.f32 %v6965, %v7244
    %v7246 = vpop.f32.mrb[0].mxu0
    %v7247 = vadd.f32 %v6961, %v7246
    %v7248 = vpop.f32.mrb[0].mxu0
    %v7249 = vadd.f32 %v6965, %v7248
    %7250 = vdwg.mxu0
    %7251 = vmatprep.subr.bf16.mxu0 %v7145
    %7252 = vmatpush1.bf16.msra.mxu0 %v7144
    %7253 = vmatprep.subr.bf16.mxu0 %v7147
    %7254 = vmatpush1.bf16.msra.mxu0 %v7146
    %7255 = vmatprep.subr.bf16.mxu0 %v7149
    %7256 = vmatpush1.bf16.msra.mxu0 %v7148
    %7257 = vmatprep.subr.bf16.mxu0 %v7151
    %7258 = vmatpush1.bf16.msra.mxu0 %v7150
    %7259 = vmatprep.subr.bf16.mxu0 %v7153
    %7260 = vmatpush1.bf16.msra.mxu0 %v7152
    %7261 = vmatprep.subr.bf16.mxu0 %v7155
    %7262 = vmatpush1.bf16.msra.mxu0 %v7154
    %7263 = vmatprep.subr.bf16.mxu0 %v7157
    %7264 = vmatpush1.bf16.msra.mxu0 %v7156
    %7265 = vmatprep.subr.bf16.mxu0 %v7159
    %7266 = vmatpush1.bf16.msra.mxu0 %v7158
    %7267 = vmatprep.subr.bf16.mxu0 0
    %7268 = vmatpush1.bf16.msra.mxu0 0
    %7269 = vmatprep.subr.bf16.mxu0 0
    %7270 = vmatpush1.bf16.msra.mxu0 0
    %7271 = vmatprep.subr.bf16.mxu0 0
    %7272 = vmatpush1.bf16.msra.mxu0 0
    %7273 = vmatprep.subr.bf16.mxu0 0
    %7274 = vmatpush1.bf16.msra.mxu0 0
    %7275 = vmatprep.subr.bf16.mxu0 0
    %7276 = vmatpush1.bf16.msra.mxu0 0
    %7277 = vmatprep.subr.bf16.mxu0 0
    %7278 = vmatpush1.bf16.msra.mxu0 0
    %7279 = vmatprep.subr.bf16.mxu0 0
    %7280 = vmatpush1.bf16.msra.mxu0 0
    %7281 = vmatprep.subr.bf16.mxu0 0
    %7282 = vmatpush1.bf16.msra.mxu0 0
    %7283 = vmatprep.mubr.bf16.mxu0 0
    %7284 = vmatmul.mubr.bf16.gmra.mrb[0].mxu0 %v6956
    %v7285 = vpop.f32.mrb[0].mxu0
    %v7286 = vadd.f32 %v7243, %v7285
    %v7287 = vpop.f32.mrb[0].mxu0
    %v7288 = vadd.f32 %v7245, %v7287
    %v7289 = vpop.f32.mrb[0].mxu0
    %v7290 = vadd.f32 %v7247, %v7289
    %v7291 = vpop.f32.mrb[0].mxu0
    %v7292 = vadd.f32 %v7249, %v7291
    %7293 = vdwg.mxu0
    %v7294 = vmax.f32 %v7286, 0.0
    %v7295 = vmax.f32 %v7288, 0.0
    %v7296 = vmax.f32 %v7290, 0.0
    %v7297 = vmax.f32 %v7292, 0.0
    %v7298 = vld [vmem:[%s71] sm:$0xff]
    %v7299 = vld [vmem:[%s71 + $0x8] sm:$0xff]
    %v7300 = vld [vmem:[%s71 + $0x10] sm:$0xff]
    %v7301 = vld [vmem:[%s71 + $0x18] sm:$0xff]
    %v7302 = vld [vmem:[%s71 + $0x20] sm:$0xff]
    %v7303 = vld [vmem:[%s71 + $0x28] sm:$0xff]
    %v7304 = vld [vmem:[%s71 + $0x30] sm:$0xff]
    %v7305 = vld [vmem:[%s71 + $0x38] sm:$0xff]
    %v7306 = vld [vmem:[%s71 + $0x40] sm:$0xff]
    %v7307 = vld [vmem:[%s71 + $0x48] sm:$0xff]
    %v7308 = vld [vmem:[%s71 + $0x50] sm:$0xff]
    %v7309 = vld [vmem:[%s71 + $0x58] sm:$0xff]
    %v7310 = vld [vmem:[%s71 + $0x60] sm:$0xff]
    %v7311 = vld [vmem:[%s71 + $0x68] sm:$0xff]
    %v7312 = vld [vmem:[%s71 + $0x70] sm:$0xff]
    %v7313 = vld [vmem:[%s71 + $0x78] sm:$0xff]
    %v7314 = vld [vmem:[%s73] sm:$0x3]
    %v7315 = vld [vmem:[%s75] sm:$0xf]
    %v7316 = vld [vmem:[%s75 + $0x4] sm:$0x7]
    %v7319 = vunpack.c.l.b16 %v7315
    %v7320 = vunpack.c.l.b16 %v7316
    %v7321 = vpack.c.b16 %v7320, %v7319
    %v7323 = vsel %vm5253, %v7321, 0
    %7325 = vmatprep.subr.bf16.mxu0 0
    %7326 = vmatpush1.bf16.msra.mxu0 %v6802
    %7327 = vmatprep.subr.bf16.mxu0 0
    %7328 = vmatpush1.bf16.msra.mxu0 %v6813
    %7329 = vmatprep.subr.bf16.mxu0 0
    %7330 = vmatpush1.bf16.msra.mxu0 0
    %7331 = vmatprep.subr.bf16.mxu0 0
    %7332 = vmatpush1.bf16.msra.mxu0 0
    %7333 = vmatprep.subr.bf16.mxu0 0
    %7334 = vmatpush1.bf16.msra.mxu0 0
    %7335 = vmatprep.subr.bf16.mxu0 0
    %7336 = vmatpush1.bf16.msra.mxu0 0
    %7337 = vmatprep.subr.bf16.mxu0 0
    %7338 = vmatpush1.bf16.msra.mxu0 0
    %7339 = vmatprep.subr.bf16.mxu0 0
    %7340 = vmatpush1.bf16.msra.mxu0 0
    %7341 = vmatprep.subr.bf16.mxu0 0
    %7342 = vmatpush1.bf16.msra.mxu0 0
    %7343 = vmatprep.subr.bf16.mxu0 0
    %7344 = vmatpush1.bf16.msra.mxu0 0
    %7345 = vmatprep.subr.bf16.mxu0 0
    %7346 = vmatpush1.bf16.msra.mxu0 0
    %7347 = vmatprep.subr.bf16.mxu0 0
    %7348 = vmatpush1.bf16.msra.mxu0 0
    %7349 = vmatprep.subr.bf16.mxu0 0
    %7350 = vmatpush1.bf16.msra.mxu0 0
    %7351 = vmatprep.subr.bf16.mxu0 0
    %7352 = vmatpush1.bf16.msra.mxu0 0
    %7353 = vmatprep.subr.bf16.mxu0 0
    %7354 = vmatpush1.bf16.msra.mxu0 0
    %7355 = vmatprep.subr.bf16.mxu0 0
    %7356 = vmatpush1.bf16.msra.mxu0 0
    %7357 = vmatprep.mubr.bf16.mxu0 0
    %7358 = vmatmul.mubr.bf16.gmra.mrb[0].mxu0 %v7323
    %v7359 = vpop.f32.mrb[0].mxu0
    %v7360 = vadd.f32 0.0, %v7359
    %v7361 = vpop.f32.mrb[0].mxu0
    %v7362 = vpop.f32.mrb[0].mxu0
    %v7363 = vadd.f32 0.0, %v7362
    %v7364 = vpop.f32.mrb[0].mxu0
    %7365 = vdwg.mxu0
    %v7366 = vpack.c.bf16 %v7363, %v7360
    %v7368 = vlaneseq
    %v7369 = vshrl.u32 %v7368, 7
    %v7370 = vsub.s32 0, %v7369
    %v7371 = vrot.slane %v7314, %v7370
    %v7372 = vlaneseq
    %v7373 = vshrl.u32 %v7372, 7
    %v7374 = vsub.s32 1, %v7373
    %v7375 = vrot.slane %v7314, %v7374
    %v7394 = vunpack.c.l.b16 %v7298
    %v7395 = vunpack.c.h.b16 %v7298
    %v7396 = vunpack.c.l.b16 %v7299
    %v7397 = vunpack.c.h.b16 %v7299
    %v7398 = vunpack.c.l.b16 %v7300
    %v7399 = vunpack.c.h.b16 %v7300
    %v7400 = vunpack.c.l.b16 %v7301
    %v7401 = vunpack.c.h.b16 %v7301
    %v7402 = vunpack.c.l.b16 %v7302
    %v7403 = vunpack.c.h.b16 %v7302
    %v7404 = vunpack.c.l.b16 %v7303
    %v7405 = vunpack.c.h.b16 %v7303
    %v7406 = vunpack.c.l.b16 %v7304
    %v7407 = vunpack.c.h.b16 %v7304
    %v7408 = vunpack.c.l.b16 %v7305
    %v7409 = vunpack.c.h.b16 %v7305
    %v7410 = vunpack.c.l.b16 %v7306
    %v7411 = vunpack.c.h.b16 %v7306
    %v7412 = vunpack.c.l.b16 %v7307
    %v7413 = vunpack.c.h.b16 %v7307
    %v7414 = vunpack.c.l.b16 %v7308
    %v7415 = vunpack.c.h.b16 %v7308
    %v7416 = vunpack.c.l.b16 %v7309
    %v7417 = vunpack.c.h.b16 %v7309
    %v7418 = vunpack.c.l.b16 %v7310
    %v7419 = vunpack.c.h.b16 %v7310
    %v7420 = vunpack.c.l.b16 %v7311
    %v7421 = vunpack.c.h.b16 %v7311
    %v7422 = vunpack.c.l.b16 %v7312
    %v7423 = vunpack.c.h.b16 %v7312
    %v7424 = vunpack.c.l.b16 %v7313
    %v7425 = vunpack.c.h.b16 %v7313
    %v7426 = vpack.c.b16 %v7396, %v7394
    %v7427 = vpack.c.b16 %v7397, %v7395
    %v7428 = vpack.c.b16 %v7400, %v7398
    %v7429 = vpack.c.b16 %v7401, %v7399
    %v7430 = vpack.c.b16 %v7404, %v7402
    %v7431 = vpack.c.b16 %v7405, %v7403
    %v7432 = vpack.c.b16 %v7408, %v7406
    %v7433 = vpack.c.b16 %v7409, %v7407
    %v7434 = vpack.c.b16 %v7412, %v7410
    %v7435 = vpack.c.b16 %v7413, %v7411
    %v7436 = vpack.c.b16 %v7416, %v7414
    %v7437 = vpack.c.b16 %v7417, %v7415
    %v7438 = vpack.c.b16 %v7420, %v7418
    %v7439 = vpack.c.b16 %v7421, %v7419
    %v7440 = vpack.c.b16 %v7424, %v7422
    %v7441 = vpack.c.b16 %v7425, %v7423
    %7458 = vmatprep.subr.bf16.mxu0 %v7427
    %7459 = vmatpush1.bf16.msra.mxu0 %v7426
    %7460 = vmatprep.subr.bf16.mxu0 %v7429
    %7461 = vmatpush1.bf16.msra.mxu0 %v7428
    %7462 = vmatprep.subr.bf16.mxu0 %v7431
    %7463 = vmatpush1.bf16.msra.mxu0 %v7430
    %7464 = vmatprep.subr.bf16.mxu0 %v7433
    %7465 = vmatpush1.bf16.msra.mxu0 %v7432
    %7466 = vmatprep.subr.bf16.mxu0 %v7435
    %7467 = vmatpush1.bf16.msra.mxu0 %v7434
    %7468 = vmatprep.subr.bf16.mxu0 %v7437
    %7469 = vmatpush1.bf16.msra.mxu0 %v7436
    %7470 = vmatprep.subr.bf16.mxu0 %v7439
    %7471 = vmatpush1.bf16.msra.mxu0 %v7438
    %7472 = vmatprep.subr.bf16.mxu0 %v7441
    %7473 = vmatpush1.bf16.msra.mxu0 %v7440
    %7474 = vmatprep.subr.bf16.mxu0 0
    %7475 = vmatpush1.bf16.msra.mxu0 0
    %7476 = vmatprep.subr.bf16.mxu0 0
    %7477 = vmatpush1.bf16.msra.mxu0 0
    %7478 = vmatprep.subr.bf16.mxu0 0
    %7479 = vmatpush1.bf16.msra.mxu0 0
    %7480 = vmatprep.subr.bf16.mxu0 0
    %7481 = vmatpush1.bf16.msra.mxu0 0
    %7482 = vmatprep.subr.bf16.mxu0 0
    %7483 = vmatpush1.bf16.msra.mxu0 0
    %7484 = vmatprep.subr.bf16.mxu0 0
    %7485 = vmatpush1.bf16.msra.mxu0 0
    %7486 = vmatprep.subr.bf16.mxu0 0
    %7487 = vmatpush1.bf16.msra.mxu0 0
    %7488 = vmatprep.subr.bf16.mxu0 0
    %7489 = vmatpush1.bf16.msra.mxu0 0
    %7490 = vmatprep.mubr.bf16.mxu0 0
    %7491 = vmatmul.mubr.bf16.gmra.mrb[0].mxu0 %v7366
    %v7492 = vpop.f32.mrb[0].mxu0
    %v7493 = vadd.f32 %v7371, %v7492
    %v7494 = vpop.f32.mrb[0].mxu0
    %v7495 = vadd.f32 %v7375, %v7494
    %v7496 = vpop.f32.mrb[0].mxu0
    %v7497 = vadd.f32 %v7371, %v7496
    %v7498 = vpop.f32.mrb[0].mxu0
    %v7499 = vadd.f32 %v7375, %v7498
    %7500 = vdwg.mxu0
    %v7501 = vld [vmem:[%s77] sm:$0xff]
    %v7502 = vld [vmem:[%s77 + $0x8] sm:$0xff]
    %v7503 = vld [vmem:[%s77 + $0x10] sm:$0xff]
    %v7504 = vld [vmem:[%s77 + $0x18] sm:$0xff]
    %v7505 = vld [vmem:[%s77 + $0x20] sm:$0xff]
    %v7506 = vld [vmem:[%s77 + $0x28] sm:$0xff]
    %v7507 = vld [vmem:[%s77 + $0x30] sm:$0xff]
    %v7508 = vld [vmem:[%s77 + $0x38] sm:$0xff]
    %v7509 = vld [vmem:[%s77 + $0x40] sm:$0xff]
    %v7510 = vld [vmem:[%s77 + $0x48] sm:$0xff]
    %v7511 = vld [vmem:[%s77 + $0x50] sm:$0xff]
    %v7512 = vld [vmem:[%s77 + $0x58] sm:$0xff]
    %v7513 = vld [vmem:[%s77 + $0x60] sm:$0xff]
    %v7514 = vld [vmem:[%s77 + $0x68] sm:$0xff]
    %v7515 = vld [vmem:[%s77 + $0x70] sm:$0xff]
    %v7516 = vld [vmem:[%s77 + $0x78] sm:$0xff]
    %v7517 = vld [vmem:[%s77 + $0x80] sm:$0xff]
    %v7518 = vld [vmem:[%s77 + $0x88] sm:$0xff]
    %v7519 = vld [vmem:[%s77 + $0x90] sm:$0xff]
    %v7520 = vld [vmem:[%s77 + $0x98] sm:$0xff]
    %v7521 = vld [vmem:[%s77 + $0xa0] sm:$0xff]
    %v7522 = vld [vmem:[%s77 + $0xa8] sm:$0xff]
    %v7523 = vld [vmem:[%s77 + $0xb0] sm:$0xff]
    %v7524 = vld [vmem:[%s77 + $0xb8] sm:$0xff]
    %v7525 = vld [vmem:[%s77 + $0xc0] sm:$0xff]
    %v7526 = vld [vmem:[%s77 + $0xc8] sm:$0xff]
    %v7527 = vld [vmem:[%s77 + $0xd0] sm:$0xff]
    %v7528 = vld [vmem:[%s77 + $0xd8] sm:$0xff]
    %v7529 = vld [vmem:[%s77 + $0xe0] sm:$0xff]
    %v7530 = vld [vmem:[%s77 + $0xe8] sm:$0xff]
    %v7531 = vld [vmem:[%s77 + $0xf0] sm:$0xff]
    %v7532 = vld [vmem:[%s77 + $0xf8] sm:$0xff]
    %v7533 = vld [vmem:[%s77 + $0x100] sm:$0xff]
    %v7534 = vld [vmem:[%s77 + $0x108] sm:$0xff]
    %v7535 = vld [vmem:[%s77 + $0x110] sm:$0xff]
    %v7536 = vld [vmem:[%s77 + $0x118] sm:$0xff]
    %v7537 = vld [vmem:[%s77 + $0x120] sm:$0xff]
    %v7538 = vld [vmem:[%s77 + $0x128] sm:$0xff]
    %v7539 = vld [vmem:[%s77 + $0x130] sm:$0xff]
    %v7540 = vld [vmem:[%s77 + $0x138] sm:$0xff]
    %v7541 = vld [vmem:[%s77 + $0x140] sm:$0xff]
    %v7542 = vld [vmem:[%s77 + $0x148] sm:$0xff]
    %v7543 = vld [vmem:[%s77 + $0x150] sm:$0xff]
    %v7544 = vld [vmem:[%s77 + $0x158] sm:$0xff]
    %v7545 = vld [vmem:[%s77 + $0x160] sm:$0xff]
    %v7546 = vld [vmem:[%s77 + $0x168] sm:$0xff]
    %v7547 = vld [vmem:[%s77 + $0x170] sm:$0xff]
    %v7548 = vld [vmem:[%s77 + $0x178] sm:$0xff]
    %v7549 = vld [vmem:[%s77 + $0x180] sm:$0xff]
    %v7550 = vld [vmem:[%s77 + $0x188] sm:$0xff]
    %v7551 = vld [vmem:[%s77 + $0x190] sm:$0xff]
    %v7552 = vld [vmem:[%s77 + $0x198] sm:$0xff]
    %v7553 = vld [vmem:[%s77 + $0x1a0] sm:$0xff]
    %v7554 = vld [vmem:[%s77 + $0x1a8] sm:$0xff]
    %v7555 = vld [vmem:[%s77 + $0x1b0] sm:$0xff]
    %v7556 = vld [vmem:[%s77 + $0x1b8] sm:$0xff]
    %v7557 = vld [vmem:[%s77 + $0x1c0] sm:$0xff]
    %v7558 = vld [vmem:[%s77 + $0x1c8] sm:$0xff]
    %v7559 = vld [vmem:[%s77 + $0x1d0] sm:$0xff]
    %v7560 = vld [vmem:[%s77 + $0x1d8] sm:$0xff]
    %v7561 = vld [vmem:[%s77 + $0x1e0] sm:$0xff]
    %v7562 = vld [vmem:[%s77 + $0x1e8] sm:$0xff]
    %v7563 = vld [vmem:[%s77 + $0x1f0] sm:$0xff]
    %v7564 = vld [vmem:[%s77 + $0x1f8] sm:$0xff]
    %v7565 = vld [vmem:[%s77 + $0x200] sm:$0xff]
    %v7566 = vld [vmem:[%s77 + $0x208] sm:$0xff]
    %v7567 = vld [vmem:[%s77 + $0x210] sm:$0xff]
    %v7568 = vld [vmem:[%s77 + $0x218] sm:$0xff]
    %v7569 = vld [vmem:[%s77 + $0x220] sm:$0xff]
    %v7570 = vld [vmem:[%s77 + $0x228] sm:$0xff]
    %v7571 = vld [vmem:[%s77 + $0x230] sm:$0xff]
    %v7572 = vld [vmem:[%s77 + $0x238] sm:$0xff]
    %v7573 = vld [vmem:[%s77 + $0x240] sm:$0xff]
    %v7574 = vld [vmem:[%s77 + $0x248] sm:$0xff]
    %v7575 = vld [vmem:[%s77 + $0x250] sm:$0xff]
    %v7576 = vld [vmem:[%s77 + $0x258] sm:$0xff]
    %v7577 = vld [vmem:[%s77 + $0x260] sm:$0xff]
    %v7578 = vld [vmem:[%s77 + $0x268] sm:$0xff]
    %v7579 = vld [vmem:[%s77 + $0x270] sm:$0xff]
    %v7580 = vld [vmem:[%s77 + $0x278] sm:$0xff]
    %v7581 = vld [vmem:[%s77 + $0x280] sm:$0xff]
    %v7582 = vld [vmem:[%s77 + $0x288] sm:$0xff]
    %v7583 = vld [vmem:[%s77 + $0x290] sm:$0xff]
    %v7584 = vld [vmem:[%s77 + $0x298] sm:$0xff]
    %v7585 = vld [vmem:[%s77 + $0x2a0] sm:$0xff]
    %v7586 = vld [vmem:[%s77 + $0x2a8] sm:$0xff]
    %v7587 = vld [vmem:[%s77 + $0x2b0] sm:$0xff]
    %v7588 = vld [vmem:[%s77 + $0x2b8] sm:$0xff]
    %v7589 = vld [vmem:[%s77 + $0x2c0] sm:$0xff]
    %v7590 = vld [vmem:[%s77 + $0x2c8] sm:$0xff]
    %v7591 = vld [vmem:[%s77 + $0x2d0] sm:$0xff]
    %v7592 = vld [vmem:[%s77 + $0x2d8] sm:$0xff]
    %v7593 = vld [vmem:[%s77 + $0x2e0] sm:$0xff]
    %v7594 = vld [vmem:[%s77 + $0x2e8] sm:$0xff]
    %v7595 = vld [vmem:[%s77 + $0x2f0] sm:$0xff]
    %v7596 = vld [vmem:[%s77 + $0x2f8] sm:$0xff]
    %v7597 = vld [vmem:[%s79] sm:$0x3]
    %v7598 = vld [vmem:[%s81] sm:$0xf]
    %v7599 = vld [vmem:[%s81 + $0x4] sm:$0x7]
    %v7600 = vld [vmem:[%s81 + $0x8] sm:$0xf]
    %v7601 = vld [vmem:[%s81 + $0xc] sm:$0x7]
    %v7602 = vld [vmem:[%s81 + $0x10] sm:$0xf]
    %v7603 = vld [vmem:[%s81 + $0x14] sm:$0x7]
    %v7604 = vpack.c.bf16 %v7296, %v7294
    %v7605 = vpack.c.bf16 %v7297, %v7295
    %v7608 = vunpack.c.l.b16 %v7598
    %v7609 = vunpack.c.l.b16 %v7599
    %v7610 = vpack.c.b16 %v7609, %v7608
    %vm7611 = vcmask 113664
    %v7613 = vsel %vm7611, %v7610, 0
    %vm7615 = vcmask 1046528
    %v7617 = vsel %vm7615, %v7604, 0
    %v7620 = vsel %vm7615, %v7605, 0
    %7622 = vmatprep.subr.bf16.mxu0 %v7620
    %7623 = vmatpush1.bf16.msra.mxu0 %v7617
    %7624 = vmatprep.subr.bf16.mxu0 0
    %7625 = vmatpush1.bf16.msra.mxu0 0
    %7626 = vmatprep.subr.bf16.mxu0 0
    %7627 = vmatpush1.bf16.msra.mxu0 0
    %7628 = vmatprep.subr.bf16.mxu0 0
    %7629 = vmatpush1.bf16.msra.mxu0 0
    %7630 = vmatprep.subr.bf16.mxu0 0
    %7631 = vmatpush1.bf16.msra.mxu0 0
    %7632 = vmatprep.subr.bf16.mxu0 0
    %7633 = vmatpush1.bf16.msra.mxu0 0
    %7634 = vmatprep.subr.bf16.mxu0 0
    %7635 = vmatpush1.bf16.msra.mxu0 0
    %7636 = vmatprep.subr.bf16.mxu0 0
    %7637 = vmatpush1.bf16.msra.mxu0 0
    %7638 = vmatprep.subr.bf16.mxu0 0
    %7639 = vmatpush1.bf16.msra.mxu0 0
    %7640 = vmatprep.subr.bf16.mxu0 0
    %7641 = vmatpush1.bf16.msra.mxu0 0
    %7642 = vmatprep.subr.bf16.mxu0 0
    %7643 = vmatpush1.bf16.msra.mxu0 0
    %7644 = vmatprep.subr.bf16.mxu0 0
    %7645 = vmatpush1.bf16.msra.mxu0 0
    %7646 = vmatprep.subr.bf16.mxu0 0
    %7647 = vmatpush1.bf16.msra.mxu0 0
    %7648 = vmatprep.subr.bf16.mxu0 0
    %7649 = vmatpush1.bf16.msra.mxu0 0
    %7650 = vmatprep.subr.bf16.mxu0 0
    %7651 = vmatpush1.bf16.msra.mxu0 0
    %7652 = vmatprep.subr.bf16.mxu0 0
    %7653 = vmatpush1.bf16.msra.mxu0 0
    %7654 = vmatprep.mubr.bf16.mxu0 0
    %7655 = vmatmul.mubr.bf16.gmra.mrb[0].mxu0 %v7613
    %v7656 = vpop.f32.mrb[0].mxu0
    %v7657 = vadd.f32 0.0, %v7656
    %v7658 = vpop.f32.mrb[0].mxu0
    %v7659 = vadd.f32 0.0, %v7658
    %v7660 = vpop.f32.mrb[0].mxu0
    %v7661 = vadd.f32 0.0, %v7660
    %v7662 = vpop.f32.mrb[0].mxu0
    %v7663 = vadd.f32 0.0, %v7662
    %7664 = vdwg.mxu0
    %v7667 = vunpack.c.l.b16 %v7600
    %v7668 = vunpack.c.l.b16 %v7601
    %v7669 = vpack.c.b16 %v7668, %v7667
    %v7671 = vsel %vm7611, %v7669, 0
    %7673 = vmatprep.subr.bf16.mxu0 %v7620
    %7674 = vmatpush1.bf16.msra.mxu0 %v7617
    %7675 = vmatprep.subr.bf16.mxu0 0
    %7676 = vmatpush1.bf16.msra.mxu0 0
    %7677 = vmatprep.subr.bf16.mxu0 0
    %7678 = vmatpush1.bf16.msra.mxu0 0
    %7679 = vmatprep.subr.bf16.mxu0 0
    %7680 = vmatpush1.bf16.msra.mxu0 0
    %7681 = vmatprep.subr.bf16.mxu0 0
    %7682 = vmatpush1.bf16.msra.mxu0 0
    %7683 = vmatprep.subr.bf16.mxu0 0
    %7684 = vmatpush1.bf16.msra.mxu0 0
    %7685 = vmatprep.subr.bf16.mxu0 0
    %7686 = vmatpush1.bf16.msra.mxu0 0
    %7687 = vmatprep.subr.bf16.mxu0 0
    %7688 = vmatpush1.bf16.msra.mxu0 0
    %7689 = vmatprep.subr.bf16.mxu0 0
    %7690 = vmatpush1.bf16.msra.mxu0 0
    %7691 = vmatprep.subr.bf16.mxu0 0
    %7692 = vmatpush1.bf16.msra.mxu0 0
    %7693 = vmatprep.subr.bf16.mxu0 0
    %7694 = vmatpush1.bf16.msra.mxu0 0
    %7695 = vmatprep.subr.bf16.mxu0 0
    %7696 = vmatpush1.bf16.msra.mxu0 0
    %7697 = vmatprep.subr.bf16.mxu0 0
    %7698 = vmatpush1.bf16.msra.mxu0 0
    %7699 = vmatprep.subr.bf16.mxu0 0
    %7700 = vmatpush1.bf16.msra.mxu0 0
    %7701 = vmatprep.subr.bf16.mxu0 0
    %7702 = vmatpush1.bf16.msra.mxu0 0
    %7703 = vmatprep.subr.bf16.mxu0 0
    %7704 = vmatpush1.bf16.msra.mxu0 0
    %7705 = vmatprep.mubr.bf16.mxu0 0
    %7706 = vmatmul.mubr.bf16.gmra.mrb[0].mxu0 %v7671
    %v7707 = vpop.f32.mrb[0].mxu0
    %v7708 = vadd.f32 0.0, %v7707
    %v7709 = vpop.f32.mrb[0].mxu0
    %v7710 = vadd.f32 0.0, %v7709
    %v7711 = vpop.f32.mrb[0].mxu0
    %v7712 = vadd.f32 0.0, %v7711
    %v7713 = vpop.f32.mrb[0].mxu0
    %v7714 = vadd.f32 0.0, %v7713
    %7715 = vdwg.mxu0
    %v7718 = vunpack.c.l.b16 %v7602
    %v7719 = vunpack.c.l.b16 %v7603
    %v7720 = vpack.c.b16 %v7719, %v7718
    %v7722 = vsel %vm7611, %v7720, 0
    %7724 = vmatprep.subr.bf16.mxu0 %v7620
    %7725 = vmatpush1.bf16.msra.mxu0 %v7617
    %7726 = vmatprep.subr.bf16.mxu0 0
    %7727 = vmatpush1.bf16.msra.mxu0 0
    %7728 = vmatprep.subr.bf16.mxu0 0
    %7729 = vmatpush1.bf16.msra.mxu0 0
    %7730 = vmatprep.subr.bf16.mxu0 0
    %7731 = vmatpush1.bf16.msra.mxu0 0
    %7732 = vmatprep.subr.bf16.mxu0 0
    %7733 = vmatpush1.bf16.msra.mxu0 0
    %7734 = vmatprep.subr.bf16.mxu0 0
    %7735 = vmatpush1.bf16.msra.mxu0 0
    %7736 = vmatprep.subr.bf16.mxu0 0
    %7737 = vmatpush1.bf16.msra.mxu0 0
    %7738 = vmatprep.subr.bf16.mxu0 0
    %7739 = vmatpush1.bf16.msra.mxu0 0
    %7740 = vmatprep.subr.bf16.mxu0 0
    %7741 = vmatpush1.bf16.msra.mxu0 0
    %7742 = vmatprep.subr.bf16.mxu0 0
    %7743 = vmatpush1.bf16.msra.mxu0 0
    %7744 = vmatprep.subr.bf16.mxu0 0
    %7745 = vmatpush1.bf16.msra.mxu0 0
    %7746 = vmatprep.subr.bf16.mxu0 0
    %7747 = vmatpush1.bf16.msra.mxu0 0
    %7748 = vmatprep.subr.bf16.mxu0 0
    %7749 = vmatpush1.bf16.msra.mxu0 0
    %7750 = vmatprep.subr.bf16.mxu0 0
    %7751 = vmatpush1.bf16.msra.mxu0 0
    %7752 = vmatprep.subr.bf16.mxu0 0
    %7753 = vmatpush1.bf16.msra.mxu0 0
    %7754 = vmatprep.subr.bf16.mxu0 0
    %7755 = vmatpush1.bf16.msra.mxu0 0
    %7756 = vmatprep.mubr.bf16.mxu0 0
    %7757 = vmatmul.mubr.bf16.gmra.mrb[0].mxu0 %v7722
    %v7758 = vpop.f32.mrb[0].mxu0
    %v7759 = vadd.f32 0.0, %v7758
    %v7760 = vpop.f32.mrb[0].mxu0
    %v7761 = vadd.f32 0.0, %v7760
    %v7762 = vpop.f32.mrb[0].mxu0
    %v7763 = vadd.f32 0.0, %v7762
    %v7764 = vpop.f32.mrb[0].mxu0
    %v7765 = vadd.f32 0.0, %v7764
    %7766 = vdwg.mxu0
    %v7767 = vpack.c.bf16 %v7661, %v7657
    %v7768 = vpack.c.bf16 %v7663, %v7659
    %v7769 = vpack.c.bf16 %v7712, %v7708
    %v7770 = vpack.c.bf16 %v7714, %v7710
    %v7771 = vpack.c.bf16 %v7763, %v7759
    %v7772 = vpack.c.bf16 %v7765, %v7761
    %v7774 = vlaneseq
    %v7775 = vshrl.u32 %v7774, 7
    %v7776 = vsub.s32 0, %v7775
    %v7777 = vrot.slane %v7597, %v7776
    %v7778 = vlaneseq
    %v7779 = vshrl.u32 %v7778, 7
    %v7780 = vsub.s32 1, %v7779
    %v7781 = vrot.slane %v7597, %v7780
    %v7880 = vunpack.c.l.b16 %v7501
    %v7881 = vunpack.c.h.b16 %v7501
    %v7882 = vunpack.c.l.b16 %v7502
    %v7883 = vunpack.c.h.b16 %v7502
    %v7884 = vunpack.c.l.b16 %v7503
    %v7885 = vunpack.c.h.b16 %v7503
    %v7886 = vunpack.c.l.b16 %v7504
    %v7887 = vunpack.c.h.b16 %v7504
    %v7888 = vunpack.c.l.b16 %v7505
    %v7889 = vunpack.c.h.b16 %v7505
    %v7890 = vunpack.c.l.b16 %v7506
    %v7891 = vunpack.c.h.b16 %v7506
    %v7892 = vunpack.c.l.b16 %v7507
    %v7893 = vunpack.c.h.b16 %v7507
    %v7894 = vunpack.c.l.b16 %v7508
    %v7895 = vunpack.c.h.b16 %v7508
    %v7896 = vunpack.c.l.b16 %v7509
    %v7897 = vunpack.c.h.b16 %v7509
    %v7898 = vunpack.c.l.b16 %v7510
    %v7899 = vunpack.c.h.b16 %v7510
    %v7900 = vunpack.c.l.b16 %v7511
    %v7901 = vunpack.c.h.b16 %v7511
    %v7902 = vunpack.c.l.b16 %v7512
    %v7903 = vunpack.c.h.b16 %v7512
    %v7904 = vunpack.c.l.b16 %v7513
    %v7905 = vunpack.c.h.b16 %v7513
    %v7906 = vunpack.c.l.b16 %v7514
    %v7907 = vunpack.c.h.b16 %v7514
    %v7908 = vunpack.c.l.b16 %v7515
    %v7909 = vunpack.c.h.b16 %v7515
    %v7910 = vunpack.c.l.b16 %v7516
    %v7911 = vunpack.c.h.b16 %v7516
    %v7912 = vunpack.c.l.b16 %v7517
    %v7913 = vunpack.c.h.b16 %v7517
    %v7914 = vunpack.c.l.b16 %v7518
    %v7915 = vunpack.c.h.b16 %v7518
    %v7916 = vunpack.c.l.b16 %v7519
    %v7917 = vunpack.c.h.b16 %v7519
    %v7918 = vunpack.c.l.b16 %v7520
    %v7919 = vunpack.c.h.b16 %v7520
    %v7920 = vunpack.c.l.b16 %v7521
    %v7921 = vunpack.c.h.b16 %v7521
    %v7922 = vunpack.c.l.b16 %v7522
    %v7923 = vunpack.c.h.b16 %v7522
    %v7924 = vunpack.c.l.b16 %v7523
    %v7925 = vunpack.c.h.b16 %v7523
    %v7926 = vunpack.c.l.b16 %v7524
    %v7927 = vunpack.c.h.b16 %v7524
    %v7928 = vunpack.c.l.b16 %v7525
    %v7929 = vunpack.c.h.b16 %v7525
    %v7930 = vunpack.c.l.b16 %v7526
    %v7931 = vunpack.c.h.b16 %v7526
    %v7932 = vunpack.c.l.b16 %v7527
    %v7933 = vunpack.c.h.b16 %v7527
    %v7934 = vunpack.c.l.b16 %v7528
    %v7935 = vunpack.c.h.b16 %v7528
    %v7936 = vunpack.c.l.b16 %v7529
    %v7937 = vunpack.c.h.b16 %v7529
    %v7938 = vunpack.c.l.b16 %v7530
    %v7939 = vunpack.c.h.b16 %v7530
    %v7940 = vunpack.c.l.b16 %v7531
    %v7941 = vunpack.c.h.b16 %v7531
    %v7942 = vunpack.c.l.b16 %v7532
    %v7943 = vunpack.c.h.b16 %v7532
    %v7944 = vunpack.c.l.b16 %v7533
    %v7945 = vunpack.c.h.b16 %v7533
    %v7946 = vunpack.c.l.b16 %v7534
    %v7947 = vunpack.c.h.b16 %v7534
    %v7948 = vunpack.c.l.b16 %v7535
    %v7949 = vunpack.c.h.b16 %v7535
    %v7950 = vunpack.c.l.b16 %v7536
    %v7951 = vunpack.c.h.b16 %v7536
    %v7952 = vunpack.c.l.b16 %v7537
    %v7953 = vunpack.c.h.b16 %v7537
    %v7954 = vunpack.c.l.b16 %v7538
    %v7955 = vunpack.c.h.b16 %v7538
    %v7956 = vunpack.c.l.b16 %v7539
    %v7957 = vunpack.c.h.b16 %v7539
    %v7958 = vunpack.c.l.b16 %v7540
    %v7959 = vunpack.c.h.b16 %v7540
    %v7960 = vunpack.c.l.b16 %v7541
    %v7961 = vunpack.c.h.b16 %v7541
    %v7962 = vunpack.c.l.b16 %v7542
    %v7963 = vunpack.c.h.b16 %v7542
    %v7964 = vunpack.c.l.b16 %v7543
    %v7965 = vunpack.c.h.b16 %v7543
    %v7966 = vunpack.c.l.b16 %v7544
    %v7967 = vunpack.c.h.b16 %v7544
    %v7968 = vunpack.c.l.b16 %v7545
    %v7969 = vunpack.c.h.b16 %v7545
    %v7970 = vunpack.c.l.b16 %v7546
    %v7971 = vunpack.c.h.b16 %v7546
    %v7972 = vunpack.c.l.b16 %v7547
    %v7973 = vunpack.c.h.b16 %v7547
    %v7974 = vunpack.c.l.b16 %v7548
    %v7975 = vunpack.c.h.b16 %v7548
    %v7976 = vunpack.c.l.b16 %v7549
    %v7977 = vunpack.c.h.b16 %v7549
    %v7978 = vunpack.c.l.b16 %v7550
    %v7979 = vunpack.c.h.b16 %v7550
    %v7980 = vunpack.c.l.b16 %v7551
    %v7981 = vunpack.c.h.b16 %v7551
    %v7982 = vunpack.c.l.b16 %v7552
    %v7983 = vunpack.c.h.b16 %v7552
    %v7984 = vunpack.c.l.b16 %v7553
    %v7985 = vunpack.c.h.b16 %v7553
    %v7986 = vunpack.c.l.b16 %v7554
    %v7987 = vunpack.c.h.b16 %v7554
    %v7988 = vunpack.c.l.b16 %v7555
    %v7989 = vunpack.c.h.b16 %v7555
    %v7990 = vunpack.c.l.b16 %v7556
    %v7991 = vunpack.c.h.b16 %v7556
    %v7992 = vunpack.c.l.b16 %v7557
    %v7993 = vunpack.c.h.b16 %v7557
    %v7994 = vunpack.c.l.b16 %v7558
    %v7995 = vunpack.c.h.b16 %v7558
    %v7996 = vunpack.c.l.b16 %v7559
    %v7997 = vunpack.c.h.b16 %v7559
    %v7998 = vunpack.c.l.b16 %v7560
    %v7999 = vunpack.c.h.b16 %v7560
    %v8000 = vunpack.c.l.b16 %v7561
    %v8001 = vunpack.c.h.b16 %v7561
    %v8002 = vunpack.c.l.b16 %v7562
    %v8003 = vunpack.c.h.b16 %v7562
    %v8004 = vunpack.c.l.b16 %v7563
    %v8005 = vunpack.c.h.b16 %v7563
    %v8006 = vunpack.c.l.b16 %v7564
    %v8007 = vunpack.c.h.b16 %v7564
    %v8008 = vunpack.c.l.b16 %v7565
    %v8009 = vunpack.c.h.b16 %v7565
    %v8010 = vunpack.c.l.b16 %v7566
    %v8011 = vunpack.c.h.b16 %v7566
    %v8012 = vunpack.c.l.b16 %v7567
    %v8013 = vunpack.c.h.b16 %v7567
    %v8014 = vunpack.c.l.b16 %v7568
    %v8015 = vunpack.c.h.b16 %v7568
    %v8016 = vunpack.c.l.b16 %v7569
    %v8017 = vunpack.c.h.b16 %v7569
    %v8018 = vunpack.c.l.b16 %v7570
    %v8019 = vunpack.c.h.b16 %v7570
    %v8020 = vunpack.c.l.b16 %v7571
    %v8021 = vunpack.c.h.b16 %v7571
    %v8022 = vunpack.c.l.b16 %v7572
    %v8023 = vunpack.c.h.b16 %v7572
    %v8024 = vunpack.c.l.b16 %v7573
    %v8025 = vunpack.c.h.b16 %v7573
    %v8026 = vunpack.c.l.b16 %v7574
    %v8027 = vunpack.c.h.b16 %v7574
    %v8028 = vunpack.c.l.b16 %v7575
    %v8029 = vunpack.c.h.b16 %v7575
    %v8030 = vunpack.c.l.b16 %v7576
    %v8031 = vunpack.c.h.b16 %v7576
    %v8032 = vunpack.c.l.b16 %v7577
    %v8033 = vunpack.c.h.b16 %v7577
    %v8034 = vunpack.c.l.b16 %v7578
    %v8035 = vunpack.c.h.b16 %v7578
    %v8036 = vunpack.c.l.b16 %v7579
    %v8037 = vunpack.c.h.b16 %v7579
    %v8038 = vunpack.c.l.b16 %v7580
    %v8039 = vunpack.c.h.b16 %v7580
    %v8040 = vunpack.c.l.b16 %v7581
    %v8041 = vunpack.c.h.b16 %v7581
    %v8042 = vunpack.c.l.b16 %v7582
    %v8043 = vunpack.c.h.b16 %v7582
    %v8044 = vunpack.c.l.b16 %v7583
    %v8045 = vunpack.c.h.b16 %v7583
    %v8046 = vunpack.c.l.b16 %v7584
    %v8047 = vunpack.c.h.b16 %v7584
    %v8048 = vunpack.c.l.b16 %v7585
    %v8049 = vunpack.c.h.b16 %v7585
    %v8050 = vunpack.c.l.b16 %v7586
    %v8051 = vunpack.c.h.b16 %v7586
    %v8052 = vunpack.c.l.b16 %v7587
    %v8053 = vunpack.c.h.b16 %v7587
    %v8054 = vunpack.c.l.b16 %v7588
    %v8055 = vunpack.c.h.b16 %v7588
    %v8056 = vunpack.c.l.b16 %v7589
    %v8057 = vunpack.c.h.b16 %v7589
    %v8058 = vunpack.c.l.b16 %v7590
    %v8059 = vunpack.c.h.b16 %v7590
    %v8060 = vunpack.c.l.b16 %v7591
    %v8061 = vunpack.c.h.b16 %v7591
    %v8062 = vunpack.c.l.b16 %v7592
    %v8063 = vunpack.c.h.b16 %v7592
    %v8064 = vunpack.c.l.b16 %v7593
    %v8065 = vunpack.c.h.b16 %v7593
    %v8066 = vunpack.c.l.b16 %v7594
    %v8067 = vunpack.c.h.b16 %v7594
    %v8068 = vunpack.c.l.b16 %v7595
    %v8069 = vunpack.c.h.b16 %v7595
    %v8070 = vunpack.c.l.b16 %v7596
    %v8071 = vunpack.c.h.b16 %v7596
    %v8072 = vpack.c.b16 %v7882, %v7880
    %v8073 = vpack.c.b16 %v7883, %v7881
    %v8074 = vpack.c.b16 %v7886, %v7884
    %v8075 = vpack.c.b16 %v7887, %v7885
    %v8076 = vpack.c.b16 %v7890, %v7888
    %v8077 = vpack.c.b16 %v7891, %v7889
    %v8078 = vpack.c.b16 %v7894, %v7892
    %v8079 = vpack.c.b16 %v7895, %v7893
    %v8080 = vpack.c.b16 %v7898, %v7896
    %v8081 = vpack.c.b16 %v7899, %v7897
    %v8082 = vpack.c.b16 %v7902, %v7900
    %v8083 = vpack.c.b16 %v7903, %v7901
    %v8084 = vpack.c.b16 %v7906, %v7904
    %v8085 = vpack.c.b16 %v7907, %v7905
    %v8086 = vpack.c.b16 %v7910, %v7908
    %v8087 = vpack.c.b16 %v7911, %v7909
    %v8088 = vpack.c.b16 %v7914, %v7912
    %v8089 = vpack.c.b16 %v7915, %v7913
    %v8090 = vpack.c.b16 %v7918, %v7916
    %v8091 = vpack.c.b16 %v7919, %v7917
    %v8092 = vpack.c.b16 %v7922, %v7920
    %v8093 = vpack.c.b16 %v7923, %v7921
    %v8094 = vpack.c.b16 %v7926, %v7924
    %v8095 = vpack.c.b16 %v7927, %v7925
    %v8096 = vpack.c.b16 %v7930, %v7928
    %v8097 = vpack.c.b16 %v7931, %v7929
    %v8098 = vpack.c.b16 %v7934, %v7932
    %v8099 = vpack.c.b16 %v7935, %v7933
    %v8100 = vpack.c.b16 %v7938, %v7936
    %v8101 = vpack.c.b16 %v7939, %v7937
    %v8102 = vpack.c.b16 %v7942, %v7940
    %v8103 = vpack.c.b16 %v7943, %v7941
    %v8104 = vpack.c.b16 %v7946, %v7944
    %v8105 = vpack.c.b16 %v7947, %v7945
    %v8106 = vpack.c.b16 %v7950, %v7948
    %v8107 = vpack.c.b16 %v7951, %v7949
    %v8108 = vpack.c.b16 %v7954, %v7952
    %v8109 = vpack.c.b16 %v7955, %v7953
    %v8110 = vpack.c.b16 %v7958, %v7956
    %v8111 = vpack.c.b16 %v7959, %v7957
    %v8112 = vpack.c.b16 %v7962, %v7960
    %v8113 = vpack.c.b16 %v7963, %v7961
    %v8114 = vpack.c.b16 %v7966, %v7964
    %v8115 = vpack.c.b16 %v7967, %v7965
    %v8116 = vpack.c.b16 %v7970, %v7968
    %v8117 = vpack.c.b16 %v7971, %v7969
    %v8118 = vpack.c.b16 %v7974, %v7972
    %v8119 = vpack.c.b16 %v7975, %v7973
    %v8120 = vpack.c.b16 %v7978, %v7976
    %v8121 = vpack.c.b16 %v7979, %v7977
    %v8122 = vpack.c.b16 %v7982, %v7980
    %v8123 = vpack.c.b16 %v7983, %v7981
    %v8124 = vpack.c.b16 %v7986, %v7984
    %v8125 = vpack.c.b16 %v7987, %v7985
    %v8126 = vpack.c.b16 %v7990, %v7988
    %v8127 = vpack.c.b16 %v7991, %v7989
    %v8128 = vpack.c.b16 %v7994, %v7992
    %v8129 = vpack.c.b16 %v7995, %v7993
    %v8130 = vpack.c.b16 %v7998, %v7996
    %v8131 = vpack.c.b16 %v7999, %v7997
    %v8132 = vpack.c.b16 %v8002, %v8000
    %v8133 = vpack.c.b16 %v8003, %v8001
    %v8134 = vpack.c.b16 %v8006, %v8004
    %v8135 = vpack.c.b16 %v8007, %v8005
    %v8136 = vpack.c.b16 %v8010, %v8008
    %v8137 = vpack.c.b16 %v8011, %v8009
    %v8138 = vpack.c.b16 %v8014, %v8012
    %v8139 = vpack.c.b16 %v8015, %v8013
    %v8140 = vpack.c.b16 %v8018, %v8016
    %v8141 = vpack.c.b16 %v8019, %v8017
    %v8142 = vpack.c.b16 %v8022, %v8020
    %v8143 = vpack.c.b16 %v8023, %v8021
    %v8144 = vpack.c.b16 %v8026, %v8024
    %v8145 = vpack.c.b16 %v8027, %v8025
    %v8146 = vpack.c.b16 %v8030, %v8028
    %v8147 = vpack.c.b16 %v8031, %v8029
    %v8148 = vpack.c.b16 %v8034, %v8032
    %v8149 = vpack.c.b16 %v8035, %v8033
    %v8150 = vpack.c.b16 %v8038, %v8036
    %v8151 = vpack.c.b16 %v8039, %v8037
    %v8152 = vpack.c.b16 %v8042, %v8040
    %v8153 = vpack.c.b16 %v8043, %v8041
    %v8154 = vpack.c.b16 %v8046, %v8044
    %v8155 = vpack.c.b16 %v8047, %v8045
    %v8156 = vpack.c.b16 %v8050, %v8048
    %v8157 = vpack.c.b16 %v8051, %v8049
    %v8158 = vpack.c.b16 %v8054, %v8052
    %v8159 = vpack.c.b16 %v8055, %v8053
    %v8160 = vpack.c.b16 %v8058, %v8056
    %v8161 = vpack.c.b16 %v8059, %v8057
    %v8162 = vpack.c.b16 %v8062, %v8060
    %v8163 = vpack.c.b16 %v8063, %v8061
    %v8164 = vpack.c.b16 %v8066, %v8064
    %v8165 = vpack.c.b16 %v8067, %v8065
    %v8166 = vpack.c.b16 %v8070, %v8068
    %v8167 = vpack.c.b16 %v8071, %v8069
    %8264 = vmatprep.subr.bf16.mxu0 %v8073
    %8265 = vmatpush1.bf16.msra.mxu0 %v8072
    %8266 = vmatprep.subr.bf16.mxu0 %v8075
    %8267 = vmatpush1.bf16.msra.mxu0 %v8074
    %8268 = vmatprep.subr.bf16.mxu0 %v8077
    %8269 = vmatpush1.bf16.msra.mxu0 %v8076
    %8270 = vmatprep.subr.bf16.mxu0 %v8079
    %8271 = vmatpush1.bf16.msra.mxu0 %v8078
    %8272 = vmatprep.subr.bf16.mxu0 %v8081
    %8273 = vmatpush1.bf16.msra.mxu0 %v8080
    %8274 = vmatprep.subr.bf16.mxu0 %v8083
    %8275 = vmatpush1.bf16.msra.mxu0 %v8082
    %8276 = vmatprep.subr.bf16.mxu0 %v8085
    %8277 = vmatpush1.bf16.msra.mxu0 %v8084
    %8278 = vmatprep.subr.bf16.mxu0 %v8087
    %8279 = vmatpush1.bf16.msra.mxu0 %v8086
    %8280 = vmatprep.subr.bf16.mxu0 %v8089
    %8281 = vmatpush1.bf16.msra.mxu0 %v8088
    %8282 = vmatprep.subr.bf16.mxu0 %v8091
    %8283 = vmatpush1.bf16.msra.mxu0 %v8090
    %8284 = vmatprep.subr.bf16.mxu0 %v8093
    %8285 = vmatpush1.bf16.msra.mxu0 %v8092
    %8286 = vmatprep.subr.bf16.mxu0 %v8095
    %8287 = vmatpush1.bf16.msra.mxu0 %v8094
    %8288 = vmatprep.subr.bf16.mxu0 %v8097
    %8289 = vmatpush1.bf16.msra.mxu0 %v8096
    %8290 = vmatprep.subr.bf16.mxu0 %v8099
    %8291 = vmatpush1.bf16.msra.mxu0 %v8098
    %8292 = vmatprep.subr.bf16.mxu0 %v8101
    %8293 = vmatpush1.bf16.msra.mxu0 %v8100
    %8294 = vmatprep.subr.bf16.mxu0 %v8103
    %8295 = vmatpush1.bf16.msra.mxu0 %v8102
    %8296 = vmatprep.mubr.bf16.mxu0 %v7768
    %8297 = vmatmul.mubr.bf16.gmra.mrb[0].mxu0 %v7767
    %v8298 = vpop.f32.mrb[0].mxu0
    %v8299 = vadd.f32 %v7777, %v8298
    %v8300 = vpop.f32.mrb[0].mxu0
    %v8301 = vadd.f32 %v7781, %v8300
    %v8302 = vpop.f32.mrb[0].mxu0
    %v8303 = vadd.f32 %v7777, %v8302
    %v8304 = vpop.f32.mrb[0].mxu0
    %v8305 = vadd.f32 %v7781, %v8304
    %8306 = vdwg.mxu0
    %8307 = vmatprep.subr.bf16.mxu0 %v8105
    %8308 = vmatpush1.bf16.msra.mxu0 %v8104
    %8309 = vmatprep.subr.bf16.mxu0 %v8107
    %8310 = vmatpush1.bf16.msra.mxu0 %v8106
    %8311 = vmatprep.subr.bf16.mxu0 %v8109
    %8312 = vmatpush1.bf16.msra.mxu0 %v8108
    %8313 = vmatprep.subr.bf16.mxu0 %v8111
    %8314 = vmatpush1.bf16.msra.mxu0 %v8110
    %8315 = vmatprep.subr.bf16.mxu0 %v8113
    %8316 = vmatpush1.bf16.msra.mxu0 %v8112
    %8317 = vmatprep.subr.bf16.mxu0 %v8115
    %8318 = vmatpush1.bf16.msra.mxu0 %v8114
    %8319 = vmatprep.subr.bf16.mxu0 %v8117
    %8320 = vmatpush1.bf16.msra.mxu0 %v8116
    %8321 = vmatprep.subr.bf16.mxu0 %v8119
    %8322 = vmatpush1.bf16.msra.mxu0 %v8118
    %8323 = vmatprep.subr.bf16.mxu0 %v8121
    %8324 = vmatpush1.bf16.msra.mxu0 %v8120
    %8325 = vmatprep.subr.bf16.mxu0 %v8123
    %8326 = vmatpush1.bf16.msra.mxu0 %v8122
    %8327 = vmatprep.subr.bf16.mxu0 %v8125
    %8328 = vmatpush1.bf16.msra.mxu0 %v8124
    %8329 = vmatprep.subr.bf16.mxu0 %v8127
    %8330 = vmatpush1.bf16.msra.mxu0 %v8126
    %8331 = vmatprep.subr.bf16.mxu0 %v8129
    %8332 = vmatpush1.bf16.msra.mxu0 %v8128
    %8333 = vmatprep.subr.bf16.mxu0 %v8131
    %8334 = vmatpush1.bf16.msra.mxu0 %v8130
    %8335 = vmatprep.subr.bf16.mxu0 %v8133
    %8336 = vmatpush1.bf16.msra.mxu0 %v8132
    %8337 = vmatprep.subr.bf16.mxu0 %v8135
    %8338 = vmatpush1.bf16.msra.mxu0 %v8134
    %8339 = vmatprep.mubr.bf16.mxu0 %v7770
    %8340 = vmatmul.mubr.bf16.gmra.mrb[0].mxu0 %v7769
    %v8341 = vpop.f32.mrb[0].mxu0
    %v8342 = vadd.f32 %v8299, %v8341
    %v8343 = vpop.f32.mrb[0].mxu0
    %v8344 = vadd.f32 %v8301, %v8343
    %v8345 = vpop.f32.mrb[0].mxu0
    %v8346 = vadd.f32 %v8303, %v8345
    %v8347 = vpop.f32.mrb[0].mxu0
    %v8348 = vadd.f32 %v8305, %v8347
    %8349 = vdwg.mxu0
    %8350 = vmatprep.subr.bf16.mxu0 %v8137
    %8351 = vmatpush1.bf16.msra.mxu0 %v8136
    %8352 = vmatprep.subr.bf16.mxu0 %v8139
    %8353 = vmatpush1.bf16.msra.mxu0 %v8138
    %8354 = vmatprep.subr.bf16.mxu0 %v8141
    %8355 = vmatpush1.bf16.msra.mxu0 %v8140
    %8356 = vmatprep.subr.bf16.mxu0 %v8143
    %8357 = vmatpush1.bf16.msra.mxu0 %v8142
    %8358 = vmatprep.subr.bf16.mxu0 %v8145
    %8359 = vmatpush1.bf16.msra.mxu0 %v8144
    %8360 = vmatprep.subr.bf16.mxu0 %v8147
    %8361 = vmatpush1.bf16.msra.mxu0 %v8146
    %8362 = vmatprep.subr.bf16.mxu0 %v8149
    %8363 = vmatpush1.bf16.msra.mxu0 %v8148
    %8364 = vmatprep.subr.bf16.mxu0 %v8151
    %8365 = vmatpush1.bf16.msra.mxu0 %v8150
    %8366 = vmatprep.subr.bf16.mxu0 %v8153
    %8367 = vmatpush1.bf16.msra.mxu0 %v8152
    %8368 = vmatprep.subr.bf16.mxu0 %v8155
    %8369 = vmatpush1.bf16.msra.mxu0 %v8154
    %8370 = vmatprep.subr.bf16.mxu0 %v8157
    %8371 = vmatpush1.bf16.msra.mxu0 %v8156
    %8372 = vmatprep.subr.bf16.mxu0 %v8159
    %8373 = vmatpush1.bf16.msra.mxu0 %v8158
    %8374 = vmatprep.subr.bf16.mxu0 %v8161
    %8375 = vmatpush1.bf16.msra.mxu0 %v8160
    %8376 = vmatprep.subr.bf16.mxu0 %v8163
    %8377 = vmatpush1.bf16.msra.mxu0 %v8162
    %8378 = vmatprep.subr.bf16.mxu0 %v8165
    %8379 = vmatpush1.bf16.msra.mxu0 %v8164
    %8380 = vmatprep.subr.bf16.mxu0 %v8167
    %8381 = vmatpush1.bf16.msra.mxu0 %v8166
    %8382 = vmatprep.mubr.bf16.mxu0 %v7772
    %8383 = vmatmul.mubr.bf16.gmra.mrb[0].mxu0 %v7771
    %v8384 = vpop.f32.mrb[0].mxu0
    %v8385 = vadd.f32 %v8342, %v8384
    %v8386 = vpop.f32.mrb[0].mxu0
    %v8387 = vadd.f32 %v8344, %v8386
    %v8388 = vpop.f32.mrb[0].mxu0
    %v8389 = vadd.f32 %v8346, %v8388
    %v8390 = vpop.f32.mrb[0].mxu0
    %v8391 = vadd.f32 %v8348, %v8390
    %8392 = vdwg.mxu0
    %v8393 = vadd.f32 %v8385, %v7493
    %v8394 = vadd.f32 %v8387, %v7495
    %v8395 = vadd.f32 %v8389, %v7497
    %v8396 = vadd.f32 %v8391, %v7499
    %v8397 = vmax.f32 %v8393, 0.0
    %v8398 = vmax.f32 %v8394, 0.0
    %v8399 = vmax.f32 %v8395, 0.0
    %v8400 = vmax.f32 %v8396, 0.0
    %v8401 = vld [vmem:[%s83] sm:$0xff]
    %v8402 = vld [vmem:[%s83 + $0x8] sm:$0xff]
    %v8403 = vld [vmem:[%s83 + $0x10] sm:$0xff]
    %v8404 = vld [vmem:[%s83 + $0x18] sm:$0xff]
    %v8405 = vld [vmem:[%s83 + $0x20] sm:$0xff]
    %v8406 = vld [vmem:[%s83 + $0x28] sm:$0xff]
    %v8407 = vld [vmem:[%s83 + $0x30] sm:$0xff]
    %v8408 = vld [vmem:[%s83 + $0x38] sm:$0xff]
    %v8409 = vld [vmem:[%s83 + $0x40] sm:$0xff]
    %v8410 = vld [vmem:[%s83 + $0x48] sm:$0xff]
    %v8411 = vld [vmem:[%s83 + $0x50] sm:$0xff]
    %v8412 = vld [vmem:[%s83 + $0x58] sm:$0xff]
    %v8413 = vld [vmem:[%s83 + $0x60] sm:$0xff]
    %v8414 = vld [vmem:[%s83 + $0x68] sm:$0xff]
    %v8415 = vld [vmem:[%s83 + $0x70] sm:$0xff]
    %v8416 = vld [vmem:[%s83 + $0x78] sm:$0xff]
    %v8417 = vld [vmem:[%s83 + $0x80] sm:$0xff]
    %v8418 = vld [vmem:[%s83 + $0x88] sm:$0xff]
    %v8419 = vld [vmem:[%s83 + $0x90] sm:$0xff]
    %v8420 = vld [vmem:[%s83 + $0x98] sm:$0xff]
    %v8421 = vld [vmem:[%s83 + $0xa0] sm:$0xff]
    %v8422 = vld [vmem:[%s83 + $0xa8] sm:$0xff]
    %v8423 = vld [vmem:[%s83 + $0xb0] sm:$0xff]
    %v8424 = vld [vmem:[%s83 + $0xb8] sm:$0xff]
    %v8425 = vld [vmem:[%s83 + $0xc0] sm:$0xff]
    %v8426 = vld [vmem:[%s83 + $0xc8] sm:$0xff]
    %v8427 = vld [vmem:[%s83 + $0xd0] sm:$0xff]
    %v8428 = vld [vmem:[%s83 + $0xd8] sm:$0xff]
    %v8429 = vld [vmem:[%s83 + $0xe0] sm:$0xff]
    %v8430 = vld [vmem:[%s83 + $0xe8] sm:$0xff]
    %v8431 = vld [vmem:[%s83 + $0xf0] sm:$0xff]
    %v8432 = vld [vmem:[%s83 + $0xf8] sm:$0xff]
    %v8433 = vld [vmem:[%s83 + $0x100] sm:$0xff]
    %v8434 = vld [vmem:[%s83 + $0x108] sm:$0xff]
    %v8435 = vld [vmem:[%s83 + $0x110] sm:$0xff]
    %v8436 = vld [vmem:[%s83 + $0x118] sm:$0xff]
    %v8437 = vld [vmem:[%s83 + $0x120] sm:$0xff]
    %v8438 = vld [vmem:[%s83 + $0x128] sm:$0xff]
    %v8439 = vld [vmem:[%s83 + $0x130] sm:$0xff]
    %v8440 = vld [vmem:[%s83 + $0x138] sm:$0xff]
    %v8441 = vld [vmem:[%s83 + $0x140] sm:$0xff]
    %v8442 = vld [vmem:[%s83 + $0x148] sm:$0xff]
    %v8443 = vld [vmem:[%s83 + $0x150] sm:$0xff]
    %v8444 = vld [vmem:[%s83 + $0x158] sm:$0xff]
    %v8445 = vld [vmem:[%s83 + $0x160] sm:$0xff]
    %v8446 = vld [vmem:[%s83 + $0x168] sm:$0xff]
    %v8447 = vld [vmem:[%s83 + $0x170] sm:$0xff]
    %v8448 = vld [vmem:[%s83 + $0x178] sm:$0xff]
    %v8449 = vld [vmem:[%s83 + $0x180] sm:$0xff]
    %v8450 = vld [vmem:[%s83 + $0x188] sm:$0xff]
    %v8451 = vld [vmem:[%s83 + $0x190] sm:$0xff]
    %v8452 = vld [vmem:[%s83 + $0x198] sm:$0xff]
    %v8453 = vld [vmem:[%s83 + $0x1a0] sm:$0xff]
    %v8454 = vld [vmem:[%s83 + $0x1a8] sm:$0xff]
    %v8455 = vld [vmem:[%s83 + $0x1b0] sm:$0xff]
    %v8456 = vld [vmem:[%s83 + $0x1b8] sm:$0xff]
    %v8457 = vld [vmem:[%s83 + $0x1c0] sm:$0xff]
    %v8458 = vld [vmem:[%s83 + $0x1c8] sm:$0xff]
    %v8459 = vld [vmem:[%s83 + $0x1d0] sm:$0xff]
    %v8460 = vld [vmem:[%s83 + $0x1d8] sm:$0xff]
    %v8461 = vld [vmem:[%s83 + $0x1e0] sm:$0xff]
    %v8462 = vld [vmem:[%s83 + $0x1e8] sm:$0xff]
    %v8463 = vld [vmem:[%s83 + $0x1f0] sm:$0xff]
    %v8464 = vld [vmem:[%s83 + $0x1f8] sm:$0xff]
    %v8465 = vld [vmem:[%s83 + $0x200] sm:$0xff]
    %v8466 = vld [vmem:[%s83 + $0x208] sm:$0xff]
    %v8467 = vld [vmem:[%s83 + $0x210] sm:$0xff]
    %v8468 = vld [vmem:[%s83 + $0x218] sm:$0xff]
    %v8469 = vld [vmem:[%s83 + $0x220] sm:$0xff]
    %v8470 = vld [vmem:[%s83 + $0x228] sm:$0xff]
    %v8471 = vld [vmem:[%s83 + $0x230] sm:$0xff]
    %v8472 = vld [vmem:[%s83 + $0x238] sm:$0xff]
    %v8473 = vld [vmem:[%s83 + $0x240] sm:$0xff]
    %v8474 = vld [vmem:[%s83 + $0x248] sm:$0xff]
    %v8475 = vld [vmem:[%s83 + $0x250] sm:$0xff]
    %v8476 = vld [vmem:[%s83 + $0x258] sm:$0xff]
    %v8477 = vld [vmem:[%s83 + $0x260] sm:$0xff]
    %v8478 = vld [vmem:[%s83 + $0x268] sm:$0xff]
    %v8479 = vld [vmem:[%s83 + $0x270] sm:$0xff]
    %v8480 = vld [vmem:[%s83 + $0x278] sm:$0xff]
    %v8481 = vld [vmem:[%s83 + $0x280] sm:$0xff]
    %v8482 = vld [vmem:[%s83 + $0x288] sm:$0xff]
    %v8483 = vld [vmem:[%s83 + $0x290] sm:$0xff]
    %v8484 = vld [vmem:[%s83 + $0x298] sm:$0xff]
    %v8485 = vld [vmem:[%s83 + $0x2a0] sm:$0xff]
    %v8486 = vld [vmem:[%s83 + $0x2a8] sm:$0xff]
    %v8487 = vld [vmem:[%s83 + $0x2b0] sm:$0xff]
    %v8488 = vld [vmem:[%s83 + $0x2b8] sm:$0xff]
    %v8489 = vld [vmem:[%s83 + $0x2c0] sm:$0xff]
    %v8490 = vld [vmem:[%s83 + $0x2c8] sm:$0xff]
    %v8491 = vld [vmem:[%s83 + $0x2d0] sm:$0xff]
    %v8492 = vld [vmem:[%s83 + $0x2d8] sm:$0xff]
    %v8493 = vld [vmem:[%s83 + $0x2e0] sm:$0xff]
    %v8494 = vld [vmem:[%s83 + $0x2e8] sm:$0xff]
    %v8495 = vld [vmem:[%s83 + $0x2f0] sm:$0xff]
    %v8496 = vld [vmem:[%s83 + $0x2f8] sm:$0xff]
    %v8497 = vld [vmem:[%s85] sm:$0x3]
    %v8498 = vld [vmem:[%s87] sm:$0xf]
    %v8499 = vld [vmem:[%s87 + $0x4] sm:$0x7]
    %v8500 = vld [vmem:[%s87 + $0x8] sm:$0xf]
    %v8501 = vld [vmem:[%s87 + $0xc] sm:$0x7]
    %v8502 = vld [vmem:[%s87 + $0x10] sm:$0xf]
    %v8503 = vld [vmem:[%s87 + $0x14] sm:$0x7]
    %v8504 = vpack.c.bf16 %v8399, %v8397
    %v8505 = vpack.c.bf16 %v8400, %v8398
    %v8508 = vunpack.c.l.b16 %v8498
    %v8509 = vunpack.c.l.b16 %v8499
    %v8510 = vpack.c.b16 %v8509, %v8508
    %v8512 = vsel %vm7611, %v8510, 0
    %v8515 = vsel %vm7615, %v8504, 0
    %v8518 = vsel %vm7615, %v8505, 0
    %8520 = vmatprep.subr.bf16.mxu0 %v8518
    %8521 = vmatpush1.bf16.msra.mxu0 %v8515
    %8522 = vmatprep.subr.bf16.mxu0 0
    %8523 = vmatpush1.bf16.msra.mxu0 0
    %8524 = vmatprep.subr.bf16.mxu0 0
    %8525 = vmatpush1.bf16.msra.mxu0 0
    %8526 = vmatprep.subr.bf16.mxu0 0
    %8527 = vmatpush1.bf16.msra.mxu0 0
    %8528 = vmatprep.subr.bf16.mxu0 0
    %8529 = vmatpush1.bf16.msra.mxu0 0
    %8530 = vmatprep.subr.bf16.mxu0 0
    %8531 = vmatpush1.bf16.msra.mxu0 0
    %8532 = vmatprep.subr.bf16.mxu0 0
    %8533 = vmatpush1.bf16.msra.mxu0 0
    %8534 = vmatprep.subr.bf16.mxu0 0
    %8535 = vmatpush1.bf16.msra.mxu0 0
    %8536 = vmatprep.subr.bf16.mxu0 0
    %8537 = vmatpush1.bf16.msra.mxu0 0
    %8538 = vmatprep.subr.bf16.mxu0 0
    %8539 = vmatpush1.bf16.msra.mxu0 0
    %8540 = vmatprep.subr.bf16.mxu0 0
    %8541 = vmatpush1.bf16.msra.mxu0 0
    %8542 = vmatprep.subr.bf16.mxu0 0
    %8543 = vmatpush1.bf16.msra.mxu0 0
    %8544 = vmatprep.subr.bf16.mxu0 0
    %8545 = vmatpush1.bf16.msra.mxu0 0
    %8546 = vmatprep.subr.bf16.mxu0 0
    %8547 = vmatpush1.bf16.msra.mxu0 0
    %8548 = vmatprep.subr.bf16.mxu0 0
    %8549 = vmatpush1.bf16.msra.mxu0 0
    %8550 = vmatprep.subr.bf16.mxu0 0
    %8551 = vmatpush1.bf16.msra.mxu0 0
    %8552 = vmatprep.mubr.bf16.mxu0 0
    %8553 = vmatmul.mubr.bf16.gmra.mrb[0].mxu0 %v8512
    %v8554 = vpop.f32.mrb[0].mxu0
    %v8555 = vadd.f32 0.0, %v8554
    %v8556 = vpop.f32.mrb[0].mxu0
    %v8557 = vadd.f32 0.0, %v8556
    %v8558 = vpop.f32.mrb[0].mxu0
    %v8559 = vadd.f32 0.0, %v8558
    %v8560 = vpop.f32.mrb[0].mxu0
    %v8561 = vadd.f32 0.0, %v8560
    %8562 = vdwg.mxu0
    %v8565 = vunpack.c.l.b16 %v8500
    %v8566 = vunpack.c.l.b16 %v8501
    %v8567 = vpack.c.b16 %v8566, %v8565
    %v8569 = vsel %vm7611, %v8567, 0
    %8571 = vmatprep.subr.bf16.mxu0 %v8518
    %8572 = vmatpush1.bf16.msra.mxu0 %v8515
    %8573 = vmatprep.subr.bf16.mxu0 0
    %8574 = vmatpush1.bf16.msra.mxu0 0
    %8575 = vmatprep.subr.bf16.mxu0 0
    %8576 = vmatpush1.bf16.msra.mxu0 0
    %8577 = vmatprep.subr.bf16.mxu0 0
    %8578 = vmatpush1.bf16.msra.mxu0 0
    %8579 = vmatprep.subr.bf16.mxu0 0
    %8580 = vmatpush1.bf16.msra.mxu0 0
    %8581 = vmatprep.subr.bf16.mxu0 0
    %8582 = vmatpush1.bf16.msra.mxu0 0
    %8583 = vmatprep.subr.bf16.mxu0 0
    %8584 = vmatpush1.bf16.msra.mxu0 0
    %8585 = vmatprep.subr.bf16.mxu0 0
    %8586 = vmatpush1.bf16.msra.mxu0 0
    %8587 = vmatprep.subr.bf16.mxu0 0
    %8588 = vmatpush1.bf16.msra.mxu0 0
    %8589 = vmatprep.subr.bf16.mxu0 0
    %8590 = vmatpush1.bf16.msra.mxu0 0
    %8591 = vmatprep.subr.bf16.mxu0 0
    %8592 = vmatpush1.bf16.msra.mxu0 0
    %8593 = vmatprep.subr.bf16.mxu0 0
    %8594 = vmatpush1.bf16.msra.mxu0 0
    %8595 = vmatprep.subr.bf16.mxu0 0
    %8596 = vmatpush1.bf16.msra.mxu0 0
    %8597 = vmatprep.subr.bf16.mxu0 0
    %8598 = vmatpush1.bf16.msra.mxu0 0
    %8599 = vmatprep.subr.bf16.mxu0 0
    %8600 = vmatpush1.bf16.msra.mxu0 0
    %8601 = vmatprep.subr.bf16.mxu0 0
    %8602 = vmatpush1.bf16.msra.mxu0 0
    %8603 = vmatprep.mubr.bf16.mxu0 0
    %8604 = vmatmul.mubr.bf16.gmra.mrb[0].mxu0 %v8569
    %v8605 = vpop.f32.mrb[0].mxu0
    %v8606 = vadd.f32 0.0, %v8605
    %v8607 = vpop.f32.mrb[0].mxu0
    %v8608 = vadd.f32 0.0, %v8607
    %v8609 = vpop.f32.mrb[0].mxu0
    %v8610 = vadd.f32 0.0, %v8609
    %v8611 = vpop.f32.mrb[0].mxu0
    %v8612 = vadd.f32 0.0, %v8611
    %8613 = vdwg.mxu0
    %v8616 = vunpack.c.l.b16 %v8502
    %v8617 = vunpack.c.l.b16 %v8503
    %v8618 = vpack.c.b16 %v8617, %v8616
    %v8620 = vsel %vm7611, %v8618, 0
    %8622 = vmatprep.subr.bf16.mxu0 %v8518
    %8623 = vmatpush1.bf16.msra.mxu0 %v8515
    %8624 = vmatprep.subr.bf16.mxu0 0
    %8625 = vmatpush1.bf16.msra.mxu0 0
    %8626 = vmatprep.subr.bf16.mxu0 0
    %8627 = vmatpush1.bf16.msra.mxu0 0
    %8628 = vmatprep.subr.bf16.mxu0 0
    %8629 = vmatpush1.bf16.msra.mxu0 0
    %8630 = vmatprep.subr.bf16.mxu0 0
    %8631 = vmatpush1.bf16.msra.mxu0 0
    %8632 = vmatprep.subr.bf16.mxu0 0
    %8633 = vmatpush1.bf16.msra.mxu0 0
    %8634 = vmatprep.subr.bf16.mxu0 0
    %8635 = vmatpush1.bf16.msra.mxu0 0
    %8636 = vmatprep.subr.bf16.mxu0 0
    %8637 = vmatpush1.bf16.msra.mxu0 0
    %8638 = vmatprep.subr.bf16.mxu0 0
    %8639 = vmatpush1.bf16.msra.mxu0 0
    %8640 = vmatprep.subr.bf16.mxu0 0
    %8641 = vmatpush1.bf16.msra.mxu0 0
    %8642 = vmatprep.subr.bf16.mxu0 0
    %8643 = vmatpush1.bf16.msra.mxu0 0
    %8644 = vmatprep.subr.bf16.mxu0 0
    %8645 = vmatpush1.bf16.msra.mxu0 0
    %8646 = vmatprep.subr.bf16.mxu0 0
    %8647 = vmatpush1.bf16.msra.mxu0 0
    %8648 = vmatprep.subr.bf16.mxu0 0
    %8649 = vmatpush1.bf16.msra.mxu0 0
    %8650 = vmatprep.subr.bf16.mxu0 0
    %8651 = vmatpush1.bf16.msra.mxu0 0
    %8652 = vmatprep.subr.bf16.mxu0 0
    %8653 = vmatpush1.bf16.msra.mxu0 0
    %8654 = vmatprep.mubr.bf16.mxu0 0
    %8655 = vmatmul.mubr.bf16.gmra.mrb[0].mxu0 %v8620
    %v8656 = vpop.f32.mrb[0].mxu0
    %v8657 = vadd.f32 0.0, %v8656
    %v8658 = vpop.f32.mrb[0].mxu0
    %v8659 = vadd.f32 0.0, %v8658
    %v8660 = vpop.f32.mrb[0].mxu0
    %v8661 = vadd.f32 0.0, %v8660
    %v8662 = vpop.f32.mrb[0].mxu0
    %v8663 = vadd.f32 0.0, %v8662
    %8664 = vdwg.mxu0
    %v8665 = vpack.c.bf16 %v8559, %v8555
    %v8666 = vpack.c.bf16 %v8561, %v8557
    %v8667 = vpack.c.bf16 %v8610, %v8606
    %v8668 = vpack.c.bf16 %v8612, %v8608
    %v8669 = vpack.c.bf16 %v8661, %v8657
    %v8670 = vpack.c.bf16 %v8663, %v8659
    %v8672 = vlaneseq
    %v8673 = vshrl.u32 %v8672, 7
    %v8674 = vsub.s32 0, %v8673
    %v8675 = vrot.slane %v8497, %v8674
    %v8676 = vlaneseq
    %v8677 = vshrl.u32 %v8676, 7
    %v8678 = vsub.s32 1, %v8677
    %v8679 = vrot.slane %v8497, %v8678
    %v8778 = vunpack.c.l.b16 %v8401
    %v8779 = vunpack.c.h.b16 %v8401
    %v8780 = vunpack.c.l.b16 %v8402
    %v8781 = vunpack.c.h.b16 %v8402
    %v8782 = vunpack.c.l.b16 %v8403
    %v8783 = vunpack.c.h.b16 %v8403
    %v8784 = vunpack.c.l.b16 %v8404
    %v8785 = vunpack.c.h.b16 %v8404
    %v8786 = vunpack.c.l.b16 %v8405
    %v8787 = vunpack.c.h.b16 %v8405
    %v8788 = vunpack.c.l.b16 %v8406
    %v8789 = vunpack.c.h.b16 %v8406
    %v8790 = vunpack.c.l.b16 %v8407
    %v8791 = vunpack.c.h.b16 %v8407
    %v8792 = vunpack.c.l.b16 %v8408
    %v8793 = vunpack.c.h.b16 %v8408
    %v8794 = vunpack.c.l.b16 %v8409
    %v8795 = vunpack.c.h.b16 %v8409
    %v8796 = vunpack.c.l.b16 %v8410
    %v8797 = vunpack.c.h.b16 %v8410
    %v8798 = vunpack.c.l.b16 %v8411
    %v8799 = vunpack.c.h.b16 %v8411
    %v8800 = vunpack.c.l.b16 %v8412
    %v8801 = vunpack.c.h.b16 %v8412
    %v8802 = vunpack.c.l.b16 %v8413
    %v8803 = vunpack.c.h.b16 %v8413
    %v8804 = vunpack.c.l.b16 %v8414
    %v8805 = vunpack.c.h.b16 %v8414
    %v8806 = vunpack.c.l.b16 %v8415
    %v8807 = vunpack.c.h.b16 %v8415
    %v8808 = vunpack.c.l.b16 %v8416
    %v8809 = vunpack.c.h.b16 %v8416
    %v8810 = vunpack.c.l.b16 %v8417
    %v8811 = vunpack.c.h.b16 %v8417
    %v8812 = vunpack.c.l.b16 %v8418
    %v8813 = vunpack.c.h.b16 %v8418
    %v8814 = vunpack.c.l.b16 %v8419
    %v8815 = vunpack.c.h.b16 %v8419
    %v8816 = vunpack.c.l.b16 %v8420
    %v8817 = vunpack.c.h.b16 %v8420
    %v8818 = vunpack.c.l.b16 %v8421
    %v8819 = vunpack.c.h.b16 %v8421
    %v8820 = vunpack.c.l.b16 %v8422
    %v8821 = vunpack.c.h.b16 %v8422
    %v8822 = vunpack.c.l.b16 %v8423
    %v8823 = vunpack.c.h.b16 %v8423
    %v8824 = vunpack.c.l.b16 %v8424
    %v8825 = vunpack.c.h.b16 %v8424
    %v8826 = vunpack.c.l.b16 %v8425
    %v8827 = vunpack.c.h.b16 %v8425
    %v8828 = vunpack.c.l.b16 %v8426
    %v8829 = vunpack.c.h.b16 %v8426
    %v8830 = vunpack.c.l.b16 %v8427
    %v8831 = vunpack.c.h.b16 %v8427
    %v8832 = vunpack.c.l.b16 %v8428
    %v8833 = vunpack.c.h.b16 %v8428
    %v8834 = vunpack.c.l.b16 %v8429
    %v8835 = vunpack.c.h.b16 %v8429
    %v8836 = vunpack.c.l.b16 %v8430
    %v8837 = vunpack.c.h.b16 %v8430
    %v8838 = vunpack.c.l.b16 %v8431
    %v8839 = vunpack.c.h.b16 %v8431
    %v8840 = vunpack.c.l.b16 %v8432
    %v8841 = vunpack.c.h.b16 %v8432
    %v8842 = vunpack.c.l.b16 %v8433
    %v8843 = vunpack.c.h.b16 %v8433
    %v8844 = vunpack.c.l.b16 %v8434
    %v8845 = vunpack.c.h.b16 %v8434
    %v8846 = vunpack.c.l.b16 %v8435
    %v8847 = vunpack.c.h.b16 %v8435
    %v8848 = vunpack.c.l.b16 %v8436
    %v8849 = vunpack.c.h.b16 %v8436
    %v8850 = vunpack.c.l.b16 %v8437
    %v8851 = vunpack.c.h.b16 %v8437
    %v8852 = vunpack.c.l.b16 %v8438
    %v8853 = vunpack.c.h.b16 %v8438
    %v8854 = vunpack.c.l.b16 %v8439
    %v8855 = vunpack.c.h.b16 %v8439
    %v8856 = vunpack.c.l.b16 %v8440
    %v8857 = vunpack.c.h.b16 %v8440
    %v8858 = vunpack.c.l.b16 %v8441
    %v8859 = vunpack.c.h.b16 %v8441
    %v8860 = vunpack.c.l.b16 %v8442
    %v8861 = vunpack.c.h.b16 %v8442
    %v8862 = vunpack.c.l.b16 %v8443
    %v8863 = vunpack.c.h.b16 %v8443
    %v8864 = vunpack.c.l.b16 %v8444
    %v8865 = vunpack.c.h.b16 %v8444
    %v8866 = vunpack.c.l.b16 %v8445
    %v8867 = vunpack.c.h.b16 %v8445
    %v8868 = vunpack.c.l.b16 %v8446
    %v8869 = vunpack.c.h.b16 %v8446
    %v8870 = vunpack.c.l.b16 %v8447
    %v8871 = vunpack.c.h.b16 %v8447
    %v8872 = vunpack.c.l.b16 %v8448
    %v8873 = vunpack.c.h.b16 %v8448
    %v8874 = vunpack.c.l.b16 %v8449
    %v8875 = vunpack.c.h.b16 %v8449
    %v8876 = vunpack.c.l.b16 %v8450
    %v8877 = vunpack.c.h.b16 %v8450
    %v8878 = vunpack.c.l.b16 %v8451
    %v8879 = vunpack.c.h.b16 %v8451
    %v8880 = vunpack.c.l.b16 %v8452
    %v8881 = vunpack.c.h.b16 %v8452
    %v8882 = vunpack.c.l.b16 %v8453
    %v8883 = vunpack.c.h.b16 %v8453
    %v8884 = vunpack.c.l.b16 %v8454
    %v8885 = vunpack.c.h.b16 %v8454
    %v8886 = vunpack.c.l.b16 %v8455
    %v8887 = vunpack.c.h.b16 %v8455
    %v8888 = vunpack.c.l.b16 %v8456
    %v8889 = vunpack.c.h.b16 %v8456
    %v8890 = vunpack.c.l.b16 %v8457
    %v8891 = vunpack.c.h.b16 %v8457
    %v8892 = vunpack.c.l.b16 %v8458
    %v8893 = vunpack.c.h.b16 %v8458
    %v8894 = vunpack.c.l.b16 %v8459
    %v8895 = vunpack.c.h.b16 %v8459
    %v8896 = vunpack.c.l.b16 %v8460
    %v8897 = vunpack.c.h.b16 %v8460
    %v8898 = vunpack.c.l.b16 %v8461
    %v8899 = vunpack.c.h.b16 %v8461
    %v8900 = vunpack.c.l.b16 %v8462
    %v8901 = vunpack.c.h.b16 %v8462
    %v8902 = vunpack.c.l.b16 %v8463
    %v8903 = vunpack.c.h.b16 %v8463
    %v8904 = vunpack.c.l.b16 %v8464
    %v8905 = vunpack.c.h.b16 %v8464
    %v8906 = vunpack.c.l.b16 %v8465
    %v8907 = vunpack.c.h.b16 %v8465
    %v8908 = vunpack.c.l.b16 %v8466
    %v8909 = vunpack.c.h.b16 %v8466
    %v8910 = vunpack.c.l.b16 %v8467
    %v8911 = vunpack.c.h.b16 %v8467
    %v8912 = vunpack.c.l.b16 %v8468
    %v8913 = vunpack.c.h.b16 %v8468
    %v8914 = vunpack.c.l.b16 %v8469
    %v8915 = vunpack.c.h.b16 %v8469
    %v8916 = vunpack.c.l.b16 %v8470
    %v8917 = vunpack.c.h.b16 %v8470
    %v8918 = vunpack.c.l.b16 %v8471
    %v8919 = vunpack.c.h.b16 %v8471
    %v8920 = vunpack.c.l.b16 %v8472
    %v8921 = vunpack.c.h.b16 %v8472
    %v8922 = vunpack.c.l.b16 %v8473
    %v8923 = vunpack.c.h.b16 %v8473
    %v8924 = vunpack.c.l.b16 %v8474
    %v8925 = vunpack.c.h.b16 %v8474
    %v8926 = vunpack.c.l.b16 %v8475
    %v8927 = vunpack.c.h.b16 %v8475
    %v8928 = vunpack.c.l.b16 %v8476
    %v8929 = vunpack.c.h.b16 %v8476
    %v8930 = vunpack.c.l.b16 %v8477
    %v8931 = vunpack.c.h.b16 %v8477
    %v8932 = vunpack.c.l.b16 %v8478
    %v8933 = vunpack.c.h.b16 %v8478
    %v8934 = vunpack.c.l.b16 %v8479
    %v8935 = vunpack.c.h.b16 %v8479
    %v8936 = vunpack.c.l.b16 %v8480
    %v8937 = vunpack.c.h.b16 %v8480
    %v8938 = vunpack.c.l.b16 %v8481
    %v8939 = vunpack.c.h.b16 %v8481
    %v8940 = vunpack.c.l.b16 %v8482
    %v8941 = vunpack.c.h.b16 %v8482
    %v8942 = vunpack.c.l.b16 %v8483
    %v8943 = vunpack.c.h.b16 %v8483
    %v8944 = vunpack.c.l.b16 %v8484
    %v8945 = vunpack.c.h.b16 %v8484
    %v8946 = vunpack.c.l.b16 %v8485
    %v8947 = vunpack.c.h.b16 %v8485
    %v8948 = vunpack.c.l.b16 %v8486
    %v8949 = vunpack.c.h.b16 %v8486
    %v8950 = vunpack.c.l.b16 %v8487
    %v8951 = vunpack.c.h.b16 %v8487
    %v8952 = vunpack.c.l.b16 %v8488
    %v8953 = vunpack.c.h.b16 %v8488
    %v8954 = vunpack.c.l.b16 %v8489
    %v8955 = vunpack.c.h.b16 %v8489
    %v8956 = vunpack.c.l.b16 %v8490
    %v8957 = vunpack.c.h.b16 %v8490
    %v8958 = vunpack.c.l.b16 %v8491
    %v8959 = vunpack.c.h.b16 %v8491
    %v8960 = vunpack.c.l.b16 %v8492
    %v8961 = vunpack.c.h.b16 %v8492
    %v8962 = vunpack.c.l.b16 %v8493
    %v8963 = vunpack.c.h.b16 %v8493
    %v8964 = vunpack.c.l.b16 %v8494
    %v8965 = vunpack.c.h.b16 %v8494
    %v8966 = vunpack.c.l.b16 %v8495
    %v8967 = vunpack.c.h.b16 %v8495
    %v8968 = vunpack.c.l.b16 %v8496
    %v8969 = vunpack.c.h.b16 %v8496
    %v8970 = vpack.c.b16 %v8780, %v8778
    %v8971 = vpack.c.b16 %v8781, %v8779
    %v8972 = vpack.c.b16 %v8784, %v8782
    %v8973 = vpack.c.b16 %v8785, %v8783
    %v8974 = vpack.c.b16 %v8788, %v8786
    %v8975 = vpack.c.b16 %v8789, %v8787
    %v8976 = vpack.c.b16 %v8792, %v8790
    %v8977 = vpack.c.b16 %v8793, %v8791
    %v8978 = vpack.c.b16 %v8796, %v8794
    %v8979 = vpack.c.b16 %v8797, %v8795
    %v8980 = vpack.c.b16 %v8800, %v8798
    %v8981 = vpack.c.b16 %v8801, %v8799
    %v8982 = vpack.c.b16 %v8804, %v8802
    %v8983 = vpack.c.b16 %v8805, %v8803
    %v8984 = vpack.c.b16 %v8808, %v8806
    %v8985 = vpack.c.b16 %v8809, %v8807
    %v8986 = vpack.c.b16 %v8812, %v8810
    %v8987 = vpack.c.b16 %v8813, %v8811
    %v8988 = vpack.c.b16 %v8816, %v8814
    %v8989 = vpack.c.b16 %v8817, %v8815
    %v8990 = vpack.c.b16 %v8820, %v8818
    %v8991 = vpack.c.b16 %v8821, %v8819
    %v8992 = vpack.c.b16 %v8824, %v8822
    %v8993 = vpack.c.b16 %v8825, %v8823
    %v8994 = vpack.c.b16 %v8828, %v8826
    %v8995 = vpack.c.b16 %v8829, %v8827
    %v8996 = vpack.c.b16 %v8832, %v8830
    %v8997 = vpack.c.b16 %v8833, %v8831
    %v8998 = vpack.c.b16 %v8836, %v8834
    %v8999 = vpack.c.b16 %v8837, %v8835
    %v9000 = vpack.c.b16 %v8840, %v8838
    %v9001 = vpack.c.b16 %v8841, %v8839
    %v9002 = vpack.c.b16 %v8844, %v8842
    %v9003 = vpack.c.b16 %v8845, %v8843
    %v9004 = vpack.c.b16 %v8848, %v8846
    %v9005 = vpack.c.b16 %v8849, %v8847
    %v9006 = vpack.c.b16 %v8852, %v8850
    %v9007 = vpack.c.b16 %v8853, %v8851
    %v9008 = vpack.c.b16 %v8856, %v8854
    %v9009 = vpack.c.b16 %v8857, %v8855
    %v9010 = vpack.c.b16 %v8860, %v8858
    %v9011 = vpack.c.b16 %v8861, %v8859
    %v9012 = vpack.c.b16 %v8864, %v8862
    %v9013 = vpack.c.b16 %v8865, %v8863
    %v9014 = vpack.c.b16 %v8868, %v8866
    %v9015 = vpack.c.b16 %v8869, %v8867
    %v9016 = vpack.c.b16 %v8872, %v8870
    %v9017 = vpack.c.b16 %v8873, %v8871
    %v9018 = vpack.c.b16 %v8876, %v8874
    %v9019 = vpack.c.b16 %v8877, %v8875
    %v9020 = vpack.c.b16 %v8880, %v8878
    %v9021 = vpack.c.b16 %v8881, %v8879
    %v9022 = vpack.c.b16 %v8884, %v8882
    %v9023 = vpack.c.b16 %v8885, %v8883
    %v9024 = vpack.c.b16 %v8888, %v8886
    %v9025 = vpack.c.b16 %v8889, %v8887
    %v9026 = vpack.c.b16 %v8892, %v8890
    %v9027 = vpack.c.b16 %v8893, %v8891
    %v9028 = vpack.c.b16 %v8896, %v8894
    %v9029 = vpack.c.b16 %v8897, %v8895
    %v9030 = vpack.c.b16 %v8900, %v8898
    %v9031 = vpack.c.b16 %v8901, %v8899
    %v9032 = vpack.c.b16 %v8904, %v8902
    %v9033 = vpack.c.b16 %v8905, %v8903
    %v9034 = vpack.c.b16 %v8908, %v8906
    %v9035 = vpack.c.b16 %v8909, %v8907
    %v9036 = vpack.c.b16 %v8912, %v8910
    %v9037 = vpack.c.b16 %v8913, %v8911
    %v9038 = vpack.c.b16 %v8916, %v8914
    %v9039 = vpack.c.b16 %v8917, %v8915
    %v9040 = vpack.c.b16 %v8920, %v8918
    %v9041 = vpack.c.b16 %v8921, %v8919
    %v9042 = vpack.c.b16 %v8924, %v8922
    %v9043 = vpack.c.b16 %v8925, %v8923
    %v9044 = vpack.c.b16 %v8928, %v8926
    %v9045 = vpack.c.b16 %v8929, %v8927
    %v9046 = vpack.c.b16 %v8932, %v8930
    %v9047 = vpack.c.b16 %v8933, %v8931
    %v9048 = vpack.c.b16 %v8936, %v8934
    %v9049 = vpack.c.b16 %v8937, %v8935
    %v9050 = vpack.c.b16 %v8940, %v8938
    %v9051 = vpack.c.b16 %v8941, %v8939
    %v9052 = vpack.c.b16 %v8944, %v8942
    %v9053 = vpack.c.b16 %v8945, %v8943
    %v9054 = vpack.c.b16 %v8948, %v8946
    %v9055 = vpack.c.b16 %v8949, %v8947
    %v9056 = vpack.c.b16 %v8952, %v8950
    %v9057 = vpack.c.b16 %v8953, %v8951
    %v9058 = vpack.c.b16 %v8956, %v8954
    %v9059 = vpack.c.b16 %v8957, %v8955
    %v9060 = vpack.c.b16 %v8960, %v8958
    %v9061 = vpack.c.b16 %v8961, %v8959
    %v9062 = vpack.c.b16 %v8964, %v8962
    %v9063 = vpack.c.b16 %v8965, %v8963
    %v9064 = vpack.c.b16 %v8968, %v8966
    %v9065 = vpack.c.b16 %v8969, %v8967
    %9162 = vmatprep.subr.bf16.mxu0 %v8971
    %9163 = vmatpush1.bf16.msra.mxu0 %v8970
    %9164 = vmatprep.subr.bf16.mxu0 %v8973
    %9165 = vmatpush1.bf16.msra.mxu0 %v8972
    %9166 = vmatprep.subr.bf16.mxu0 %v8975
    %9167 = vmatpush1.bf16.msra.mxu0 %v8974
    %9168 = vmatprep.subr.bf16.mxu0 %v8977
    %9169 = vmatpush1.bf16.msra.mxu0 %v8976
    %9170 = vmatprep.subr.bf16.mxu0 %v8979
    %9171 = vmatpush1.bf16.msra.mxu0 %v8978
    %9172 = vmatprep.subr.bf16.mxu0 %v8981
    %9173 = vmatpush1.bf16.msra.mxu0 %v8980
    %9174 = vmatprep.subr.bf16.mxu0 %v8983
    %9175 = vmatpush1.bf16.msra.mxu0 %v8982
    %9176 = vmatprep.subr.bf16.mxu0 %v8985
    %9177 = vmatpush1.bf16.msra.mxu0 %v8984
    %9178 = vmatprep.subr.bf16.mxu0 %v8987
    %9179 = vmatpush1.bf16.msra.mxu0 %v8986
    %9180 = vmatprep.subr.bf16.mxu0 %v8989
    %9181 = vmatpush1.bf16.msra.mxu0 %v8988
    %9182 = vmatprep.subr.bf16.mxu0 %v8991
    %9183 = vmatpush1.bf16.msra.mxu0 %v8990
    %9184 = vmatprep.subr.bf16.mxu0 %v8993
    %9185 = vmatpush1.bf16.msra.mxu0 %v8992
    %9186 = vmatprep.subr.bf16.mxu0 %v8995
    %9187 = vmatpush1.bf16.msra.mxu0 %v8994
    %9188 = vmatprep.subr.bf16.mxu0 %v8997
    %9189 = vmatpush1.bf16.msra.mxu0 %v8996
    %9190 = vmatprep.subr.bf16.mxu0 %v8999
    %9191 = vmatpush1.bf16.msra.mxu0 %v8998
    %9192 = vmatprep.subr.bf16.mxu0 %v9001
    %9193 = vmatpush1.bf16.msra.mxu0 %v9000
    %9194 = vmatprep.mubr.bf16.mxu0 %v8666
    %9195 = vmatmul.mubr.bf16.gmra.mrb[0].mxu0 %v8665
    %v9196 = vpop.f32.mrb[0].mxu0
    %v9197 = vadd.f32 %v8675, %v9196
    %v9198 = vpop.f32.mrb[0].mxu0
    %v9199 = vadd.f32 %v8679, %v9198
    %v9200 = vpop.f32.mrb[0].mxu0
    %v9201 = vadd.f32 %v8675, %v9200
    %v9202 = vpop.f32.mrb[0].mxu0
    %v9203 = vadd.f32 %v8679, %v9202
    %9204 = vdwg.mxu0
    %9205 = vmatprep.subr.bf16.mxu0 %v9003
    %9206 = vmatpush1.bf16.msra.mxu0 %v9002
    %9207 = vmatprep.subr.bf16.mxu0 %v9005
    %9208 = vmatpush1.bf16.msra.mxu0 %v9004
    %9209 = vmatprep.subr.bf16.mxu0 %v9007
    %9210 = vmatpush1.bf16.msra.mxu0 %v9006
    %9211 = vmatprep.subr.bf16.mxu0 %v9009
    %9212 = vmatpush1.bf16.msra.mxu0 %v9008
    %9213 = vmatprep.subr.bf16.mxu0 %v9011
    %9214 = vmatpush1.bf16.msra.mxu0 %v9010
    %9215 = vmatprep.subr.bf16.mxu0 %v9013
    %9216 = vmatpush1.bf16.msra.mxu0 %v9012
    %9217 = vmatprep.subr.bf16.mxu0 %v9015
    %9218 = vmatpush1.bf16.msra.mxu0 %v9014
    %9219 = vmatprep.subr.bf16.mxu0 %v9017
    %9220 = vmatpush1.bf16.msra.mxu0 %v9016
    %9221 = vmatprep.subr.bf16.mxu0 %v9019
    %9222 = vmatpush1.bf16.msra.mxu0 %v9018
    %9223 = vmatprep.subr.bf16.mxu0 %v9021
    %9224 = vmatpush1.bf16.msra.mxu0 %v9020
    %9225 = vmatprep.subr.bf16.mxu0 %v9023
    %9226 = vmatpush1.bf16.msra.mxu0 %v9022
    %9227 = vmatprep.subr.bf16.mxu0 %v9025
    %9228 = vmatpush1.bf16.msra.mxu0 %v9024
    %9229 = vmatprep.subr.bf16.mxu0 %v9027
    %9230 = vmatpush1.bf16.msra.mxu0 %v9026
    %9231 = vmatprep.subr.bf16.mxu0 %v9029
    %9232 = vmatpush1.bf16.msra.mxu0 %v9028
    %9233 = vmatprep.subr.bf16.mxu0 %v9031
    %9234 = vmatpush1.bf16.msra.mxu0 %v9030
    %9235 = vmatprep.subr.bf16.mxu0 %v9033
    %9236 = vmatpush1.bf16.msra.mxu0 %v9032
    %9237 = vmatprep.mubr.bf16.mxu0 %v8668
    %9238 = vmatmul.mubr.bf16.gmra.mrb[0].mxu0 %v8667
    %v9239 = vpop.f32.mrb[0].mxu0
    %v9240 = vadd.f32 %v9197, %v9239
    %v9241 = vpop.f32.mrb[0].mxu0
    %v9242 = vadd.f32 %v9199, %v9241
    %v9243 = vpop.f32.mrb[0].mxu0
    %v9244 = vadd.f32 %v9201, %v9243
    %v9245 = vpop.f32.mrb[0].mxu0
    %v9246 = vadd.f32 %v9203, %v9245
    %9247 = vdwg.mxu0
    %9248 = vmatprep.subr.bf16.mxu0 %v9035
    %9249 = vmatpush1.bf16.msra.mxu0 %v9034
    %9250 = vmatprep.subr.bf16.mxu0 %v9037
    %9251 = vmatpush1.bf16.msra.mxu0 %v9036
    %9252 = vmatprep.subr.bf16.mxu0 %v9039
    %9253 = vmatpush1.bf16.msra.mxu0 %v9038
    %9254 = vmatprep.subr.bf16.mxu0 %v9041
    %9255 = vmatpush1.bf16.msra.mxu0 %v9040
    %9256 = vmatprep.subr.bf16.mxu0 %v9043
    %9257 = vmatpush1.bf16.msra.mxu0 %v9042
    %9258 = vmatprep.subr.bf16.mxu0 %v9045
    %9259 = vmatpush1.bf16.msra.mxu0 %v9044
    %9260 = vmatprep.subr.bf16.mxu0 %v9047
    %9261 = vmatpush1.bf16.msra.mxu0 %v9046
    %9262 = vmatprep.subr.bf16.mxu0 %v9049
    %9263 = vmatpush1.bf16.msra.mxu0 %v9048
    %9264 = vmatprep.subr.bf16.mxu0 %v9051
    %9265 = vmatpush1.bf16.msra.mxu0 %v9050
    %9266 = vmatprep.subr.bf16.mxu0 %v9053
    %9267 = vmatpush1.bf16.msra.mxu0 %v9052
    %9268 = vmatprep.subr.bf16.mxu0 %v9055
    %9269 = vmatpush1.bf16.msra.mxu0 %v9054
    %9270 = vmatprep.subr.bf16.mxu0 %v9057
    %9271 = vmatpush1.bf16.msra.mxu0 %v9056
    %9272 = vmatprep.subr.bf16.mxu0 %v9059
    %9273 = vmatpush1.bf16.msra.mxu0 %v9058
    %9274 = vmatprep.subr.bf16.mxu0 %v9061
    %9275 = vmatpush1.bf16.msra.mxu0 %v9060
    %9276 = vmatprep.subr.bf16.mxu0 %v9063
    %9277 = vmatpush1.bf16.msra.mxu0 %v9062
    %9278 = vmatprep.subr.bf16.mxu0 %v9065
    %9279 = vmatpush1.bf16.msra.mxu0 %v9064
    %9280 = vmatprep.mubr.bf16.mxu0 %v8670
    %9281 = vmatmul.mubr.bf16.gmra.mrb[0].mxu0 %v8669
    %v9282 = vpop.f32.mrb[0].mxu0
    %v9283 = vadd.f32 %v9240, %v9282
    %v9284 = vpop.f32.mrb[0].mxu0
    %v9285 = vadd.f32 %v9242, %v9284
    %v9286 = vpop.f32.mrb[0].mxu0
    %v9287 = vadd.f32 %v9244, %v9286
    %v9288 = vpop.f32.mrb[0].mxu0
    %v9289 = vadd.f32 %v9246, %v9288
    %9290 = vdwg.mxu0
    %v9291 = vmax.f32 %v9283, 0.0
    %v9292 = vmax.f32 %v9285, 0.0
    %v9293 = vmax.f32 %v9287, 0.0
    %v9294 = vmax.f32 %v9289, 0.0
    %v9295 = vld [vmem:[%s89] sm:$0xff]
    %v9296 = vld [vmem:[%s89 + $0x8] sm:$0xff]
    %v9297 = vld [vmem:[%s89 + $0x10] sm:$0xff]
    %v9298 = vld [vmem:[%s89 + $0x18] sm:$0xff]
    %v9299 = vld [vmem:[%s89 + $0x20] sm:$0xff]
    %v9300 = vld [vmem:[%s89 + $0x28] sm:$0xff]
    %v9301 = vld [vmem:[%s89 + $0x30] sm:$0xff]
    %v9302 = vld [vmem:[%s89 + $0x38] sm:$0xff]
    %v9303 = vld [vmem:[%s89 + $0x40] sm:$0xff]
    %v9304 = vld [vmem:[%s89 + $0x48] sm:$0xff]
    %v9305 = vld [vmem:[%s89 + $0x50] sm:$0xff]
    %v9306 = vld [vmem:[%s89 + $0x58] sm:$0xff]
    %v9307 = vld [vmem:[%s89 + $0x60] sm:$0xff]
    %v9308 = vld [vmem:[%s89 + $0x68] sm:$0xff]
    %v9309 = vld [vmem:[%s89 + $0x70] sm:$0xff]
    %v9310 = vld [vmem:[%s89 + $0x78] sm:$0xff]
    %v9311 = vld [vmem:[%s89 + $0x80] sm:$0xff]
    %v9312 = vld [vmem:[%s89 + $0x88] sm:$0xff]
    %v9313 = vld [vmem:[%s89 + $0x90] sm:$0xff]
    %v9314 = vld [vmem:[%s89 + $0x98] sm:$0xff]
    %v9315 = vld [vmem:[%s89 + $0xa0] sm:$0xff]
    %v9316 = vld [vmem:[%s89 + $0xa8] sm:$0xff]
    %v9317 = vld [vmem:[%s89 + $0xb0] sm:$0xff]
    %v9318 = vld [vmem:[%s89 + $0xb8] sm:$0xff]
    %v9319 = vld [vmem:[%s89 + $0xc0] sm:$0xff]
    %v9320 = vld [vmem:[%s89 + $0xc8] sm:$0xff]
    %v9321 = vld [vmem:[%s89 + $0xd0] sm:$0xff]
    %v9322 = vld [vmem:[%s89 + $0xd8] sm:$0xff]
    %v9323 = vld [vmem:[%s89 + $0xe0] sm:$0xff]
    %v9324 = vld [vmem:[%s89 + $0xe8] sm:$0xff]
    %v9325 = vld [vmem:[%s89 + $0xf0] sm:$0xff]
    %v9326 = vld [vmem:[%s89 + $0xf8] sm:$0xff]
    %v9327 = vld [vmem:[%s89 + $0x100] sm:$0xff]
    %v9328 = vld [vmem:[%s89 + $0x108] sm:$0xff]
    %v9329 = vld [vmem:[%s89 + $0x110] sm:$0xff]
    %v9330 = vld [vmem:[%s89 + $0x118] sm:$0xff]
    %v9331 = vld [vmem:[%s89 + $0x120] sm:$0xff]
    %v9332 = vld [vmem:[%s89 + $0x128] sm:$0xff]
    %v9333 = vld [vmem:[%s89 + $0x130] sm:$0xff]
    %v9334 = vld [vmem:[%s89 + $0x138] sm:$0xff]
    %v9335 = vld [vmem:[%s89 + $0x140] sm:$0xff]
    %v9336 = vld [vmem:[%s89 + $0x148] sm:$0xff]
    %v9337 = vld [vmem:[%s89 + $0x150] sm:$0xff]
    %v9338 = vld [vmem:[%s89 + $0x158] sm:$0xff]
    %v9339 = vld [vmem:[%s89 + $0x160] sm:$0xff]
    %v9340 = vld [vmem:[%s89 + $0x168] sm:$0xff]
    %v9341 = vld [vmem:[%s89 + $0x170] sm:$0xff]
    %v9342 = vld [vmem:[%s89 + $0x178] sm:$0xff]
    %v9343 = vld [vmem:[%s89 + $0x180] sm:$0xff]
    %v9344 = vld [vmem:[%s89 + $0x188] sm:$0xff]
    %v9345 = vld [vmem:[%s89 + $0x190] sm:$0xff]
    %v9346 = vld [vmem:[%s89 + $0x198] sm:$0xff]
    %v9347 = vld [vmem:[%s89 + $0x1a0] sm:$0xff]
    %v9348 = vld [vmem:[%s89 + $0x1a8] sm:$0xff]
    %v9349 = vld [vmem:[%s89 + $0x1b0] sm:$0xff]
    %v9350 = vld [vmem:[%s89 + $0x1b8] sm:$0xff]
    %v9351 = vld [vmem:[%s89 + $0x1c0] sm:$0xff]
    %v9352 = vld [vmem:[%s89 + $0x1c8] sm:$0xff]
    %v9353 = vld [vmem:[%s89 + $0x1d0] sm:$0xff]
    %v9354 = vld [vmem:[%s89 + $0x1d8] sm:$0xff]
    %v9355 = vld [vmem:[%s89 + $0x1e0] sm:$0xff]
    %v9356 = vld [vmem:[%s89 + $0x1e8] sm:$0xff]
    %v9357 = vld [vmem:[%s89 + $0x1f0] sm:$0xff]
    %v9358 = vld [vmem:[%s89 + $0x1f8] sm:$0xff]
    %v9359 = vld [vmem:[%s89 + $0x200] sm:$0xff]
    %v9360 = vld [vmem:[%s89 + $0x208] sm:$0xff]
    %v9361 = vld [vmem:[%s89 + $0x210] sm:$0xff]
    %v9362 = vld [vmem:[%s89 + $0x218] sm:$0xff]
    %v9363 = vld [vmem:[%s89 + $0x220] sm:$0xff]
    %v9364 = vld [vmem:[%s89 + $0x228] sm:$0xff]
    %v9365 = vld [vmem:[%s89 + $0x230] sm:$0xff]
    %v9366 = vld [vmem:[%s89 + $0x238] sm:$0xff]
    %v9367 = vld [vmem:[%s89 + $0x240] sm:$0xff]
    %v9368 = vld [vmem:[%s89 + $0x248] sm:$0xff]
    %v9369 = vld [vmem:[%s89 + $0x250] sm:$0xff]
    %v9370 = vld [vmem:[%s89 + $0x258] sm:$0xff]
    %v9371 = vld [vmem:[%s89 + $0x260] sm:$0xff]
    %v9372 = vld [vmem:[%s89 + $0x268] sm:$0xff]
    %v9373 = vld [vmem:[%s89 + $0x270] sm:$0xff]
    %v9374 = vld [vmem:[%s89 + $0x278] sm:$0xff]
    %v9375 = vld [vmem:[%s89 + $0x280] sm:$0xff]
    %v9376 = vld [vmem:[%s89 + $0x288] sm:$0xff]
    %v9377 = vld [vmem:[%s89 + $0x290] sm:$0xff]
    %v9378 = vld [vmem:[%s89 + $0x298] sm:$0xff]
    %v9379 = vld [vmem:[%s89 + $0x2a0] sm:$0xff]
    %v9380 = vld [vmem:[%s89 + $0x2a8] sm:$0xff]
    %v9381 = vld [vmem:[%s89 + $0x2b0] sm:$0xff]
    %v9382 = vld [vmem:[%s89 + $0x2b8] sm:$0xff]
    %v9383 = vld [vmem:[%s89 + $0x2c0] sm:$0xff]
    %v9384 = vld [vmem:[%s89 + $0x2c8] sm:$0xff]
    %v9385 = vld [vmem:[%s89 + $0x2d0] sm:$0xff]
    %v9386 = vld [vmem:[%s89 + $0x2d8] sm:$0xff]
    %v9387 = vld [vmem:[%s89 + $0x2e0] sm:$0xff]
    %v9388 = vld [vmem:[%s89 + $0x2e8] sm:$0xff]
    %v9389 = vld [vmem:[%s89 + $0x2f0] sm:$0xff]
    %v9390 = vld [vmem:[%s89 + $0x2f8] sm:$0xff]
    %v9391 = vld [vmem:[%s91] sm:$0x3]
    %v9392 = vld [vmem:[%s93] sm:$0xf]
    %v9393 = vld [vmem:[%s93 + $0x4] sm:$0x7]
    %v9394 = vld [vmem:[%s93 + $0x8] sm:$0xf]
    %v9395 = vld [vmem:[%s93 + $0xc] sm:$0x7]
    %v9396 = vld [vmem:[%s93 + $0x10] sm:$0xf]
    %v9397 = vld [vmem:[%s93 + $0x14] sm:$0x7]
    %v9398 = vpack.c.bf16 %v9293, %v9291
    %v9399 = vpack.c.bf16 %v9294, %v9292
    %v9402 = vunpack.c.l.b16 %v9392
    %v9403 = vunpack.c.l.b16 %v9393
    %v9404 = vpack.c.b16 %v9403, %v9402
    %v9406 = vsel %vm7611, %v9404, 0
    %v9409 = vsel %vm7615, %v9398, 0
    %v9412 = vsel %vm7615, %v9399, 0
    %9414 = vmatprep.subr.bf16.mxu0 %v9412
    %9415 = vmatpush1.bf16.msra.mxu0 %v9409
    %9416 = vmatprep.subr.bf16.mxu0 0
    %9417 = vmatpush1.bf16.msra.mxu0 0
    %9418 = vmatprep.subr.bf16.mxu0 0
    %9419 = vmatpush1.bf16.msra.mxu0 0
    %9420 = vmatprep.subr.bf16.mxu0 0
    %9421 = vmatpush1.bf16.msra.mxu0 0
    %9422 = vmatprep.subr.bf16.mxu0 0
    %9423 = vmatpush1.bf16.msra.mxu0 0
    %9424 = vmatprep.subr.bf16.mxu0 0
    %9425 = vmatpush1.bf16.msra.mxu0 0
    %9426 = vmatprep.subr.bf16.mxu0 0
    %9427 = vmatpush1.bf16.msra.mxu0 0
    %9428 = vmatprep.subr.bf16.mxu0 0
    %9429 = vmatpush1.bf16.msra.mxu0 0
    %9430 = vmatprep.subr.bf16.mxu0 0
    %9431 = vmatpush1.bf16.msra.mxu0 0
    %9432 = vmatprep.subr.bf16.mxu0 0
    %9433 = vmatpush1.bf16.msra.mxu0 0
    %9434 = vmatprep.subr.bf16.mxu0 0
    %9435 = vmatpush1.bf16.msra.mxu0 0
    %9436 = vmatprep.subr.bf16.mxu0 0
    %9437 = vmatpush1.bf16.msra.mxu0 0
    %9438 = vmatprep.subr.bf16.mxu0 0
    %9439 = vmatpush1.bf16.msra.mxu0 0
    %9440 = vmatprep.subr.bf16.mxu0 0
    %9441 = vmatpush1.bf16.msra.mxu0 0
    %9442 = vmatprep.subr.bf16.mxu0 0
    %9443 = vmatpush1.bf16.msra.mxu0 0
    %9444 = vmatprep.subr.bf16.mxu0 0
    %9445 = vmatpush1.bf16.msra.mxu0 0
    %9446 = vmatprep.mubr.bf16.mxu0 0
    %9447 = vmatmul.mubr.bf16.gmra.mrb[0].mxu0 %v9406
    %v9448 = vpop.f32.mrb[0].mxu0
    %v9449 = vadd.f32 0.0, %v9448
    %v9450 = vpop.f32.mrb[0].mxu0
    %v9451 = vadd.f32 0.0, %v9450
    %v9452 = vpop.f32.mrb[0].mxu0
    %v9453 = vadd.f32 0.0, %v9452
    %v9454 = vpop.f32.mrb[0].mxu0
    %v9455 = vadd.f32 0.0, %v9454
    %9456 = vdwg.mxu0
    %v9459 = vunpack.c.l.b16 %v9394
    %v9460 = vunpack.c.l.b16 %v9395
    %v9461 = vpack.c.b16 %v9460, %v9459
    %v9463 = vsel %vm7611, %v9461, 0
    %9465 = vmatprep.subr.bf16.mxu0 %v9412
    %9466 = vmatpush1.bf16.msra.mxu0 %v9409
    %9467 = vmatprep.subr.bf16.mxu0 0
    %9468 = vmatpush1.bf16.msra.mxu0 0
    %9469 = vmatprep.subr.bf16.mxu0 0
    %9470 = vmatpush1.bf16.msra.mxu0 0
    %9471 = vmatprep.subr.bf16.mxu0 0
    %9472 = vmatpush1.bf16.msra.mxu0 0
    %9473 = vmatprep.subr.bf16.mxu0 0
    %9474 = vmatpush1.bf16.msra.mxu0 0
    %9475 = vmatprep.subr.bf16.mxu0 0
    %9476 = vmatpush1.bf16.msra.mxu0 0
    %9477 = vmatprep.subr.bf16.mxu0 0
    %9478 = vmatpush1.bf16.msra.mxu0 0
    %9479 = vmatprep.subr.bf16.mxu0 0
    %9480 = vmatpush1.bf16.msra.mxu0 0
    %9481 = vmatprep.subr.bf16.mxu0 0
    %9482 = vmatpush1.bf16.msra.mxu0 0
    %9483 = vmatprep.subr.bf16.mxu0 0
    %9484 = vmatpush1.bf16.msra.mxu0 0
    %9485 = vmatprep.subr.bf16.mxu0 0
    %9486 = vmatpush1.bf16.msra.mxu0 0
    %9487 = vmatprep.subr.bf16.mxu0 0
    %9488 = vmatpush1.bf16.msra.mxu0 0
    %9489 = vmatprep.subr.bf16.mxu0 0
    %9490 = vmatpush1.bf16.msra.mxu0 0
    %9491 = vmatprep.subr.bf16.mxu0 0
    %9492 = vmatpush1.bf16.msra.mxu0 0
    %9493 = vmatprep.subr.bf16.mxu0 0
    %9494 = vmatpush1.bf16.msra.mxu0 0
    %9495 = vmatprep.subr.bf16.mxu0 0
    %9496 = vmatpush1.bf16.msra.mxu0 0
    %9497 = vmatprep.mubr.bf16.mxu0 0
    %9498 = vmatmul.mubr.bf16.gmra.mrb[0].mxu0 %v9463
    %v9499 = vpop.f32.mrb[0].mxu0
    %v9500 = vadd.f32 0.0, %v9499
    %v9501 = vpop.f32.mrb[0].mxu0
    %v9502 = vadd.f32 0.0, %v9501
    %v9503 = vpop.f32.mrb[0].mxu0
    %v9504 = vadd.f32 0.0, %v9503
    %v9505 = vpop.f32.mrb[0].mxu0
    %v9506 = vadd.f32 0.0, %v9505
    %9507 = vdwg.mxu0
    %v9510 = vunpack.c.l.b16 %v9396
    %v9511 = vunpack.c.l.b16 %v9397
    %v9512 = vpack.c.b16 %v9511, %v9510
    %v9514 = vsel %vm7611, %v9512, 0
    %9516 = vmatprep.subr.bf16.mxu0 %v9412
    %9517 = vmatpush1.bf16.msra.mxu0 %v9409
    %9518 = vmatprep.subr.bf16.mxu0 0
    %9519 = vmatpush1.bf16.msra.mxu0 0
    %9520 = vmatprep.subr.bf16.mxu0 0
    %9521 = vmatpush1.bf16.msra.mxu0 0
    %9522 = vmatprep.subr.bf16.mxu0 0
    %9523 = vmatpush1.bf16.msra.mxu0 0
    %9524 = vmatprep.subr.bf16.mxu0 0
    %9525 = vmatpush1.bf16.msra.mxu0 0
    %9526 = vmatprep.subr.bf16.mxu0 0
    %9527 = vmatpush1.bf16.msra.mxu0 0
    %9528 = vmatprep.subr.bf16.mxu0 0
    %9529 = vmatpush1.bf16.msra.mxu0 0
    %9530 = vmatprep.subr.bf16.mxu0 0
    %9531 = vmatpush1.bf16.msra.mxu0 0
    %9532 = vmatprep.subr.bf16.mxu0 0
    %9533 = vmatpush1.bf16.msra.mxu0 0
    %9534 = vmatprep.subr.bf16.mxu0 0
    %9535 = vmatpush1.bf16.msra.mxu0 0
    %9536 = vmatprep.subr.bf16.mxu0 0
    %9537 = vmatpush1.bf16.msra.mxu0 0
    %9538 = vmatprep.subr.bf16.mxu0 0
    %9539 = vmatpush1.bf16.msra.mxu0 0
    %9540 = vmatprep.subr.bf16.mxu0 0
    %9541 = vmatpush1.bf16.msra.mxu0 0
    %9542 = vmatprep.subr.bf16.mxu0 0
    %9543 = vmatpush1.bf16.msra.mxu0 0
    %9544 = vmatprep.subr.bf16.mxu0 0
    %9545 = vmatpush1.bf16.msra.mxu0 0
    %9546 = vmatprep.subr.bf16.mxu0 0
    %9547 = vmatpush1.bf16.msra.mxu0 0
    %9548 = vmatprep.mubr.bf16.mxu0 0
    %9549 = vmatmul.mubr.bf16.gmra.mrb[0].mxu0 %v9514
    %v9550 = vpop.f32.mrb[0].mxu0
    %v9551 = vadd.f32 0.0, %v9550
    %v9552 = vpop.f32.mrb[0].mxu0
    %v9553 = vadd.f32 0.0, %v9552
    %v9554 = vpop.f32.mrb[0].mxu0
    %v9555 = vadd.f32 0.0, %v9554
    %v9556 = vpop.f32.mrb[0].mxu0
    %v9557 = vadd.f32 0.0, %v9556
    %9558 = vdwg.mxu0
    %v9559 = vpack.c.bf16 %v9453, %v9449
    %v9560 = vpack.c.bf16 %v9455, %v9451
    %v9561 = vpack.c.bf16 %v9504, %v9500
    %v9562 = vpack.c.bf16 %v9506, %v9502
    %v9563 = vpack.c.bf16 %v9555, %v9551
    %v9564 = vpack.c.bf16 %v9557, %v9553
    %v9566 = vlaneseq
    %v9567 = vshrl.u32 %v9566, 7
    %v9568 = vsub.s32 0, %v9567
    %v9569 = vrot.slane %v9391, %v9568
    %v9570 = vlaneseq
    %v9571 = vshrl.u32 %v9570, 7
    %v9572 = vsub.s32 1, %v9571
    %v9573 = vrot.slane %v9391, %v9572
    %v9672 = vunpack.c.l.b16 %v9295
    %v9673 = vunpack.c.h.b16 %v9295
    %v9674 = vunpack.c.l.b16 %v9296
    %v9675 = vunpack.c.h.b16 %v9296
    %v9676 = vunpack.c.l.b16 %v9297
    %v9677 = vunpack.c.h.b16 %v9297
    %v9678 = vunpack.c.l.b16 %v9298
    %v9679 = vunpack.c.h.b16 %v9298
    %v9680 = vunpack.c.l.b16 %v9299
    %v9681 = vunpack.c.h.b16 %v9299
    %v9682 = vunpack.c.l.b16 %v9300
    %v9683 = vunpack.c.h.b16 %v9300
    %v9684 = vunpack.c.l.b16 %v9301
    %v9685 = vunpack.c.h.b16 %v9301
    %v9686 = vunpack.c.l.b16 %v9302
    %v9687 = vunpack.c.h.b16 %v9302
    %v9688 = vunpack.c.l.b16 %v9303
    %v9689 = vunpack.c.h.b16 %v9303
    %v9690 = vunpack.c.l.b16 %v9304
    %v9691 = vunpack.c.h.b16 %v9304
    %v9692 = vunpack.c.l.b16 %v9305
    %v9693 = vunpack.c.h.b16 %v9305
    %v9694 = vunpack.c.l.b16 %v9306
    %v9695 = vunpack.c.h.b16 %v9306
    %v9696 = vunpack.c.l.b16 %v9307
    %v9697 = vunpack.c.h.b16 %v9307
    %v9698 = vunpack.c.l.b16 %v9308
    %v9699 = vunpack.c.h.b16 %v9308
    %v9700 = vunpack.c.l.b16 %v9309
    %v9701 = vunpack.c.h.b16 %v9309
    %v9702 = vunpack.c.l.b16 %v9310
    %v9703 = vunpack.c.h.b16 %v9310
    %v9704 = vunpack.c.l.b16 %v9311
    %v9705 = vunpack.c.h.b16 %v9311
    %v9706 = vunpack.c.l.b16 %v9312
    %v9707 = vunpack.c.h.b16 %v9312
    %v9708 = vunpack.c.l.b16 %v9313
    %v9709 = vunpack.c.h.b16 %v9313
    %v9710 = vunpack.c.l.b16 %v9314
    %v9711 = vunpack.c.h.b16 %v9314
    %v9712 = vunpack.c.l.b16 %v9315
    %v9713 = vunpack.c.h.b16 %v9315
    %v9714 = vunpack.c.l.b16 %v9316
    %v9715 = vunpack.c.h.b16 %v9316
    %v9716 = vunpack.c.l.b16 %v9317
    %v9717 = vunpack.c.h.b16 %v9317
    %v9718 = vunpack.c.l.b16 %v9318
    %v9719 = vunpack.c.h.b16 %v9318
    %v9720 = vunpack.c.l.b16 %v9319
    %v9721 = vunpack.c.h.b16 %v9319
    %v9722 = vunpack.c.l.b16 %v9320
    %v9723 = vunpack.c.h.b16 %v9320
    %v9724 = vunpack.c.l.b16 %v9321
    %v9725 = vunpack.c.h.b16 %v9321
    %v9726 = vunpack.c.l.b16 %v9322
    %v9727 = vunpack.c.h.b16 %v9322
    %v9728 = vunpack.c.l.b16 %v9323
    %v9729 = vunpack.c.h.b16 %v9323
    %v9730 = vunpack.c.l.b16 %v9324
    %v9731 = vunpack.c.h.b16 %v9324
    %v9732 = vunpack.c.l.b16 %v9325
    %v9733 = vunpack.c.h.b16 %v9325
    %v9734 = vunpack.c.l.b16 %v9326
    %v9735 = vunpack.c.h.b16 %v9326
    %v9736 = vunpack.c.l.b16 %v9327
    %v9737 = vunpack.c.h.b16 %v9327
    %v9738 = vunpack.c.l.b16 %v9328
    %v9739 = vunpack.c.h.b16 %v9328
    %v9740 = vunpack.c.l.b16 %v9329
    %v9741 = vunpack.c.h.b16 %v9329
    %v9742 = vunpack.c.l.b16 %v9330
    %v9743 = vunpack.c.h.b16 %v9330
    %v9744 = vunpack.c.l.b16 %v9331
    %v9745 = vunpack.c.h.b16 %v9331
    %v9746 = vunpack.c.l.b16 %v9332
    %v9747 = vunpack.c.h.b16 %v9332
    %v9748 = vunpack.c.l.b16 %v9333
    %v9749 = vunpack.c.h.b16 %v9333
    %v9750 = vunpack.c.l.b16 %v9334
    %v9751 = vunpack.c.h.b16 %v9334
    %v9752 = vunpack.c.l.b16 %v9335
    %v9753 = vunpack.c.h.b16 %v9335
    %v9754 = vunpack.c.l.b16 %v9336
    %v9755 = vunpack.c.h.b16 %v9336
    %v9756 = vunpack.c.l.b16 %v9337
    %v9757 = vunpack.c.h.b16 %v9337
    %v9758 = vunpack.c.l.b16 %v9338
    %v9759 = vunpack.c.h.b16 %v9338
    %v9760 = vunpack.c.l.b16 %v9339
    %v9761 = vunpack.c.h.b16 %v9339
    %v9762 = vunpack.c.l.b16 %v9340
    %v9763 = vunpack.c.h.b16 %v9340
    %v9764 = vunpack.c.l.b16 %v9341
    %v9765 = vunpack.c.h.b16 %v9341
    %v9766 = vunpack.c.l.b16 %v9342
    %v9767 = vunpack.c.h.b16 %v9342
    %v9768 = vunpack.c.l.b16 %v9343
    %v9769 = vunpack.c.h.b16 %v9343
    %v9770 = vunpack.c.l.b16 %v9344
    %v9771 = vunpack.c.h.b16 %v9344
    %v9772 = vunpack.c.l.b16 %v9345
    %v9773 = vunpack.c.h.b16 %v9345
    %v9774 = vunpack.c.l.b16 %v9346
    %v9775 = vunpack.c.h.b16 %v9346
    %v9776 = vunpack.c.l.b16 %v9347
    %v9777 = vunpack.c.h.b16 %v9347
    %v9778 = vunpack.c.l.b16 %v9348
    %v9779 = vunpack.c.h.b16 %v9348
    %v9780 = vunpack.c.l.b16 %v9349
    %v9781 = vunpack.c.h.b16 %v9349
    %v9782 = vunpack.c.l.b16 %v9350
    %v9783 = vunpack.c.h.b16 %v9350
    %v9784 = vunpack.c.l.b16 %v9351
    %v9785 = vunpack.c.h.b16 %v9351
    %v9786 = vunpack.c.l.b16 %v9352
    %v9787 = vunpack.c.h.b16 %v9352
    %v9788 = vunpack.c.l.b16 %v9353
    %v9789 = vunpack.c.h.b16 %v9353
    %v9790 = vunpack.c.l.b16 %v9354
    %v9791 = vunpack.c.h.b16 %v9354
    %v9792 = vunpack.c.l.b16 %v9355
    %v9793 = vunpack.c.h.b16 %v9355
    %v9794 = vunpack.c.l.b16 %v9356
    %v9795 = vunpack.c.h.b16 %v9356
    %v9796 = vunpack.c.l.b16 %v9357
    %v9797 = vunpack.c.h.b16 %v9357
    %v9798 = vunpack.c.l.b16 %v9358
    %v9799 = vunpack.c.h.b16 %v9358
    %v9800 = vunpack.c.l.b16 %v9359
    %v9801 = vunpack.c.h.b16 %v9359
    %v9802 = vunpack.c.l.b16 %v9360
    %v9803 = vunpack.c.h.b16 %v9360
    %v9804 = vunpack.c.l.b16 %v9361
    %v9805 = vunpack.c.h.b16 %v9361
    %v9806 = vunpack.c.l.b16 %v9362
    %v9807 = vunpack.c.h.b16 %v9362
    %v9808 = vunpack.c.l.b16 %v9363
    %v9809 = vunpack.c.h.b16 %v9363
    %v9810 = vunpack.c.l.b16 %v9364
    %v9811 = vunpack.c.h.b16 %v9364
    %v9812 = vunpack.c.l.b16 %v9365
    %v9813 = vunpack.c.h.b16 %v9365
    %v9814 = vunpack.c.l.b16 %v9366
    %v9815 = vunpack.c.h.b16 %v9366
    %v9816 = vunpack.c.l.b16 %v9367
    %v9817 = vunpack.c.h.b16 %v9367
    %v9818 = vunpack.c.l.b16 %v9368
    %v9819 = vunpack.c.h.b16 %v9368
    %v9820 = vunpack.c.l.b16 %v9369
    %v9821 = vunpack.c.h.b16 %v9369
    %v9822 = vunpack.c.l.b16 %v9370
    %v9823 = vunpack.c.h.b16 %v9370
    %v9824 = vunpack.c.l.b16 %v9371
    %v9825 = vunpack.c.h.b16 %v9371
    %v9826 = vunpack.c.l.b16 %v9372
    %v9827 = vunpack.c.h.b16 %v9372
    %v9828 = vunpack.c.l.b16 %v9373
    %v9829 = vunpack.c.h.b16 %v9373
    %v9830 = vunpack.c.l.b16 %v9374
    %v9831 = vunpack.c.h.b16 %v9374
    %v9832 = vunpack.c.l.b16 %v9375
    %v9833 = vunpack.c.h.b16 %v9375
    %v9834 = vunpack.c.l.b16 %v9376
    %v9835 = vunpack.c.h.b16 %v9376
    %v9836 = vunpack.c.l.b16 %v9377
    %v9837 = vunpack.c.h.b16 %v9377
    %v9838 = vunpack.c.l.b16 %v9378
    %v9839 = vunpack.c.h.b16 %v9378
    %v9840 = vunpack.c.l.b16 %v9379
    %v9841 = vunpack.c.h.b16 %v9379
    %v9842 = vunpack.c.l.b16 %v9380
    %v9843 = vunpack.c.h.b16 %v9380
    %v9844 = vunpack.c.l.b16 %v9381
    %v9845 = vunpack.c.h.b16 %v9381
    %v9846 = vunpack.c.l.b16 %v9382
    %v9847 = vunpack.c.h.b16 %v9382
    %v9848 = vunpack.c.l.b16 %v9383
    %v9849 = vunpack.c.h.b16 %v9383
    %v9850 = vunpack.c.l.b16 %v9384
    %v9851 = vunpack.c.h.b16 %v9384
    %v9852 = vunpack.c.l.b16 %v9385
    %v9853 = vunpack.c.h.b16 %v9385
    %v9854 = vunpack.c.l.b16 %v9386
    %v9855 = vunpack.c.h.b16 %v9386
    %v9856 = vunpack.c.l.b16 %v9387
    %v9857 = vunpack.c.h.b16 %v9387
    %v9858 = vunpack.c.l.b16 %v9388
    %v9859 = vunpack.c.h.b16 %v9388
    %v9860 = vunpack.c.l.b16 %v9389
    %v9861 = vunpack.c.h.b16 %v9389
    %v9862 = vunpack.c.l.b16 %v9390
    %v9863 = vunpack.c.h.b16 %v9390
    %v9864 = vpack.c.b16 %v9674, %v9672
    %v9865 = vpack.c.b16 %v9675, %v9673
    %v9866 = vpack.c.b16 %v9678, %v9676
    %v9867 = vpack.c.b16 %v9679, %v9677
    %v9868 = vpack.c.b16 %v9682, %v9680
    %v9869 = vpack.c.b16 %v9683, %v9681
    %v9870 = vpack.c.b16 %v9686, %v9684
    %v9871 = vpack.c.b16 %v9687, %v9685
    %v9872 = vpack.c.b16 %v9690, %v9688
    %v9873 = vpack.c.b16 %v9691, %v9689
    %v9874 = vpack.c.b16 %v9694, %v9692
    %v9875 = vpack.c.b16 %v9695, %v9693
    %v9876 = vpack.c.b16 %v9698, %v9696
    %v9877 = vpack.c.b16 %v9699, %v9697
    %v9878 = vpack.c.b16 %v9702, %v9700
    %v9879 = vpack.c.b16 %v9703, %v9701
    %v9880 = vpack.c.b16 %v9706, %v9704
    %v9881 = vpack.c.b16 %v9707, %v9705
    %v9882 = vpack.c.b16 %v9710, %v9708
    %v9883 = vpack.c.b16 %v9711, %v9709
    %v9884 = vpack.c.b16 %v9714, %v9712
    %v9885 = vpack.c.b16 %v9715, %v9713
    %v9886 = vpack.c.b16 %v9718, %v9716
    %v9887 = vpack.c.b16 %v9719, %v9717
    %v9888 = vpack.c.b16 %v9722, %v9720
    %v9889 = vpack.c.b16 %v9723, %v9721
    %v9890 = vpack.c.b16 %v9726, %v9724
    %v9891 = vpack.c.b16 %v9727, %v9725
    %v9892 = vpack.c.b16 %v9730, %v9728
    %v9893 = vpack.c.b16 %v9731, %v9729
    %v9894 = vpack.c.b16 %v9734, %v9732
    %v9895 = vpack.c.b16 %v9735, %v9733
    %v9896 = vpack.c.b16 %v9738, %v9736
    %v9897 = vpack.c.b16 %v9739, %v9737
    %v9898 = vpack.c.b16 %v9742, %v9740
    %v9899 = vpack.c.b16 %v9743, %v9741
    %v9900 = vpack.c.b16 %v9746, %v9744
    %v9901 = vpack.c.b16 %v9747, %v9745
    %v9902 = vpack.c.b16 %v9750, %v9748
    %v9903 = vpack.c.b16 %v9751, %v9749
    %v9904 = vpack.c.b16 %v9754, %v9752
    %v9905 = vpack.c.b16 %v9755, %v9753
    %v9906 = vpack.c.b16 %v9758, %v9756
    %v9907 = vpack.c.b16 %v9759, %v9757
    %v9908 = vpack.c.b16 %v9762, %v9760
    %v9909 = vpack.c.b16 %v9763, %v9761
    %v9910 = vpack.c.b16 %v9766, %v9764
    %v9911 = vpack.c.b16 %v9767, %v9765
    %v9912 = vpack.c.b16 %v9770, %v9768
    %v9913 = vpack.c.b16 %v9771, %v9769
    %v9914 = vpack.c.b16 %v9774, %v9772
    %v9915 = vpack.c.b16 %v9775, %v9773
    %v9916 = vpack.c.b16 %v9778, %v9776
    %v9917 = vpack.c.b16 %v9779, %v9777
    %v9918 = vpack.c.b16 %v9782, %v9780
    %v9919 = vpack.c.b16 %v9783, %v9781
    %v9920 = vpack.c.b16 %v9786, %v9784
    %v9921 = vpack.c.b16 %v9787, %v9785
    %v9922 = vpack.c.b16 %v9790, %v9788
    %v9923 = vpack.c.b16 %v9791, %v9789
    %v9924 = vpack.c.b16 %v9794, %v9792
    %v9925 = vpack.c.b16 %v9795, %v9793
    %v9926 = vpack.c.b16 %v9798, %v9796
    %v9927 = vpack.c.b16 %v9799, %v9797
    %v9928 = vpack.c.b16 %v9802, %v9800
    %v9929 = vpack.c.b16 %v9803, %v9801
    %v9930 = vpack.c.b16 %v9806, %v9804
    %v9931 = vpack.c.b16 %v9807, %v9805
    %v9932 = vpack.c.b16 %v9810, %v9808
    %v9933 = vpack.c.b16 %v9811, %v9809
    %v9934 = vpack.c.b16 %v9814, %v9812
    %v9935 = vpack.c.b16 %v9815, %v9813
    %v9936 = vpack.c.b16 %v9818, %v9816
    %v9937 = vpack.c.b16 %v9819, %v9817
    %v9938 = vpack.c.b16 %v9822, %v9820
    %v9939 = vpack.c.b16 %v9823, %v9821
    %v9940 = vpack.c.b16 %v9826, %v9824
    %v9941 = vpack.c.b16 %v9827, %v9825
    %v9942 = vpack.c.b16 %v9830, %v9828
    %v9943 = vpack.c.b16 %v9831, %v9829
    %v9944 = vpack.c.b16 %v9834, %v9832
    %v9945 = vpack.c.b16 %v9835, %v9833
    %v9946 = vpack.c.b16 %v9838, %v9836
    %v9947 = vpack.c.b16 %v9839, %v9837
    %v9948 = vpack.c.b16 %v9842, %v9840
    %v9949 = vpack.c.b16 %v9843, %v9841
    %v9950 = vpack.c.b16 %v9846, %v9844
    %v9951 = vpack.c.b16 %v9847, %v9845
    %v9952 = vpack.c.b16 %v9850, %v9848
    %v9953 = vpack.c.b16 %v9851, %v9849
    %v9954 = vpack.c.b16 %v9854, %v9852
    %v9955 = vpack.c.b16 %v9855, %v9853
    %v9956 = vpack.c.b16 %v9858, %v9856
    %v9957 = vpack.c.b16 %v9859, %v9857
    %v9958 = vpack.c.b16 %v9862, %v9860
    %v9959 = vpack.c.b16 %v9863, %v9861
    %10056 = vmatprep.subr.bf16.mxu0 %v9865
    %10057 = vmatpush1.bf16.msra.mxu0 %v9864
    %10058 = vmatprep.subr.bf16.mxu0 %v9867
    %10059 = vmatpush1.bf16.msra.mxu0 %v9866
    %10060 = vmatprep.subr.bf16.mxu0 %v9869
    %10061 = vmatpush1.bf16.msra.mxu0 %v9868
    %10062 = vmatprep.subr.bf16.mxu0 %v9871
    %10063 = vmatpush1.bf16.msra.mxu0 %v9870
    %10064 = vmatprep.subr.bf16.mxu0 %v9873
    %10065 = vmatpush1.bf16.msra.mxu0 %v9872
    %10066 = vmatprep.subr.bf16.mxu0 %v9875
    %10067 = vmatpush1.bf16.msra.mxu0 %v9874
    %10068 = vmatprep.subr.bf16.mxu0 %v9877
    %10069 = vmatpush1.bf16.msra.mxu0 %v9876
    %10070 = vmatprep.subr.bf16.mxu0 %v9879
    %10071 = vmatpush1.bf16.msra.mxu0 %v9878
    %10072 = vmatprep.subr.bf16.mxu0 %v9881
    %10073 = vmatpush1.bf16.msra.mxu0 %v9880
    %10074 = vmatprep.subr.bf16.mxu0 %v9883
    %10075 = vmatpush1.bf16.msra.mxu0 %v9882
    %10076 = vmatprep.subr.bf16.mxu0 %v9885
    %10077 = vmatpush1.bf16.msra.mxu0 %v9884
    %10078 = vmatprep.subr.bf16.mxu0 %v9887
    %10079 = vmatpush1.bf16.msra.mxu0 %v9886
    %10080 = vmatprep.subr.bf16.mxu0 %v9889
    %10081 = vmatpush1.bf16.msra.mxu0 %v9888
    %10082 = vmatprep.subr.bf16.mxu0 %v9891
    %10083 = vmatpush1.bf16.msra.mxu0 %v9890
    %10084 = vmatprep.subr.bf16.mxu0 %v9893
    %10085 = vmatpush1.bf16.msra.mxu0 %v9892
    %10086 = vmatprep.subr.bf16.mxu0 %v9895
    %10087 = vmatpush1.bf16.msra.mxu0 %v9894
    %10088 = vmatprep.mubr.bf16.mxu0 %v9560
    %10089 = vmatmul.mubr.bf16.gmra.mrb[0].mxu0 %v9559
    %v10090 = vpop.f32.mrb[0].mxu0
    %v10091 = vadd.f32 %v9569, %v10090
    %v10092 = vpop.f32.mrb[0].mxu0
    %v10093 = vadd.f32 %v9573, %v10092
    %v10094 = vpop.f32.mrb[0].mxu0
    %v10095 = vadd.f32 %v9569, %v10094
    %v10096 = vpop.f32.mrb[0].mxu0
    %v10097 = vadd.f32 %v9573, %v10096
    %10098 = vdwg.mxu0
    %10099 = vmatprep.subr.bf16.mxu0 %v9897
    %10100 = vmatpush1.bf16.msra.mxu0 %v9896
    %10101 = vmatprep.subr.bf16.mxu0 %v9899
    %10102 = vmatpush1.bf16.msra.mxu0 %v9898
    %10103 = vmatprep.subr.bf16.mxu0 %v9901
    %10104 = vmatpush1.bf16.msra.mxu0 %v9900
    %10105 = vmatprep.subr.bf16.mxu0 %v9903
    %10106 = vmatpush1.bf16.msra.mxu0 %v9902
    %10107 = vmatprep.subr.bf16.mxu0 %v9905
    %10108 = vmatpush1.bf16.msra.mxu0 %v9904
    %10109 = vmatprep.subr.bf16.mxu0 %v9907
    %10110 = vmatpush1.bf16.msra.mxu0 %v9906
    %10111 = vmatprep.subr.bf16.mxu0 %v9909
    %10112 = vmatpush1.bf16.msra.mxu0 %v9908
    %10113 = vmatprep.subr.bf16.mxu0 %v9911
    %10114 = vmatpush1.bf16.msra.mxu0 %v9910
    %10115 = vmatprep.subr.bf16.mxu0 %v9913
    %10116 = vmatpush1.bf16.msra.mxu0 %v9912
    %10117 = vmatprep.subr.bf16.mxu0 %v9915
    %10118 = vmatpush1.bf16.msra.mxu0 %v9914
    %10119 = vmatprep.subr.bf16.mxu0 %v9917
    %10120 = vmatpush1.bf16.msra.mxu0 %v9916
    %10121 = vmatprep.subr.bf16.mxu0 %v9919
    %10122 = vmatpush1.bf16.msra.mxu0 %v9918
    %10123 = vmatprep.subr.bf16.mxu0 %v9921
    %10124 = vmatpush1.bf16.msra.mxu0 %v9920
    %10125 = vmatprep.subr.bf16.mxu0 %v9923
    %10126 = vmatpush1.bf16.msra.mxu0 %v9922
    %10127 = vmatprep.subr.bf16.mxu0 %v9925
    %10128 = vmatpush1.bf16.msra.mxu0 %v9924
    %10129 = vmatprep.subr.bf16.mxu0 %v9927
    %10130 = vmatpush1.bf16.msra.mxu0 %v9926
    %10131 = vmatprep.mubr.bf16.mxu0 %v9562
    %10132 = vmatmul.mubr.bf16.gmra.mrb[0].mxu0 %v9561
    %v10133 = vpop.f32.mrb[0].mxu0
    %v10134 = vadd.f32 %v10091, %v10133
    %v10135 = vpop.f32.mrb[0].mxu0
    %v10136 = vadd.f32 %v10093, %v10135
    %v10137 = vpop.f32.mrb[0].mxu0
    %v10138 = vadd.f32 %v10095, %v10137
    %v10139 = vpop.f32.mrb[0].mxu0
    %v10140 = vadd.f32 %v10097, %v10139
    %10141 = vdwg.mxu0
    %10142 = vmatprep.subr.bf16.mxu0 %v9929
    %10143 = vmatpush1.bf16.msra.mxu0 %v9928
    %10144 = vmatprep.subr.bf16.mxu0 %v9931
    %10145 = vmatpush1.bf16.msra.mxu0 %v9930
    %10146 = vmatprep.subr.bf16.mxu0 %v9933
    %10147 = vmatpush1.bf16.msra.mxu0 %v9932
    %10148 = vmatprep.subr.bf16.mxu0 %v9935
    %10149 = vmatpush1.bf16.msra.mxu0 %v9934
    %10150 = vmatprep.subr.bf16.mxu0 %v9937
    %10151 = vmatpush1.bf16.msra.mxu0 %v9936
    %10152 = vmatprep.subr.bf16.mxu0 %v9939
    %10153 = vmatpush1.bf16.msra.mxu0 %v9938
    %10154 = vmatprep.subr.bf16.mxu0 %v9941
    %10155 = vmatpush1.bf16.msra.mxu0 %v9940
    %10156 = vmatprep.subr.bf16.mxu0 %v9943
    %10157 = vmatpush1.bf16.msra.mxu0 %v9942
    %10158 = vmatprep.subr.bf16.mxu0 %v9945
    %10159 = vmatpush1.bf16.msra.mxu0 %v9944
    %10160 = vmatprep.subr.bf16.mxu0 %v9947
    %10161 = vmatpush1.bf16.msra.mxu0 %v9946
    %10162 = vmatprep.subr.bf16.mxu0 %v9949
    %10163 = vmatpush1.bf16.msra.mxu0 %v9948
    %10164 = vmatprep.subr.bf16.mxu0 %v9951
    %10165 = vmatpush1.bf16.msra.mxu0 %v9950
    %10166 = vmatprep.subr.bf16.mxu0 %v9953
    %10167 = vmatpush1.bf16.msra.mxu0 %v9952
    %10168 = vmatprep.subr.bf16.mxu0 %v9955
    %10169 = vmatpush1.bf16.msra.mxu0 %v9954
    %10170 = vmatprep.subr.bf16.mxu0 %v9957
    %10171 = vmatpush1.bf16.msra.mxu0 %v9956
    %10172 = vmatprep.subr.bf16.mxu0 %v9959
    %10173 = vmatpush1.bf16.msra.mxu0 %v9958
    %10174 = vmatprep.mubr.bf16.mxu0 %v9564
    %10175 = vmatmul.mubr.bf16.gmra.mrb[0].mxu0 %v9563
    %v10176 = vpop.f32.mrb[0].mxu0
    %v10177 = vadd.f32 %v10134, %v10176
    %v10178 = vpop.f32.mrb[0].mxu0
    %v10179 = vadd.f32 %v10136, %v10178
    %v10180 = vpop.f32.mrb[0].mxu0
    %v10181 = vadd.f32 %v10138, %v10180
    %v10182 = vpop.f32.mrb[0].mxu0
    %v10183 = vadd.f32 %v10140, %v10182
    %10184 = vdwg.mxu0
    %v10185 = vadd.f32 %v10177, %v8397
    %v10186 = vadd.f32 %v10179, %v8398
    %v10187 = vadd.f32 %v10181, %v8399
    %v10188 = vadd.f32 %v10183, %v8400
    %v10189 = vmax.f32 %v10185, 0.0
    %v10190 = vmax.f32 %v10186, 0.0
    %v10191 = vmax.f32 %v10187, 0.0
    %v10192 = vmax.f32 %v10188, 0.0
    %v10193 = vld [vmem:[%s95] sm:$0x3]
    %v10194 = vld [vmem:[%s97] sm:$0xff]
    %v10195 = vld [vmem:[%s97 + $0x8] sm:$0xff]
    %v10196 = vld [vmem:[%s97 + $0x10] sm:$0xff]
    %v10197 = vld [vmem:[%s97 + $0x18] sm:$0xff]
    %v10198 = vld [vmem:[%s97 + $0x20] sm:$0xff]
    %v10199 = vld [vmem:[%s97 + $0x28] sm:$0xff]
    %v10200 = vld [vmem:[%s97 + $0x30] sm:$0xff]
    %v10201 = vld [vmem:[%s97 + $0x38] sm:$0xff]
    %v10202 = vld [vmem:[%s97 + $0x40] sm:$0xff]
    %v10203 = vld [vmem:[%s97 + $0x48] sm:$0xff]
    %v10204 = vld [vmem:[%s97 + $0x50] sm:$0xff]
    %v10205 = vld [vmem:[%s97 + $0x58] sm:$0xff]
    %v10206 = vld [vmem:[%s97 + $0x60] sm:$0xff]
    %v10207 = vld [vmem:[%s97 + $0x68] sm:$0xff]
    %v10208 = vld [vmem:[%s97 + $0x70] sm:$0xff]
    %v10209 = vld [vmem:[%s97 + $0x78] sm:$0xff]
    %v10210 = vld [vmem:[%s97 + $0x80] sm:$0xff]
    %v10211 = vld [vmem:[%s97 + $0x88] sm:$0xff]
    %v10212 = vld [vmem:[%s97 + $0x90] sm:$0xff]
    %v10213 = vld [vmem:[%s97 + $0x98] sm:$0xff]
    %v10214 = vld [vmem:[%s97 + $0xa0] sm:$0xff]
    %v10215 = vld [vmem:[%s97 + $0xa8] sm:$0xff]
    %v10216 = vld [vmem:[%s97 + $0xb0] sm:$0xff]
    %v10217 = vld [vmem:[%s97 + $0xb8] sm:$0xff]
    %v10218 = vld [vmem:[%s97 + $0xc0] sm:$0xff]
    %v10219 = vld [vmem:[%s97 + $0xc8] sm:$0xff]
    %v10220 = vld [vmem:[%s97 + $0xd0] sm:$0xff]
    %v10221 = vld [vmem:[%s97 + $0xd8] sm:$0xff]
    %v10222 = vld [vmem:[%s97 + $0xe0] sm:$0xff]
    %v10223 = vld [vmem:[%s97 + $0xe8] sm:$0xff]
    %v10224 = vld [vmem:[%s97 + $0xf0] sm:$0xff]
    %v10225 = vld [vmem:[%s97 + $0xf8] sm:$0xff]
    %v10226 = vld [vmem:[%s99] sm:$0x1]
    %v10228 = vsel %vm7611, %v10193, 0
    %vm10230 = vcmask 1045504
    %v10232 = vsel %vm10230, %v10191, 0
    %v10235 = vsel %vm10230, %v10192, 0
    %10237 = vmatprep.subr.mxu0 %v10190
    %10238 = vmatpush1.msra.mxu0 %v10189
    %10239 = vmatprep.subr.mxu0 %v10235
    %10240 = vmatpush1.msra.mxu0 %v10232
    %10241 = vmatprep.subr.mxu0 0.0
    %10242 = vmatpush1.msra.mxu0 0.0
    %10243 = vmatprep.subr.mxu0 0.0
    %10244 = vmatpush1.msra.mxu0 0.0
    %10245 = vmatprep.subr.mxu0 0.0
    %10246 = vmatpush1.msra.mxu0 0.0
    %10247 = vmatprep.subr.mxu0 0.0
    %10248 = vmatpush1.msra.mxu0 0.0
    %10249 = vmatprep.subr.mxu0 0.0
    %10250 = vmatpush1.msra.mxu0 0.0
    %10251 = vmatprep.subr.mxu0 0.0
    %10252 = vmatpush1.msra.mxu0 0.0
    %10253 = vmatprep.subr.mxu0 0.0
    %10254 = vmatpush1.msra.mxu0 0.0
    %10255 = vmatprep.subr.mxu0 0.0
    %10256 = vmatpush1.msra.mxu0 0.0
    %10257 = vmatprep.subr.mxu0 0.0
    %10258 = vmatpush1.msra.mxu0 0.0
    %10259 = vmatprep.subr.mxu0 0.0
    %10260 = vmatpush1.msra.mxu0 0.0
    %10261 = vmatprep.subr.mxu0 0.0
    %10262 = vmatpush1.msra.mxu0 0.0
    %10263 = vmatprep.subr.mxu0 0.0
    %10264 = vmatpush1.msra.mxu0 0.0
    %10265 = vmatprep.subr.mxu0 0.0
    %10266 = vmatpush1.msra.mxu0 0.0
    %10267 = vmatprep.subr.mxu0 0.0
    %10268 = vmatpush1.msra.mxu0 0.0
    %10269 = vmatprep.subr.mxu0 0.0
    %10270 = vmatpush1.msra.mxu0 0.0
    %10271 = vmatprep.subr.mxu0 0.0
    %10272 = vmatpush1.msra.mxu0 0.0
    %10273 = vmatprep.subr.mxu0 0.0
    %10274 = vmatpush1.msra.mxu0 0.0
    %10275 = vmatprep.subr.mxu0 0.0
    %10276 = vmatpush1.msra.mxu0 0.0
    %10277 = vmatprep.subr.mxu0 0.0
    %10278 = vmatpush1.msra.mxu0 0.0
    %10279 = vmatprep.subr.mxu0 0.0
    %10280 = vmatpush1.msra.mxu0 0.0
    %10281 = vmatprep.subr.mxu0 0.0
    %10282 = vmatpush1.msra.mxu0 0.0
    %10283 = vmatprep.subr.mxu0 0.0
    %10284 = vmatpush1.msra.mxu0 0.0
    %10285 = vmatprep.subr.mxu0 0.0
    %10286 = vmatpush1.msra.mxu0 0.0
    %10287 = vmatprep.subr.mxu0 0.0
    %10288 = vmatpush1.msra.mxu0 0.0
    %10289 = vmatprep.subr.mxu0 0.0
    %10290 = vmatpush1.msra.mxu0 0.0
    %10291 = vmatprep.subr.mxu0 0.0
    %10292 = vmatpush1.msra.mxu0 0.0
    %10293 = vmatprep.subr.mxu0 0.0
    %10294 = vmatpush1.msra.mxu0 0.0
    %10295 = vmatprep.subr.mxu0 0.0
    %10296 = vmatpush1.msra.mxu0 0.0
    %10297 = vmatprep.subr.mxu0 0.0
    %10298 = vmatpush1.msra.mxu0 0.0
    %10299 = vmatprep.subr.mxu0 0.0
    %10300 = vmatpush1.msra.mxu0 0.0
    %10301 = vmatprep.mubr.f32.mxu0 0.0
    %10302 = vmatmul.mubr.f32.gmra.mrb[0].mxu0 %v10228
    %v10303 = vpop.f32.mrb[0].mxu0
    %v10304 = vadd.f32 0.0, %v10303
    %v10305 = vpop.f32.mrb[0].mxu0
    %v10306 = vadd.f32 0.0, %v10305
    %10307 = vdwg.mxu0
    %v10309 = vlaneseq
    %v10310 = vshrl.u32 %v10309, 7
    %v10311 = vsub.s32 0, %v10310
    %v10312 = vrot.slane %v10226, %v10311
    %10314 = vmatprep.subr.mxu0 0.0
    %10315 = vmatpush1.msra.mxu0 %v10194
    %10316 = vmatprep.subr.mxu0 0.0
    %10317 = vmatpush1.msra.mxu0 %v10195
    %10318 = vmatprep.subr.mxu0 0.0
    %10319 = vmatpush1.msra.mxu0 %v10196
    %10320 = vmatprep.subr.mxu0 0.0
    %10321 = vmatpush1.msra.mxu0 %v10197
    %10322 = vmatprep.subr.mxu0 0.0
    %10323 = vmatpush1.msra.mxu0 %v10198
    %10324 = vmatprep.subr.mxu0 0.0
    %10325 = vmatpush1.msra.mxu0 %v10199
    %10326 = vmatprep.subr.mxu0 0.0
    %10327 = vmatpush1.msra.mxu0 %v10200
    %10328 = vmatprep.subr.mxu0 0.0
    %10329 = vmatpush1.msra.mxu0 %v10201
    %10330 = vmatprep.subr.mxu0 0.0
    %10331 = vmatpush1.msra.mxu0 %v10202
    %10332 = vmatprep.subr.mxu0 0.0
    %10333 = vmatpush1.msra.mxu0 %v10203
    %10334 = vmatprep.subr.mxu0 0.0
    %10335 = vmatpush1.msra.mxu0 %v10204
    %10336 = vmatprep.subr.mxu0 0.0
    %10337 = vmatpush1.msra.mxu0 %v10205
    %10338 = vmatprep.subr.mxu0 0.0
    %10339 = vmatpush1.msra.mxu0 %v10206
    %10340 = vmatprep.subr.mxu0 0.0
    %10341 = vmatpush1.msra.mxu0 %v10207
    %10342 = vmatprep.subr.mxu0 0.0
    %10343 = vmatpush1.msra.mxu0 %v10208
    %10344 = vmatprep.subr.mxu0 0.0
    %10345 = vmatpush1.msra.mxu0 %v10209
    %10346 = vmatprep.subr.mxu0 0.0
    %10347 = vmatpush1.msra.mxu0 %v10210
    %10348 = vmatprep.subr.mxu0 0.0
    %10349 = vmatpush1.msra.mxu0 %v10211
    %10350 = vmatprep.subr.mxu0 0.0
    %10351 = vmatpush1.msra.mxu0 %v10212
    %10352 = vmatprep.subr.mxu0 0.0
    %10353 = vmatpush1.msra.mxu0 %v10213
    %10354 = vmatprep.subr.mxu0 0.0
    %10355 = vmatpush1.msra.mxu0 %v10214
    %10356 = vmatprep.subr.mxu0 0.0
    %10357 = vmatpush1.msra.mxu0 %v10215
    %10358 = vmatprep.subr.mxu0 0.0
    %10359 = vmatpush1.msra.mxu0 %v10216
    %10360 = vmatprep.subr.mxu0 0.0
    %10361 = vmatpush1.msra.mxu0 %v10217
    %10362 = vmatprep.subr.mxu0 0.0
    %10363 = vmatpush1.msra.mxu0 %v10218
    %10364 = vmatprep.subr.mxu0 0.0
    %10365 = vmatpush1.msra.mxu0 %v10219
    %10366 = vmatprep.subr.mxu0 0.0
    %10367 = vmatpush1.msra.mxu0 %v10220
    %10368 = vmatprep.subr.mxu0 0.0
    %10369 = vmatpush1.msra.mxu0 %v10221
    %10370 = vmatprep.subr.mxu0 0.0
    %10371 = vmatpush1.msra.mxu0 %v10222
    %10372 = vmatprep.subr.mxu0 0.0
    %10373 = vmatpush1.msra.mxu0 %v10223
    %10374 = vmatprep.subr.mxu0 0.0
    %10375 = vmatpush1.msra.mxu0 %v10224
    %10376 = vmatprep.subr.mxu0 0.0
    %10377 = vmatpush1.msra.mxu0 %v10225
    %10378 = vmatprep.mubr.f32.mxu0 %v10306
    %10379 = vmatmul.mubr.f32.gmra.mrb[0].mxu0 %v10304
    %v10380 = vpop.f32.mrb[0].mxu0
    %v10381 = vadd.f32 %v10312, %v10380
    %v10382 = vpop.f32.mrb[0].mxu0
    %10383 = vdwg.mxu0
    %v10384 = vsub.f32 0.0, %v10381
    %v10385 = vmul.f32 %v10384, 1.442695
    %v10386 = vpow.pop %v10385
    %v10387 = vadd.f32 %v10386, 1.0
    %v10388 = vrcp.pop %v10387
    %v10389 = vmul.f32 1.0, %v10388
    %vm10390 = vcmask 9216
    %10391 = vst.msk [vmem:[#allocation2] sm:$0x3] %vm10390, %v10389
    // Predicated region
    $region202: #{forward.1} parent=1 // pred_check
      _
    $region203: #{forward.1} parent=1 // pred_check_branch
      %10393 = sbr.rel (0) target = $region205
    $region204: #{forward.1} parent=1 // pred_region
      %s10395 = ssub.s32 32, 32
      %10396 = vsyncadd [#allocation3], %s10395
      %s10398 = sshll.u32 [#allocation2], 4
      %s10399 = int_to_ptr.vmem [resolvable:$true] %s10398
      %10401 = dma.vmem_to_hbm [thread:$0]  %s10399, 32, %s101, [#allocation3]
    $region205: #{forward.1} parent=1 // pred_fallthru
      _
    // Predicated region
    $region206: #{forward.1} parent=1 // pred_check
      _
    $region207: #{forward.1} parent=1 // pred_check_branch
      %10403 = sbr.rel (0) target = $region209
    $region208: #{forward.1} parent=1 // pred_region
      %10404 = dma.done [#allocation3], 32
    $region209: #{forward.1} parent=1 // pred_fallthru
      _
    %10405 = vsyncpa [#allocation3], 1

</llo_original>
